<compile_context>
chip_gen: v6e
topology: v6e:2x2x1
jax: 0.10.0
libtpu: 0.0.40
codegen_flags: <defaults>
</compile_context>

<pallas_src>
import functools

import jax
import jax.numpy as jnp
from jax import lax
from jax.experimental import pallas as pl
from jax.experimental.pallas import tpu as pltpu

BACKBONE_DIM = 768
HIDDEN_DIM = 4096
Z_DIM = 128
BN_EPS = 1e-5


def _default_split():
    """2 on dual-TensorCore chips (v7x), 1 on single-TC chips (v5e/v6e)."""
    try:
        kind = jax.devices()[0].device_kind.lower()
    except Exception:
        return 1
    return 2 if "7" in kind else 1


def _head_kernel(x_ref, w1_ref, gb_ref, rhs_ref, bias_ref, acc_ref):
    """Fused Linear(768->H) + BatchNorm1d(train) + ReLU + packed-heads matmul.

    grid = (split, HIDDEN_DIM // (split * tile_h)):
      axis 0: (optional) parallel split of the hidden reduction,
      axis 1: hidden tiles within the split; acc_ref is resident across it.
    """
    j = pl.program_id(1)

    @pl.when(j == 0)
    def _init():
        acc_ref[...] = jnp.zeros_like(acc_ref)

    # pre_feature Linear (bias b1 omitted: cancelled exactly by the BN batch mean).
    xb = x_ref[...].astype(jnp.bfloat16)
    h = jnp.dot(xb, w1_ref[...], preferred_element_type=jnp.float32)

    # BatchNorm1d in training mode (batch mean / biased variance per column),
    # affine transform folded into a single FMA per element.
    mean = jnp.mean(h, axis=0, keepdims=True)
    var = jnp.mean(h * h, axis=0, keepdims=True) - mean * mean
    gb = gb_ref[...].astype(jnp.float32)               # [2, tile_h]: gamma; beta
    scale = gb[0:1, :] * lax.rsqrt(var + BN_EPS)
    shift = gb[1:2, :] - mean * scale
    pre = jnp.maximum(h * scale + shift, 0.0)          # ReLU

    # One wide matmul covers the subspace head AND every cluster head
    # (their weight columns are packed side by side in rhs).
    acc_ref[...] += jnp.dot(pre.astype(rhs_ref.dtype), rhs_ref[...],
                            preferred_element_type=jnp.float32)

    # Epilogue: add the packed biases exactly once (only on split index 0).
    @pl.when((j == pl.num_programs(1) - 1) & (pl.program_id(0) == 0))
    def _fin():
        acc_ref[...] += bias_ref[...]


def _head_i_pallas(x, w1, gb, rhs, bias, *, tile_h, split):
    B = x.shape[0]
    out_pad = rhs.shape[1]
    assert HIDDEN_DIM % (split * tile_h) == 0
    inner = HIDDEN_DIM // (split * tile_h)

    in_specs = [
        pl.BlockSpec((B, BACKBONE_DIM), lambda c, j: (0, 0)),                    # x (f32)
        pl.BlockSpec((BACKBONE_DIM, tile_h), lambda c, j: (0, c * inner + j)),   # w1 (bf16)
        pl.BlockSpec((2, tile_h), lambda c, j: (0, c * inner + j)),              # gamma/beta
        pl.BlockSpec((tile_h, out_pad), lambda c, j: (c * inner + j, 0)),        # w2|wc packed
        pl.BlockSpec((1, out_pad), lambda c, j: (0, 0)),                         # packed bias
    ]
    if split == 1:
        out_shape = jax.ShapeDtypeStruct((B, out_pad), jnp.float32)
        out_specs = pl.BlockSpec((B, out_pad), lambda c, j: (0, 0))
    else:
        out_shape = jax.ShapeDtypeStruct((split, B, out_pad), jnp.float32)
        out_specs = pl.BlockSpec((None, B, out_pad), lambda c, j: (c, 0, 0))

    flops = 2 * B * BACKBONE_DIM * HIDDEN_DIM + 2 * B * HIDDEN_DIM * out_pad
    bytes_accessed = (w1.size + rhs.size + gb.size) * 2 \
        + (x.size + bias.size + split * B * out_pad) * 4

    grid_spec = pltpu.PrefetchScalarGridSpec(
        num_scalar_prefetch=0,
        grid=(split, inner),
        in_specs=in_specs,
        out_specs=out_specs,
    )

    return pl.pallas_call(
        _head_kernel,
        out_shape=out_shape,
        grid_spec=grid_spec,
        cost_estimate=pl.CostEstimate(flops=flops,
                                      transcendentals=HIDDEN_DIM,
                                      bytes_accessed=bytes_accessed),
        compiler_params=pltpu.CompilerParams(
            dimension_semantics=("parallel", "arbitrary")),
    )(x, w1, gb, rhs, bias)


@functools.partial(jax.jit,
                   static_argnames=('nclusters', 'nheads', 'tile_h', 'split'))
def clustering_model_head_i(x, packed, nclusters, nheads, *, tile_h=2048, split=1):
    """Pallas implementation of ClusteringModel.forward(x, 'head_i').

    x: [B, 768] float32 backbone features (B must be a multiple of 8).
    Returns (subspace_head [B, 128], tuple of [B, nclusters], one per head).
    """
    B = x.shape[0]
    if B % 8 != 0:
        raise ValueError(f"batch size must be a multiple of 8, got {B}")

    out = _head_i_pallas(x, packed['w1'], packed['gb'], packed['rhs'],
                         packed['bias'], tile_h=tile_h, split=split)
    if split > 1:
        out = jnp.sum(out, axis=0)                        # bias already added once
    z = out[:, :Z_DIM]
    logits = tuple(out[:, Z_DIM + n * nclusters: Z_DIM + (n + 1) * nclusters]
                   for n in range(nheads))
    return z, logits


def init_params(key, nclusters, nheads):
    """Deterministic params matching the shapes in ClusteringModel.__init__ (f32)."""
    k1, k2, k3, k4, k5, k6 = jax.random.split(key, 6)
    return {
        # pre_feature[0]: Linear(768, 4096), stored as [in, out]
        'w1': jax.random.normal(k1, (BACKBONE_DIM, HIDDEN_DIM), jnp.float32)
              * (1.0 / jnp.sqrt(BACKBONE_DIM)),
        'b1': 0.01 * jax.random.normal(k2, (1, HIDDEN_DIM), jnp.float32),
        # pre_feature[1]: BatchNorm1d(4096) affine params (training-mode stats)
        'gamma': jnp.ones((1, HIDDEN_DIM), jnp.float32),
        'beta': jnp.zeros((1, HIDDEN_DIM), jnp.float32),
        # subspace: Linear(4096, 128)
        'w2': jax.random.normal(k3, (HIDDEN_DIM, Z_DIM), jnp.float32)
              * (1.0 / jnp.sqrt(HIDDEN_DIM)),
        'b2': 0.01 * jax.random.normal(k4, (1, Z_DIM), jnp.float32),
        # cluster_head_i: nheads x Linear(4096, nclusters)
        'wc': jax.random.normal(k5, (nheads, HIDDEN_DIM, nclusters), jnp.float32)
              * (1.0 / jnp.sqrt(HIDDEN_DIM)),
        'bc': 0.01 * jax.random.normal(k6, (nheads, nclusters), jnp.float32),
    }


def pack_params(params, nclusters, nheads):
    """Build the bf16 packed-weight layout consumed by the kernel."""
    cluster_cols = nheads * nclusters
    out_cols = Z_DIM + cluster_cols          # packed contiguously, NO pad to 128:
                                             # block == full array dim keeps it legal
                                             # and avoids streaming zero columns.

    # [HIDDEN, nheads*nclusters], head-major columns
    wc_flat = jnp.transpose(params['wc'], (1, 0, 2)).reshape(HIDDEN_DIM, cluster_cols)
    rhs = jnp.concatenate([params['w2'], wc_flat], axis=1)          # [HIDDEN, out_cols]
    bias = jnp.concatenate([params['b2'],
                            params['bc'].reshape(1, cluster_cols)], axis=1)

    return {
        'w1': params['w1'].astype(jnp.bfloat16),                    # [768, HIDDEN] bf16
        'gb': jnp.concatenate([params['gamma'], params['beta']],
                              axis=0).astype(jnp.bfloat16),          # [2, HIDDEN] bf16
        'rhs': rhs.astype(jnp.bfloat16),                             # [HIDDEN, out_cols] bf16
        'bias': bias.astype(jnp.float32),                            # [1, out_cols] f32
        # note: b1 intentionally not packed — it is a no-op under training-mode BN
    }


def reference_head_i(x, params, nclusters, nheads):
    """Pure-JAX reference of the PyTorch head_i forward (bf16 weights, f32 BN/accum)."""
    xb = x.astype(jnp.bfloat16)
    h = jnp.dot(xb, params['w1'].astype(jnp.bfloat16),
                preferred_element_type=jnp.float32) + params['b1']
    mean = jnp.mean(h, axis=0, keepdims=True)
    var = jnp.mean((h - mean) ** 2, axis=0, keepdims=True)
    pre = jnp.maximum((h - mean) * lax.rsqrt(var + BN_EPS) * params['gamma']
                      + params['beta'], 0.0)
    preb = pre.astype(jnp.bfloat16)
    z = jnp.dot(preb, params['w2'].astype(jnp.bfloat16),
                preferred_element_type=jnp.float32) + params['b2']
    outs = [jnp.dot(preb, params['wc'][n].astype(jnp.bfloat16),
                    preferred_element_type=jnp.float32) + params['bc'][n]
            for n in range(nheads)]
    return z, outs


if __name__ == "__main__":
    nclusters = 10
    nheads = 2
    batch = 8  # must be a multiple of 8 (sublane)

    key = jax.random.PRNGKey(0)
    kx, kp = jax.random.split(key)
    # x: backbone image features [B, 768] (already .float() in the module).
    x = jax.random.normal(kx, (batch, BACKBONE_DIM), jnp.float32)
    params = init_params(kp, nclusters, nheads)
    packed = pack_params(params, nclusters, nheads)

    split = _default_split()       # 1 on v5e/v6e (single TC), 2 on v7x
    z, outs = clustering_model_head_i(x, packed, nclusters, nheads,
                                      tile_h=2048, split=split)
    z = jax.block_until_ready(z)
    outs = [jax.block_until_ready(o) for o in outs]

    # Sanity check vs pure-JAX reference (same bf16-weight semantics).
    z_ref, outs_ref = reference_head_i(x, params, nclusters, nheads)
    assert z.shape == (batch, Z_DIM)
    assert all(o.shape == (batch, nclusters) for o in outs)
    assert jnp.allclose(z, z_ref, atol=3e-2, rtol=3e-2)
    for o, o_ref in zip(outs, outs_ref):
        assert jnp.allclose(o, o_ref, atol=3e-2, rtol=3e-2)

    print("KERNEL_OK")
</pallas_src>

<mosaic_0001>
module attributes {stable_mosaic.version = 11 : i64} {
  func.func @_head_kernel(%arg0: i32, %arg1: i32, %arg2: memref<8x768xf32, #tpu.memory_space<vmem>>, %arg3: memref<768x2048xbf16, #tpu.memory_space<vmem>>, %arg4: memref<2x2048xbf16, #tpu.memory_space<vmem>>, %arg5: memref<2048x148xbf16, #tpu.memory_space<vmem>>, %arg6: memref<1x148xf32, #tpu.memory_space<vmem>>, %arg7: memref<8x148xf32, #tpu.memory_space<vmem>>) attributes {dimension_semantics = [#tpu.dimension_semantics<parallel>, #tpu.dimension_semantics<arbitrary>], iteration_bounds = array<i64: 1, 2>, scalar_prefetch = 0 : i64, scratch_operands = 0 : i64, tpu.core_type = #tpu.core_type<tc>, window_params = [{pipeline_mode = #tpu.pipeline_mode<synchronous>, transform_indices = @transform_0, window_bounds = array<i64: 8, 768>}, {transform_indices = @transform_1, window_bounds = array<i64: 768, 2048>}, {transform_indices = @transform_2, window_bounds = array<i64: 2, 2048>}, {transform_indices = @transform_3, window_bounds = array<i64: 2048, 148>}, {pipeline_mode = #tpu.pipeline_mode<synchronous>, transform_indices = @transform_4, window_bounds = array<i64: 1, 148>}, {pipeline_mode = #tpu.pipeline_mode<synchronous>, transform_indices = @transform_5, window_bounds = array<i64: 8, 148>}]} {
    %c0_i32 = arith.constant 0 : i32
    %0 = arith.cmpi eq, %arg1, %c0_i32 : i32
    %1 = arith.extui %0 : i1 to i32
    %c0_i32_0 = arith.constant 0 : i32
    %2 = arith.cmpi ne, %1, %c0_i32_0 : i32
    scf.if %2 {
      %cst_21 = arith.constant 0.000000e+00 : f32
      %45 = vector.broadcast %cst_21 : f32 to vector<8x148xf32>
      %c0_22 = arith.constant 0 : index
      %c0_23 = arith.constant 0 : index
      %46 = vector.load %arg7[%c0_22, %c0_23] : memref<8x148xf32, #tpu.memory_space<vmem>>, vector<8x148xf32>
      tpu.vector_store %arg7[%c0_22, %c0_23], %45 {strides = array<i32>} : memref<8x148xf32, #tpu.memory_space<vmem>>, vector<8x148xf32>,
    } else {
    }
    %c0 = arith.constant 0 : index
    %c0_1 = arith.constant 0 : index
    %3 = vector.load %arg2[%c0, %c0_1] : memref<8x768xf32, #tpu.memory_space<vmem>>, vector<8x768xf32>
    %4 = arith.truncf %3 : vector<8x768xf32> to vector<8x768xbf16>
    %c0_2 = arith.constant 0 : index
    %c0_3 = arith.constant 0 : index
    %5 = vector.load %arg3[%c0_2, %c0_3] : memref<768x2048xbf16, #tpu.memory_space<vmem>>, vector<768x2048xbf16>
    %cst = arith.constant dense<0.000000e+00> : vector<8x2048xf32>
    %6 = tpu.matmul %4, %5, %cst {dimension_numbers = #tpu.dot_dimension_numbers<[1], [0], [0], [1], [0, 0, 1, 1], [], []>} : vector<8x768xbf16>, vector<768x2048xbf16>, vector<8x2048xf32> -> vector<8x2048xf32>
    %cst_4 = arith.constant dense<0.000000e+00> : vector<2048xf32>
    %7 = vector.multi_reduction <add>, %6, %cst_4 [0] : vector<8x2048xf32> to vector<2048xf32>
    %8 = vector.shape_cast %7 : vector<2048xf32> to vector<1x2048xf32>
    %cst_5 = arith.constant 8.000000e+00 : f32
    %9 = vector.broadcast %cst_5 : f32 to vector<1x2048xf32>
    %10 = arith.divf %8, %9 : vector<1x2048xf32>
    %11 = arith.mulf %6, %6 : vector<8x2048xf32>
    %cst_6 = arith.constant dense<0.000000e+00> : vector<2048xf32>
    %12 = vector.multi_reduction <add>, %11, %cst_6 [0] : vector<8x2048xf32> to vector<2048xf32>
    %13 = vector.shape_cast %12 : vector<2048xf32> to vector<1x2048xf32>
    %cst_7 = arith.constant 8.000000e+00 : f32
    %14 = vector.broadcast %cst_7 : f32 to vector<1x2048xf32>
    %15 = arith.divf %13, %14 : vector<1x2048xf32>
    %16 = arith.mulf %10, %10 : vector<1x2048xf32>
    %17 = arith.subf %15, %16 : vector<1x2048xf32>
    %c0_8 = arith.constant 0 : index
    %c0_9 = arith.constant 0 : index
    %18 = vector.load %arg4[%c0_8, %c0_9] : memref<2x2048xbf16, #tpu.memory_space<vmem>>, vector<2x2048xbf16>
    %19 = arith.extf %18 : vector<2x2048xbf16> to vector<2x2048xf32>
    %20 = vector.extract_strided_slice %19 {offsets = [0, 0], sizes = [1, 2048], strides = [1, 1]} : vector<2x2048xf32> to vector<1x2048xf32>
    %cst_10 = arith.constant 9.99999974E-6 : f32
    %21 = vector.broadcast %cst_10 : f32 to vector<1x2048xf32>
    %22 = arith.addf %17, %21 : vector<1x2048xf32>
    %23 = math.rsqrt %22 : vector<1x2048xf32>
    %24 = arith.mulf %20, %23 : vector<1x2048xf32>
    %25 = vector.extract_strided_slice %19 {offsets = [1, 0], sizes = [1, 2048], strides = [1, 1]} : vector<2x2048xf32> to vector<1x2048xf32>
    %26 = arith.mulf %10, %24 : vector<1x2048xf32>
    %27 = arith.subf %25, %26 : vector<1x2048xf32>
    %28 = vector.broadcast %24 : vector<1x2048xf32> to vector<8x2048xf32>
    %29 = arith.mulf %6, %28 : vector<8x2048xf32>
    %30 = vector.broadcast %27 : vector<1x2048xf32> to vector<8x2048xf32>
    %31 = arith.addf %29, %30 : vector<8x2048xf32>
    %cst_11 = arith.constant 0.000000e+00 : f32
    %32 = vector.broadcast %cst_11 : f32 to vector<8x2048xf32>
    %33 = arith.maximumf %31, %32 : vector<8x2048xf32>
    %c0_12 = arith.constant 0 : index
    %c0_13 = arith.constant 0 : index
    %34 = vector.load %arg7[%c0_12, %c0_13] : memref<8x148xf32, #tpu.memory_space<vmem>>, vector<8x148xf32>
    %35 = arith.truncf %33 : vector<8x2048xf32> to vector<8x2048xbf16>
    %c0_14 = arith.constant 0 : index
    %c0_15 = arith.constant 0 : index
    %36 = vector.load %arg5[%c0_14, %c0_15] : memref<2048x148xbf16, #tpu.memory_space<vmem>>, vector<2048x148xbf16>
    %cst_16 = arith.constant dense<0.000000e+00> : vector<8x148xf32>
    %37 = tpu.matmul %35, %36, %cst_16 {dimension_numbers = #tpu.dot_dimension_numbers<[1], [0], [0], [1], [0, 0, 1, 1], [], []>} : vector<8x2048xbf16>, vector<2048x148xbf16>, vector<8x148xf32> -> vector<8x148xf32>
    %38 = arith.addf %34, %37 : vector<8x148xf32>
    %c0_17 = arith.constant 0 : index
    %c0_18 = arith.constant 0 : index
    %39 = vector.load %arg7[%c0_17, %c0_18] : memref<8x148xf32, #tpu.memory_space<vmem>>, vector<8x148xf32>
    tpu.vector_store %arg7[%c0_17, %c0_18], %38 {strides = array<i32>} : memref<8x148xf32, #tpu.memory_space<vmem>>, vector<8x148xf32>,
    %c1_i32 = arith.constant 1 : i32
    %40 = arith.cmpi eq, %arg1, %c1_i32 : i32
    %c0_i32_19 = arith.constant 0 : i32
    %41 = arith.cmpi eq, %arg0, %c0_i32_19 : i32
    %42 = arith.andi %40, %41 : i1
    %43 = arith.extui %42 : i1 to i32
    %c0_i32_20 = arith.constant 0 : i32
    %44 = arith.cmpi ne, %43, %c0_i32_20 : i32
    scf.if %44 {
      %c0_21 = arith.constant 0 : index
      %c0_22 = arith.constant 0 : index
      %45 = vector.load %arg7[%c0_21, %c0_22] : memref<8x148xf32, #tpu.memory_space<vmem>>, vector<8x148xf32>
      %c0_23 = arith.constant 0 : index
      %c0_24 = arith.constant 0 : index
      %46 = vector.load %arg6[%c0_23, %c0_24] : memref<1x148xf32, #tpu.memory_space<vmem>>, vector<1x148xf32>
      %47 = vector.broadcast %46 : vector<1x148xf32> to vector<8x148xf32>
      %48 = arith.addf %45, %47 : vector<8x148xf32>
      %c0_25 = arith.constant 0 : index
      %c0_26 = arith.constant 0 : index
      %49 = vector.load %arg7[%c0_25, %c0_26] : memref<8x148xf32, #tpu.memory_space<vmem>>, vector<8x148xf32>
      tpu.vector_store %arg7[%c0_25, %c0_26], %48 {strides = array<i32>} : memref<8x148xf32, #tpu.memory_space<vmem>>, vector<8x148xf32>,
    } else {
    }
    return
  }
  func.func @transform_0(%arg0: i32, %arg1: i32) -> (i32, i32) {
    %c0_i32 = arith.constant 0 : i32
    %c0_i32_0 = arith.constant 0 : i32
    %c0_i32_1 = arith.constant 0 : i32
    return %c0_i32, %c0_i32_0 : i32, i32
  }
  func.func @transform_1(%arg0: i32, %arg1: i32) -> (i32, i32) {
    %c2_i32 = arith.constant 2 : i32
    %0 = arith.muli %arg0, %c2_i32 : i32
    %1 = arith.addi %0, %arg1 : i32
    %c0_i32 = arith.constant 0 : i32
    %c0_i32_0 = arith.constant 0 : i32
    return %c0_i32, %1 : i32, i32
  }
  func.func @transform_2(%arg0: i32, %arg1: i32) -> (i32, i32) {
    %c2_i32 = arith.constant 2 : i32
    %0 = arith.muli %arg0, %c2_i32 : i32
    %1 = arith.addi %0, %arg1 : i32
    %c0_i32 = arith.constant 0 : i32
    %c0_i32_0 = arith.constant 0 : i32
    return %c0_i32, %1 : i32, i32
  }
  func.func @transform_3(%arg0: i32, %arg1: i32) -> (i32, i32) {
    %c2_i32 = arith.constant 2 : i32
    %0 = arith.muli %arg0, %c2_i32 : i32
    %1 = arith.addi %0, %arg1 : i32
    %c0_i32 = arith.constant 0 : i32
    %c0_i32_0 = arith.constant 0 : i32
    return %1, %c0_i32 : i32, i32
  }
  func.func @transform_4(%arg0: i32, %arg1: i32) -> (i32, i32) {
    %c0_i32 = arith.constant 0 : i32
    %c0_i32_0 = arith.constant 0 : i32
    %c0_i32_1 = arith.constant 0 : i32
    return %c0_i32, %c0_i32_0 : i32, i32
  }
  func.func @transform_5(%arg0: i32, %arg1: i32) -> (i32, i32) {
    %c0_i32 = arith.constant 0 : i32
    %c0_i32_0 = arith.constant 0 : i32
    %c0_i32_1 = arith.constant 0 : i32
    return %c0_i32, %c0_i32_0 : i32, i32
  }
}

</mosaic_0001>

<llo_original>
// kernel: clustering_model_head_i.1
$region0: #{clustering_model_head_i.1}
  #allocation0 [shape = 'u32[]', space=smem, size = 0x4, offset = 0x4, fixed_abs, tag = 'smem constant byte address 0x4 - core index']
  #allocation1 [shape = 'u32[144,128]{1,0:T(1,128)}', space=vmem, size = 0x12000, scoped, tag = 'internal scratch']
  %s0 = inlined_call_operand.vmem [shape: f32[8,768], index: 0, kind: input, shape index: {}]
  %s1 = inlined_call_operand.hbm [shape: bf16[768,4096], index: 1, kind: input, shape index: {}]
  %s2 = inlined_call_operand.vmem [shape: bf16[2,4096], index: 2, kind: input, shape index: {}]
  %s3 = inlined_call_operand.vmem [shape: bf16[4096,148], index: 3, kind: input, shape index: {}]
  %s4 = inlined_call_operand.vmem [shape: f32[1,148], index: 4, kind: input, shape index: {}]
  %s5 = inlined_call_operand.vmem [shape: f32[8,148], index: 5, kind: output, shape index: {}]
  %s6 = sld [smem:[#allocation0]]
  $region65: #{clustering_model_head_i.1} parent=0
    _
  %s8 = ssub.s32 1, %s6
  %s9 = scalar_select 0, %s8, %s6
  $region1: #{clustering_model_head_i.1} parent=0
    #allocation2 [shape = 'u8[6291456]{0}', space=vmem, size = 0x600000, scoped, tag = 'input window, operand 1']
    #allocation3 [shape = 's32[2]{0}', space=sflag, size = 0x8, scoped, tag = 'scoped memory for clustering_model_head_i.1']
    %10 = vsyncpa [#allocation3], 0
    %s11 = scalar_lea.sflag [#allocation3], 1
    %12 = vsyncpa %s11, 0
    loop: start=0, step=1, limit=4
    $region2: #{clustering_model_head_i.1} parent=1 // loop_pre_header
      _
    $region3: #{clustering_model_head_i.1} parent=1 // loop_header
      %s14 = sphi 0, %s18
      %p15 = scmp.ge.s32.totalorder %s14, 4
      %s21 = sphi 0, %s33
      %s22 = sphi 0, %s29
      %s23 = sphi 0, %s21
      %s24 = sphi 0, %s22
      %s25 = sphi 0, %s23
      %s26 = sphi 0, %s24
      %s34 = sphi 0, %s34
      %s36 = sphi 0, %s34
      %s37 = sphi 0, %s36
      %s51 = sphi 0, %s37
      %s61 = sphi 0, %s63
      %s64 = sphi 0, %s61
      %s65 = sphi 0, %s64
      %s81 = sphi 0, %s65
      %s91 = sphi 0, %s93
      %s94 = sphi 0, %s91
      %s95 = sphi 0, %s94
      %s111 = sphi 0, %s95
      %s121 = sphi 0, %s123
      %s124 = sphi 0, %s121
      %s125 = sphi 0, %s124
      %s141 = sphi 0, %s125
      %s145 = sphi 0, %s145
      %s147 = sphi 0, %s145
      %s148 = sphi 0, %s147
      %s162 = sphi 0, %s148
      %s166 = sphi 0, %s166
      %s168 = sphi 0, %s166
      %s169 = sphi 0, %s168
      %s183 = sphi 0, %s169
    $region4: #{clustering_model_head_i.1} parent=1 // loop_header_branch
      %17 = sbr.rel (%p15) target = $region8
    $region5: #{clustering_model_head_i.1} parent=1 // loop_body
      %s19 = ssub.s32 %s14, 1
      %s20 = ssub.s32 %s14, 2
      %s27 = sadd.s32 1, %s22
      %p28 = scmp.ge.s32.totalorder %s27, 2
      %s29 = scalar_select %p28, 0, %s27
      %s30 = sadd.s32 1, %s21
      %s31 = scalar_select %p28, %s30, %s21
      %p32 = scmp.ge.s32.totalorder %s31, 1
      %s33 = scalar_select %p32, 0, %s31
      %s35 = sadd.s32 %s34, 1
      %p38 = scmp.eq.s32.totalorder %s14, 1
      %p39 = scmp.ne.s32.totalorder %s34, %s36
      %p40 = scmp.eq.s32.totalorder %s14, 0
      %p41 = por %p39, %p40
      %p42 = scmp.ne.s32.totalorder %s34, %s36
      %p43 = scmp.eq.s32.totalorder %s19, 1
      %p44 = por %p42, %p43
      %p45 = scmp.ne.s32.totalorder %s36, %s37
      %p46 = scmp.eq.s32.totalorder %s19, 0
      %p47 = por %p45, %p46
      %p48 = scmp.ne.s32.totalorder %s36, %s37
      %p49 = scmp.eq.s32.totalorder %s20, 1
      %p50 = por %p48, %p49
      %p52 = scmp.ne.s32.totalorder %s37, %s51
      %p53 = scmp.eq.s32.totalorder %s20, 0
      %p54 = por %p52, %p53
      %s55 = smul.u32 %s21, 2
      %s56 = sadd.s32 %s55, %s22
      %s57 = smul.u32 %s33, 2
      %s58 = sadd.s32 %s57, %s29
      %s59 = ssub.s32 %s56, %s58
      %p60 = scmp.eq.s32.totalorder %s59, 0
      %s62 = sadd.s32 %s61, 1
      %s63 = scalar_select %p60, %s61, %s62
      %p66 = pneg %p60
      %p67 = scmp.eq.s32.totalorder %s14, 1
      %p68 = por %p66, %p67
      %p69 = scmp.ne.s32.totalorder %s61, %s64
      %p70 = scmp.eq.s32.totalorder %s14, 0
      %p71 = por %p69, %p70
      %p72 = scmp.ne.s32.totalorder %s61, %s64
      %p73 = scmp.eq.s32.totalorder %s19, 1
      %p74 = por %p72, %p73
      %p75 = scmp.ne.s32.totalorder %s64, %s65
      %p76 = scmp.eq.s32.totalorder %s19, 0
      %p77 = por %p75, %p76
      %p78 = scmp.ne.s32.totalorder %s64, %s65
      %p79 = scmp.eq.s32.totalorder %s20, 1
      %p80 = por %p78, %p79
      %p82 = scmp.ne.s32.totalorder %s65, %s81
      %p83 = scmp.eq.s32.totalorder %s20, 0
      %p84 = por %p82, %p83
      %s85 = smul.u32 %s21, 2
      %s86 = sadd.s32 %s85, %s22
      %s87 = smul.u32 %s33, 2
      %s88 = sadd.s32 %s87, %s29
      %s89 = ssub.s32 %s86, %s88
      %p90 = scmp.eq.s32.totalorder %s89, 0
      %s92 = sadd.s32 %s91, 1
      %s93 = scalar_select %p90, %s91, %s92
      %p96 = pneg %p90
      %p97 = scmp.eq.s32.totalorder %s14, 1
      %p98 = por %p96, %p97
      %p99 = scmp.ne.s32.totalorder %s91, %s94
      %p100 = scmp.eq.s32.totalorder %s14, 0
      %p101 = por %p99, %p100
      %p102 = scmp.ne.s32.totalorder %s91, %s94
      %p103 = scmp.eq.s32.totalorder %s19, 1
      %p104 = por %p102, %p103
      %p105 = scmp.ne.s32.totalorder %s94, %s95
      %p106 = scmp.eq.s32.totalorder %s19, 0
      %p107 = por %p105, %p106
      %p108 = scmp.ne.s32.totalorder %s94, %s95
      %p109 = scmp.eq.s32.totalorder %s20, 1
      %p110 = por %p108, %p109
      %p112 = scmp.ne.s32.totalorder %s95, %s111
      %p113 = scmp.eq.s32.totalorder %s20, 0
      %p114 = por %p112, %p113
      %s115 = smul.u32 %s21, 2
      %s116 = sadd.s32 %s115, %s22
      %s117 = smul.u32 %s33, 2
      %s118 = sadd.s32 %s117, %s29
      %s119 = ssub.s32 %s116, %s118
      %p120 = scmp.eq.s32.totalorder %s119, 0
      %s122 = sadd.s32 %s121, 1
      %s123 = scalar_select %p120, %s121, %s122
      %p126 = pneg %p120
      %p127 = scmp.eq.s32.totalorder %s14, 1
      %p128 = por %p126, %p127
      %p129 = scmp.ne.s32.totalorder %s121, %s124
      %p130 = scmp.eq.s32.totalorder %s14, 0
      %p131 = por %p129, %p130
      %p132 = scmp.ne.s32.totalorder %s121, %s124
      %p133 = scmp.eq.s32.totalorder %s19, 1
      %p134 = por %p132, %p133
      %p135 = scmp.ne.s32.totalorder %s124, %s125
      %p136 = scmp.eq.s32.totalorder %s19, 0
      %p137 = por %p135, %p136
      %p138 = scmp.ne.s32.totalorder %s124, %s125
      %p139 = scmp.eq.s32.totalorder %s20, 1
      %p140 = por %p138, %p139
      %p142 = scmp.ne.s32.totalorder %s125, %s141
      %p143 = scmp.eq.s32.totalorder %s20, 0
      %p144 = por %p142, %p143
      %s146 = sadd.s32 %s145, 1
      %p149 = scmp.eq.s32.totalorder %s14, 1
      %p150 = scmp.ne.s32.totalorder %s145, %s147
      %p151 = scmp.eq.s32.totalorder %s14, 0
      %p152 = por %p150, %p151
      %p153 = scmp.ne.s32.totalorder %s145, %s147
      %p154 = scmp.eq.s32.totalorder %s19, 1
      %p155 = por %p153, %p154
      %p156 = scmp.ne.s32.totalorder %s147, %s148
      %p157 = scmp.eq.s32.totalorder %s19, 0
      %p158 = por %p156, %p157
      %p159 = scmp.ne.s32.totalorder %s147, %s148
      %p160 = scmp.eq.s32.totalorder %s20, 1
      %p161 = por %p159, %p160
      %p163 = scmp.ne.s32.totalorder %s148, %s162
      %p164 = scmp.eq.s32.totalorder %s20, 0
      %p165 = por %p163, %p164
      %s167 = sadd.s32 %s166, 1
      %p170 = scmp.eq.s32.totalorder %s14, 1
      %p171 = scmp.ne.s32.totalorder %s166, %s168
      %p172 = scmp.eq.s32.totalorder %s14, 0
      %p173 = por %p171, %p172
      %p174 = scmp.ne.s32.totalorder %s166, %s168
      %p175 = scmp.eq.s32.totalorder %s19, 1
      %p176 = por %p174, %p175
      %p177 = scmp.ne.s32.totalorder %s168, %s169
      %p178 = scmp.eq.s32.totalorder %s19, 0
      %p179 = por %p177, %p178
      %p180 = scmp.ne.s32.totalorder %s168, %s169
      %p181 = scmp.eq.s32.totalorder %s20, 1
      %p182 = por %p180, %p181
      %p184 = scmp.ne.s32.totalorder %s169, %s183
      %p185 = scmp.eq.s32.totalorder %s20, 0
      %p186 = por %p184, %p185
      %p187 = scmp.le.s32.totalorder 1, %s14
      %p188 = scmp.lt.s32.totalorder %s14, 3
      %p189 = pnand %p187, %p188
      %p190 = pneg %p189
      // Predicated region
      $region9: #{clustering_model_head_i.1} parent=5 // pred_check
        _
      $region10: #{clustering_model_head_i.1} parent=5 // pred_check_branch
        %192 = sbr.rel (%p189) target = $region12
      $region11: #{clustering_model_head_i.1} parent=5 // pred_region
        %s193 = ssub.s32 %s14, 1
        // Predicated region
        $region13: #{clustering_model_head_i.1} parent=11 // pred_check
          %p194 = pneg %p47
        $region14: #{clustering_model_head_i.1} parent=11 // pred_check_branch
          %196 = sbr.rel (%p194) target = $region16
        $region15: #{clustering_model_head_i.1} parent=11 // pred_region
          _
        $region16: #{clustering_model_head_i.1} parent=11 // pred_fallthru
          _
        // Predicated region
        $region17: #{clustering_model_head_i.1} parent=11 // pred_check
          %p197 = pneg %p158
        $region18: #{clustering_model_head_i.1} parent=11 // pred_check_branch
          %199 = sbr.rel (%p197) target = $region20
        $region19: #{clustering_model_head_i.1} parent=11 // pred_region
          _
        $region20: #{clustering_model_head_i.1} parent=11 // pred_fallthru
          _
      $region12: #{clustering_model_head_i.1} parent=5 // pred_fallthru
        _
      %p200 = scmp.lt.s32.totalorder %s14, 2
      // Predicated region
      $region21: #{clustering_model_head_i.1} parent=5 // pred_check
        %p201 = pneg %p200
      $region22: #{clustering_model_head_i.1} parent=5 // pred_check_branch
        %203 = sbr.rel (%p201) target = $region24
      $region23: #{clustering_model_head_i.1} parent=5 // pred_region
        // Predicated region
        $region25: #{clustering_model_head_i.1} parent=23 // pred_check
          %p204 = pneg %p71
        $region26: #{clustering_model_head_i.1} parent=23 // pred_check_branch
          %206 = sbr.rel (%p204) target = $region28
        $region27: #{clustering_model_head_i.1} parent=23 // pred_region
          %s207 = sand.u32 %s61, 1
          %s208 = scalar_lea.sflag [#allocation3], %s207
          %s209 = sand.u32 %s61, 1
          %s210 = smul.addr %s209, 6144
          %s211 = scalar_lea.vmem [#allocation2], %s210
          %s212 = smul.u32 %s21, 2
          %s213 = sadd.s32 %s212, %s22
          %s214 = smul.u32 16, %s213
          %s216 = ssub.s32 98304, 98304
          %217 = vsyncadd %s208, %s216
          %s218 = smul.addr %s214, 64
          %s219 = scalar_lea.hbm %s1, %s218
          %s220 = sshll.u32 %s211, 4
          %s221 = int_to_ptr.vmem [resolvable:$true] %s220
          %226 = dma.hbm_to_vmem [thread:$0]  %s219, 98304, %s221, %s208, 2048, 1024, 64
        $region28: #{clustering_model_head_i.1} parent=23 // pred_fallthru
          _
        // Predicated region
        $region29: #{clustering_model_head_i.1} parent=23 // pred_check
          %p227 = pneg %p101
        $region30: #{clustering_model_head_i.1} parent=23 // pred_check_branch
          %229 = sbr.rel (%p227) target = $region32
        $region31: #{clustering_model_head_i.1} parent=23 // pred_region
          %s230 = smul.u32 %s21, 2
          %s231 = sadd.s32 %s230, %s22
          %s232 = smul.u32 16, %s231
          %p233 = scmp.lt.s32.totalorder %s232, 31
          %s234 = scalar_select %p233, %s232, 31
          %s235 = scalar_lea.vmem %s2, %s234
          %s236 = smul.u32 %s21, 2
          %s237 = sadd.s32 %s236, %s22
          %s238 = smul.u32 16, %s237
        $region32: #{clustering_model_head_i.1} parent=23 // pred_fallthru
          _
        // Predicated region
        $region33: #{clustering_model_head_i.1} parent=23 // pred_check
          %p239 = pneg %p131
        $region34: #{clustering_model_head_i.1} parent=23 // pred_check_branch
          %241 = sbr.rel (%p239) target = $region36
        $region35: #{clustering_model_head_i.1} parent=23 // pred_region
          %s242 = smul.u32 %s21, 2
          %s243 = sadd.s32 %s242, %s22
          %s244 = smul.u32 256, %s243
          %p245 = scmp.lt.s32.totalorder %s244, 511
          %s246 = scalar_select %p245, %s244, 511
          %s247 = smul.addr %s246, 2
          %s248 = smul.addr %s247, 4
          %s249 = scalar_lea.vmem %s3, %s248
          %s250 = smul.u32 %s21, 2
          %s251 = sadd.s32 %s250, %s22
          %s252 = smul.u32 256, %s251
        $region36: #{clustering_model_head_i.1} parent=23 // pred_fallthru
          _
      $region24: #{clustering_model_head_i.1} parent=5 // pred_fallthru
        _
      %p253 = scmp.le.s32.totalorder 1, %s14
      %p254 = scmp.lt.s32.totalorder %s14, 3
      %p255 = pnand %p253, %p254
      %p256 = pneg %p255
      // Predicated region
      $region37: #{clustering_model_head_i.1} parent=5 // pred_check
        _
      $region38: #{clustering_model_head_i.1} parent=5 // pred_check_branch
        %258 = sbr.rel (%p255) target = $region40
      $region39: #{clustering_model_head_i.1} parent=5 // pred_region
        %s259 = ssub.s32 %s14, 1
        %s260 = sand.u32 %s64, 1
        %s261 = scalar_lea.sflag [#allocation3], %s260
        %s262 = sand.u32 %s64, 1
        %s263 = smul.addr %s262, 6144
        %s264 = scalar_lea.vmem [#allocation2], %s263
        // Predicated region
        $region41: #{clustering_model_head_i.1} parent=39 // pred_check
          %p265 = pneg %p77
        $region42: #{clustering_model_head_i.1} parent=39 // pred_check_branch
          %267 = sbr.rel (%p265) target = $region44
        $region43: #{clustering_model_head_i.1} parent=39 // pred_region
          %268 = dma.done %s261, 98304
        $region44: #{clustering_model_head_i.1} parent=39 // pred_fallthru
          _
        %p269 = pneg %p47
        %p270 = pneg %p44
        %s271 = sand.u32 %s64, 1
        %s272 = scalar_lea.sflag [#allocation3], %s271
        %s273 = sand.u32 %s64, 1
        %s274 = smul.addr %s273, 6144
        %s275 = scalar_lea.vmem [#allocation2], %s274
        %p276 = pneg %p77
        %p277 = pneg %p74
        %s278 = smul.u32 %s23, 2
        %s279 = sadd.s32 %s278, %s24
        %s280 = smul.u32 16, %s279
        %p281 = scmp.lt.s32.totalorder %s280, 31
        %s282 = scalar_select %p281, %s280, 31
        %s283 = scalar_lea.vmem %s2, %s282
        %p284 = pneg %p107
        %p285 = pneg %p104
        %s286 = smul.u32 %s23, 2
        %s287 = sadd.s32 %s286, %s24
        %s288 = smul.u32 256, %s287
        %p289 = scmp.lt.s32.totalorder %s288, 511
        %s290 = scalar_select %p289, %s288, 511
        %s291 = smul.addr %s290, 2
        %s292 = smul.addr %s291, 4
        %s293 = scalar_lea.vmem %s3, %s292
        %p294 = pneg %p137
        %p295 = pneg %p134
        %p296 = pneg %p158
        %p297 = pneg %p155
        %p298 = pneg %p179
        %p299 = pneg %p176
        %s300 = smul.u32 %s23, 2
        %s301 = sadd.s32 %s300, %s24
        %s302 = smul.u32 16, %s301
        %s303 = smul.u32 %s23, 2
        %s304 = sadd.s32 %s303, %s24
        %s305 = smul.u32 16, %s304
        %p306 = scmp.lt.s32.totalorder %s305, 31
        %s307 = scalar_select %p306, %s305, 31
        %s308 = scalar_lea.vmem %s2, %s307
        %s309 = smul.u32 %s23, 2
        %s310 = sadd.s32 %s309, %s24
        %s311 = smul.u32 16, %s310
        %s312 = smul.u32 %s23, 2
        %s313 = sadd.s32 %s312, %s24
        %s314 = smul.u32 256, %s313
        %p315 = scmp.lt.s32.totalorder %s314, 511
        %s316 = scalar_select %p315, %s314, 511
        %s317 = smul.addr %s316, 2
        %s318 = smul.addr %s317, 4
        %s319 = scalar_lea.vmem %s3, %s318
        %s320 = smul.u32 %s23, 2
        %s321 = sadd.s32 %s320, %s24
        %s322 = smul.u32 256, %s321
        %p323 = scmp.eq.s32.totalorder %s24, 0
        // Predicated region
        $region45: #{clustering_model_head_i.1} parent=39 // pred_check
          %p324 = pneg %p323
        $region46: #{clustering_model_head_i.1} parent=39 // pred_check_branch
          %326 = sbr.rel (%p324) target = $region48
        $region47: #{clustering_model_head_i.1} parent=39 // pred_region
          %327 = vst [vmem:[%s5] sm:$0xff] 0.0
          %vm328 = vcmask 162816
          %329 = vst.msk [vmem:[%s5 + $0x8] sm:$0xff] %vm328, 0.0
        $region48: #{clustering_model_head_i.1} parent=39 // pred_fallthru
          _
        %v330 = vld [vmem:[%s0] sm:$0xff]
        %v331 = vld [vmem:[%s0 + $0x8] sm:$0xff]
        %v332 = vld [vmem:[%s0 + $0x10] sm:$0xff]
        %v333 = vld [vmem:[%s0 + $0x18] sm:$0xff]
        %v334 = vld [vmem:[%s0 + $0x20] sm:$0xff]
        %v335 = vld [vmem:[%s0 + $0x28] sm:$0xff]
        %v336 = vpack.c.bf16 %v330, %v330
        %v337 = vpack.c.bf16 %v331, %v331
        %v338 = vpack.c.bf16 %v332, %v332
        %v339 = vpack.c.bf16 %v333, %v333
        %v340 = vpack.c.bf16 %v334, %v334
        %v341 = vpack.c.bf16 %v335, %v335
        %v342 = vld [vmem:[%s264] sm:$0xff]
        %v343 = vld [vmem:[%s264 + $0x8] sm:$0xff]
        %v344 = vld [vmem:[%s264 + $0x10] sm:$0xff]
        %v345 = vld [vmem:[%s264 + $0x18] sm:$0xff]
        %v346 = vld [vmem:[%s264 + $0x20] sm:$0xff]
        %v347 = vld [vmem:[%s264 + $0x28] sm:$0xff]
        %v348 = vld [vmem:[%s264 + $0x30] sm:$0xff]
        %v349 = vld [vmem:[%s264 + $0x38] sm:$0xff]
        %v350 = vld [vmem:[%s264 + $0x40] sm:$0xff]
        %v351 = vld [vmem:[%s264 + $0x48] sm:$0xff]
        %v352 = vld [vmem:[%s264 + $0x50] sm:$0xff]
        %v353 = vld [vmem:[%s264 + $0x58] sm:$0xff]
        %v354 = vld [vmem:[%s264 + $0x60] sm:$0xff]
        %v355 = vld [vmem:[%s264 + $0x68] sm:$0xff]
        %v356 = vld [vmem:[%s264 + $0x70] sm:$0xff]
        %v357 = vld [vmem:[%s264 + $0x78] sm:$0xff]
        %v358 = vld [vmem:[%s264 + $0x80] sm:$0xff]
        %v359 = vld [vmem:[%s264 + $0x88] sm:$0xff]
        %v360 = vld [vmem:[%s264 + $0x90] sm:$0xff]
        %v361 = vld [vmem:[%s264 + $0x98] sm:$0xff]
        %v362 = vld [vmem:[%s264 + $0xa0] sm:$0xff]
        %v363 = vld [vmem:[%s264 + $0xa8] sm:$0xff]
        %v364 = vld [vmem:[%s264 + $0xb0] sm:$0xff]
        %v365 = vld [vmem:[%s264 + $0xb8] sm:$0xff]
        %v366 = vld [vmem:[%s264 + $0xc0] sm:$0xff]
        %v367 = vld [vmem:[%s264 + $0xc8] sm:$0xff]
        %v368 = vld [vmem:[%s264 + $0xd0] sm:$0xff]
        %v369 = vld [vmem:[%s264 + $0xd8] sm:$0xff]
        %v370 = vld [vmem:[%s264 + $0xe0] sm:$0xff]
        %v371 = vld [vmem:[%s264 + $0xe8] sm:$0xff]
        %v372 = vld [vmem:[%s264 + $0xf0] sm:$0xff]
        %v373 = vld [vmem:[%s264 + $0xf8] sm:$0xff]
        %v374 = vld [vmem:[%s264 + $0x100] sm:$0xff]
        %v375 = vld [vmem:[%s264 + $0x108] sm:$0xff]
        %v376 = vld [vmem:[%s264 + $0x110] sm:$0xff]
        %v377 = vld [vmem:[%s264 + $0x118] sm:$0xff]
        %v378 = vld [vmem:[%s264 + $0x120] sm:$0xff]
        %v379 = vld [vmem:[%s264 + $0x128] sm:$0xff]
        %v380 = vld [vmem:[%s264 + $0x130] sm:$0xff]
        %v381 = vld [vmem:[%s264 + $0x138] sm:$0xff]
        %v382 = vld [vmem:[%s264 + $0x140] sm:$0xff]
        %v383 = vld [vmem:[%s264 + $0x148] sm:$0xff]
        %v384 = vld [vmem:[%s264 + $0x150] sm:$0xff]
        %v385 = vld [vmem:[%s264 + $0x158] sm:$0xff]
        %v386 = vld [vmem:[%s264 + $0x160] sm:$0xff]
        %v387 = vld [vmem:[%s264 + $0x168] sm:$0xff]
        %v388 = vld [vmem:[%s264 + $0x170] sm:$0xff]
        %v389 = vld [vmem:[%s264 + $0x178] sm:$0xff]
        %v390 = vld [vmem:[%s264 + $0x180] sm:$0xff]
        %v391 = vld [vmem:[%s264 + $0x188] sm:$0xff]
        %v392 = vld [vmem:[%s264 + $0x190] sm:$0xff]
        %v393 = vld [vmem:[%s264 + $0x198] sm:$0xff]
        %v394 = vld [vmem:[%s264 + $0x1a0] sm:$0xff]
        %v395 = vld [vmem:[%s264 + $0x1a8] sm:$0xff]
        %v396 = vld [vmem:[%s264 + $0x1b0] sm:$0xff]
        %v397 = vld [vmem:[%s264 + $0x1b8] sm:$0xff]
        %v398 = vld [vmem:[%s264 + $0x1c0] sm:$0xff]
        %v399 = vld [vmem:[%s264 + $0x1c8] sm:$0xff]
        %v400 = vld [vmem:[%s264 + $0x1d0] sm:$0xff]
        %v401 = vld [vmem:[%s264 + $0x1d8] sm:$0xff]
        %v402 = vld [vmem:[%s264 + $0x1e0] sm:$0xff]
        %v403 = vld [vmem:[%s264 + $0x1e8] sm:$0xff]
        %v404 = vld [vmem:[%s264 + $0x1f0] sm:$0xff]
        %v405 = vld [vmem:[%s264 + $0x1f8] sm:$0xff]
        %v406 = vld [vmem:[%s264 + $0x200] sm:$0xff]
        %v407 = vld [vmem:[%s264 + $0x208] sm:$0xff]
        %v408 = vld [vmem:[%s264 + $0x210] sm:$0xff]
        %v409 = vld [vmem:[%s264 + $0x218] sm:$0xff]
        %v410 = vld [vmem:[%s264 + $0x220] sm:$0xff]
        %v411 = vld [vmem:[%s264 + $0x228] sm:$0xff]
        %v412 = vld [vmem:[%s264 + $0x230] sm:$0xff]
        %v413 = vld [vmem:[%s264 + $0x238] sm:$0xff]
        %v414 = vld [vmem:[%s264 + $0x240] sm:$0xff]
        %v415 = vld [vmem:[%s264 + $0x248] sm:$0xff]
        %v416 = vld [vmem:[%s264 + $0x250] sm:$0xff]
        %v417 = vld [vmem:[%s264 + $0x258] sm:$0xff]
        %v418 = vld [vmem:[%s264 + $0x260] sm:$0xff]
        %v419 = vld [vmem:[%s264 + $0x268] sm:$0xff]
        %v420 = vld [vmem:[%s264 + $0x270] sm:$0xff]
        %v421 = vld [vmem:[%s264 + $0x278] sm:$0xff]
        %v422 = vld [vmem:[%s264 + $0x280] sm:$0xff]
        %v423 = vld [vmem:[%s264 + $0x288] sm:$0xff]
        %v424 = vld [vmem:[%s264 + $0x290] sm:$0xff]
        %v425 = vld [vmem:[%s264 + $0x298] sm:$0xff]
        %v426 = vld [vmem:[%s264 + $0x2a0] sm:$0xff]
        %v427 = vld [vmem:[%s264 + $0x2a8] sm:$0xff]
        %v428 = vld [vmem:[%s264 + $0x2b0] sm:$0xff]
        %v429 = vld [vmem:[%s264 + $0x2b8] sm:$0xff]
        %v430 = vld [vmem:[%s264 + $0x2c0] sm:$0xff]
        %v431 = vld [vmem:[%s264 + $0x2c8] sm:$0xff]
        %v432 = vld [vmem:[%s264 + $0x2d0] sm:$0xff]
        %v433 = vld [vmem:[%s264 + $0x2d8] sm:$0xff]
        %v434 = vld [vmem:[%s264 + $0x2e0] sm:$0xff]
        %v435 = vld [vmem:[%s264 + $0x2e8] sm:$0xff]
        %v436 = vld [vmem:[%s264 + $0x2f0] sm:$0xff]
        %v437 = vld [vmem:[%s264 + $0x2f8] sm:$0xff]
        %v438 = vld [vmem:[%s264 + $0x300] sm:$0xff]
        %v439 = vld [vmem:[%s264 + $0x308] sm:$0xff]
        %v440 = vld [vmem:[%s264 + $0x310] sm:$0xff]
        %v441 = vld [vmem:[%s264 + $0x318] sm:$0xff]
        %v442 = vld [vmem:[%s264 + $0x320] sm:$0xff]
        %v443 = vld [vmem:[%s264 + $0x328] sm:$0xff]
        %v444 = vld [vmem:[%s264 + $0x330] sm:$0xff]
        %v445 = vld [vmem:[%s264 + $0x338] sm:$0xff]
        %v446 = vld [vmem:[%s264 + $0x340] sm:$0xff]
        %v447 = vld [vmem:[%s264 + $0x348] sm:$0xff]
        %v448 = vld [vmem:[%s264 + $0x350] sm:$0xff]
        %v449 = vld [vmem:[%s264 + $0x358] sm:$0xff]
        %v450 = vld [vmem:[%s264 + $0x360] sm:$0xff]
        %v451 = vld [vmem:[%s264 + $0x368] sm:$0xff]
        %v452 = vld [vmem:[%s264 + $0x370] sm:$0xff]
        %v453 = vld [vmem:[%s264 + $0x378] sm:$0xff]
        %v454 = vld [vmem:[%s264 + $0x380] sm:$0xff]
        %v455 = vld [vmem:[%s264 + $0x388] sm:$0xff]
        %v456 = vld [vmem:[%s264 + $0x390] sm:$0xff]
        %v457 = vld [vmem:[%s264 + $0x398] sm:$0xff]
        %v458 = vld [vmem:[%s264 + $0x3a0] sm:$0xff]
        %v459 = vld [vmem:[%s264 + $0x3a8] sm:$0xff]
        %v460 = vld [vmem:[%s264 + $0x3b0] sm:$0xff]
        %v461 = vld [vmem:[%s264 + $0x3b8] sm:$0xff]
        %v462 = vld [vmem:[%s264 + $0x3c0] sm:$0xff]
        %v463 = vld [vmem:[%s264 + $0x3c8] sm:$0xff]
        %v464 = vld [vmem:[%s264 + $0x3d0] sm:$0xff]
        %v465 = vld [vmem:[%s264 + $0x3d8] sm:$0xff]
        %v466 = vld [vmem:[%s264 + $0x3e0] sm:$0xff]
        %v467 = vld [vmem:[%s264 + $0x3e8] sm:$0xff]
        %v468 = vld [vmem:[%s264 + $0x3f0] sm:$0xff]
        %v469 = vld [vmem:[%s264 + $0x3f8] sm:$0xff]
        %v470 = vld [vmem:[%s264 + $0x400] sm:$0xff]
        %v471 = vld [vmem:[%s264 + $0x408] sm:$0xff]
        %v472 = vld [vmem:[%s264 + $0x410] sm:$0xff]
        %v473 = vld [vmem:[%s264 + $0x418] sm:$0xff]
        %v474 = vld [vmem:[%s264 + $0x420] sm:$0xff]
        %v475 = vld [vmem:[%s264 + $0x428] sm:$0xff]
        %v476 = vld [vmem:[%s264 + $0x430] sm:$0xff]
        %v477 = vld [vmem:[%s264 + $0x438] sm:$0xff]
        %v478 = vld [vmem:[%s264 + $0x440] sm:$0xff]
        %v479 = vld [vmem:[%s264 + $0x448] sm:$0xff]
        %v480 = vld [vmem:[%s264 + $0x450] sm:$0xff]
        %v481 = vld [vmem:[%s264 + $0x458] sm:$0xff]
        %v482 = vld [vmem:[%s264 + $0x460] sm:$0xff]
        %v483 = vld [vmem:[%s264 + $0x468] sm:$0xff]
        %v484 = vld [vmem:[%s264 + $0x470] sm:$0xff]
        %v485 = vld [vmem:[%s264 + $0x478] sm:$0xff]
        %v486 = vld [vmem:[%s264 + $0x480] sm:$0xff]
        %v487 = vld [vmem:[%s264 + $0x488] sm:$0xff]
        %v488 = vld [vmem:[%s264 + $0x490] sm:$0xff]
        %v489 = vld [vmem:[%s264 + $0x498] sm:$0xff]
        %v490 = vld [vmem:[%s264 + $0x4a0] sm:$0xff]
        %v491 = vld [vmem:[%s264 + $0x4a8] sm:$0xff]
        %v492 = vld [vmem:[%s264 + $0x4b0] sm:$0xff]
        %v493 = vld [vmem:[%s264 + $0x4b8] sm:$0xff]
        %v494 = vld [vmem:[%s264 + $0x4c0] sm:$0xff]
        %v495 = vld [vmem:[%s264 + $0x4c8] sm:$0xff]
        %v496 = vld [vmem:[%s264 + $0x4d0] sm:$0xff]
        %v497 = vld [vmem:[%s264 + $0x4d8] sm:$0xff]
        %v498 = vld [vmem:[%s264 + $0x4e0] sm:$0xff]
        %v499 = vld [vmem:[%s264 + $0x4e8] sm:$0xff]
        %v500 = vld [vmem:[%s264 + $0x4f0] sm:$0xff]
        %v501 = vld [vmem:[%s264 + $0x4f8] sm:$0xff]
        %v502 = vld [vmem:[%s264 + $0x500] sm:$0xff]
        %v503 = vld [vmem:[%s264 + $0x508] sm:$0xff]
        %v504 = vld [vmem:[%s264 + $0x510] sm:$0xff]
        %v505 = vld [vmem:[%s264 + $0x518] sm:$0xff]
        %v506 = vld [vmem:[%s264 + $0x520] sm:$0xff]
        %v507 = vld [vmem:[%s264 + $0x528] sm:$0xff]
        %v508 = vld [vmem:[%s264 + $0x530] sm:$0xff]
        %v509 = vld [vmem:[%s264 + $0x538] sm:$0xff]
        %v510 = vld [vmem:[%s264 + $0x540] sm:$0xff]
        %v511 = vld [vmem:[%s264 + $0x548] sm:$0xff]
        %v512 = vld [vmem:[%s264 + $0x550] sm:$0xff]
        %v513 = vld [vmem:[%s264 + $0x558] sm:$0xff]
        %v514 = vld [vmem:[%s264 + $0x560] sm:$0xff]
        %v515 = vld [vmem:[%s264 + $0x568] sm:$0xff]
        %v516 = vld [vmem:[%s264 + $0x570] sm:$0xff]
        %v517 = vld [vmem:[%s264 + $0x578] sm:$0xff]
        %v518 = vld [vmem:[%s264 + $0x580] sm:$0xff]
        %v519 = vld [vmem:[%s264 + $0x588] sm:$0xff]
        %v520 = vld [vmem:[%s264 + $0x590] sm:$0xff]
        %v521 = vld [vmem:[%s264 + $0x598] sm:$0xff]
        %v522 = vld [vmem:[%s264 + $0x5a0] sm:$0xff]
        %v523 = vld [vmem:[%s264 + $0x5a8] sm:$0xff]
        %v524 = vld [vmem:[%s264 + $0x5b0] sm:$0xff]
        %v525 = vld [vmem:[%s264 + $0x5b8] sm:$0xff]
        %v526 = vld [vmem:[%s264 + $0x5c0] sm:$0xff]
        %v527 = vld [vmem:[%s264 + $0x5c8] sm:$0xff]
        %v528 = vld [vmem:[%s264 + $0x5d0] sm:$0xff]
        %v529 = vld [vmem:[%s264 + $0x5d8] sm:$0xff]
        %v530 = vld [vmem:[%s264 + $0x5e0] sm:$0xff]
        %v531 = vld [vmem:[%s264 + $0x5e8] sm:$0xff]
        %v532 = vld [vmem:[%s264 + $0x5f0] sm:$0xff]
        %v533 = vld [vmem:[%s264 + $0x5f8] sm:$0xff]
        %v534 = vld [vmem:[%s264 + $0x600] sm:$0xff]
        %v535 = vld [vmem:[%s264 + $0x608] sm:$0xff]
        %v536 = vld [vmem:[%s264 + $0x610] sm:$0xff]
        %v537 = vld [vmem:[%s264 + $0x618] sm:$0xff]
        %v538 = vld [vmem:[%s264 + $0x620] sm:$0xff]
        %v539 = vld [vmem:[%s264 + $0x628] sm:$0xff]
        %v540 = vld [vmem:[%s264 + $0x630] sm:$0xff]
        %v541 = vld [vmem:[%s264 + $0x638] sm:$0xff]
        %v542 = vld [vmem:[%s264 + $0x640] sm:$0xff]
        %v543 = vld [vmem:[%s264 + $0x648] sm:$0xff]
        %v544 = vld [vmem:[%s264 + $0x650] sm:$0xff]
        %v545 = vld [vmem:[%s264 + $0x658] sm:$0xff]
        %v546 = vld [vmem:[%s264 + $0x660] sm:$0xff]
        %v547 = vld [vmem:[%s264 + $0x668] sm:$0xff]
        %v548 = vld [vmem:[%s264 + $0x670] sm:$0xff]
        %v549 = vld [vmem:[%s264 + $0x678] sm:$0xff]
        %v550 = vld [vmem:[%s264 + $0x680] sm:$0xff]
        %v551 = vld [vmem:[%s264 + $0x688] sm:$0xff]
        %v552 = vld [vmem:[%s264 + $0x690] sm:$0xff]
        %v553 = vld [vmem:[%s264 + $0x698] sm:$0xff]
        %v554 = vld [vmem:[%s264 + $0x6a0] sm:$0xff]
        %v555 = vld [vmem:[%s264 + $0x6a8] sm:$0xff]
        %v556 = vld [vmem:[%s264 + $0x6b0] sm:$0xff]
        %v557 = vld [vmem:[%s264 + $0x6b8] sm:$0xff]
        %v558 = vld [vmem:[%s264 + $0x6c0] sm:$0xff]
        %v559 = vld [vmem:[%s264 + $0x6c8] sm:$0xff]
        %v560 = vld [vmem:[%s264 + $0x6d0] sm:$0xff]
        %v561 = vld [vmem:[%s264 + $0x6d8] sm:$0xff]
        %v562 = vld [vmem:[%s264 + $0x6e0] sm:$0xff]
        %v563 = vld [vmem:[%s264 + $0x6e8] sm:$0xff]
        %v564 = vld [vmem:[%s264 + $0x6f0] sm:$0xff]
        %v565 = vld [vmem:[%s264 + $0x6f8] sm:$0xff]
        %v566 = vld [vmem:[%s264 + $0x700] sm:$0xff]
        %v567 = vld [vmem:[%s264 + $0x708] sm:$0xff]
        %v568 = vld [vmem:[%s264 + $0x710] sm:$0xff]
        %v569 = vld [vmem:[%s264 + $0x718] sm:$0xff]
        %v570 = vld [vmem:[%s264 + $0x720] sm:$0xff]
        %v571 = vld [vmem:[%s264 + $0x728] sm:$0xff]
        %v572 = vld [vmem:[%s264 + $0x730] sm:$0xff]
        %v573 = vld [vmem:[%s264 + $0x738] sm:$0xff]
        %v574 = vld [vmem:[%s264 + $0x740] sm:$0xff]
        %v575 = vld [vmem:[%s264 + $0x748] sm:$0xff]
        %v576 = vld [vmem:[%s264 + $0x750] sm:$0xff]
        %v577 = vld [vmem:[%s264 + $0x758] sm:$0xff]
        %v578 = vld [vmem:[%s264 + $0x760] sm:$0xff]
        %v579 = vld [vmem:[%s264 + $0x768] sm:$0xff]
        %v580 = vld [vmem:[%s264 + $0x770] sm:$0xff]
        %v581 = vld [vmem:[%s264 + $0x778] sm:$0xff]
        %v582 = vld [vmem:[%s264 + $0x780] sm:$0xff]
        %v583 = vld [vmem:[%s264 + $0x788] sm:$0xff]
        %v584 = vld [vmem:[%s264 + $0x790] sm:$0xff]
        %v585 = vld [vmem:[%s264 + $0x798] sm:$0xff]
        %v586 = vld [vmem:[%s264 + $0x7a0] sm:$0xff]
        %v587 = vld [vmem:[%s264 + $0x7a8] sm:$0xff]
        %v588 = vld [vmem:[%s264 + $0x7b0] sm:$0xff]
        %v589 = vld [vmem:[%s264 + $0x7b8] sm:$0xff]
        %v590 = vld [vmem:[%s264 + $0x7c0] sm:$0xff]
        %v591 = vld [vmem:[%s264 + $0x7c8] sm:$0xff]
        %v592 = vld [vmem:[%s264 + $0x7d0] sm:$0xff]
        %v593 = vld [vmem:[%s264 + $0x7d8] sm:$0xff]
        %v594 = vld [vmem:[%s264 + $0x7e0] sm:$0xff]
        %v595 = vld [vmem:[%s264 + $0x7e8] sm:$0xff]
        %v596 = vld [vmem:[%s264 + $0x7f0] sm:$0xff]
        %v597 = vld [vmem:[%s264 + $0x7f8] sm:$0xff]
        %v598 = vld [vmem:[%s264 + $0x800] sm:$0xff]
        %v599 = vld [vmem:[%s264 + $0x808] sm:$0xff]
        %v600 = vld [vmem:[%s264 + $0x810] sm:$0xff]
        %v601 = vld [vmem:[%s264 + $0x818] sm:$0xff]
        %v602 = vld [vmem:[%s264 + $0x820] sm:$0xff]
        %v603 = vld [vmem:[%s264 + $0x828] sm:$0xff]
        %v604 = vld [vmem:[%s264 + $0x830] sm:$0xff]
        %v605 = vld [vmem:[%s264 + $0x838] sm:$0xff]
        %v606 = vld [vmem:[%s264 + $0x840] sm:$0xff]
        %v607 = vld [vmem:[%s264 + $0x848] sm:$0xff]
        %v608 = vld [vmem:[%s264 + $0x850] sm:$0xff]
        %v609 = vld [vmem:[%s264 + $0x858] sm:$0xff]
        %v610 = vld [vmem:[%s264 + $0x860] sm:$0xff]
        %v611 = vld [vmem:[%s264 + $0x868] sm:$0xff]
        %v612 = vld [vmem:[%s264 + $0x870] sm:$0xff]
        %v613 = vld [vmem:[%s264 + $0x878] sm:$0xff]
        %v614 = vld [vmem:[%s264 + $0x880] sm:$0xff]
        %v615 = vld [vmem:[%s264 + $0x888] sm:$0xff]
        %v616 = vld [vmem:[%s264 + $0x890] sm:$0xff]
        %v617 = vld [vmem:[%s264 + $0x898] sm:$0xff]
        %v618 = vld [vmem:[%s264 + $0x8a0] sm:$0xff]
        %v619 = vld [vmem:[%s264 + $0x8a8] sm:$0xff]
        %v620 = vld [vmem:[%s264 + $0x8b0] sm:$0xff]
        %v621 = vld [vmem:[%s264 + $0x8b8] sm:$0xff]
        %v622 = vld [vmem:[%s264 + $0x8c0] sm:$0xff]
        %v623 = vld [vmem:[%s264 + $0x8c8] sm:$0xff]
        %v624 = vld [vmem:[%s264 + $0x8d0] sm:$0xff]
        %v625 = vld [vmem:[%s264 + $0x8d8] sm:$0xff]
        %v626 = vld [vmem:[%s264 + $0x8e0] sm:$0xff]
        %v627 = vld [vmem:[%s264 + $0x8e8] sm:$0xff]
        %v628 = vld [vmem:[%s264 + $0x8f0] sm:$0xff]
        %v629 = vld [vmem:[%s264 + $0x8f8] sm:$0xff]
        %v630 = vld [vmem:[%s264 + $0x900] sm:$0xff]
        %v631 = vld [vmem:[%s264 + $0x908] sm:$0xff]
        %v632 = vld [vmem:[%s264 + $0x910] sm:$0xff]
        %v633 = vld [vmem:[%s264 + $0x918] sm:$0xff]
        %v634 = vld [vmem:[%s264 + $0x920] sm:$0xff]
        %v635 = vld [vmem:[%s264 + $0x928] sm:$0xff]
        %v636 = vld [vmem:[%s264 + $0x930] sm:$0xff]
        %v637 = vld [vmem:[%s264 + $0x938] sm:$0xff]
        %v638 = vld [vmem:[%s264 + $0x940] sm:$0xff]
        %v639 = vld [vmem:[%s264 + $0x948] sm:$0xff]
        %v640 = vld [vmem:[%s264 + $0x950] sm:$0xff]
        %v641 = vld [vmem:[%s264 + $0x958] sm:$0xff]
        %v642 = vld [vmem:[%s264 + $0x960] sm:$0xff]
        %v643 = vld [vmem:[%s264 + $0x968] sm:$0xff]
        %v644 = vld [vmem:[%s264 + $0x970] sm:$0xff]
        %v645 = vld [vmem:[%s264 + $0x978] sm:$0xff]
        %v646 = vld [vmem:[%s264 + $0x980] sm:$0xff]
        %v647 = vld [vmem:[%s264 + $0x988] sm:$0xff]
        %v648 = vld [vmem:[%s264 + $0x990] sm:$0xff]
        %v649 = vld [vmem:[%s264 + $0x998] sm:$0xff]
        %v650 = vld [vmem:[%s264 + $0x9a0] sm:$0xff]
        %v651 = vld [vmem:[%s264 + $0x9a8] sm:$0xff]
        %v652 = vld [vmem:[%s264 + $0x9b0] sm:$0xff]
        %v653 = vld [vmem:[%s264 + $0x9b8] sm:$0xff]
        %v654 = vld [vmem:[%s264 + $0x9c0] sm:$0xff]
        %v655 = vld [vmem:[%s264 + $0x9c8] sm:$0xff]
        %v656 = vld [vmem:[%s264 + $0x9d0] sm:$0xff]
        %v657 = vld [vmem:[%s264 + $0x9d8] sm:$0xff]
        %v658 = vld [vmem:[%s264 + $0x9e0] sm:$0xff]
        %v659 = vld [vmem:[%s264 + $0x9e8] sm:$0xff]
        %v660 = vld [vmem:[%s264 + $0x9f0] sm:$0xff]
        %v661 = vld [vmem:[%s264 + $0x9f8] sm:$0xff]
        %v662 = vld [vmem:[%s264 + $0xa00] sm:$0xff]
        %v663 = vld [vmem:[%s264 + $0xa08] sm:$0xff]
        %v664 = vld [vmem:[%s264 + $0xa10] sm:$0xff]
        %v665 = vld [vmem:[%s264 + $0xa18] sm:$0xff]
        %v666 = vld [vmem:[%s264 + $0xa20] sm:$0xff]
        %v667 = vld [vmem:[%s264 + $0xa28] sm:$0xff]
        %v668 = vld [vmem:[%s264 + $0xa30] sm:$0xff]
        %v669 = vld [vmem:[%s264 + $0xa38] sm:$0xff]
        %v670 = vld [vmem:[%s264 + $0xa40] sm:$0xff]
        %v671 = vld [vmem:[%s264 + $0xa48] sm:$0xff]
        %v672 = vld [vmem:[%s264 + $0xa50] sm:$0xff]
        %v673 = vld [vmem:[%s264 + $0xa58] sm:$0xff]
        %v674 = vld [vmem:[%s264 + $0xa60] sm:$0xff]
        %v675 = vld [vmem:[%s264 + $0xa68] sm:$0xff]
        %v676 = vld [vmem:[%s264 + $0xa70] sm:$0xff]
        %v677 = vld [vmem:[%s264 + $0xa78] sm:$0xff]
        %v678 = vld [vmem:[%s264 + $0xa80] sm:$0xff]
        %v679 = vld [vmem:[%s264 + $0xa88] sm:$0xff]
        %v680 = vld [vmem:[%s264 + $0xa90] sm:$0xff]
        %v681 = vld [vmem:[%s264 + $0xa98] sm:$0xff]
        %v682 = vld [vmem:[%s264 + $0xaa0] sm:$0xff]
        %v683 = vld [vmem:[%s264 + $0xaa8] sm:$0xff]
        %v684 = vld [vmem:[%s264 + $0xab0] sm:$0xff]
        %v685 = vld [vmem:[%s264 + $0xab8] sm:$0xff]
        %v686 = vld [vmem:[%s264 + $0xac0] sm:$0xff]
        %v687 = vld [vmem:[%s264 + $0xac8] sm:$0xff]
        %v688 = vld [vmem:[%s264 + $0xad0] sm:$0xff]
        %v689 = vld [vmem:[%s264 + $0xad8] sm:$0xff]
        %v690 = vld [vmem:[%s264 + $0xae0] sm:$0xff]
        %v691 = vld [vmem:[%s264 + $0xae8] sm:$0xff]
        %v692 = vld [vmem:[%s264 + $0xaf0] sm:$0xff]
        %v693 = vld [vmem:[%s264 + $0xaf8] sm:$0xff]
        %v694 = vld [vmem:[%s264 + $0xb00] sm:$0xff]
        %v695 = vld [vmem:[%s264 + $0xb08] sm:$0xff]
        %v696 = vld [vmem:[%s264 + $0xb10] sm:$0xff]
        %v697 = vld [vmem:[%s264 + $0xb18] sm:$0xff]
        %v698 = vld [vmem:[%s264 + $0xb20] sm:$0xff]
        %v699 = vld [vmem:[%s264 + $0xb28] sm:$0xff]
        %v700 = vld [vmem:[%s264 + $0xb30] sm:$0xff]
        %v701 = vld [vmem:[%s264 + $0xb38] sm:$0xff]
        %v702 = vld [vmem:[%s264 + $0xb40] sm:$0xff]
        %v703 = vld [vmem:[%s264 + $0xb48] sm:$0xff]
        %v704 = vld [vmem:[%s264 + $0xb50] sm:$0xff]
        %v705 = vld [vmem:[%s264 + $0xb58] sm:$0xff]
        %v706 = vld [vmem:[%s264 + $0xb60] sm:$0xff]
        %v707 = vld [vmem:[%s264 + $0xb68] sm:$0xff]
        %v708 = vld [vmem:[%s264 + $0xb70] sm:$0xff]
        %v709 = vld [vmem:[%s264 + $0xb78] sm:$0xff]
        %v710 = vld [vmem:[%s264 + $0xb80] sm:$0xff]
        %v711 = vld [vmem:[%s264 + $0xb88] sm:$0xff]
        %v712 = vld [vmem:[%s264 + $0xb90] sm:$0xff]
        %v713 = vld [vmem:[%s264 + $0xb98] sm:$0xff]
        %v714 = vld [vmem:[%s264 + $0xba0] sm:$0xff]
        %v715 = vld [vmem:[%s264 + $0xba8] sm:$0xff]
        %v716 = vld [vmem:[%s264 + $0xbb0] sm:$0xff]
        %v717 = vld [vmem:[%s264 + $0xbb8] sm:$0xff]
        %v718 = vld [vmem:[%s264 + $0xbc0] sm:$0xff]
        %v719 = vld [vmem:[%s264 + $0xbc8] sm:$0xff]
        %v720 = vld [vmem:[%s264 + $0xbd0] sm:$0xff]
        %v721 = vld [vmem:[%s264 + $0xbd8] sm:$0xff]
        %v722 = vld [vmem:[%s264 + $0xbe0] sm:$0xff]
        %v723 = vld [vmem:[%s264 + $0xbe8] sm:$0xff]
        %v724 = vld [vmem:[%s264 + $0xbf0] sm:$0xff]
        %v725 = vld [vmem:[%s264 + $0xbf8] sm:$0xff]
        %v726 = vld [vmem:[%s264 + $0xc00] sm:$0xff]
        %v727 = vld [vmem:[%s264 + $0xc08] sm:$0xff]
        %v728 = vld [vmem:[%s264 + $0xc10] sm:$0xff]
        %v729 = vld [vmem:[%s264 + $0xc18] sm:$0xff]
        %v730 = vld [vmem:[%s264 + $0xc20] sm:$0xff]
        %v731 = vld [vmem:[%s264 + $0xc28] sm:$0xff]
        %v732 = vld [vmem:[%s264 + $0xc30] sm:$0xff]
        %v733 = vld [vmem:[%s264 + $0xc38] sm:$0xff]
        %v734 = vld [vmem:[%s264 + $0xc40] sm:$0xff]
        %v735 = vld [vmem:[%s264 + $0xc48] sm:$0xff]
        %v736 = vld [vmem:[%s264 + $0xc50] sm:$0xff]
        %v737 = vld [vmem:[%s264 + $0xc58] sm:$0xff]
        %v738 = vld [vmem:[%s264 + $0xc60] sm:$0xff]
        %v739 = vld [vmem:[%s264 + $0xc68] sm:$0xff]
        %v740 = vld [vmem:[%s264 + $0xc70] sm:$0xff]
        %v741 = vld [vmem:[%s264 + $0xc78] sm:$0xff]
        %v742 = vld [vmem:[%s264 + $0xc80] sm:$0xff]
        %v743 = vld [vmem:[%s264 + $0xc88] sm:$0xff]
        %v744 = vld [vmem:[%s264 + $0xc90] sm:$0xff]
        %v745 = vld [vmem:[%s264 + $0xc98] sm:$0xff]
        %v746 = vld [vmem:[%s264 + $0xca0] sm:$0xff]
        %v747 = vld [vmem:[%s264 + $0xca8] sm:$0xff]
        %v748 = vld [vmem:[%s264 + $0xcb0] sm:$0xff]
        %v749 = vld [vmem:[%s264 + $0xcb8] sm:$0xff]
        %v750 = vld [vmem:[%s264 + $0xcc0] sm:$0xff]
        %v751 = vld [vmem:[%s264 + $0xcc8] sm:$0xff]
        %v752 = vld [vmem:[%s264 + $0xcd0] sm:$0xff]
        %v753 = vld [vmem:[%s264 + $0xcd8] sm:$0xff]
        %v754 = vld [vmem:[%s264 + $0xce0] sm:$0xff]
        %v755 = vld [vmem:[%s264 + $0xce8] sm:$0xff]
        %v756 = vld [vmem:[%s264 + $0xcf0] sm:$0xff]
        %v757 = vld [vmem:[%s264 + $0xcf8] sm:$0xff]
        %v758 = vld [vmem:[%s264 + $0xd00] sm:$0xff]
        %v759 = vld [vmem:[%s264 + $0xd08] sm:$0xff]
        %v760 = vld [vmem:[%s264 + $0xd10] sm:$0xff]
        %v761 = vld [vmem:[%s264 + $0xd18] sm:$0xff]
        %v762 = vld [vmem:[%s264 + $0xd20] sm:$0xff]
        %v763 = vld [vmem:[%s264 + $0xd28] sm:$0xff]
        %v764 = vld [vmem:[%s264 + $0xd30] sm:$0xff]
        %v765 = vld [vmem:[%s264 + $0xd38] sm:$0xff]
        %v766 = vld [vmem:[%s264 + $0xd40] sm:$0xff]
        %v767 = vld [vmem:[%s264 + $0xd48] sm:$0xff]
        %v768 = vld [vmem:[%s264 + $0xd50] sm:$0xff]
        %v769 = vld [vmem:[%s264 + $0xd58] sm:$0xff]
        %v770 = vld [vmem:[%s264 + $0xd60] sm:$0xff]
        %v771 = vld [vmem:[%s264 + $0xd68] sm:$0xff]
        %v772 = vld [vmem:[%s264 + $0xd70] sm:$0xff]
        %v773 = vld [vmem:[%s264 + $0xd78] sm:$0xff]
        %v774 = vld [vmem:[%s264 + $0xd80] sm:$0xff]
        %v775 = vld [vmem:[%s264 + $0xd88] sm:$0xff]
        %v776 = vld [vmem:[%s264 + $0xd90] sm:$0xff]
        %v777 = vld [vmem:[%s264 + $0xd98] sm:$0xff]
        %v778 = vld [vmem:[%s264 + $0xda0] sm:$0xff]
        %v779 = vld [vmem:[%s264 + $0xda8] sm:$0xff]
        %v780 = vld [vmem:[%s264 + $0xdb0] sm:$0xff]
        %v781 = vld [vmem:[%s264 + $0xdb8] sm:$0xff]
        %v782 = vld [vmem:[%s264 + $0xdc0] sm:$0xff]
        %v783 = vld [vmem:[%s264 + $0xdc8] sm:$0xff]
        %v784 = vld [vmem:[%s264 + $0xdd0] sm:$0xff]
        %v785 = vld [vmem:[%s264 + $0xdd8] sm:$0xff]
        %v786 = vld [vmem:[%s264 + $0xde0] sm:$0xff]
        %v787 = vld [vmem:[%s264 + $0xde8] sm:$0xff]
        %v788 = vld [vmem:[%s264 + $0xdf0] sm:$0xff]
        %v789 = vld [vmem:[%s264 + $0xdf8] sm:$0xff]
        %v790 = vld [vmem:[%s264 + $0xe00] sm:$0xff]
        %v791 = vld [vmem:[%s264 + $0xe08] sm:$0xff]
        %v792 = vld [vmem:[%s264 + $0xe10] sm:$0xff]
        %v793 = vld [vmem:[%s264 + $0xe18] sm:$0xff]
        %v794 = vld [vmem:[%s264 + $0xe20] sm:$0xff]
        %v795 = vld [vmem:[%s264 + $0xe28] sm:$0xff]
        %v796 = vld [vmem:[%s264 + $0xe30] sm:$0xff]
        %v797 = vld [vmem:[%s264 + $0xe38] sm:$0xff]
        %v798 = vld [vmem:[%s264 + $0xe40] sm:$0xff]
        %v799 = vld [vmem:[%s264 + $0xe48] sm:$0xff]
        %v800 = vld [vmem:[%s264 + $0xe50] sm:$0xff]
        %v801 = vld [vmem:[%s264 + $0xe58] sm:$0xff]
        %v802 = vld [vmem:[%s264 + $0xe60] sm:$0xff]
        %v803 = vld [vmem:[%s264 + $0xe68] sm:$0xff]
        %v804 = vld [vmem:[%s264 + $0xe70] sm:$0xff]
        %v805 = vld [vmem:[%s264 + $0xe78] sm:$0xff]
        %v806 = vld [vmem:[%s264 + $0xe80] sm:$0xff]
        %v807 = vld [vmem:[%s264 + $0xe88] sm:$0xff]
        %v808 = vld [vmem:[%s264 + $0xe90] sm:$0xff]
        %v809 = vld [vmem:[%s264 + $0xe98] sm:$0xff]
        %v810 = vld [vmem:[%s264 + $0xea0] sm:$0xff]
        %v811 = vld [vmem:[%s264 + $0xea8] sm:$0xff]
        %v812 = vld [vmem:[%s264 + $0xeb0] sm:$0xff]
        %v813 = vld [vmem:[%s264 + $0xeb8] sm:$0xff]
        %v814 = vld [vmem:[%s264 + $0xec0] sm:$0xff]
        %v815 = vld [vmem:[%s264 + $0xec8] sm:$0xff]
        %v816 = vld [vmem:[%s264 + $0xed0] sm:$0xff]
        %v817 = vld [vmem:[%s264 + $0xed8] sm:$0xff]
        %v818 = vld [vmem:[%s264 + $0xee0] sm:$0xff]
        %v819 = vld [vmem:[%s264 + $0xee8] sm:$0xff]
        %v820 = vld [vmem:[%s264 + $0xef0] sm:$0xff]
        %v821 = vld [vmem:[%s264 + $0xef8] sm:$0xff]
        %v822 = vld [vmem:[%s264 + $0xf00] sm:$0xff]
        %v823 = vld [vmem:[%s264 + $0xf08] sm:$0xff]
        %v824 = vld [vmem:[%s264 + $0xf10] sm:$0xff]
        %v825 = vld [vmem:[%s264 + $0xf18] sm:$0xff]
        %v826 = vld [vmem:[%s264 + $0xf20] sm:$0xff]
        %v827 = vld [vmem:[%s264 + $0xf28] sm:$0xff]
        %v828 = vld [vmem:[%s264 + $0xf30] sm:$0xff]
        %v829 = vld [vmem:[%s264 + $0xf38] sm:$0xff]
        %v830 = vld [vmem:[%s264 + $0xf40] sm:$0xff]
        %v831 = vld [vmem:[%s264 + $0xf48] sm:$0xff]
        %v832 = vld [vmem:[%s264 + $0xf50] sm:$0xff]
        %v833 = vld [vmem:[%s264 + $0xf58] sm:$0xff]
        %v834 = vld [vmem:[%s264 + $0xf60] sm:$0xff]
        %v835 = vld [vmem:[%s264 + $0xf68] sm:$0xff]
        %v836 = vld [vmem:[%s264 + $0xf70] sm:$0xff]
        %v837 = vld [vmem:[%s264 + $0xf78] sm:$0xff]
        %v838 = vld [vmem:[%s264 + $0xf80] sm:$0xff]
        %v839 = vld [vmem:[%s264 + $0xf88] sm:$0xff]
        %v840 = vld [vmem:[%s264 + $0xf90] sm:$0xff]
        %v841 = vld [vmem:[%s264 + $0xf98] sm:$0xff]
        %v842 = vld [vmem:[%s264 + $0xfa0] sm:$0xff]
        %v843 = vld [vmem:[%s264 + $0xfa8] sm:$0xff]
        %v844 = vld [vmem:[%s264 + $0xfb0] sm:$0xff]
        %v845 = vld [vmem:[%s264 + $0xfb8] sm:$0xff]
        %v846 = vld [vmem:[%s264 + $0xfc0] sm:$0xff]
        %v847 = vld [vmem:[%s264 + $0xfc8] sm:$0xff]
        %v848 = vld [vmem:[%s264 + $0xfd0] sm:$0xff]
        %v849 = vld [vmem:[%s264 + $0xfd8] sm:$0xff]
        %v850 = vld [vmem:[%s264 + $0xfe0] sm:$0xff]
        %v851 = vld [vmem:[%s264 + $0xfe8] sm:$0xff]
        %v852 = vld [vmem:[%s264 + $0xff0] sm:$0xff]
        %v853 = vld [vmem:[%s264 + $0xff8] sm:$0xff]
        %v854 = vld [vmem:[%s264 + $0x1000] sm:$0xff]
        %v855 = vld [vmem:[%s264 + $0x1008] sm:$0xff]
        %v856 = vld [vmem:[%s264 + $0x1010] sm:$0xff]
        %v857 = vld [vmem:[%s264 + $0x1018] sm:$0xff]
        %v858 = vld [vmem:[%s264 + $0x1020] sm:$0xff]
        %v859 = vld [vmem:[%s264 + $0x1028] sm:$0xff]
        %v860 = vld [vmem:[%s264 + $0x1030] sm:$0xff]
        %v861 = vld [vmem:[%s264 + $0x1038] sm:$0xff]
        %v862 = vld [vmem:[%s264 + $0x1040] sm:$0xff]
        %v863 = vld [vmem:[%s264 + $0x1048] sm:$0xff]
        %v864 = vld [vmem:[%s264 + $0x1050] sm:$0xff]
        %v865 = vld [vmem:[%s264 + $0x1058] sm:$0xff]
        %v866 = vld [vmem:[%s264 + $0x1060] sm:$0xff]
        %v867 = vld [vmem:[%s264 + $0x1068] sm:$0xff]
        %v868 = vld [vmem:[%s264 + $0x1070] sm:$0xff]
        %v869 = vld [vmem:[%s264 + $0x1078] sm:$0xff]
        %v870 = vld [vmem:[%s264 + $0x1080] sm:$0xff]
        %v871 = vld [vmem:[%s264 + $0x1088] sm:$0xff]
        %v872 = vld [vmem:[%s264 + $0x1090] sm:$0xff]
        %v873 = vld [vmem:[%s264 + $0x1098] sm:$0xff]
        %v874 = vld [vmem:[%s264 + $0x10a0] sm:$0xff]
        %v875 = vld [vmem:[%s264 + $0x10a8] sm:$0xff]
        %v876 = vld [vmem:[%s264 + $0x10b0] sm:$0xff]
        %v877 = vld [vmem:[%s264 + $0x10b8] sm:$0xff]
        %v878 = vld [vmem:[%s264 + $0x10c0] sm:$0xff]
        %v879 = vld [vmem:[%s264 + $0x10c8] sm:$0xff]
        %v880 = vld [vmem:[%s264 + $0x10d0] sm:$0xff]
        %v881 = vld [vmem:[%s264 + $0x10d8] sm:$0xff]
        %v882 = vld [vmem:[%s264 + $0x10e0] sm:$0xff]
        %v883 = vld [vmem:[%s264 + $0x10e8] sm:$0xff]
        %v884 = vld [vmem:[%s264 + $0x10f0] sm:$0xff]
        %v885 = vld [vmem:[%s264 + $0x10f8] sm:$0xff]
        %v886 = vld [vmem:[%s264 + $0x1100] sm:$0xff]
        %v887 = vld [vmem:[%s264 + $0x1108] sm:$0xff]
        %v888 = vld [vmem:[%s264 + $0x1110] sm:$0xff]
        %v889 = vld [vmem:[%s264 + $0x1118] sm:$0xff]
        %v890 = vld [vmem:[%s264 + $0x1120] sm:$0xff]
        %v891 = vld [vmem:[%s264 + $0x1128] sm:$0xff]
        %v892 = vld [vmem:[%s264 + $0x1130] sm:$0xff]
        %v893 = vld [vmem:[%s264 + $0x1138] sm:$0xff]
        %v894 = vld [vmem:[%s264 + $0x1140] sm:$0xff]
        %v895 = vld [vmem:[%s264 + $0x1148] sm:$0xff]
        %v896 = vld [vmem:[%s264 + $0x1150] sm:$0xff]
        %v897 = vld [vmem:[%s264 + $0x1158] sm:$0xff]
        %v898 = vld [vmem:[%s264 + $0x1160] sm:$0xff]
        %v899 = vld [vmem:[%s264 + $0x1168] sm:$0xff]
        %v900 = vld [vmem:[%s264 + $0x1170] sm:$0xff]
        %v901 = vld [vmem:[%s264 + $0x1178] sm:$0xff]
        %v902 = vld [vmem:[%s264 + $0x1180] sm:$0xff]
        %v903 = vld [vmem:[%s264 + $0x1188] sm:$0xff]
        %v904 = vld [vmem:[%s264 + $0x1190] sm:$0xff]
        %v905 = vld [vmem:[%s264 + $0x1198] sm:$0xff]
        %v906 = vld [vmem:[%s264 + $0x11a0] sm:$0xff]
        %v907 = vld [vmem:[%s264 + $0x11a8] sm:$0xff]
        %v908 = vld [vmem:[%s264 + $0x11b0] sm:$0xff]
        %v909 = vld [vmem:[%s264 + $0x11b8] sm:$0xff]
        %v910 = vld [vmem:[%s264 + $0x11c0] sm:$0xff]
        %v911 = vld [vmem:[%s264 + $0x11c8] sm:$0xff]
        %v912 = vld [vmem:[%s264 + $0x11d0] sm:$0xff]
        %v913 = vld [vmem:[%s264 + $0x11d8] sm:$0xff]
        %v914 = vld [vmem:[%s264 + $0x11e0] sm:$0xff]
        %v915 = vld [vmem:[%s264 + $0x11e8] sm:$0xff]
        %v916 = vld [vmem:[%s264 + $0x11f0] sm:$0xff]
        %v917 = vld [vmem:[%s264 + $0x11f8] sm:$0xff]
        %v918 = vld [vmem:[%s264 + $0x1200] sm:$0xff]
        %v919 = vld [vmem:[%s264 + $0x1208] sm:$0xff]
        %v920 = vld [vmem:[%s264 + $0x1210] sm:$0xff]
        %v921 = vld [vmem:[%s264 + $0x1218] sm:$0xff]
        %v922 = vld [vmem:[%s264 + $0x1220] sm:$0xff]
        %v923 = vld [vmem:[%s264 + $0x1228] sm:$0xff]
        %v924 = vld [vmem:[%s264 + $0x1230] sm:$0xff]
        %v925 = vld [vmem:[%s264 + $0x1238] sm:$0xff]
        %v926 = vld [vmem:[%s264 + $0x1240] sm:$0xff]
        %v927 = vld [vmem:[%s264 + $0x1248] sm:$0xff]
        %v928 = vld [vmem:[%s264 + $0x1250] sm:$0xff]
        %v929 = vld [vmem:[%s264 + $0x1258] sm:$0xff]
        %v930 = vld [vmem:[%s264 + $0x1260] sm:$0xff]
        %v931 = vld [vmem:[%s264 + $0x1268] sm:$0xff]
        %v932 = vld [vmem:[%s264 + $0x1270] sm:$0xff]
        %v933 = vld [vmem:[%s264 + $0x1278] sm:$0xff]
        %v934 = vld [vmem:[%s264 + $0x1280] sm:$0xff]
        %v935 = vld [vmem:[%s264 + $0x1288] sm:$0xff]
        %v936 = vld [vmem:[%s264 + $0x1290] sm:$0xff]
        %v937 = vld [vmem:[%s264 + $0x1298] sm:$0xff]
        %v938 = vld [vmem:[%s264 + $0x12a0] sm:$0xff]
        %v939 = vld [vmem:[%s264 + $0x12a8] sm:$0xff]
        %v940 = vld [vmem:[%s264 + $0x12b0] sm:$0xff]
        %v941 = vld [vmem:[%s264 + $0x12b8] sm:$0xff]
        %v942 = vld [vmem:[%s264 + $0x12c0] sm:$0xff]
        %v943 = vld [vmem:[%s264 + $0x12c8] sm:$0xff]
        %v944 = vld [vmem:[%s264 + $0x12d0] sm:$0xff]
        %v945 = vld [vmem:[%s264 + $0x12d8] sm:$0xff]
        %v946 = vld [vmem:[%s264 + $0x12e0] sm:$0xff]
        %v947 = vld [vmem:[%s264 + $0x12e8] sm:$0xff]
        %v948 = vld [vmem:[%s264 + $0x12f0] sm:$0xff]
        %v949 = vld [vmem:[%s264 + $0x12f8] sm:$0xff]
        %v950 = vld [vmem:[%s264 + $0x1300] sm:$0xff]
        %v951 = vld [vmem:[%s264 + $0x1308] sm:$0xff]
        %v952 = vld [vmem:[%s264 + $0x1310] sm:$0xff]
        %v953 = vld [vmem:[%s264 + $0x1318] sm:$0xff]
        %v954 = vld [vmem:[%s264 + $0x1320] sm:$0xff]
        %v955 = vld [vmem:[%s264 + $0x1328] sm:$0xff]
        %v956 = vld [vmem:[%s264 + $0x1330] sm:$0xff]
        %v957 = vld [vmem:[%s264 + $0x1338] sm:$0xff]
        %v958 = vld [vmem:[%s264 + $0x1340] sm:$0xff]
        %v959 = vld [vmem:[%s264 + $0x1348] sm:$0xff]
        %v960 = vld [vmem:[%s264 + $0x1350] sm:$0xff]
        %v961 = vld [vmem:[%s264 + $0x1358] sm:$0xff]
        %v962 = vld [vmem:[%s264 + $0x1360] sm:$0xff]
        %v963 = vld [vmem:[%s264 + $0x1368] sm:$0xff]
        %v964 = vld [vmem:[%s264 + $0x1370] sm:$0xff]
        %v965 = vld [vmem:[%s264 + $0x1378] sm:$0xff]
        %v966 = vld [vmem:[%s264 + $0x1380] sm:$0xff]
        %v967 = vld [vmem:[%s264 + $0x1388] sm:$0xff]
        %v968 = vld [vmem:[%s264 + $0x1390] sm:$0xff]
        %v969 = vld [vmem:[%s264 + $0x1398] sm:$0xff]
        %v970 = vld [vmem:[%s264 + $0x13a0] sm:$0xff]
        %v971 = vld [vmem:[%s264 + $0x13a8] sm:$0xff]
        %v972 = vld [vmem:[%s264 + $0x13b0] sm:$0xff]
        %v973 = vld [vmem:[%s264 + $0x13b8] sm:$0xff]
        %v974 = vld [vmem:[%s264 + $0x13c0] sm:$0xff]
        %v975 = vld [vmem:[%s264 + $0x13c8] sm:$0xff]
        %v976 = vld [vmem:[%s264 + $0x13d0] sm:$0xff]
        %v977 = vld [vmem:[%s264 + $0x13d8] sm:$0xff]
        %v978 = vld [vmem:[%s264 + $0x13e0] sm:$0xff]
        %v979 = vld [vmem:[%s264 + $0x13e8] sm:$0xff]
        %v980 = vld [vmem:[%s264 + $0x13f0] sm:$0xff]
        %v981 = vld [vmem:[%s264 + $0x13f8] sm:$0xff]
        %v982 = vld [vmem:[%s264 + $0x1400] sm:$0xff]
        %v983 = vld [vmem:[%s264 + $0x1408] sm:$0xff]
        %v984 = vld [vmem:[%s264 + $0x1410] sm:$0xff]
        %v985 = vld [vmem:[%s264 + $0x1418] sm:$0xff]
        %v986 = vld [vmem:[%s264 + $0x1420] sm:$0xff]
        %v987 = vld [vmem:[%s264 + $0x1428] sm:$0xff]
        %v988 = vld [vmem:[%s264 + $0x1430] sm:$0xff]
        %v989 = vld [vmem:[%s264 + $0x1438] sm:$0xff]
        %v990 = vld [vmem:[%s264 + $0x1440] sm:$0xff]
        %v991 = vld [vmem:[%s264 + $0x1448] sm:$0xff]
        %v992 = vld [vmem:[%s264 + $0x1450] sm:$0xff]
        %v993 = vld [vmem:[%s264 + $0x1458] sm:$0xff]
        %v994 = vld [vmem:[%s264 + $0x1460] sm:$0xff]
        %v995 = vld [vmem:[%s264 + $0x1468] sm:$0xff]
        %v996 = vld [vmem:[%s264 + $0x1470] sm:$0xff]
        %v997 = vld [vmem:[%s264 + $0x1478] sm:$0xff]
        %v998 = vld [vmem:[%s264 + $0x1480] sm:$0xff]
        %v999 = vld [vmem:[%s264 + $0x1488] sm:$0xff]
        %v1000 = vld [vmem:[%s264 + $0x1490] sm:$0xff]
        %v1001 = vld [vmem:[%s264 + $0x1498] sm:$0xff]
        %v1002 = vld [vmem:[%s264 + $0x14a0] sm:$0xff]
        %v1003 = vld [vmem:[%s264 + $0x14a8] sm:$0xff]
        %v1004 = vld [vmem:[%s264 + $0x14b0] sm:$0xff]
        %v1005 = vld [vmem:[%s264 + $0x14b8] sm:$0xff]
        %v1006 = vld [vmem:[%s264 + $0x14c0] sm:$0xff]
        %v1007 = vld [vmem:[%s264 + $0x14c8] sm:$0xff]
        %v1008 = vld [vmem:[%s264 + $0x14d0] sm:$0xff]
        %v1009 = vld [vmem:[%s264 + $0x14d8] sm:$0xff]
        %v1010 = vld [vmem:[%s264 + $0x14e0] sm:$0xff]
        %v1011 = vld [vmem:[%s264 + $0x14e8] sm:$0xff]
        %v1012 = vld [vmem:[%s264 + $0x14f0] sm:$0xff]
        %v1013 = vld [vmem:[%s264 + $0x14f8] sm:$0xff]
        %v1014 = vld [vmem:[%s264 + $0x1500] sm:$0xff]
        %v1015 = vld [vmem:[%s264 + $0x1508] sm:$0xff]
        %v1016 = vld [vmem:[%s264 + $0x1510] sm:$0xff]
        %v1017 = vld [vmem:[%s264 + $0x1518] sm:$0xff]
        %v1018 = vld [vmem:[%s264 + $0x1520] sm:$0xff]
        %v1019 = vld [vmem:[%s264 + $0x1528] sm:$0xff]
        %v1020 = vld [vmem:[%s264 + $0x1530] sm:$0xff]
        %v1021 = vld [vmem:[%s264 + $0x1538] sm:$0xff]
        %v1022 = vld [vmem:[%s264 + $0x1540] sm:$0xff]
        %v1023 = vld [vmem:[%s264 + $0x1548] sm:$0xff]
        %v1024 = vld [vmem:[%s264 + $0x1550] sm:$0xff]
        %v1025 = vld [vmem:[%s264 + $0x1558] sm:$0xff]
        %v1026 = vld [vmem:[%s264 + $0x1560] sm:$0xff]
        %v1027 = vld [vmem:[%s264 + $0x1568] sm:$0xff]
        %v1028 = vld [vmem:[%s264 + $0x1570] sm:$0xff]
        %v1029 = vld [vmem:[%s264 + $0x1578] sm:$0xff]
        %v1030 = vld [vmem:[%s264 + $0x1580] sm:$0xff]
        %v1031 = vld [vmem:[%s264 + $0x1588] sm:$0xff]
        %v1032 = vld [vmem:[%s264 + $0x1590] sm:$0xff]
        %v1033 = vld [vmem:[%s264 + $0x1598] sm:$0xff]
        %v1034 = vld [vmem:[%s264 + $0x15a0] sm:$0xff]
        %v1035 = vld [vmem:[%s264 + $0x15a8] sm:$0xff]
        %v1036 = vld [vmem:[%s264 + $0x15b0] sm:$0xff]
        %v1037 = vld [vmem:[%s264 + $0x15b8] sm:$0xff]
        %v1038 = vld [vmem:[%s264 + $0x15c0] sm:$0xff]
        %v1039 = vld [vmem:[%s264 + $0x15c8] sm:$0xff]
        %v1040 = vld [vmem:[%s264 + $0x15d0] sm:$0xff]
        %v1041 = vld [vmem:[%s264 + $0x15d8] sm:$0xff]
        %v1042 = vld [vmem:[%s264 + $0x15e0] sm:$0xff]
        %v1043 = vld [vmem:[%s264 + $0x15e8] sm:$0xff]
        %v1044 = vld [vmem:[%s264 + $0x15f0] sm:$0xff]
        %v1045 = vld [vmem:[%s264 + $0x15f8] sm:$0xff]
        %v1046 = vld [vmem:[%s264 + $0x1600] sm:$0xff]
        %v1047 = vld [vmem:[%s264 + $0x1608] sm:$0xff]
        %v1048 = vld [vmem:[%s264 + $0x1610] sm:$0xff]
        %v1049 = vld [vmem:[%s264 + $0x1618] sm:$0xff]
        %v1050 = vld [vmem:[%s264 + $0x1620] sm:$0xff]
        %v1051 = vld [vmem:[%s264 + $0x1628] sm:$0xff]
        %v1052 = vld [vmem:[%s264 + $0x1630] sm:$0xff]
        %v1053 = vld [vmem:[%s264 + $0x1638] sm:$0xff]
        %v1054 = vld [vmem:[%s264 + $0x1640] sm:$0xff]
        %v1055 = vld [vmem:[%s264 + $0x1648] sm:$0xff]
        %v1056 = vld [vmem:[%s264 + $0x1650] sm:$0xff]
        %v1057 = vld [vmem:[%s264 + $0x1658] sm:$0xff]
        %v1058 = vld [vmem:[%s264 + $0x1660] sm:$0xff]
        %v1059 = vld [vmem:[%s264 + $0x1668] sm:$0xff]
        %v1060 = vld [vmem:[%s264 + $0x1670] sm:$0xff]
        %v1061 = vld [vmem:[%s264 + $0x1678] sm:$0xff]
        %v1062 = vld [vmem:[%s264 + $0x1680] sm:$0xff]
        %v1063 = vld [vmem:[%s264 + $0x1688] sm:$0xff]
        %v1064 = vld [vmem:[%s264 + $0x1690] sm:$0xff]
        %v1065 = vld [vmem:[%s264 + $0x1698] sm:$0xff]
        %v1066 = vld [vmem:[%s264 + $0x16a0] sm:$0xff]
        %v1067 = vld [vmem:[%s264 + $0x16a8] sm:$0xff]
        %v1068 = vld [vmem:[%s264 + $0x16b0] sm:$0xff]
        %v1069 = vld [vmem:[%s264 + $0x16b8] sm:$0xff]
        %v1070 = vld [vmem:[%s264 + $0x16c0] sm:$0xff]
        %v1071 = vld [vmem:[%s264 + $0x16c8] sm:$0xff]
        %v1072 = vld [vmem:[%s264 + $0x16d0] sm:$0xff]
        %v1073 = vld [vmem:[%s264 + $0x16d8] sm:$0xff]
        %v1074 = vld [vmem:[%s264 + $0x16e0] sm:$0xff]
        %v1075 = vld [vmem:[%s264 + $0x16e8] sm:$0xff]
        %v1076 = vld [vmem:[%s264 + $0x16f0] sm:$0xff]
        %v1077 = vld [vmem:[%s264 + $0x16f8] sm:$0xff]
        %v1078 = vld [vmem:[%s264 + $0x1700] sm:$0xff]
        %v1079 = vld [vmem:[%s264 + $0x1708] sm:$0xff]
        %v1080 = vld [vmem:[%s264 + $0x1710] sm:$0xff]
        %v1081 = vld [vmem:[%s264 + $0x1718] sm:$0xff]
        %v1082 = vld [vmem:[%s264 + $0x1720] sm:$0xff]
        %v1083 = vld [vmem:[%s264 + $0x1728] sm:$0xff]
        %v1084 = vld [vmem:[%s264 + $0x1730] sm:$0xff]
        %v1085 = vld [vmem:[%s264 + $0x1738] sm:$0xff]
        %v1086 = vld [vmem:[%s264 + $0x1740] sm:$0xff]
        %v1087 = vld [vmem:[%s264 + $0x1748] sm:$0xff]
        %v1088 = vld [vmem:[%s264 + $0x1750] sm:$0xff]
        %v1089 = vld [vmem:[%s264 + $0x1758] sm:$0xff]
        %v1090 = vld [vmem:[%s264 + $0x1760] sm:$0xff]
        %v1091 = vld [vmem:[%s264 + $0x1768] sm:$0xff]
        %v1092 = vld [vmem:[%s264 + $0x1770] sm:$0xff]
        %v1093 = vld [vmem:[%s264 + $0x1778] sm:$0xff]
        %v1094 = vld [vmem:[%s264 + $0x1780] sm:$0xff]
        %v1095 = vld [vmem:[%s264 + $0x1788] sm:$0xff]
        %v1096 = vld [vmem:[%s264 + $0x1790] sm:$0xff]
        %v1097 = vld [vmem:[%s264 + $0x1798] sm:$0xff]
        %v1098 = vld [vmem:[%s264 + $0x17a0] sm:$0xff]
        %v1099 = vld [vmem:[%s264 + $0x17a8] sm:$0xff]
        %v1100 = vld [vmem:[%s264 + $0x17b0] sm:$0xff]
        %v1101 = vld [vmem:[%s264 + $0x17b8] sm:$0xff]
        %v1102 = vld [vmem:[%s264 + $0x17c0] sm:$0xff]
        %v1103 = vld [vmem:[%s264 + $0x17c8] sm:$0xff]
        %v1104 = vld [vmem:[%s264 + $0x17d0] sm:$0xff]
        %v1105 = vld [vmem:[%s264 + $0x17d8] sm:$0xff]
        %v1106 = vld [vmem:[%s264 + $0x17e0] sm:$0xff]
        %v1107 = vld [vmem:[%s264 + $0x17e8] sm:$0xff]
        %v1108 = vld [vmem:[%s264 + $0x17f0] sm:$0xff]
        %v1109 = vld [vmem:[%s264 + $0x17f8] sm:$0xff]
        %v1878 = vunpack.c.l.b16 %v342
        %v1879 = vunpack.c.h.b16 %v342
        %v1880 = vunpack.c.l.b16 %v343
        %v1881 = vunpack.c.h.b16 %v343
        %v1882 = vunpack.c.l.b16 %v344
        %v1883 = vunpack.c.h.b16 %v344
        %v1884 = vunpack.c.l.b16 %v345
        %v1885 = vunpack.c.h.b16 %v345
        %v1886 = vunpack.c.l.b16 %v346
        %v1887 = vunpack.c.h.b16 %v346
        %v1888 = vunpack.c.l.b16 %v347
        %v1889 = vunpack.c.h.b16 %v347
        %v1890 = vunpack.c.l.b16 %v348
        %v1891 = vunpack.c.h.b16 %v348
        %v1892 = vunpack.c.l.b16 %v349
        %v1893 = vunpack.c.h.b16 %v349
        %v1894 = vunpack.c.l.b16 %v350
        %v1895 = vunpack.c.h.b16 %v350
        %v1896 = vunpack.c.l.b16 %v351
        %v1897 = vunpack.c.h.b16 %v351
        %v1898 = vunpack.c.l.b16 %v352
        %v1899 = vunpack.c.h.b16 %v352
        %v1900 = vunpack.c.l.b16 %v353
        %v1901 = vunpack.c.h.b16 %v353
        %v1902 = vunpack.c.l.b16 %v354
        %v1903 = vunpack.c.h.b16 %v354
        %v1904 = vunpack.c.l.b16 %v355
        %v1905 = vunpack.c.h.b16 %v355
        %v1906 = vunpack.c.l.b16 %v356
        %v1907 = vunpack.c.h.b16 %v356
        %v1908 = vunpack.c.l.b16 %v357
        %v1909 = vunpack.c.h.b16 %v357
        %v1910 = vunpack.c.l.b16 %v358
        %v1911 = vunpack.c.h.b16 %v358
        %v1912 = vunpack.c.l.b16 %v359
        %v1913 = vunpack.c.h.b16 %v359
        %v1914 = vunpack.c.l.b16 %v360
        %v1915 = vunpack.c.h.b16 %v360
        %v1916 = vunpack.c.l.b16 %v361
        %v1917 = vunpack.c.h.b16 %v361
        %v1918 = vunpack.c.l.b16 %v362
        %v1919 = vunpack.c.h.b16 %v362
        %v1920 = vunpack.c.l.b16 %v363
        %v1921 = vunpack.c.h.b16 %v363
        %v1922 = vunpack.c.l.b16 %v364
        %v1923 = vunpack.c.h.b16 %v364
        %v1924 = vunpack.c.l.b16 %v365
        %v1925 = vunpack.c.h.b16 %v365
        %v1926 = vunpack.c.l.b16 %v366
        %v1927 = vunpack.c.h.b16 %v366
        %v1928 = vunpack.c.l.b16 %v367
        %v1929 = vunpack.c.h.b16 %v367
        %v1930 = vunpack.c.l.b16 %v368
        %v1931 = vunpack.c.h.b16 %v368
        %v1932 = vunpack.c.l.b16 %v369
        %v1933 = vunpack.c.h.b16 %v369
        %v1934 = vunpack.c.l.b16 %v370
        %v1935 = vunpack.c.h.b16 %v370
        %v1936 = vunpack.c.l.b16 %v371
        %v1937 = vunpack.c.h.b16 %v371
        %v1938 = vunpack.c.l.b16 %v372
        %v1939 = vunpack.c.h.b16 %v372
        %v1940 = vunpack.c.l.b16 %v373
        %v1941 = vunpack.c.h.b16 %v373
        %v1942 = vunpack.c.l.b16 %v374
        %v1943 = vunpack.c.h.b16 %v374
        %v1944 = vunpack.c.l.b16 %v375
        %v1945 = vunpack.c.h.b16 %v375
        %v1946 = vunpack.c.l.b16 %v376
        %v1947 = vunpack.c.h.b16 %v376
        %v1948 = vunpack.c.l.b16 %v377
        %v1949 = vunpack.c.h.b16 %v377
        %v1950 = vunpack.c.l.b16 %v378
        %v1951 = vunpack.c.h.b16 %v378
        %v1952 = vunpack.c.l.b16 %v379
        %v1953 = vunpack.c.h.b16 %v379
        %v1954 = vunpack.c.l.b16 %v380
        %v1955 = vunpack.c.h.b16 %v380
        %v1956 = vunpack.c.l.b16 %v381
        %v1957 = vunpack.c.h.b16 %v381
        %v1958 = vunpack.c.l.b16 %v382
        %v1959 = vunpack.c.h.b16 %v382
        %v1960 = vunpack.c.l.b16 %v383
        %v1961 = vunpack.c.h.b16 %v383
        %v1962 = vunpack.c.l.b16 %v384
        %v1963 = vunpack.c.h.b16 %v384
        %v1964 = vunpack.c.l.b16 %v385
        %v1965 = vunpack.c.h.b16 %v385
        %v1966 = vunpack.c.l.b16 %v386
        %v1967 = vunpack.c.h.b16 %v386
        %v1968 = vunpack.c.l.b16 %v387
        %v1969 = vunpack.c.h.b16 %v387
        %v1970 = vunpack.c.l.b16 %v388
        %v1971 = vunpack.c.h.b16 %v388
        %v1972 = vunpack.c.l.b16 %v389
        %v1973 = vunpack.c.h.b16 %v389
        %v1974 = vunpack.c.l.b16 %v390
        %v1975 = vunpack.c.h.b16 %v390
        %v1976 = vunpack.c.l.b16 %v391
        %v1977 = vunpack.c.h.b16 %v391
        %v1978 = vunpack.c.l.b16 %v392
        %v1979 = vunpack.c.h.b16 %v392
        %v1980 = vunpack.c.l.b16 %v393
        %v1981 = vunpack.c.h.b16 %v393
        %v1982 = vunpack.c.l.b16 %v394
        %v1983 = vunpack.c.h.b16 %v394
        %v1984 = vunpack.c.l.b16 %v395
        %v1985 = vunpack.c.h.b16 %v395
        %v1986 = vunpack.c.l.b16 %v396
        %v1987 = vunpack.c.h.b16 %v396
        %v1988 = vunpack.c.l.b16 %v397
        %v1989 = vunpack.c.h.b16 %v397
        %v1990 = vunpack.c.l.b16 %v398
        %v1991 = vunpack.c.h.b16 %v398
        %v1992 = vunpack.c.l.b16 %v399
        %v1993 = vunpack.c.h.b16 %v399
        %v1994 = vunpack.c.l.b16 %v400
        %v1995 = vunpack.c.h.b16 %v400
        %v1996 = vunpack.c.l.b16 %v401
        %v1997 = vunpack.c.h.b16 %v401
        %v1998 = vunpack.c.l.b16 %v402
        %v1999 = vunpack.c.h.b16 %v402
        %v2000 = vunpack.c.l.b16 %v403
        %v2001 = vunpack.c.h.b16 %v403
        %v2002 = vunpack.c.l.b16 %v404
        %v2003 = vunpack.c.h.b16 %v404
        %v2004 = vunpack.c.l.b16 %v405
        %v2005 = vunpack.c.h.b16 %v405
        %v2006 = vunpack.c.l.b16 %v406
        %v2007 = vunpack.c.h.b16 %v406
        %v2008 = vunpack.c.l.b16 %v407
        %v2009 = vunpack.c.h.b16 %v407
        %v2010 = vunpack.c.l.b16 %v408
        %v2011 = vunpack.c.h.b16 %v408
        %v2012 = vunpack.c.l.b16 %v409
        %v2013 = vunpack.c.h.b16 %v409
        %v2014 = vunpack.c.l.b16 %v410
        %v2015 = vunpack.c.h.b16 %v410
        %v2016 = vunpack.c.l.b16 %v411
        %v2017 = vunpack.c.h.b16 %v411
        %v2018 = vunpack.c.l.b16 %v412
        %v2019 = vunpack.c.h.b16 %v412
        %v2020 = vunpack.c.l.b16 %v413
        %v2021 = vunpack.c.h.b16 %v413
        %v2022 = vunpack.c.l.b16 %v414
        %v2023 = vunpack.c.h.b16 %v414
        %v2024 = vunpack.c.l.b16 %v415
        %v2025 = vunpack.c.h.b16 %v415
        %v2026 = vunpack.c.l.b16 %v416
        %v2027 = vunpack.c.h.b16 %v416
        %v2028 = vunpack.c.l.b16 %v417
        %v2029 = vunpack.c.h.b16 %v417
        %v2030 = vunpack.c.l.b16 %v418
        %v2031 = vunpack.c.h.b16 %v418
        %v2032 = vunpack.c.l.b16 %v419
        %v2033 = vunpack.c.h.b16 %v419
        %v2034 = vunpack.c.l.b16 %v420
        %v2035 = vunpack.c.h.b16 %v420
        %v2036 = vunpack.c.l.b16 %v421
        %v2037 = vunpack.c.h.b16 %v421
        %v2038 = vunpack.c.l.b16 %v422
        %v2039 = vunpack.c.h.b16 %v422
        %v2040 = vunpack.c.l.b16 %v423
        %v2041 = vunpack.c.h.b16 %v423
        %v2042 = vunpack.c.l.b16 %v424
        %v2043 = vunpack.c.h.b16 %v424
        %v2044 = vunpack.c.l.b16 %v425
        %v2045 = vunpack.c.h.b16 %v425
        %v2046 = vunpack.c.l.b16 %v426
        %v2047 = vunpack.c.h.b16 %v426
        %v2048 = vunpack.c.l.b16 %v427
        %v2049 = vunpack.c.h.b16 %v427
        %v2050 = vunpack.c.l.b16 %v428
        %v2051 = vunpack.c.h.b16 %v428
        %v2052 = vunpack.c.l.b16 %v429
        %v2053 = vunpack.c.h.b16 %v429
        %v2054 = vunpack.c.l.b16 %v430
        %v2055 = vunpack.c.h.b16 %v430
        %v2056 = vunpack.c.l.b16 %v431
        %v2057 = vunpack.c.h.b16 %v431
        %v2058 = vunpack.c.l.b16 %v432
        %v2059 = vunpack.c.h.b16 %v432
        %v2060 = vunpack.c.l.b16 %v433
        %v2061 = vunpack.c.h.b16 %v433
        %v2062 = vunpack.c.l.b16 %v434
        %v2063 = vunpack.c.h.b16 %v434
        %v2064 = vunpack.c.l.b16 %v435
        %v2065 = vunpack.c.h.b16 %v435
        %v2066 = vunpack.c.l.b16 %v436
        %v2067 = vunpack.c.h.b16 %v436
        %v2068 = vunpack.c.l.b16 %v437
        %v2069 = vunpack.c.h.b16 %v437
        %v2070 = vunpack.c.l.b16 %v438
        %v2071 = vunpack.c.h.b16 %v438
        %v2072 = vunpack.c.l.b16 %v439
        %v2073 = vunpack.c.h.b16 %v439
        %v2074 = vunpack.c.l.b16 %v440
        %v2075 = vunpack.c.h.b16 %v440
        %v2076 = vunpack.c.l.b16 %v441
        %v2077 = vunpack.c.h.b16 %v441
        %v2078 = vunpack.c.l.b16 %v442
        %v2079 = vunpack.c.h.b16 %v442
        %v2080 = vunpack.c.l.b16 %v443
        %v2081 = vunpack.c.h.b16 %v443
        %v2082 = vunpack.c.l.b16 %v444
        %v2083 = vunpack.c.h.b16 %v444
        %v2084 = vunpack.c.l.b16 %v445
        %v2085 = vunpack.c.h.b16 %v445
        %v2086 = vunpack.c.l.b16 %v446
        %v2087 = vunpack.c.h.b16 %v446
        %v2088 = vunpack.c.l.b16 %v447
        %v2089 = vunpack.c.h.b16 %v447
        %v2090 = vunpack.c.l.b16 %v448
        %v2091 = vunpack.c.h.b16 %v448
        %v2092 = vunpack.c.l.b16 %v449
        %v2093 = vunpack.c.h.b16 %v449
        %v2094 = vunpack.c.l.b16 %v450
        %v2095 = vunpack.c.h.b16 %v450
        %v2096 = vunpack.c.l.b16 %v451
        %v2097 = vunpack.c.h.b16 %v451
        %v2098 = vunpack.c.l.b16 %v452
        %v2099 = vunpack.c.h.b16 %v452
        %v2100 = vunpack.c.l.b16 %v453
        %v2101 = vunpack.c.h.b16 %v453
        %v2102 = vunpack.c.l.b16 %v454
        %v2103 = vunpack.c.h.b16 %v454
        %v2104 = vunpack.c.l.b16 %v455
        %v2105 = vunpack.c.h.b16 %v455
        %v2106 = vunpack.c.l.b16 %v456
        %v2107 = vunpack.c.h.b16 %v456
        %v2108 = vunpack.c.l.b16 %v457
        %v2109 = vunpack.c.h.b16 %v457
        %v2110 = vunpack.c.l.b16 %v458
        %v2111 = vunpack.c.h.b16 %v458
        %v2112 = vunpack.c.l.b16 %v459
        %v2113 = vunpack.c.h.b16 %v459
        %v2114 = vunpack.c.l.b16 %v460
        %v2115 = vunpack.c.h.b16 %v460
        %v2116 = vunpack.c.l.b16 %v461
        %v2117 = vunpack.c.h.b16 %v461
        %v2118 = vunpack.c.l.b16 %v462
        %v2119 = vunpack.c.h.b16 %v462
        %v2120 = vunpack.c.l.b16 %v463
        %v2121 = vunpack.c.h.b16 %v463
        %v2122 = vunpack.c.l.b16 %v464
        %v2123 = vunpack.c.h.b16 %v464
        %v2124 = vunpack.c.l.b16 %v465
        %v2125 = vunpack.c.h.b16 %v465
        %v2126 = vunpack.c.l.b16 %v466
        %v2127 = vunpack.c.h.b16 %v466
        %v2128 = vunpack.c.l.b16 %v467
        %v2129 = vunpack.c.h.b16 %v467
        %v2130 = vunpack.c.l.b16 %v468
        %v2131 = vunpack.c.h.b16 %v468
        %v2132 = vunpack.c.l.b16 %v469
        %v2133 = vunpack.c.h.b16 %v469
        %v2134 = vunpack.c.l.b16 %v470
        %v2135 = vunpack.c.h.b16 %v470
        %v2136 = vunpack.c.l.b16 %v471
        %v2137 = vunpack.c.h.b16 %v471
        %v2138 = vunpack.c.l.b16 %v472
        %v2139 = vunpack.c.h.b16 %v472
        %v2140 = vunpack.c.l.b16 %v473
        %v2141 = vunpack.c.h.b16 %v473
        %v2142 = vunpack.c.l.b16 %v474
        %v2143 = vunpack.c.h.b16 %v474
        %v2144 = vunpack.c.l.b16 %v475
        %v2145 = vunpack.c.h.b16 %v475
        %v2146 = vunpack.c.l.b16 %v476
        %v2147 = vunpack.c.h.b16 %v476
        %v2148 = vunpack.c.l.b16 %v477
        %v2149 = vunpack.c.h.b16 %v477
        %v2150 = vunpack.c.l.b16 %v478
        %v2151 = vunpack.c.h.b16 %v478
        %v2152 = vunpack.c.l.b16 %v479
        %v2153 = vunpack.c.h.b16 %v479
        %v2154 = vunpack.c.l.b16 %v480
        %v2155 = vunpack.c.h.b16 %v480
        %v2156 = vunpack.c.l.b16 %v481
        %v2157 = vunpack.c.h.b16 %v481
        %v2158 = vunpack.c.l.b16 %v482
        %v2159 = vunpack.c.h.b16 %v482
        %v2160 = vunpack.c.l.b16 %v483
        %v2161 = vunpack.c.h.b16 %v483
        %v2162 = vunpack.c.l.b16 %v484
        %v2163 = vunpack.c.h.b16 %v484
        %v2164 = vunpack.c.l.b16 %v485
        %v2165 = vunpack.c.h.b16 %v485
        %v2166 = vunpack.c.l.b16 %v486
        %v2167 = vunpack.c.h.b16 %v486
        %v2168 = vunpack.c.l.b16 %v487
        %v2169 = vunpack.c.h.b16 %v487
        %v2170 = vunpack.c.l.b16 %v488
        %v2171 = vunpack.c.h.b16 %v488
        %v2172 = vunpack.c.l.b16 %v489
        %v2173 = vunpack.c.h.b16 %v489
        %v2174 = vunpack.c.l.b16 %v490
        %v2175 = vunpack.c.h.b16 %v490
        %v2176 = vunpack.c.l.b16 %v491
        %v2177 = vunpack.c.h.b16 %v491
        %v2178 = vunpack.c.l.b16 %v492
        %v2179 = vunpack.c.h.b16 %v492
        %v2180 = vunpack.c.l.b16 %v493
        %v2181 = vunpack.c.h.b16 %v493
        %v2182 = vunpack.c.l.b16 %v494
        %v2183 = vunpack.c.h.b16 %v494
        %v2184 = vunpack.c.l.b16 %v495
        %v2185 = vunpack.c.h.b16 %v495
        %v2186 = vunpack.c.l.b16 %v496
        %v2187 = vunpack.c.h.b16 %v496
        %v2188 = vunpack.c.l.b16 %v497
        %v2189 = vunpack.c.h.b16 %v497
        %v2190 = vunpack.c.l.b16 %v498
        %v2191 = vunpack.c.h.b16 %v498
        %v2192 = vunpack.c.l.b16 %v499
        %v2193 = vunpack.c.h.b16 %v499
        %v2194 = vunpack.c.l.b16 %v500
        %v2195 = vunpack.c.h.b16 %v500
        %v2196 = vunpack.c.l.b16 %v501
        %v2197 = vunpack.c.h.b16 %v501
        %v2198 = vunpack.c.l.b16 %v502
        %v2199 = vunpack.c.h.b16 %v502
        %v2200 = vunpack.c.l.b16 %v503
        %v2201 = vunpack.c.h.b16 %v503
        %v2202 = vunpack.c.l.b16 %v504
        %v2203 = vunpack.c.h.b16 %v504
        %v2204 = vunpack.c.l.b16 %v505
        %v2205 = vunpack.c.h.b16 %v505
        %v2206 = vunpack.c.l.b16 %v506
        %v2207 = vunpack.c.h.b16 %v506
        %v2208 = vunpack.c.l.b16 %v507
        %v2209 = vunpack.c.h.b16 %v507
        %v2210 = vunpack.c.l.b16 %v508
        %v2211 = vunpack.c.h.b16 %v508
        %v2212 = vunpack.c.l.b16 %v509
        %v2213 = vunpack.c.h.b16 %v509
        %v2214 = vunpack.c.l.b16 %v510
        %v2215 = vunpack.c.h.b16 %v510
        %v2216 = vunpack.c.l.b16 %v511
        %v2217 = vunpack.c.h.b16 %v511
        %v2218 = vunpack.c.l.b16 %v512
        %v2219 = vunpack.c.h.b16 %v512
        %v2220 = vunpack.c.l.b16 %v513
        %v2221 = vunpack.c.h.b16 %v513
        %v2222 = vunpack.c.l.b16 %v514
        %v2223 = vunpack.c.h.b16 %v514
        %v2224 = vunpack.c.l.b16 %v515
        %v2225 = vunpack.c.h.b16 %v515
        %v2226 = vunpack.c.l.b16 %v516
        %v2227 = vunpack.c.h.b16 %v516
        %v2228 = vunpack.c.l.b16 %v517
        %v2229 = vunpack.c.h.b16 %v517
        %v2230 = vunpack.c.l.b16 %v518
        %v2231 = vunpack.c.h.b16 %v518
        %v2232 = vunpack.c.l.b16 %v519
        %v2233 = vunpack.c.h.b16 %v519
        %v2234 = vunpack.c.l.b16 %v520
        %v2235 = vunpack.c.h.b16 %v520
        %v2236 = vunpack.c.l.b16 %v521
        %v2237 = vunpack.c.h.b16 %v521
        %v2238 = vunpack.c.l.b16 %v522
        %v2239 = vunpack.c.h.b16 %v522
        %v2240 = vunpack.c.l.b16 %v523
        %v2241 = vunpack.c.h.b16 %v523
        %v2242 = vunpack.c.l.b16 %v524
        %v2243 = vunpack.c.h.b16 %v524
        %v2244 = vunpack.c.l.b16 %v525
        %v2245 = vunpack.c.h.b16 %v525
        %v2246 = vunpack.c.l.b16 %v526
        %v2247 = vunpack.c.h.b16 %v526
        %v2248 = vunpack.c.l.b16 %v527
        %v2249 = vunpack.c.h.b16 %v527
        %v2250 = vunpack.c.l.b16 %v528
        %v2251 = vunpack.c.h.b16 %v528
        %v2252 = vunpack.c.l.b16 %v529
        %v2253 = vunpack.c.h.b16 %v529
        %v2254 = vunpack.c.l.b16 %v530
        %v2255 = vunpack.c.h.b16 %v530
        %v2256 = vunpack.c.l.b16 %v531
        %v2257 = vunpack.c.h.b16 %v531
        %v2258 = vunpack.c.l.b16 %v532
        %v2259 = vunpack.c.h.b16 %v532
        %v2260 = vunpack.c.l.b16 %v533
        %v2261 = vunpack.c.h.b16 %v533
        %v2262 = vunpack.c.l.b16 %v534
        %v2263 = vunpack.c.h.b16 %v534
        %v2264 = vunpack.c.l.b16 %v535
        %v2265 = vunpack.c.h.b16 %v535
        %v2266 = vunpack.c.l.b16 %v536
        %v2267 = vunpack.c.h.b16 %v536
        %v2268 = vunpack.c.l.b16 %v537
        %v2269 = vunpack.c.h.b16 %v537
        %v2270 = vunpack.c.l.b16 %v538
        %v2271 = vunpack.c.h.b16 %v538
        %v2272 = vunpack.c.l.b16 %v539
        %v2273 = vunpack.c.h.b16 %v539
        %v2274 = vunpack.c.l.b16 %v540
        %v2275 = vunpack.c.h.b16 %v540
        %v2276 = vunpack.c.l.b16 %v541
        %v2277 = vunpack.c.h.b16 %v541
        %v2278 = vunpack.c.l.b16 %v542
        %v2279 = vunpack.c.h.b16 %v542
        %v2280 = vunpack.c.l.b16 %v543
        %v2281 = vunpack.c.h.b16 %v543
        %v2282 = vunpack.c.l.b16 %v544
        %v2283 = vunpack.c.h.b16 %v544
        %v2284 = vunpack.c.l.b16 %v545
        %v2285 = vunpack.c.h.b16 %v545
        %v2286 = vunpack.c.l.b16 %v546
        %v2287 = vunpack.c.h.b16 %v546
        %v2288 = vunpack.c.l.b16 %v547
        %v2289 = vunpack.c.h.b16 %v547
        %v2290 = vunpack.c.l.b16 %v548
        %v2291 = vunpack.c.h.b16 %v548
        %v2292 = vunpack.c.l.b16 %v549
        %v2293 = vunpack.c.h.b16 %v549
        %v2294 = vunpack.c.l.b16 %v550
        %v2295 = vunpack.c.h.b16 %v550
        %v2296 = vunpack.c.l.b16 %v551
        %v2297 = vunpack.c.h.b16 %v551
        %v2298 = vunpack.c.l.b16 %v552
        %v2299 = vunpack.c.h.b16 %v552
        %v2300 = vunpack.c.l.b16 %v553
        %v2301 = vunpack.c.h.b16 %v553
        %v2302 = vunpack.c.l.b16 %v554
        %v2303 = vunpack.c.h.b16 %v554
        %v2304 = vunpack.c.l.b16 %v555
        %v2305 = vunpack.c.h.b16 %v555
        %v2306 = vunpack.c.l.b16 %v556
        %v2307 = vunpack.c.h.b16 %v556
        %v2308 = vunpack.c.l.b16 %v557
        %v2309 = vunpack.c.h.b16 %v557
        %v2310 = vunpack.c.l.b16 %v558
        %v2311 = vunpack.c.h.b16 %v558
        %v2312 = vunpack.c.l.b16 %v559
        %v2313 = vunpack.c.h.b16 %v559
        %v2314 = vunpack.c.l.b16 %v560
        %v2315 = vunpack.c.h.b16 %v560
        %v2316 = vunpack.c.l.b16 %v561
        %v2317 = vunpack.c.h.b16 %v561
        %v2318 = vunpack.c.l.b16 %v562
        %v2319 = vunpack.c.h.b16 %v562
        %v2320 = vunpack.c.l.b16 %v563
        %v2321 = vunpack.c.h.b16 %v563
        %v2322 = vunpack.c.l.b16 %v564
        %v2323 = vunpack.c.h.b16 %v564
        %v2324 = vunpack.c.l.b16 %v565
        %v2325 = vunpack.c.h.b16 %v565
        %v2326 = vunpack.c.l.b16 %v566
        %v2327 = vunpack.c.h.b16 %v566
        %v2328 = vunpack.c.l.b16 %v567
        %v2329 = vunpack.c.h.b16 %v567
        %v2330 = vunpack.c.l.b16 %v568
        %v2331 = vunpack.c.h.b16 %v568
        %v2332 = vunpack.c.l.b16 %v569
        %v2333 = vunpack.c.h.b16 %v569
        %v2334 = vunpack.c.l.b16 %v570
        %v2335 = vunpack.c.h.b16 %v570
        %v2336 = vunpack.c.l.b16 %v571
        %v2337 = vunpack.c.h.b16 %v571
        %v2338 = vunpack.c.l.b16 %v572
        %v2339 = vunpack.c.h.b16 %v572
        %v2340 = vunpack.c.l.b16 %v573
        %v2341 = vunpack.c.h.b16 %v573
        %v2342 = vunpack.c.l.b16 %v574
        %v2343 = vunpack.c.h.b16 %v574
        %v2344 = vunpack.c.l.b16 %v575
        %v2345 = vunpack.c.h.b16 %v575
        %v2346 = vunpack.c.l.b16 %v576
        %v2347 = vunpack.c.h.b16 %v576
        %v2348 = vunpack.c.l.b16 %v577
        %v2349 = vunpack.c.h.b16 %v577
        %v2350 = vunpack.c.l.b16 %v578
        %v2351 = vunpack.c.h.b16 %v578
        %v2352 = vunpack.c.l.b16 %v579
        %v2353 = vunpack.c.h.b16 %v579
        %v2354 = vunpack.c.l.b16 %v580
        %v2355 = vunpack.c.h.b16 %v580
        %v2356 = vunpack.c.l.b16 %v581
        %v2357 = vunpack.c.h.b16 %v581
        %v2358 = vunpack.c.l.b16 %v582
        %v2359 = vunpack.c.h.b16 %v582
        %v2360 = vunpack.c.l.b16 %v583
        %v2361 = vunpack.c.h.b16 %v583
        %v2362 = vunpack.c.l.b16 %v584
        %v2363 = vunpack.c.h.b16 %v584
        %v2364 = vunpack.c.l.b16 %v585
        %v2365 = vunpack.c.h.b16 %v585
        %v2366 = vunpack.c.l.b16 %v586
        %v2367 = vunpack.c.h.b16 %v586
        %v2368 = vunpack.c.l.b16 %v587
        %v2369 = vunpack.c.h.b16 %v587
        %v2370 = vunpack.c.l.b16 %v588
        %v2371 = vunpack.c.h.b16 %v588
        %v2372 = vunpack.c.l.b16 %v589
        %v2373 = vunpack.c.h.b16 %v589
        %v2374 = vunpack.c.l.b16 %v590
        %v2375 = vunpack.c.h.b16 %v590
        %v2376 = vunpack.c.l.b16 %v591
        %v2377 = vunpack.c.h.b16 %v591
        %v2378 = vunpack.c.l.b16 %v592
        %v2379 = vunpack.c.h.b16 %v592
        %v2380 = vunpack.c.l.b16 %v593
        %v2381 = vunpack.c.h.b16 %v593
        %v2382 = vunpack.c.l.b16 %v594
        %v2383 = vunpack.c.h.b16 %v594
        %v2384 = vunpack.c.l.b16 %v595
        %v2385 = vunpack.c.h.b16 %v595
        %v2386 = vunpack.c.l.b16 %v596
        %v2387 = vunpack.c.h.b16 %v596
        %v2388 = vunpack.c.l.b16 %v597
        %v2389 = vunpack.c.h.b16 %v597
        %v2390 = vunpack.c.l.b16 %v598
        %v2391 = vunpack.c.h.b16 %v598
        %v2392 = vunpack.c.l.b16 %v599
        %v2393 = vunpack.c.h.b16 %v599
        %v2394 = vunpack.c.l.b16 %v600
        %v2395 = vunpack.c.h.b16 %v600
        %v2396 = vunpack.c.l.b16 %v601
        %v2397 = vunpack.c.h.b16 %v601
        %v2398 = vunpack.c.l.b16 %v602
        %v2399 = vunpack.c.h.b16 %v602
        %v2400 = vunpack.c.l.b16 %v603
        %v2401 = vunpack.c.h.b16 %v603
        %v2402 = vunpack.c.l.b16 %v604
        %v2403 = vunpack.c.h.b16 %v604
        %v2404 = vunpack.c.l.b16 %v605
        %v2405 = vunpack.c.h.b16 %v605
        %v2406 = vunpack.c.l.b16 %v606
        %v2407 = vunpack.c.h.b16 %v606
        %v2408 = vunpack.c.l.b16 %v607
        %v2409 = vunpack.c.h.b16 %v607
        %v2410 = vunpack.c.l.b16 %v608
        %v2411 = vunpack.c.h.b16 %v608
        %v2412 = vunpack.c.l.b16 %v609
        %v2413 = vunpack.c.h.b16 %v609
        %v2414 = vunpack.c.l.b16 %v610
        %v2415 = vunpack.c.h.b16 %v610
        %v2416 = vunpack.c.l.b16 %v611
        %v2417 = vunpack.c.h.b16 %v611
        %v2418 = vunpack.c.l.b16 %v612
        %v2419 = vunpack.c.h.b16 %v612
        %v2420 = vunpack.c.l.b16 %v613
        %v2421 = vunpack.c.h.b16 %v613
        %v2422 = vunpack.c.l.b16 %v614
        %v2423 = vunpack.c.h.b16 %v614
        %v2424 = vunpack.c.l.b16 %v615
        %v2425 = vunpack.c.h.b16 %v615
        %v2426 = vunpack.c.l.b16 %v616
        %v2427 = vunpack.c.h.b16 %v616
        %v2428 = vunpack.c.l.b16 %v617
        %v2429 = vunpack.c.h.b16 %v617
        %v2430 = vunpack.c.l.b16 %v618
        %v2431 = vunpack.c.h.b16 %v618
        %v2432 = vunpack.c.l.b16 %v619
        %v2433 = vunpack.c.h.b16 %v619
        %v2434 = vunpack.c.l.b16 %v620
        %v2435 = vunpack.c.h.b16 %v620
        %v2436 = vunpack.c.l.b16 %v621
        %v2437 = vunpack.c.h.b16 %v621
        %v2438 = vunpack.c.l.b16 %v622
        %v2439 = vunpack.c.h.b16 %v622
        %v2440 = vunpack.c.l.b16 %v623
        %v2441 = vunpack.c.h.b16 %v623
        %v2442 = vunpack.c.l.b16 %v624
        %v2443 = vunpack.c.h.b16 %v624
        %v2444 = vunpack.c.l.b16 %v625
        %v2445 = vunpack.c.h.b16 %v625
        %v2446 = vunpack.c.l.b16 %v626
        %v2447 = vunpack.c.h.b16 %v626
        %v2448 = vunpack.c.l.b16 %v627
        %v2449 = vunpack.c.h.b16 %v627
        %v2450 = vunpack.c.l.b16 %v628
        %v2451 = vunpack.c.h.b16 %v628
        %v2452 = vunpack.c.l.b16 %v629
        %v2453 = vunpack.c.h.b16 %v629
        %v2454 = vunpack.c.l.b16 %v630
        %v2455 = vunpack.c.h.b16 %v630
        %v2456 = vunpack.c.l.b16 %v631
        %v2457 = vunpack.c.h.b16 %v631
        %v2458 = vunpack.c.l.b16 %v632
        %v2459 = vunpack.c.h.b16 %v632
        %v2460 = vunpack.c.l.b16 %v633
        %v2461 = vunpack.c.h.b16 %v633
        %v2462 = vunpack.c.l.b16 %v634
        %v2463 = vunpack.c.h.b16 %v634
        %v2464 = vunpack.c.l.b16 %v635
        %v2465 = vunpack.c.h.b16 %v635
        %v2466 = vunpack.c.l.b16 %v636
        %v2467 = vunpack.c.h.b16 %v636
        %v2468 = vunpack.c.l.b16 %v637
        %v2469 = vunpack.c.h.b16 %v637
        %v2470 = vunpack.c.l.b16 %v638
        %v2471 = vunpack.c.h.b16 %v638
        %v2472 = vunpack.c.l.b16 %v639
        %v2473 = vunpack.c.h.b16 %v639
        %v2474 = vunpack.c.l.b16 %v640
        %v2475 = vunpack.c.h.b16 %v640
        %v2476 = vunpack.c.l.b16 %v641
        %v2477 = vunpack.c.h.b16 %v641
        %v2478 = vunpack.c.l.b16 %v642
        %v2479 = vunpack.c.h.b16 %v642
        %v2480 = vunpack.c.l.b16 %v643
        %v2481 = vunpack.c.h.b16 %v643
        %v2482 = vunpack.c.l.b16 %v644
        %v2483 = vunpack.c.h.b16 %v644
        %v2484 = vunpack.c.l.b16 %v645
        %v2485 = vunpack.c.h.b16 %v645
        %v2486 = vunpack.c.l.b16 %v646
        %v2487 = vunpack.c.h.b16 %v646
        %v2488 = vunpack.c.l.b16 %v647
        %v2489 = vunpack.c.h.b16 %v647
        %v2490 = vunpack.c.l.b16 %v648
        %v2491 = vunpack.c.h.b16 %v648
        %v2492 = vunpack.c.l.b16 %v649
        %v2493 = vunpack.c.h.b16 %v649
        %v2494 = vunpack.c.l.b16 %v650
        %v2495 = vunpack.c.h.b16 %v650
        %v2496 = vunpack.c.l.b16 %v651
        %v2497 = vunpack.c.h.b16 %v651
        %v2498 = vunpack.c.l.b16 %v652
        %v2499 = vunpack.c.h.b16 %v652
        %v2500 = vunpack.c.l.b16 %v653
        %v2501 = vunpack.c.h.b16 %v653
        %v2502 = vunpack.c.l.b16 %v654
        %v2503 = vunpack.c.h.b16 %v654
        %v2504 = vunpack.c.l.b16 %v655
        %v2505 = vunpack.c.h.b16 %v655
        %v2506 = vunpack.c.l.b16 %v656
        %v2507 = vunpack.c.h.b16 %v656
        %v2508 = vunpack.c.l.b16 %v657
        %v2509 = vunpack.c.h.b16 %v657
        %v2510 = vunpack.c.l.b16 %v658
        %v2511 = vunpack.c.h.b16 %v658
        %v2512 = vunpack.c.l.b16 %v659
        %v2513 = vunpack.c.h.b16 %v659
        %v2514 = vunpack.c.l.b16 %v660
        %v2515 = vunpack.c.h.b16 %v660
        %v2516 = vunpack.c.l.b16 %v661
        %v2517 = vunpack.c.h.b16 %v661
        %v2518 = vunpack.c.l.b16 %v662
        %v2519 = vunpack.c.h.b16 %v662
        %v2520 = vunpack.c.l.b16 %v663
        %v2521 = vunpack.c.h.b16 %v663
        %v2522 = vunpack.c.l.b16 %v664
        %v2523 = vunpack.c.h.b16 %v664
        %v2524 = vunpack.c.l.b16 %v665
        %v2525 = vunpack.c.h.b16 %v665
        %v2526 = vunpack.c.l.b16 %v666
        %v2527 = vunpack.c.h.b16 %v666
        %v2528 = vunpack.c.l.b16 %v667
        %v2529 = vunpack.c.h.b16 %v667
        %v2530 = vunpack.c.l.b16 %v668
        %v2531 = vunpack.c.h.b16 %v668
        %v2532 = vunpack.c.l.b16 %v669
        %v2533 = vunpack.c.h.b16 %v669
        %v2534 = vunpack.c.l.b16 %v670
        %v2535 = vunpack.c.h.b16 %v670
        %v2536 = vunpack.c.l.b16 %v671
        %v2537 = vunpack.c.h.b16 %v671
        %v2538 = vunpack.c.l.b16 %v672
        %v2539 = vunpack.c.h.b16 %v672
        %v2540 = vunpack.c.l.b16 %v673
        %v2541 = vunpack.c.h.b16 %v673
        %v2542 = vunpack.c.l.b16 %v674
        %v2543 = vunpack.c.h.b16 %v674
        %v2544 = vunpack.c.l.b16 %v675
        %v2545 = vunpack.c.h.b16 %v675
        %v2546 = vunpack.c.l.b16 %v676
        %v2547 = vunpack.c.h.b16 %v676
        %v2548 = vunpack.c.l.b16 %v677
        %v2549 = vunpack.c.h.b16 %v677
        %v2550 = vunpack.c.l.b16 %v678
        %v2551 = vunpack.c.h.b16 %v678
        %v2552 = vunpack.c.l.b16 %v679
        %v2553 = vunpack.c.h.b16 %v679
        %v2554 = vunpack.c.l.b16 %v680
        %v2555 = vunpack.c.h.b16 %v680
        %v2556 = vunpack.c.l.b16 %v681
        %v2557 = vunpack.c.h.b16 %v681
        %v2558 = vunpack.c.l.b16 %v682
        %v2559 = vunpack.c.h.b16 %v682
        %v2560 = vunpack.c.l.b16 %v683
        %v2561 = vunpack.c.h.b16 %v683
        %v2562 = vunpack.c.l.b16 %v684
        %v2563 = vunpack.c.h.b16 %v684
        %v2564 = vunpack.c.l.b16 %v685
        %v2565 = vunpack.c.h.b16 %v685
        %v2566 = vunpack.c.l.b16 %v686
        %v2567 = vunpack.c.h.b16 %v686
        %v2568 = vunpack.c.l.b16 %v687
        %v2569 = vunpack.c.h.b16 %v687
        %v2570 = vunpack.c.l.b16 %v688
        %v2571 = vunpack.c.h.b16 %v688
        %v2572 = vunpack.c.l.b16 %v689
        %v2573 = vunpack.c.h.b16 %v689
        %v2574 = vunpack.c.l.b16 %v690
        %v2575 = vunpack.c.h.b16 %v690
        %v2576 = vunpack.c.l.b16 %v691
        %v2577 = vunpack.c.h.b16 %v691
        %v2578 = vunpack.c.l.b16 %v692
        %v2579 = vunpack.c.h.b16 %v692
        %v2580 = vunpack.c.l.b16 %v693
        %v2581 = vunpack.c.h.b16 %v693
        %v2582 = vunpack.c.l.b16 %v694
        %v2583 = vunpack.c.h.b16 %v694
        %v2584 = vunpack.c.l.b16 %v695
        %v2585 = vunpack.c.h.b16 %v695
        %v2586 = vunpack.c.l.b16 %v696
        %v2587 = vunpack.c.h.b16 %v696
        %v2588 = vunpack.c.l.b16 %v697
        %v2589 = vunpack.c.h.b16 %v697
        %v2590 = vunpack.c.l.b16 %v698
        %v2591 = vunpack.c.h.b16 %v698
        %v2592 = vunpack.c.l.b16 %v699
        %v2593 = vunpack.c.h.b16 %v699
        %v2594 = vunpack.c.l.b16 %v700
        %v2595 = vunpack.c.h.b16 %v700
        %v2596 = vunpack.c.l.b16 %v701
        %v2597 = vunpack.c.h.b16 %v701
        %v2598 = vunpack.c.l.b16 %v702
        %v2599 = vunpack.c.h.b16 %v702
        %v2600 = vunpack.c.l.b16 %v703
        %v2601 = vunpack.c.h.b16 %v703
        %v2602 = vunpack.c.l.b16 %v704
        %v2603 = vunpack.c.h.b16 %v704
        %v2604 = vunpack.c.l.b16 %v705
        %v2605 = vunpack.c.h.b16 %v705
        %v2606 = vunpack.c.l.b16 %v706
        %v2607 = vunpack.c.h.b16 %v706
        %v2608 = vunpack.c.l.b16 %v707
        %v2609 = vunpack.c.h.b16 %v707
        %v2610 = vunpack.c.l.b16 %v708
        %v2611 = vunpack.c.h.b16 %v708
        %v2612 = vunpack.c.l.b16 %v709
        %v2613 = vunpack.c.h.b16 %v709
        %v2614 = vunpack.c.l.b16 %v710
        %v2615 = vunpack.c.h.b16 %v710
        %v2616 = vunpack.c.l.b16 %v711
        %v2617 = vunpack.c.h.b16 %v711
        %v2618 = vunpack.c.l.b16 %v712
        %v2619 = vunpack.c.h.b16 %v712
        %v2620 = vunpack.c.l.b16 %v713
        %v2621 = vunpack.c.h.b16 %v713
        %v2622 = vunpack.c.l.b16 %v714
        %v2623 = vunpack.c.h.b16 %v714
        %v2624 = vunpack.c.l.b16 %v715
        %v2625 = vunpack.c.h.b16 %v715
        %v2626 = vunpack.c.l.b16 %v716
        %v2627 = vunpack.c.h.b16 %v716
        %v2628 = vunpack.c.l.b16 %v717
        %v2629 = vunpack.c.h.b16 %v717
        %v2630 = vunpack.c.l.b16 %v718
        %v2631 = vunpack.c.h.b16 %v718
        %v2632 = vunpack.c.l.b16 %v719
        %v2633 = vunpack.c.h.b16 %v719
        %v2634 = vunpack.c.l.b16 %v720
        %v2635 = vunpack.c.h.b16 %v720
        %v2636 = vunpack.c.l.b16 %v721
        %v2637 = vunpack.c.h.b16 %v721
        %v2638 = vunpack.c.l.b16 %v722
        %v2639 = vunpack.c.h.b16 %v722
        %v2640 = vunpack.c.l.b16 %v723
        %v2641 = vunpack.c.h.b16 %v723
        %v2642 = vunpack.c.l.b16 %v724
        %v2643 = vunpack.c.h.b16 %v724
        %v2644 = vunpack.c.l.b16 %v725
        %v2645 = vunpack.c.h.b16 %v725
        %v2646 = vunpack.c.l.b16 %v726
        %v2647 = vunpack.c.h.b16 %v726
        %v2648 = vunpack.c.l.b16 %v727
        %v2649 = vunpack.c.h.b16 %v727
        %v2650 = vunpack.c.l.b16 %v728
        %v2651 = vunpack.c.h.b16 %v728
        %v2652 = vunpack.c.l.b16 %v729
        %v2653 = vunpack.c.h.b16 %v729
        %v2654 = vunpack.c.l.b16 %v730
        %v2655 = vunpack.c.h.b16 %v730
        %v2656 = vunpack.c.l.b16 %v731
        %v2657 = vunpack.c.h.b16 %v731
        %v2658 = vunpack.c.l.b16 %v732
        %v2659 = vunpack.c.h.b16 %v732
        %v2660 = vunpack.c.l.b16 %v733
        %v2661 = vunpack.c.h.b16 %v733
        %v2662 = vunpack.c.l.b16 %v734
        %v2663 = vunpack.c.h.b16 %v734
        %v2664 = vunpack.c.l.b16 %v735
        %v2665 = vunpack.c.h.b16 %v735
        %v2666 = vunpack.c.l.b16 %v736
        %v2667 = vunpack.c.h.b16 %v736
        %v2668 = vunpack.c.l.b16 %v737
        %v2669 = vunpack.c.h.b16 %v737
        %v2670 = vunpack.c.l.b16 %v738
        %v2671 = vunpack.c.h.b16 %v738
        %v2672 = vunpack.c.l.b16 %v739
        %v2673 = vunpack.c.h.b16 %v739
        %v2674 = vunpack.c.l.b16 %v740
        %v2675 = vunpack.c.h.b16 %v740
        %v2676 = vunpack.c.l.b16 %v741
        %v2677 = vunpack.c.h.b16 %v741
        %v2678 = vunpack.c.l.b16 %v742
        %v2679 = vunpack.c.h.b16 %v742
        %v2680 = vunpack.c.l.b16 %v743
        %v2681 = vunpack.c.h.b16 %v743
        %v2682 = vunpack.c.l.b16 %v744
        %v2683 = vunpack.c.h.b16 %v744
        %v2684 = vunpack.c.l.b16 %v745
        %v2685 = vunpack.c.h.b16 %v745
        %v2686 = vunpack.c.l.b16 %v746
        %v2687 = vunpack.c.h.b16 %v746
        %v2688 = vunpack.c.l.b16 %v747
        %v2689 = vunpack.c.h.b16 %v747
        %v2690 = vunpack.c.l.b16 %v748
        %v2691 = vunpack.c.h.b16 %v748
        %v2692 = vunpack.c.l.b16 %v749
        %v2693 = vunpack.c.h.b16 %v749
        %v2694 = vunpack.c.l.b16 %v750
        %v2695 = vunpack.c.h.b16 %v750
        %v2696 = vunpack.c.l.b16 %v751
        %v2697 = vunpack.c.h.b16 %v751
        %v2698 = vunpack.c.l.b16 %v752
        %v2699 = vunpack.c.h.b16 %v752
        %v2700 = vunpack.c.l.b16 %v753
        %v2701 = vunpack.c.h.b16 %v753
        %v2702 = vunpack.c.l.b16 %v754
        %v2703 = vunpack.c.h.b16 %v754
        %v2704 = vunpack.c.l.b16 %v755
        %v2705 = vunpack.c.h.b16 %v755
        %v2706 = vunpack.c.l.b16 %v756
        %v2707 = vunpack.c.h.b16 %v756
        %v2708 = vunpack.c.l.b16 %v757
        %v2709 = vunpack.c.h.b16 %v757
        %v2710 = vunpack.c.l.b16 %v758
        %v2711 = vunpack.c.h.b16 %v758
        %v2712 = vunpack.c.l.b16 %v759
        %v2713 = vunpack.c.h.b16 %v759
        %v2714 = vunpack.c.l.b16 %v760
        %v2715 = vunpack.c.h.b16 %v760
        %v2716 = vunpack.c.l.b16 %v761
        %v2717 = vunpack.c.h.b16 %v761
        %v2718 = vunpack.c.l.b16 %v762
        %v2719 = vunpack.c.h.b16 %v762
        %v2720 = vunpack.c.l.b16 %v763
        %v2721 = vunpack.c.h.b16 %v763
        %v2722 = vunpack.c.l.b16 %v764
        %v2723 = vunpack.c.h.b16 %v764
        %v2724 = vunpack.c.l.b16 %v765
        %v2725 = vunpack.c.h.b16 %v765
        %v2726 = vunpack.c.l.b16 %v766
        %v2727 = vunpack.c.h.b16 %v766
        %v2728 = vunpack.c.l.b16 %v767
        %v2729 = vunpack.c.h.b16 %v767
        %v2730 = vunpack.c.l.b16 %v768
        %v2731 = vunpack.c.h.b16 %v768
        %v2732 = vunpack.c.l.b16 %v769
        %v2733 = vunpack.c.h.b16 %v769
        %v2734 = vunpack.c.l.b16 %v770
        %v2735 = vunpack.c.h.b16 %v770
        %v2736 = vunpack.c.l.b16 %v771
        %v2737 = vunpack.c.h.b16 %v771
        %v2738 = vunpack.c.l.b16 %v772
        %v2739 = vunpack.c.h.b16 %v772
        %v2740 = vunpack.c.l.b16 %v773
        %v2741 = vunpack.c.h.b16 %v773
        %v2742 = vunpack.c.l.b16 %v774
        %v2743 = vunpack.c.h.b16 %v774
        %v2744 = vunpack.c.l.b16 %v775
        %v2745 = vunpack.c.h.b16 %v775
        %v2746 = vunpack.c.l.b16 %v776
        %v2747 = vunpack.c.h.b16 %v776
        %v2748 = vunpack.c.l.b16 %v777
        %v2749 = vunpack.c.h.b16 %v777
        %v2750 = vunpack.c.l.b16 %v778
        %v2751 = vunpack.c.h.b16 %v778
        %v2752 = vunpack.c.l.b16 %v779
        %v2753 = vunpack.c.h.b16 %v779
        %v2754 = vunpack.c.l.b16 %v780
        %v2755 = vunpack.c.h.b16 %v780
        %v2756 = vunpack.c.l.b16 %v781
        %v2757 = vunpack.c.h.b16 %v781
        %v2758 = vunpack.c.l.b16 %v782
        %v2759 = vunpack.c.h.b16 %v782
        %v2760 = vunpack.c.l.b16 %v783
        %v2761 = vunpack.c.h.b16 %v783
        %v2762 = vunpack.c.l.b16 %v784
        %v2763 = vunpack.c.h.b16 %v784
        %v2764 = vunpack.c.l.b16 %v785
        %v2765 = vunpack.c.h.b16 %v785
        %v2766 = vunpack.c.l.b16 %v786
        %v2767 = vunpack.c.h.b16 %v786
        %v2768 = vunpack.c.l.b16 %v787
        %v2769 = vunpack.c.h.b16 %v787
        %v2770 = vunpack.c.l.b16 %v788
        %v2771 = vunpack.c.h.b16 %v788
        %v2772 = vunpack.c.l.b16 %v789
        %v2773 = vunpack.c.h.b16 %v789
        %v2774 = vunpack.c.l.b16 %v790
        %v2775 = vunpack.c.h.b16 %v790
        %v2776 = vunpack.c.l.b16 %v791
        %v2777 = vunpack.c.h.b16 %v791
        %v2778 = vunpack.c.l.b16 %v792
        %v2779 = vunpack.c.h.b16 %v792
        %v2780 = vunpack.c.l.b16 %v793
        %v2781 = vunpack.c.h.b16 %v793
        %v2782 = vunpack.c.l.b16 %v794
        %v2783 = vunpack.c.h.b16 %v794
        %v2784 = vunpack.c.l.b16 %v795
        %v2785 = vunpack.c.h.b16 %v795
        %v2786 = vunpack.c.l.b16 %v796
        %v2787 = vunpack.c.h.b16 %v796
        %v2788 = vunpack.c.l.b16 %v797
        %v2789 = vunpack.c.h.b16 %v797
        %v2790 = vunpack.c.l.b16 %v798
        %v2791 = vunpack.c.h.b16 %v798
        %v2792 = vunpack.c.l.b16 %v799
        %v2793 = vunpack.c.h.b16 %v799
        %v2794 = vunpack.c.l.b16 %v800
        %v2795 = vunpack.c.h.b16 %v800
        %v2796 = vunpack.c.l.b16 %v801
        %v2797 = vunpack.c.h.b16 %v801
        %v2798 = vunpack.c.l.b16 %v802
        %v2799 = vunpack.c.h.b16 %v802
        %v2800 = vunpack.c.l.b16 %v803
        %v2801 = vunpack.c.h.b16 %v803
        %v2802 = vunpack.c.l.b16 %v804
        %v2803 = vunpack.c.h.b16 %v804
        %v2804 = vunpack.c.l.b16 %v805
        %v2805 = vunpack.c.h.b16 %v805
        %v2806 = vunpack.c.l.b16 %v806
        %v2807 = vunpack.c.h.b16 %v806
        %v2808 = vunpack.c.l.b16 %v807
        %v2809 = vunpack.c.h.b16 %v807
        %v2810 = vunpack.c.l.b16 %v808
        %v2811 = vunpack.c.h.b16 %v808
        %v2812 = vunpack.c.l.b16 %v809
        %v2813 = vunpack.c.h.b16 %v809
        %v2814 = vunpack.c.l.b16 %v810
        %v2815 = vunpack.c.h.b16 %v810
        %v2816 = vunpack.c.l.b16 %v811
        %v2817 = vunpack.c.h.b16 %v811
        %v2818 = vunpack.c.l.b16 %v812
        %v2819 = vunpack.c.h.b16 %v812
        %v2820 = vunpack.c.l.b16 %v813
        %v2821 = vunpack.c.h.b16 %v813
        %v2822 = vunpack.c.l.b16 %v814
        %v2823 = vunpack.c.h.b16 %v814
        %v2824 = vunpack.c.l.b16 %v815
        %v2825 = vunpack.c.h.b16 %v815
        %v2826 = vunpack.c.l.b16 %v816
        %v2827 = vunpack.c.h.b16 %v816
        %v2828 = vunpack.c.l.b16 %v817
        %v2829 = vunpack.c.h.b16 %v817
        %v2830 = vunpack.c.l.b16 %v818
        %v2831 = vunpack.c.h.b16 %v818
        %v2832 = vunpack.c.l.b16 %v819
        %v2833 = vunpack.c.h.b16 %v819
        %v2834 = vunpack.c.l.b16 %v820
        %v2835 = vunpack.c.h.b16 %v820
        %v2836 = vunpack.c.l.b16 %v821
        %v2837 = vunpack.c.h.b16 %v821
        %v2838 = vunpack.c.l.b16 %v822
        %v2839 = vunpack.c.h.b16 %v822
        %v2840 = vunpack.c.l.b16 %v823
        %v2841 = vunpack.c.h.b16 %v823
        %v2842 = vunpack.c.l.b16 %v824
        %v2843 = vunpack.c.h.b16 %v824
        %v2844 = vunpack.c.l.b16 %v825
        %v2845 = vunpack.c.h.b16 %v825
        %v2846 = vunpack.c.l.b16 %v826
        %v2847 = vunpack.c.h.b16 %v826
        %v2848 = vunpack.c.l.b16 %v827
        %v2849 = vunpack.c.h.b16 %v827
        %v2850 = vunpack.c.l.b16 %v828
        %v2851 = vunpack.c.h.b16 %v828
        %v2852 = vunpack.c.l.b16 %v829
        %v2853 = vunpack.c.h.b16 %v829
        %v2854 = vunpack.c.l.b16 %v830
        %v2855 = vunpack.c.h.b16 %v830
        %v2856 = vunpack.c.l.b16 %v831
        %v2857 = vunpack.c.h.b16 %v831
        %v2858 = vunpack.c.l.b16 %v832
        %v2859 = vunpack.c.h.b16 %v832
        %v2860 = vunpack.c.l.b16 %v833
        %v2861 = vunpack.c.h.b16 %v833
        %v2862 = vunpack.c.l.b16 %v834
        %v2863 = vunpack.c.h.b16 %v834
        %v2864 = vunpack.c.l.b16 %v835
        %v2865 = vunpack.c.h.b16 %v835
        %v2866 = vunpack.c.l.b16 %v836
        %v2867 = vunpack.c.h.b16 %v836
        %v2868 = vunpack.c.l.b16 %v837
        %v2869 = vunpack.c.h.b16 %v837
        %v2870 = vunpack.c.l.b16 %v838
        %v2871 = vunpack.c.h.b16 %v838
        %v2872 = vunpack.c.l.b16 %v839
        %v2873 = vunpack.c.h.b16 %v839
        %v2874 = vunpack.c.l.b16 %v840
        %v2875 = vunpack.c.h.b16 %v840
        %v2876 = vunpack.c.l.b16 %v841
        %v2877 = vunpack.c.h.b16 %v841
        %v2878 = vunpack.c.l.b16 %v842
        %v2879 = vunpack.c.h.b16 %v842
        %v2880 = vunpack.c.l.b16 %v843
        %v2881 = vunpack.c.h.b16 %v843
        %v2882 = vunpack.c.l.b16 %v844
        %v2883 = vunpack.c.h.b16 %v844
        %v2884 = vunpack.c.l.b16 %v845
        %v2885 = vunpack.c.h.b16 %v845
        %v2886 = vunpack.c.l.b16 %v846
        %v2887 = vunpack.c.h.b16 %v846
        %v2888 = vunpack.c.l.b16 %v847
        %v2889 = vunpack.c.h.b16 %v847
        %v2890 = vunpack.c.l.b16 %v848
        %v2891 = vunpack.c.h.b16 %v848
        %v2892 = vunpack.c.l.b16 %v849
        %v2893 = vunpack.c.h.b16 %v849
        %v2894 = vunpack.c.l.b16 %v850
        %v2895 = vunpack.c.h.b16 %v850
        %v2896 = vunpack.c.l.b16 %v851
        %v2897 = vunpack.c.h.b16 %v851
        %v2898 = vunpack.c.l.b16 %v852
        %v2899 = vunpack.c.h.b16 %v852
        %v2900 = vunpack.c.l.b16 %v853
        %v2901 = vunpack.c.h.b16 %v853
        %v2902 = vunpack.c.l.b16 %v854
        %v2903 = vunpack.c.h.b16 %v854
        %v2904 = vunpack.c.l.b16 %v855
        %v2905 = vunpack.c.h.b16 %v855
        %v2906 = vunpack.c.l.b16 %v856
        %v2907 = vunpack.c.h.b16 %v856
        %v2908 = vunpack.c.l.b16 %v857
        %v2909 = vunpack.c.h.b16 %v857
        %v2910 = vunpack.c.l.b16 %v858
        %v2911 = vunpack.c.h.b16 %v858
        %v2912 = vunpack.c.l.b16 %v859
        %v2913 = vunpack.c.h.b16 %v859
        %v2914 = vunpack.c.l.b16 %v860
        %v2915 = vunpack.c.h.b16 %v860
        %v2916 = vunpack.c.l.b16 %v861
        %v2917 = vunpack.c.h.b16 %v861
        %v2918 = vunpack.c.l.b16 %v862
        %v2919 = vunpack.c.h.b16 %v862
        %v2920 = vunpack.c.l.b16 %v863
        %v2921 = vunpack.c.h.b16 %v863
        %v2922 = vunpack.c.l.b16 %v864
        %v2923 = vunpack.c.h.b16 %v864
        %v2924 = vunpack.c.l.b16 %v865
        %v2925 = vunpack.c.h.b16 %v865
        %v2926 = vunpack.c.l.b16 %v866
        %v2927 = vunpack.c.h.b16 %v866
        %v2928 = vunpack.c.l.b16 %v867
        %v2929 = vunpack.c.h.b16 %v867
        %v2930 = vunpack.c.l.b16 %v868
        %v2931 = vunpack.c.h.b16 %v868
        %v2932 = vunpack.c.l.b16 %v869
        %v2933 = vunpack.c.h.b16 %v869
        %v2934 = vunpack.c.l.b16 %v870
        %v2935 = vunpack.c.h.b16 %v870
        %v2936 = vunpack.c.l.b16 %v871
        %v2937 = vunpack.c.h.b16 %v871
        %v2938 = vunpack.c.l.b16 %v872
        %v2939 = vunpack.c.h.b16 %v872
        %v2940 = vunpack.c.l.b16 %v873
        %v2941 = vunpack.c.h.b16 %v873
        %v2942 = vunpack.c.l.b16 %v874
        %v2943 = vunpack.c.h.b16 %v874
        %v2944 = vunpack.c.l.b16 %v875
        %v2945 = vunpack.c.h.b16 %v875
        %v2946 = vunpack.c.l.b16 %v876
        %v2947 = vunpack.c.h.b16 %v876
        %v2948 = vunpack.c.l.b16 %v877
        %v2949 = vunpack.c.h.b16 %v877
        %v2950 = vunpack.c.l.b16 %v878
        %v2951 = vunpack.c.h.b16 %v878
        %v2952 = vunpack.c.l.b16 %v879
        %v2953 = vunpack.c.h.b16 %v879
        %v2954 = vunpack.c.l.b16 %v880
        %v2955 = vunpack.c.h.b16 %v880
        %v2956 = vunpack.c.l.b16 %v881
        %v2957 = vunpack.c.h.b16 %v881
        %v2958 = vunpack.c.l.b16 %v882
        %v2959 = vunpack.c.h.b16 %v882
        %v2960 = vunpack.c.l.b16 %v883
        %v2961 = vunpack.c.h.b16 %v883
        %v2962 = vunpack.c.l.b16 %v884
        %v2963 = vunpack.c.h.b16 %v884
        %v2964 = vunpack.c.l.b16 %v885
        %v2965 = vunpack.c.h.b16 %v885
        %v2966 = vunpack.c.l.b16 %v886
        %v2967 = vunpack.c.h.b16 %v886
        %v2968 = vunpack.c.l.b16 %v887
        %v2969 = vunpack.c.h.b16 %v887
        %v2970 = vunpack.c.l.b16 %v888
        %v2971 = vunpack.c.h.b16 %v888
        %v2972 = vunpack.c.l.b16 %v889
        %v2973 = vunpack.c.h.b16 %v889
        %v2974 = vunpack.c.l.b16 %v890
        %v2975 = vunpack.c.h.b16 %v890
        %v2976 = vunpack.c.l.b16 %v891
        %v2977 = vunpack.c.h.b16 %v891
        %v2978 = vunpack.c.l.b16 %v892
        %v2979 = vunpack.c.h.b16 %v892
        %v2980 = vunpack.c.l.b16 %v893
        %v2981 = vunpack.c.h.b16 %v893
        %v2982 = vunpack.c.l.b16 %v894
        %v2983 = vunpack.c.h.b16 %v894
        %v2984 = vunpack.c.l.b16 %v895
        %v2985 = vunpack.c.h.b16 %v895
        %v2986 = vunpack.c.l.b16 %v896
        %v2987 = vunpack.c.h.b16 %v896
        %v2988 = vunpack.c.l.b16 %v897
        %v2989 = vunpack.c.h.b16 %v897
        %v2990 = vunpack.c.l.b16 %v898
        %v2991 = vunpack.c.h.b16 %v898
        %v2992 = vunpack.c.l.b16 %v899
        %v2993 = vunpack.c.h.b16 %v899
        %v2994 = vunpack.c.l.b16 %v900
        %v2995 = vunpack.c.h.b16 %v900
        %v2996 = vunpack.c.l.b16 %v901
        %v2997 = vunpack.c.h.b16 %v901
        %v2998 = vunpack.c.l.b16 %v902
        %v2999 = vunpack.c.h.b16 %v902
        %v3000 = vunpack.c.l.b16 %v903
        %v3001 = vunpack.c.h.b16 %v903
        %v3002 = vunpack.c.l.b16 %v904
        %v3003 = vunpack.c.h.b16 %v904
        %v3004 = vunpack.c.l.b16 %v905
        %v3005 = vunpack.c.h.b16 %v905
        %v3006 = vunpack.c.l.b16 %v906
        %v3007 = vunpack.c.h.b16 %v906
        %v3008 = vunpack.c.l.b16 %v907
        %v3009 = vunpack.c.h.b16 %v907
        %v3010 = vunpack.c.l.b16 %v908
        %v3011 = vunpack.c.h.b16 %v908
        %v3012 = vunpack.c.l.b16 %v909
        %v3013 = vunpack.c.h.b16 %v909
        %v3014 = vunpack.c.l.b16 %v910
        %v3015 = vunpack.c.h.b16 %v910
        %v3016 = vunpack.c.l.b16 %v911
        %v3017 = vunpack.c.h.b16 %v911
        %v3018 = vunpack.c.l.b16 %v912
        %v3019 = vunpack.c.h.b16 %v912
        %v3020 = vunpack.c.l.b16 %v913
        %v3021 = vunpack.c.h.b16 %v913
        %v3022 = vunpack.c.l.b16 %v914
        %v3023 = vunpack.c.h.b16 %v914
        %v3024 = vunpack.c.l.b16 %v915
        %v3025 = vunpack.c.h.b16 %v915
        %v3026 = vunpack.c.l.b16 %v916
        %v3027 = vunpack.c.h.b16 %v916
        %v3028 = vunpack.c.l.b16 %v917
        %v3029 = vunpack.c.h.b16 %v917
        %v3030 = vunpack.c.l.b16 %v918
        %v3031 = vunpack.c.h.b16 %v918
        %v3032 = vunpack.c.l.b16 %v919
        %v3033 = vunpack.c.h.b16 %v919
        %v3034 = vunpack.c.l.b16 %v920
        %v3035 = vunpack.c.h.b16 %v920
        %v3036 = vunpack.c.l.b16 %v921
        %v3037 = vunpack.c.h.b16 %v921
        %v3038 = vunpack.c.l.b16 %v922
        %v3039 = vunpack.c.h.b16 %v922
        %v3040 = vunpack.c.l.b16 %v923
        %v3041 = vunpack.c.h.b16 %v923
        %v3042 = vunpack.c.l.b16 %v924
        %v3043 = vunpack.c.h.b16 %v924
        %v3044 = vunpack.c.l.b16 %v925
        %v3045 = vunpack.c.h.b16 %v925
        %v3046 = vunpack.c.l.b16 %v926
        %v3047 = vunpack.c.h.b16 %v926
        %v3048 = vunpack.c.l.b16 %v927
        %v3049 = vunpack.c.h.b16 %v927
        %v3050 = vunpack.c.l.b16 %v928
        %v3051 = vunpack.c.h.b16 %v928
        %v3052 = vunpack.c.l.b16 %v929
        %v3053 = vunpack.c.h.b16 %v929
        %v3054 = vunpack.c.l.b16 %v930
        %v3055 = vunpack.c.h.b16 %v930
        %v3056 = vunpack.c.l.b16 %v931
        %v3057 = vunpack.c.h.b16 %v931
        %v3058 = vunpack.c.l.b16 %v932
        %v3059 = vunpack.c.h.b16 %v932
        %v3060 = vunpack.c.l.b16 %v933
        %v3061 = vunpack.c.h.b16 %v933
        %v3062 = vunpack.c.l.b16 %v934
        %v3063 = vunpack.c.h.b16 %v934
        %v3064 = vunpack.c.l.b16 %v935
        %v3065 = vunpack.c.h.b16 %v935
        %v3066 = vunpack.c.l.b16 %v936
        %v3067 = vunpack.c.h.b16 %v936
        %v3068 = vunpack.c.l.b16 %v937
        %v3069 = vunpack.c.h.b16 %v937
        %v3070 = vunpack.c.l.b16 %v938
        %v3071 = vunpack.c.h.b16 %v938
        %v3072 = vunpack.c.l.b16 %v939
        %v3073 = vunpack.c.h.b16 %v939
        %v3074 = vunpack.c.l.b16 %v940
        %v3075 = vunpack.c.h.b16 %v940
        %v3076 = vunpack.c.l.b16 %v941
        %v3077 = vunpack.c.h.b16 %v941
        %v3078 = vunpack.c.l.b16 %v942
        %v3079 = vunpack.c.h.b16 %v942
        %v3080 = vunpack.c.l.b16 %v943
        %v3081 = vunpack.c.h.b16 %v943
        %v3082 = vunpack.c.l.b16 %v944
        %v3083 = vunpack.c.h.b16 %v944
        %v3084 = vunpack.c.l.b16 %v945
        %v3085 = vunpack.c.h.b16 %v945
        %v3086 = vunpack.c.l.b16 %v946
        %v3087 = vunpack.c.h.b16 %v946
        %v3088 = vunpack.c.l.b16 %v947
        %v3089 = vunpack.c.h.b16 %v947
        %v3090 = vunpack.c.l.b16 %v948
        %v3091 = vunpack.c.h.b16 %v948
        %v3092 = vunpack.c.l.b16 %v949
        %v3093 = vunpack.c.h.b16 %v949
        %v3094 = vunpack.c.l.b16 %v950
        %v3095 = vunpack.c.h.b16 %v950
        %v3096 = vunpack.c.l.b16 %v951
        %v3097 = vunpack.c.h.b16 %v951
        %v3098 = vunpack.c.l.b16 %v952
        %v3099 = vunpack.c.h.b16 %v952
        %v3100 = vunpack.c.l.b16 %v953
        %v3101 = vunpack.c.h.b16 %v953
        %v3102 = vunpack.c.l.b16 %v954
        %v3103 = vunpack.c.h.b16 %v954
        %v3104 = vunpack.c.l.b16 %v955
        %v3105 = vunpack.c.h.b16 %v955
        %v3106 = vunpack.c.l.b16 %v956
        %v3107 = vunpack.c.h.b16 %v956
        %v3108 = vunpack.c.l.b16 %v957
        %v3109 = vunpack.c.h.b16 %v957
        %v3110 = vunpack.c.l.b16 %v958
        %v3111 = vunpack.c.h.b16 %v958
        %v3112 = vunpack.c.l.b16 %v959
        %v3113 = vunpack.c.h.b16 %v959
        %v3114 = vunpack.c.l.b16 %v960
        %v3115 = vunpack.c.h.b16 %v960
        %v3116 = vunpack.c.l.b16 %v961
        %v3117 = vunpack.c.h.b16 %v961
        %v3118 = vunpack.c.l.b16 %v962
        %v3119 = vunpack.c.h.b16 %v962
        %v3120 = vunpack.c.l.b16 %v963
        %v3121 = vunpack.c.h.b16 %v963
        %v3122 = vunpack.c.l.b16 %v964
        %v3123 = vunpack.c.h.b16 %v964
        %v3124 = vunpack.c.l.b16 %v965
        %v3125 = vunpack.c.h.b16 %v965
        %v3126 = vunpack.c.l.b16 %v966
        %v3127 = vunpack.c.h.b16 %v966
        %v3128 = vunpack.c.l.b16 %v967
        %v3129 = vunpack.c.h.b16 %v967
        %v3130 = vunpack.c.l.b16 %v968
        %v3131 = vunpack.c.h.b16 %v968
        %v3132 = vunpack.c.l.b16 %v969
        %v3133 = vunpack.c.h.b16 %v969
        %v3134 = vunpack.c.l.b16 %v970
        %v3135 = vunpack.c.h.b16 %v970
        %v3136 = vunpack.c.l.b16 %v971
        %v3137 = vunpack.c.h.b16 %v971
        %v3138 = vunpack.c.l.b16 %v972
        %v3139 = vunpack.c.h.b16 %v972
        %v3140 = vunpack.c.l.b16 %v973
        %v3141 = vunpack.c.h.b16 %v973
        %v3142 = vunpack.c.l.b16 %v974
        %v3143 = vunpack.c.h.b16 %v974
        %v3144 = vunpack.c.l.b16 %v975
        %v3145 = vunpack.c.h.b16 %v975
        %v3146 = vunpack.c.l.b16 %v976
        %v3147 = vunpack.c.h.b16 %v976
        %v3148 = vunpack.c.l.b16 %v977
        %v3149 = vunpack.c.h.b16 %v977
        %v3150 = vunpack.c.l.b16 %v978
        %v3151 = vunpack.c.h.b16 %v978
        %v3152 = vunpack.c.l.b16 %v979
        %v3153 = vunpack.c.h.b16 %v979
        %v3154 = vunpack.c.l.b16 %v980
        %v3155 = vunpack.c.h.b16 %v980
        %v3156 = vunpack.c.l.b16 %v981
        %v3157 = vunpack.c.h.b16 %v981
        %v3158 = vunpack.c.l.b16 %v982
        %v3159 = vunpack.c.h.b16 %v982
        %v3160 = vunpack.c.l.b16 %v983
        %v3161 = vunpack.c.h.b16 %v983
        %v3162 = vunpack.c.l.b16 %v984
        %v3163 = vunpack.c.h.b16 %v984
        %v3164 = vunpack.c.l.b16 %v985
        %v3165 = vunpack.c.h.b16 %v985
        %v3166 = vunpack.c.l.b16 %v986
        %v3167 = vunpack.c.h.b16 %v986
        %v3168 = vunpack.c.l.b16 %v987
        %v3169 = vunpack.c.h.b16 %v987
        %v3170 = vunpack.c.l.b16 %v988
        %v3171 = vunpack.c.h.b16 %v988
        %v3172 = vunpack.c.l.b16 %v989
        %v3173 = vunpack.c.h.b16 %v989
        %v3174 = vunpack.c.l.b16 %v990
        %v3175 = vunpack.c.h.b16 %v990
        %v3176 = vunpack.c.l.b16 %v991
        %v3177 = vunpack.c.h.b16 %v991
        %v3178 = vunpack.c.l.b16 %v992
        %v3179 = vunpack.c.h.b16 %v992
        %v3180 = vunpack.c.l.b16 %v993
        %v3181 = vunpack.c.h.b16 %v993
        %v3182 = vunpack.c.l.b16 %v994
        %v3183 = vunpack.c.h.b16 %v994
        %v3184 = vunpack.c.l.b16 %v995
        %v3185 = vunpack.c.h.b16 %v995
        %v3186 = vunpack.c.l.b16 %v996
        %v3187 = vunpack.c.h.b16 %v996
        %v3188 = vunpack.c.l.b16 %v997
        %v3189 = vunpack.c.h.b16 %v997
        %v3190 = vunpack.c.l.b16 %v998
        %v3191 = vunpack.c.h.b16 %v998
        %v3192 = vunpack.c.l.b16 %v999
        %v3193 = vunpack.c.h.b16 %v999
        %v3194 = vunpack.c.l.b16 %v1000
        %v3195 = vunpack.c.h.b16 %v1000
        %v3196 = vunpack.c.l.b16 %v1001
        %v3197 = vunpack.c.h.b16 %v1001
        %v3198 = vunpack.c.l.b16 %v1002
        %v3199 = vunpack.c.h.b16 %v1002
        %v3200 = vunpack.c.l.b16 %v1003
        %v3201 = vunpack.c.h.b16 %v1003
        %v3202 = vunpack.c.l.b16 %v1004
        %v3203 = vunpack.c.h.b16 %v1004
        %v3204 = vunpack.c.l.b16 %v1005
        %v3205 = vunpack.c.h.b16 %v1005
        %v3206 = vunpack.c.l.b16 %v1006
        %v3207 = vunpack.c.h.b16 %v1006
        %v3208 = vunpack.c.l.b16 %v1007
        %v3209 = vunpack.c.h.b16 %v1007
        %v3210 = vunpack.c.l.b16 %v1008
        %v3211 = vunpack.c.h.b16 %v1008
        %v3212 = vunpack.c.l.b16 %v1009
        %v3213 = vunpack.c.h.b16 %v1009
        %v3214 = vunpack.c.l.b16 %v1010
        %v3215 = vunpack.c.h.b16 %v1010
        %v3216 = vunpack.c.l.b16 %v1011
        %v3217 = vunpack.c.h.b16 %v1011
        %v3218 = vunpack.c.l.b16 %v1012
        %v3219 = vunpack.c.h.b16 %v1012
        %v3220 = vunpack.c.l.b16 %v1013
        %v3221 = vunpack.c.h.b16 %v1013
        %v3222 = vunpack.c.l.b16 %v1014
        %v3223 = vunpack.c.h.b16 %v1014
        %v3224 = vunpack.c.l.b16 %v1015
        %v3225 = vunpack.c.h.b16 %v1015
        %v3226 = vunpack.c.l.b16 %v1016
        %v3227 = vunpack.c.h.b16 %v1016
        %v3228 = vunpack.c.l.b16 %v1017
        %v3229 = vunpack.c.h.b16 %v1017
        %v3230 = vunpack.c.l.b16 %v1018
        %v3231 = vunpack.c.h.b16 %v1018
        %v3232 = vunpack.c.l.b16 %v1019
        %v3233 = vunpack.c.h.b16 %v1019
        %v3234 = vunpack.c.l.b16 %v1020
        %v3235 = vunpack.c.h.b16 %v1020
        %v3236 = vunpack.c.l.b16 %v1021
        %v3237 = vunpack.c.h.b16 %v1021
        %v3238 = vunpack.c.l.b16 %v1022
        %v3239 = vunpack.c.h.b16 %v1022
        %v3240 = vunpack.c.l.b16 %v1023
        %v3241 = vunpack.c.h.b16 %v1023
        %v3242 = vunpack.c.l.b16 %v1024
        %v3243 = vunpack.c.h.b16 %v1024
        %v3244 = vunpack.c.l.b16 %v1025
        %v3245 = vunpack.c.h.b16 %v1025
        %v3246 = vunpack.c.l.b16 %v1026
        %v3247 = vunpack.c.h.b16 %v1026
        %v3248 = vunpack.c.l.b16 %v1027
        %v3249 = vunpack.c.h.b16 %v1027
        %v3250 = vunpack.c.l.b16 %v1028
        %v3251 = vunpack.c.h.b16 %v1028
        %v3252 = vunpack.c.l.b16 %v1029
        %v3253 = vunpack.c.h.b16 %v1029
        %v3254 = vunpack.c.l.b16 %v1030
        %v3255 = vunpack.c.h.b16 %v1030
        %v3256 = vunpack.c.l.b16 %v1031
        %v3257 = vunpack.c.h.b16 %v1031
        %v3258 = vunpack.c.l.b16 %v1032
        %v3259 = vunpack.c.h.b16 %v1032
        %v3260 = vunpack.c.l.b16 %v1033
        %v3261 = vunpack.c.h.b16 %v1033
        %v3262 = vunpack.c.l.b16 %v1034
        %v3263 = vunpack.c.h.b16 %v1034
        %v3264 = vunpack.c.l.b16 %v1035
        %v3265 = vunpack.c.h.b16 %v1035
        %v3266 = vunpack.c.l.b16 %v1036
        %v3267 = vunpack.c.h.b16 %v1036
        %v3268 = vunpack.c.l.b16 %v1037
        %v3269 = vunpack.c.h.b16 %v1037
        %v3270 = vunpack.c.l.b16 %v1038
        %v3271 = vunpack.c.h.b16 %v1038
        %v3272 = vunpack.c.l.b16 %v1039
        %v3273 = vunpack.c.h.b16 %v1039
        %v3274 = vunpack.c.l.b16 %v1040
        %v3275 = vunpack.c.h.b16 %v1040
        %v3276 = vunpack.c.l.b16 %v1041
        %v3277 = vunpack.c.h.b16 %v1041
        %v3278 = vunpack.c.l.b16 %v1042
        %v3279 = vunpack.c.h.b16 %v1042
        %v3280 = vunpack.c.l.b16 %v1043
        %v3281 = vunpack.c.h.b16 %v1043
        %v3282 = vunpack.c.l.b16 %v1044
        %v3283 = vunpack.c.h.b16 %v1044
        %v3284 = vunpack.c.l.b16 %v1045
        %v3285 = vunpack.c.h.b16 %v1045
        %v3286 = vunpack.c.l.b16 %v1046
        %v3287 = vunpack.c.h.b16 %v1046
        %v3288 = vunpack.c.l.b16 %v1047
        %v3289 = vunpack.c.h.b16 %v1047
        %v3290 = vunpack.c.l.b16 %v1048
        %v3291 = vunpack.c.h.b16 %v1048
        %v3292 = vunpack.c.l.b16 %v1049
        %v3293 = vunpack.c.h.b16 %v1049
        %v3294 = vunpack.c.l.b16 %v1050
        %v3295 = vunpack.c.h.b16 %v1050
        %v3296 = vunpack.c.l.b16 %v1051
        %v3297 = vunpack.c.h.b16 %v1051
        %v3298 = vunpack.c.l.b16 %v1052
        %v3299 = vunpack.c.h.b16 %v1052
        %v3300 = vunpack.c.l.b16 %v1053
        %v3301 = vunpack.c.h.b16 %v1053
        %v3302 = vunpack.c.l.b16 %v1054
        %v3303 = vunpack.c.h.b16 %v1054
        %v3304 = vunpack.c.l.b16 %v1055
        %v3305 = vunpack.c.h.b16 %v1055
        %v3306 = vunpack.c.l.b16 %v1056
        %v3307 = vunpack.c.h.b16 %v1056
        %v3308 = vunpack.c.l.b16 %v1057
        %v3309 = vunpack.c.h.b16 %v1057
        %v3310 = vunpack.c.l.b16 %v1058
        %v3311 = vunpack.c.h.b16 %v1058
        %v3312 = vunpack.c.l.b16 %v1059
        %v3313 = vunpack.c.h.b16 %v1059
        %v3314 = vunpack.c.l.b16 %v1060
        %v3315 = vunpack.c.h.b16 %v1060
        %v3316 = vunpack.c.l.b16 %v1061
        %v3317 = vunpack.c.h.b16 %v1061
        %v3318 = vunpack.c.l.b16 %v1062
        %v3319 = vunpack.c.h.b16 %v1062
        %v3320 = vunpack.c.l.b16 %v1063
        %v3321 = vunpack.c.h.b16 %v1063
        %v3322 = vunpack.c.l.b16 %v1064
        %v3323 = vunpack.c.h.b16 %v1064
        %v3324 = vunpack.c.l.b16 %v1065
        %v3325 = vunpack.c.h.b16 %v1065
        %v3326 = vunpack.c.l.b16 %v1066
        %v3327 = vunpack.c.h.b16 %v1066
        %v3328 = vunpack.c.l.b16 %v1067
        %v3329 = vunpack.c.h.b16 %v1067
        %v3330 = vunpack.c.l.b16 %v1068
        %v3331 = vunpack.c.h.b16 %v1068
        %v3332 = vunpack.c.l.b16 %v1069
        %v3333 = vunpack.c.h.b16 %v1069
        %v3334 = vunpack.c.l.b16 %v1070
        %v3335 = vunpack.c.h.b16 %v1070
        %v3336 = vunpack.c.l.b16 %v1071
        %v3337 = vunpack.c.h.b16 %v1071
        %v3338 = vunpack.c.l.b16 %v1072
        %v3339 = vunpack.c.h.b16 %v1072
        %v3340 = vunpack.c.l.b16 %v1073
        %v3341 = vunpack.c.h.b16 %v1073
        %v3342 = vunpack.c.l.b16 %v1074
        %v3343 = vunpack.c.h.b16 %v1074
        %v3344 = vunpack.c.l.b16 %v1075
        %v3345 = vunpack.c.h.b16 %v1075
        %v3346 = vunpack.c.l.b16 %v1076
        %v3347 = vunpack.c.h.b16 %v1076
        %v3348 = vunpack.c.l.b16 %v1077
        %v3349 = vunpack.c.h.b16 %v1077
        %v3350 = vunpack.c.l.b16 %v1078
        %v3351 = vunpack.c.h.b16 %v1078
        %v3352 = vunpack.c.l.b16 %v1079
        %v3353 = vunpack.c.h.b16 %v1079
        %v3354 = vunpack.c.l.b16 %v1080
        %v3355 = vunpack.c.h.b16 %v1080
        %v3356 = vunpack.c.l.b16 %v1081
        %v3357 = vunpack.c.h.b16 %v1081
        %v3358 = vunpack.c.l.b16 %v1082
        %v3359 = vunpack.c.h.b16 %v1082
        %v3360 = vunpack.c.l.b16 %v1083
        %v3361 = vunpack.c.h.b16 %v1083
        %v3362 = vunpack.c.l.b16 %v1084
        %v3363 = vunpack.c.h.b16 %v1084
        %v3364 = vunpack.c.l.b16 %v1085
        %v3365 = vunpack.c.h.b16 %v1085
        %v3366 = vunpack.c.l.b16 %v1086
        %v3367 = vunpack.c.h.b16 %v1086
        %v3368 = vunpack.c.l.b16 %v1087
        %v3369 = vunpack.c.h.b16 %v1087
        %v3370 = vunpack.c.l.b16 %v1088
        %v3371 = vunpack.c.h.b16 %v1088
        %v3372 = vunpack.c.l.b16 %v1089
        %v3373 = vunpack.c.h.b16 %v1089
        %v3374 = vunpack.c.l.b16 %v1090
        %v3375 = vunpack.c.h.b16 %v1090
        %v3376 = vunpack.c.l.b16 %v1091
        %v3377 = vunpack.c.h.b16 %v1091
        %v3378 = vunpack.c.l.b16 %v1092
        %v3379 = vunpack.c.h.b16 %v1092
        %v3380 = vunpack.c.l.b16 %v1093
        %v3381 = vunpack.c.h.b16 %v1093
        %v3382 = vunpack.c.l.b16 %v1094
        %v3383 = vunpack.c.h.b16 %v1094
        %v3384 = vunpack.c.l.b16 %v1095
        %v3385 = vunpack.c.h.b16 %v1095
        %v3386 = vunpack.c.l.b16 %v1096
        %v3387 = vunpack.c.h.b16 %v1096
        %v3388 = vunpack.c.l.b16 %v1097
        %v3389 = vunpack.c.h.b16 %v1097
        %v3390 = vunpack.c.l.b16 %v1098
        %v3391 = vunpack.c.h.b16 %v1098
        %v3392 = vunpack.c.l.b16 %v1099
        %v3393 = vunpack.c.h.b16 %v1099
        %v3394 = vunpack.c.l.b16 %v1100
        %v3395 = vunpack.c.h.b16 %v1100
        %v3396 = vunpack.c.l.b16 %v1101
        %v3397 = vunpack.c.h.b16 %v1101
        %v3398 = vunpack.c.l.b16 %v1102
        %v3399 = vunpack.c.h.b16 %v1102
        %v3400 = vunpack.c.l.b16 %v1103
        %v3401 = vunpack.c.h.b16 %v1103
        %v3402 = vunpack.c.l.b16 %v1104
        %v3403 = vunpack.c.h.b16 %v1104
        %v3404 = vunpack.c.l.b16 %v1105
        %v3405 = vunpack.c.h.b16 %v1105
        %v3406 = vunpack.c.l.b16 %v1106
        %v3407 = vunpack.c.h.b16 %v1106
        %v3408 = vunpack.c.l.b16 %v1107
        %v3409 = vunpack.c.h.b16 %v1107
        %v3410 = vunpack.c.l.b16 %v1108
        %v3411 = vunpack.c.h.b16 %v1108
        %v3412 = vunpack.c.l.b16 %v1109
        %v3413 = vunpack.c.h.b16 %v1109
        %v3414 = vpack.c.b16 %v1894, %v1878
        %v3415 = vpack.c.b16 %v1895, %v1879
        %v3416 = vpack.c.b16 %v1896, %v1880
        %v3417 = vpack.c.b16 %v1897, %v1881
        %v3418 = vpack.c.b16 %v1898, %v1882
        %v3419 = vpack.c.b16 %v1899, %v1883
        %v3420 = vpack.c.b16 %v1900, %v1884
        %v3421 = vpack.c.b16 %v1901, %v1885
        %v3422 = vpack.c.b16 %v1902, %v1886
        %v3423 = vpack.c.b16 %v1903, %v1887
        %v3424 = vpack.c.b16 %v1904, %v1888
        %v3425 = vpack.c.b16 %v1905, %v1889
        %v3426 = vpack.c.b16 %v1906, %v1890
        %v3427 = vpack.c.b16 %v1907, %v1891
        %v3428 = vpack.c.b16 %v1908, %v1892
        %v3429 = vpack.c.b16 %v1909, %v1893
        %v3430 = vpack.c.b16 %v1926, %v1910
        %v3431 = vpack.c.b16 %v1927, %v1911
        %v3432 = vpack.c.b16 %v1928, %v1912
        %v3433 = vpack.c.b16 %v1929, %v1913
        %v3434 = vpack.c.b16 %v1930, %v1914
        %v3435 = vpack.c.b16 %v1931, %v1915
        %v3436 = vpack.c.b16 %v1932, %v1916
        %v3437 = vpack.c.b16 %v1933, %v1917
        %v3438 = vpack.c.b16 %v1934, %v1918
        %v3439 = vpack.c.b16 %v1935, %v1919
        %v3440 = vpack.c.b16 %v1936, %v1920
        %v3441 = vpack.c.b16 %v1937, %v1921
        %v3442 = vpack.c.b16 %v1938, %v1922
        %v3443 = vpack.c.b16 %v1939, %v1923
        %v3444 = vpack.c.b16 %v1940, %v1924
        %v3445 = vpack.c.b16 %v1941, %v1925
        %v3446 = vpack.c.b16 %v1958, %v1942
        %v3447 = vpack.c.b16 %v1959, %v1943
        %v3448 = vpack.c.b16 %v1960, %v1944
        %v3449 = vpack.c.b16 %v1961, %v1945
        %v3450 = vpack.c.b16 %v1962, %v1946
        %v3451 = vpack.c.b16 %v1963, %v1947
        %v3452 = vpack.c.b16 %v1964, %v1948
        %v3453 = vpack.c.b16 %v1965, %v1949
        %v3454 = vpack.c.b16 %v1966, %v1950
        %v3455 = vpack.c.b16 %v1967, %v1951
        %v3456 = vpack.c.b16 %v1968, %v1952
        %v3457 = vpack.c.b16 %v1969, %v1953
        %v3458 = vpack.c.b16 %v1970, %v1954
        %v3459 = vpack.c.b16 %v1971, %v1955
        %v3460 = vpack.c.b16 %v1972, %v1956
        %v3461 = vpack.c.b16 %v1973, %v1957
        %v3462 = vpack.c.b16 %v1990, %v1974
        %v3463 = vpack.c.b16 %v1991, %v1975
        %v3464 = vpack.c.b16 %v1992, %v1976
        %v3465 = vpack.c.b16 %v1993, %v1977
        %v3466 = vpack.c.b16 %v1994, %v1978
        %v3467 = vpack.c.b16 %v1995, %v1979
        %v3468 = vpack.c.b16 %v1996, %v1980
        %v3469 = vpack.c.b16 %v1997, %v1981
        %v3470 = vpack.c.b16 %v1998, %v1982
        %v3471 = vpack.c.b16 %v1999, %v1983
        %v3472 = vpack.c.b16 %v2000, %v1984
        %v3473 = vpack.c.b16 %v2001, %v1985
        %v3474 = vpack.c.b16 %v2002, %v1986
        %v3475 = vpack.c.b16 %v2003, %v1987
        %v3476 = vpack.c.b16 %v2004, %v1988
        %v3477 = vpack.c.b16 %v2005, %v1989
        %v3478 = vpack.c.b16 %v2022, %v2006
        %v3479 = vpack.c.b16 %v2023, %v2007
        %v3480 = vpack.c.b16 %v2024, %v2008
        %v3481 = vpack.c.b16 %v2025, %v2009
        %v3482 = vpack.c.b16 %v2026, %v2010
        %v3483 = vpack.c.b16 %v2027, %v2011
        %v3484 = vpack.c.b16 %v2028, %v2012
        %v3485 = vpack.c.b16 %v2029, %v2013
        %v3486 = vpack.c.b16 %v2030, %v2014
        %v3487 = vpack.c.b16 %v2031, %v2015
        %v3488 = vpack.c.b16 %v2032, %v2016
        %v3489 = vpack.c.b16 %v2033, %v2017
        %v3490 = vpack.c.b16 %v2034, %v2018
        %v3491 = vpack.c.b16 %v2035, %v2019
        %v3492 = vpack.c.b16 %v2036, %v2020
        %v3493 = vpack.c.b16 %v2037, %v2021
        %v3494 = vpack.c.b16 %v2054, %v2038
        %v3495 = vpack.c.b16 %v2055, %v2039
        %v3496 = vpack.c.b16 %v2056, %v2040
        %v3497 = vpack.c.b16 %v2057, %v2041
        %v3498 = vpack.c.b16 %v2058, %v2042
        %v3499 = vpack.c.b16 %v2059, %v2043
        %v3500 = vpack.c.b16 %v2060, %v2044
        %v3501 = vpack.c.b16 %v2061, %v2045
        %v3502 = vpack.c.b16 %v2062, %v2046
        %v3503 = vpack.c.b16 %v2063, %v2047
        %v3504 = vpack.c.b16 %v2064, %v2048
        %v3505 = vpack.c.b16 %v2065, %v2049
        %v3506 = vpack.c.b16 %v2066, %v2050
        %v3507 = vpack.c.b16 %v2067, %v2051
        %v3508 = vpack.c.b16 %v2068, %v2052
        %v3509 = vpack.c.b16 %v2069, %v2053
        %v3510 = vpack.c.b16 %v2086, %v2070
        %v3511 = vpack.c.b16 %v2087, %v2071
        %v3512 = vpack.c.b16 %v2088, %v2072
        %v3513 = vpack.c.b16 %v2089, %v2073
        %v3514 = vpack.c.b16 %v2090, %v2074
        %v3515 = vpack.c.b16 %v2091, %v2075
        %v3516 = vpack.c.b16 %v2092, %v2076
        %v3517 = vpack.c.b16 %v2093, %v2077
        %v3518 = vpack.c.b16 %v2094, %v2078
        %v3519 = vpack.c.b16 %v2095, %v2079
        %v3520 = vpack.c.b16 %v2096, %v2080
        %v3521 = vpack.c.b16 %v2097, %v2081
        %v3522 = vpack.c.b16 %v2098, %v2082
        %v3523 = vpack.c.b16 %v2099, %v2083
        %v3524 = vpack.c.b16 %v2100, %v2084
        %v3525 = vpack.c.b16 %v2101, %v2085
        %v3526 = vpack.c.b16 %v2118, %v2102
        %v3527 = vpack.c.b16 %v2119, %v2103
        %v3528 = vpack.c.b16 %v2120, %v2104
        %v3529 = vpack.c.b16 %v2121, %v2105
        %v3530 = vpack.c.b16 %v2122, %v2106
        %v3531 = vpack.c.b16 %v2123, %v2107
        %v3532 = vpack.c.b16 %v2124, %v2108
        %v3533 = vpack.c.b16 %v2125, %v2109
        %v3534 = vpack.c.b16 %v2126, %v2110
        %v3535 = vpack.c.b16 %v2127, %v2111
        %v3536 = vpack.c.b16 %v2128, %v2112
        %v3537 = vpack.c.b16 %v2129, %v2113
        %v3538 = vpack.c.b16 %v2130, %v2114
        %v3539 = vpack.c.b16 %v2131, %v2115
        %v3540 = vpack.c.b16 %v2132, %v2116
        %v3541 = vpack.c.b16 %v2133, %v2117
        %v3542 = vpack.c.b16 %v2150, %v2134
        %v3543 = vpack.c.b16 %v2151, %v2135
        %v3544 = vpack.c.b16 %v2152, %v2136
        %v3545 = vpack.c.b16 %v2153, %v2137
        %v3546 = vpack.c.b16 %v2154, %v2138
        %v3547 = vpack.c.b16 %v2155, %v2139
        %v3548 = vpack.c.b16 %v2156, %v2140
        %v3549 = vpack.c.b16 %v2157, %v2141
        %v3550 = vpack.c.b16 %v2158, %v2142
        %v3551 = vpack.c.b16 %v2159, %v2143
        %v3552 = vpack.c.b16 %v2160, %v2144
        %v3553 = vpack.c.b16 %v2161, %v2145
        %v3554 = vpack.c.b16 %v2162, %v2146
        %v3555 = vpack.c.b16 %v2163, %v2147
        %v3556 = vpack.c.b16 %v2164, %v2148
        %v3557 = vpack.c.b16 %v2165, %v2149
        %v3558 = vpack.c.b16 %v2182, %v2166
        %v3559 = vpack.c.b16 %v2183, %v2167
        %v3560 = vpack.c.b16 %v2184, %v2168
        %v3561 = vpack.c.b16 %v2185, %v2169
        %v3562 = vpack.c.b16 %v2186, %v2170
        %v3563 = vpack.c.b16 %v2187, %v2171
        %v3564 = vpack.c.b16 %v2188, %v2172
        %v3565 = vpack.c.b16 %v2189, %v2173
        %v3566 = vpack.c.b16 %v2190, %v2174
        %v3567 = vpack.c.b16 %v2191, %v2175
        %v3568 = vpack.c.b16 %v2192, %v2176
        %v3569 = vpack.c.b16 %v2193, %v2177
        %v3570 = vpack.c.b16 %v2194, %v2178
        %v3571 = vpack.c.b16 %v2195, %v2179
        %v3572 = vpack.c.b16 %v2196, %v2180
        %v3573 = vpack.c.b16 %v2197, %v2181
        %v3574 = vpack.c.b16 %v2214, %v2198
        %v3575 = vpack.c.b16 %v2215, %v2199
        %v3576 = vpack.c.b16 %v2216, %v2200
        %v3577 = vpack.c.b16 %v2217, %v2201
        %v3578 = vpack.c.b16 %v2218, %v2202
        %v3579 = vpack.c.b16 %v2219, %v2203
        %v3580 = vpack.c.b16 %v2220, %v2204
        %v3581 = vpack.c.b16 %v2221, %v2205
        %v3582 = vpack.c.b16 %v2222, %v2206
        %v3583 = vpack.c.b16 %v2223, %v2207
        %v3584 = vpack.c.b16 %v2224, %v2208
        %v3585 = vpack.c.b16 %v2225, %v2209
        %v3586 = vpack.c.b16 %v2226, %v2210
        %v3587 = vpack.c.b16 %v2227, %v2211
        %v3588 = vpack.c.b16 %v2228, %v2212
        %v3589 = vpack.c.b16 %v2229, %v2213
        %v3590 = vpack.c.b16 %v2246, %v2230
        %v3591 = vpack.c.b16 %v2247, %v2231
        %v3592 = vpack.c.b16 %v2248, %v2232
        %v3593 = vpack.c.b16 %v2249, %v2233
        %v3594 = vpack.c.b16 %v2250, %v2234
        %v3595 = vpack.c.b16 %v2251, %v2235
        %v3596 = vpack.c.b16 %v2252, %v2236
        %v3597 = vpack.c.b16 %v2253, %v2237
        %v3598 = vpack.c.b16 %v2254, %v2238
        %v3599 = vpack.c.b16 %v2255, %v2239
        %v3600 = vpack.c.b16 %v2256, %v2240
        %v3601 = vpack.c.b16 %v2257, %v2241
        %v3602 = vpack.c.b16 %v2258, %v2242
        %v3603 = vpack.c.b16 %v2259, %v2243
        %v3604 = vpack.c.b16 %v2260, %v2244
        %v3605 = vpack.c.b16 %v2261, %v2245
        %v3606 = vpack.c.b16 %v2278, %v2262
        %v3607 = vpack.c.b16 %v2279, %v2263
        %v3608 = vpack.c.b16 %v2280, %v2264
        %v3609 = vpack.c.b16 %v2281, %v2265
        %v3610 = vpack.c.b16 %v2282, %v2266
        %v3611 = vpack.c.b16 %v2283, %v2267
        %v3612 = vpack.c.b16 %v2284, %v2268
        %v3613 = vpack.c.b16 %v2285, %v2269
        %v3614 = vpack.c.b16 %v2286, %v2270
        %v3615 = vpack.c.b16 %v2287, %v2271
        %v3616 = vpack.c.b16 %v2288, %v2272
        %v3617 = vpack.c.b16 %v2289, %v2273
        %v3618 = vpack.c.b16 %v2290, %v2274
        %v3619 = vpack.c.b16 %v2291, %v2275
        %v3620 = vpack.c.b16 %v2292, %v2276
        %v3621 = vpack.c.b16 %v2293, %v2277
        %v3622 = vpack.c.b16 %v2310, %v2294
        %v3623 = vpack.c.b16 %v2311, %v2295
        %v3624 = vpack.c.b16 %v2312, %v2296
        %v3625 = vpack.c.b16 %v2313, %v2297
        %v3626 = vpack.c.b16 %v2314, %v2298
        %v3627 = vpack.c.b16 %v2315, %v2299
        %v3628 = vpack.c.b16 %v2316, %v2300
        %v3629 = vpack.c.b16 %v2317, %v2301
        %v3630 = vpack.c.b16 %v2318, %v2302
        %v3631 = vpack.c.b16 %v2319, %v2303
        %v3632 = vpack.c.b16 %v2320, %v2304
        %v3633 = vpack.c.b16 %v2321, %v2305
        %v3634 = vpack.c.b16 %v2322, %v2306
        %v3635 = vpack.c.b16 %v2323, %v2307
        %v3636 = vpack.c.b16 %v2324, %v2308
        %v3637 = vpack.c.b16 %v2325, %v2309
        %v3638 = vpack.c.b16 %v2342, %v2326
        %v3639 = vpack.c.b16 %v2343, %v2327
        %v3640 = vpack.c.b16 %v2344, %v2328
        %v3641 = vpack.c.b16 %v2345, %v2329
        %v3642 = vpack.c.b16 %v2346, %v2330
        %v3643 = vpack.c.b16 %v2347, %v2331
        %v3644 = vpack.c.b16 %v2348, %v2332
        %v3645 = vpack.c.b16 %v2349, %v2333
        %v3646 = vpack.c.b16 %v2350, %v2334
        %v3647 = vpack.c.b16 %v2351, %v2335
        %v3648 = vpack.c.b16 %v2352, %v2336
        %v3649 = vpack.c.b16 %v2353, %v2337
        %v3650 = vpack.c.b16 %v2354, %v2338
        %v3651 = vpack.c.b16 %v2355, %v2339
        %v3652 = vpack.c.b16 %v2356, %v2340
        %v3653 = vpack.c.b16 %v2357, %v2341
        %v3654 = vpack.c.b16 %v2374, %v2358
        %v3655 = vpack.c.b16 %v2375, %v2359
        %v3656 = vpack.c.b16 %v2376, %v2360
        %v3657 = vpack.c.b16 %v2377, %v2361
        %v3658 = vpack.c.b16 %v2378, %v2362
        %v3659 = vpack.c.b16 %v2379, %v2363
        %v3660 = vpack.c.b16 %v2380, %v2364
        %v3661 = vpack.c.b16 %v2381, %v2365
        %v3662 = vpack.c.b16 %v2382, %v2366
        %v3663 = vpack.c.b16 %v2383, %v2367
        %v3664 = vpack.c.b16 %v2384, %v2368
        %v3665 = vpack.c.b16 %v2385, %v2369
        %v3666 = vpack.c.b16 %v2386, %v2370
        %v3667 = vpack.c.b16 %v2387, %v2371
        %v3668 = vpack.c.b16 %v2388, %v2372
        %v3669 = vpack.c.b16 %v2389, %v2373
        %v3670 = vpack.c.b16 %v2406, %v2390
        %v3671 = vpack.c.b16 %v2407, %v2391
        %v3672 = vpack.c.b16 %v2408, %v2392
        %v3673 = vpack.c.b16 %v2409, %v2393
        %v3674 = vpack.c.b16 %v2410, %v2394
        %v3675 = vpack.c.b16 %v2411, %v2395
        %v3676 = vpack.c.b16 %v2412, %v2396
        %v3677 = vpack.c.b16 %v2413, %v2397
        %v3678 = vpack.c.b16 %v2414, %v2398
        %v3679 = vpack.c.b16 %v2415, %v2399
        %v3680 = vpack.c.b16 %v2416, %v2400
        %v3681 = vpack.c.b16 %v2417, %v2401
        %v3682 = vpack.c.b16 %v2418, %v2402
        %v3683 = vpack.c.b16 %v2419, %v2403
        %v3684 = vpack.c.b16 %v2420, %v2404
        %v3685 = vpack.c.b16 %v2421, %v2405
        %v3686 = vpack.c.b16 %v2438, %v2422
        %v3687 = vpack.c.b16 %v2439, %v2423
        %v3688 = vpack.c.b16 %v2440, %v2424
        %v3689 = vpack.c.b16 %v2441, %v2425
        %v3690 = vpack.c.b16 %v2442, %v2426
        %v3691 = vpack.c.b16 %v2443, %v2427
        %v3692 = vpack.c.b16 %v2444, %v2428
        %v3693 = vpack.c.b16 %v2445, %v2429
        %v3694 = vpack.c.b16 %v2446, %v2430
        %v3695 = vpack.c.b16 %v2447, %v2431
        %v3696 = vpack.c.b16 %v2448, %v2432
        %v3697 = vpack.c.b16 %v2449, %v2433
        %v3698 = vpack.c.b16 %v2450, %v2434
        %v3699 = vpack.c.b16 %v2451, %v2435
        %v3700 = vpack.c.b16 %v2452, %v2436
        %v3701 = vpack.c.b16 %v2453, %v2437
        %v3702 = vpack.c.b16 %v2470, %v2454
        %v3703 = vpack.c.b16 %v2471, %v2455
        %v3704 = vpack.c.b16 %v2472, %v2456
        %v3705 = vpack.c.b16 %v2473, %v2457
        %v3706 = vpack.c.b16 %v2474, %v2458
        %v3707 = vpack.c.b16 %v2475, %v2459
        %v3708 = vpack.c.b16 %v2476, %v2460
        %v3709 = vpack.c.b16 %v2477, %v2461
        %v3710 = vpack.c.b16 %v2478, %v2462
        %v3711 = vpack.c.b16 %v2479, %v2463
        %v3712 = vpack.c.b16 %v2480, %v2464
        %v3713 = vpack.c.b16 %v2481, %v2465
        %v3714 = vpack.c.b16 %v2482, %v2466
        %v3715 = vpack.c.b16 %v2483, %v2467
        %v3716 = vpack.c.b16 %v2484, %v2468
        %v3717 = vpack.c.b16 %v2485, %v2469
        %v3718 = vpack.c.b16 %v2502, %v2486
        %v3719 = vpack.c.b16 %v2503, %v2487
        %v3720 = vpack.c.b16 %v2504, %v2488
        %v3721 = vpack.c.b16 %v2505, %v2489
        %v3722 = vpack.c.b16 %v2506, %v2490
        %v3723 = vpack.c.b16 %v2507, %v2491
        %v3724 = vpack.c.b16 %v2508, %v2492
        %v3725 = vpack.c.b16 %v2509, %v2493
        %v3726 = vpack.c.b16 %v2510, %v2494
        %v3727 = vpack.c.b16 %v2511, %v2495
        %v3728 = vpack.c.b16 %v2512, %v2496
        %v3729 = vpack.c.b16 %v2513, %v2497
        %v3730 = vpack.c.b16 %v2514, %v2498
        %v3731 = vpack.c.b16 %v2515, %v2499
        %v3732 = vpack.c.b16 %v2516, %v2500
        %v3733 = vpack.c.b16 %v2517, %v2501
        %v3734 = vpack.c.b16 %v2534, %v2518
        %v3735 = vpack.c.b16 %v2535, %v2519
        %v3736 = vpack.c.b16 %v2536, %v2520
        %v3737 = vpack.c.b16 %v2537, %v2521
        %v3738 = vpack.c.b16 %v2538, %v2522
        %v3739 = vpack.c.b16 %v2539, %v2523
        %v3740 = vpack.c.b16 %v2540, %v2524
        %v3741 = vpack.c.b16 %v2541, %v2525
        %v3742 = vpack.c.b16 %v2542, %v2526
        %v3743 = vpack.c.b16 %v2543, %v2527
        %v3744 = vpack.c.b16 %v2544, %v2528
        %v3745 = vpack.c.b16 %v2545, %v2529
        %v3746 = vpack.c.b16 %v2546, %v2530
        %v3747 = vpack.c.b16 %v2547, %v2531
        %v3748 = vpack.c.b16 %v2548, %v2532
        %v3749 = vpack.c.b16 %v2549, %v2533
        %v3750 = vpack.c.b16 %v2566, %v2550
        %v3751 = vpack.c.b16 %v2567, %v2551
        %v3752 = vpack.c.b16 %v2568, %v2552
        %v3753 = vpack.c.b16 %v2569, %v2553
        %v3754 = vpack.c.b16 %v2570, %v2554
        %v3755 = vpack.c.b16 %v2571, %v2555
        %v3756 = vpack.c.b16 %v2572, %v2556
        %v3757 = vpack.c.b16 %v2573, %v2557
        %v3758 = vpack.c.b16 %v2574, %v2558
        %v3759 = vpack.c.b16 %v2575, %v2559
        %v3760 = vpack.c.b16 %v2576, %v2560
        %v3761 = vpack.c.b16 %v2577, %v2561
        %v3762 = vpack.c.b16 %v2578, %v2562
        %v3763 = vpack.c.b16 %v2579, %v2563
        %v3764 = vpack.c.b16 %v2580, %v2564
        %v3765 = vpack.c.b16 %v2581, %v2565
        %v3766 = vpack.c.b16 %v2598, %v2582
        %v3767 = vpack.c.b16 %v2599, %v2583
        %v3768 = vpack.c.b16 %v2600, %v2584
        %v3769 = vpack.c.b16 %v2601, %v2585
        %v3770 = vpack.c.b16 %v2602, %v2586
        %v3771 = vpack.c.b16 %v2603, %v2587
        %v3772 = vpack.c.b16 %v2604, %v2588
        %v3773 = vpack.c.b16 %v2605, %v2589
        %v3774 = vpack.c.b16 %v2606, %v2590
        %v3775 = vpack.c.b16 %v2607, %v2591
        %v3776 = vpack.c.b16 %v2608, %v2592
        %v3777 = vpack.c.b16 %v2609, %v2593
        %v3778 = vpack.c.b16 %v2610, %v2594
        %v3779 = vpack.c.b16 %v2611, %v2595
        %v3780 = vpack.c.b16 %v2612, %v2596
        %v3781 = vpack.c.b16 %v2613, %v2597
        %v3782 = vpack.c.b16 %v2630, %v2614
        %v3783 = vpack.c.b16 %v2631, %v2615
        %v3784 = vpack.c.b16 %v2632, %v2616
        %v3785 = vpack.c.b16 %v2633, %v2617
        %v3786 = vpack.c.b16 %v2634, %v2618
        %v3787 = vpack.c.b16 %v2635, %v2619
        %v3788 = vpack.c.b16 %v2636, %v2620
        %v3789 = vpack.c.b16 %v2637, %v2621
        %v3790 = vpack.c.b16 %v2638, %v2622
        %v3791 = vpack.c.b16 %v2639, %v2623
        %v3792 = vpack.c.b16 %v2640, %v2624
        %v3793 = vpack.c.b16 %v2641, %v2625
        %v3794 = vpack.c.b16 %v2642, %v2626
        %v3795 = vpack.c.b16 %v2643, %v2627
        %v3796 = vpack.c.b16 %v2644, %v2628
        %v3797 = vpack.c.b16 %v2645, %v2629
        %v3798 = vpack.c.b16 %v2662, %v2646
        %v3799 = vpack.c.b16 %v2663, %v2647
        %v3800 = vpack.c.b16 %v2664, %v2648
        %v3801 = vpack.c.b16 %v2665, %v2649
        %v3802 = vpack.c.b16 %v2666, %v2650
        %v3803 = vpack.c.b16 %v2667, %v2651
        %v3804 = vpack.c.b16 %v2668, %v2652
        %v3805 = vpack.c.b16 %v2669, %v2653
        %v3806 = vpack.c.b16 %v2670, %v2654
        %v3807 = vpack.c.b16 %v2671, %v2655
        %v3808 = vpack.c.b16 %v2672, %v2656
        %v3809 = vpack.c.b16 %v2673, %v2657
        %v3810 = vpack.c.b16 %v2674, %v2658
        %v3811 = vpack.c.b16 %v2675, %v2659
        %v3812 = vpack.c.b16 %v2676, %v2660
        %v3813 = vpack.c.b16 %v2677, %v2661
        %v3814 = vpack.c.b16 %v2694, %v2678
        %v3815 = vpack.c.b16 %v2695, %v2679
        %v3816 = vpack.c.b16 %v2696, %v2680
        %v3817 = vpack.c.b16 %v2697, %v2681
        %v3818 = vpack.c.b16 %v2698, %v2682
        %v3819 = vpack.c.b16 %v2699, %v2683
        %v3820 = vpack.c.b16 %v2700, %v2684
        %v3821 = vpack.c.b16 %v2701, %v2685
        %v3822 = vpack.c.b16 %v2702, %v2686
        %v3823 = vpack.c.b16 %v2703, %v2687
        %v3824 = vpack.c.b16 %v2704, %v2688
        %v3825 = vpack.c.b16 %v2705, %v2689
        %v3826 = vpack.c.b16 %v2706, %v2690
        %v3827 = vpack.c.b16 %v2707, %v2691
        %v3828 = vpack.c.b16 %v2708, %v2692
        %v3829 = vpack.c.b16 %v2709, %v2693
        %v3830 = vpack.c.b16 %v2726, %v2710
        %v3831 = vpack.c.b16 %v2727, %v2711
        %v3832 = vpack.c.b16 %v2728, %v2712
        %v3833 = vpack.c.b16 %v2729, %v2713
        %v3834 = vpack.c.b16 %v2730, %v2714
        %v3835 = vpack.c.b16 %v2731, %v2715
        %v3836 = vpack.c.b16 %v2732, %v2716
        %v3837 = vpack.c.b16 %v2733, %v2717
        %v3838 = vpack.c.b16 %v2734, %v2718
        %v3839 = vpack.c.b16 %v2735, %v2719
        %v3840 = vpack.c.b16 %v2736, %v2720
        %v3841 = vpack.c.b16 %v2737, %v2721
        %v3842 = vpack.c.b16 %v2738, %v2722
        %v3843 = vpack.c.b16 %v2739, %v2723
        %v3844 = vpack.c.b16 %v2740, %v2724
        %v3845 = vpack.c.b16 %v2741, %v2725
        %v3846 = vpack.c.b16 %v2758, %v2742
        %v3847 = vpack.c.b16 %v2759, %v2743
        %v3848 = vpack.c.b16 %v2760, %v2744
        %v3849 = vpack.c.b16 %v2761, %v2745
        %v3850 = vpack.c.b16 %v2762, %v2746
        %v3851 = vpack.c.b16 %v2763, %v2747
        %v3852 = vpack.c.b16 %v2764, %v2748
        %v3853 = vpack.c.b16 %v2765, %v2749
        %v3854 = vpack.c.b16 %v2766, %v2750
        %v3855 = vpack.c.b16 %v2767, %v2751
        %v3856 = vpack.c.b16 %v2768, %v2752
        %v3857 = vpack.c.b16 %v2769, %v2753
        %v3858 = vpack.c.b16 %v2770, %v2754
        %v3859 = vpack.c.b16 %v2771, %v2755
        %v3860 = vpack.c.b16 %v2772, %v2756
        %v3861 = vpack.c.b16 %v2773, %v2757
        %v3862 = vpack.c.b16 %v2790, %v2774
        %v3863 = vpack.c.b16 %v2791, %v2775
        %v3864 = vpack.c.b16 %v2792, %v2776
        %v3865 = vpack.c.b16 %v2793, %v2777
        %v3866 = vpack.c.b16 %v2794, %v2778
        %v3867 = vpack.c.b16 %v2795, %v2779
        %v3868 = vpack.c.b16 %v2796, %v2780
        %v3869 = vpack.c.b16 %v2797, %v2781
        %v3870 = vpack.c.b16 %v2798, %v2782
        %v3871 = vpack.c.b16 %v2799, %v2783
        %v3872 = vpack.c.b16 %v2800, %v2784
        %v3873 = vpack.c.b16 %v2801, %v2785
        %v3874 = vpack.c.b16 %v2802, %v2786
        %v3875 = vpack.c.b16 %v2803, %v2787
        %v3876 = vpack.c.b16 %v2804, %v2788
        %v3877 = vpack.c.b16 %v2805, %v2789
        %v3878 = vpack.c.b16 %v2822, %v2806
        %v3879 = vpack.c.b16 %v2823, %v2807
        %v3880 = vpack.c.b16 %v2824, %v2808
        %v3881 = vpack.c.b16 %v2825, %v2809
        %v3882 = vpack.c.b16 %v2826, %v2810
        %v3883 = vpack.c.b16 %v2827, %v2811
        %v3884 = vpack.c.b16 %v2828, %v2812
        %v3885 = vpack.c.b16 %v2829, %v2813
        %v3886 = vpack.c.b16 %v2830, %v2814
        %v3887 = vpack.c.b16 %v2831, %v2815
        %v3888 = vpack.c.b16 %v2832, %v2816
        %v3889 = vpack.c.b16 %v2833, %v2817
        %v3890 = vpack.c.b16 %v2834, %v2818
        %v3891 = vpack.c.b16 %v2835, %v2819
        %v3892 = vpack.c.b16 %v2836, %v2820
        %v3893 = vpack.c.b16 %v2837, %v2821
        %v3894 = vpack.c.b16 %v2854, %v2838
        %v3895 = vpack.c.b16 %v2855, %v2839
        %v3896 = vpack.c.b16 %v2856, %v2840
        %v3897 = vpack.c.b16 %v2857, %v2841
        %v3898 = vpack.c.b16 %v2858, %v2842
        %v3899 = vpack.c.b16 %v2859, %v2843
        %v3900 = vpack.c.b16 %v2860, %v2844
        %v3901 = vpack.c.b16 %v2861, %v2845
        %v3902 = vpack.c.b16 %v2862, %v2846
        %v3903 = vpack.c.b16 %v2863, %v2847
        %v3904 = vpack.c.b16 %v2864, %v2848
        %v3905 = vpack.c.b16 %v2865, %v2849
        %v3906 = vpack.c.b16 %v2866, %v2850
        %v3907 = vpack.c.b16 %v2867, %v2851
        %v3908 = vpack.c.b16 %v2868, %v2852
        %v3909 = vpack.c.b16 %v2869, %v2853
        %v3910 = vpack.c.b16 %v2886, %v2870
        %v3911 = vpack.c.b16 %v2887, %v2871
        %v3912 = vpack.c.b16 %v2888, %v2872
        %v3913 = vpack.c.b16 %v2889, %v2873
        %v3914 = vpack.c.b16 %v2890, %v2874
        %v3915 = vpack.c.b16 %v2891, %v2875
        %v3916 = vpack.c.b16 %v2892, %v2876
        %v3917 = vpack.c.b16 %v2893, %v2877
        %v3918 = vpack.c.b16 %v2894, %v2878
        %v3919 = vpack.c.b16 %v2895, %v2879
        %v3920 = vpack.c.b16 %v2896, %v2880
        %v3921 = vpack.c.b16 %v2897, %v2881
        %v3922 = vpack.c.b16 %v2898, %v2882
        %v3923 = vpack.c.b16 %v2899, %v2883
        %v3924 = vpack.c.b16 %v2900, %v2884
        %v3925 = vpack.c.b16 %v2901, %v2885
        %v3926 = vpack.c.b16 %v2918, %v2902
        %v3927 = vpack.c.b16 %v2919, %v2903
        %v3928 = vpack.c.b16 %v2920, %v2904
        %v3929 = vpack.c.b16 %v2921, %v2905
        %v3930 = vpack.c.b16 %v2922, %v2906
        %v3931 = vpack.c.b16 %v2923, %v2907
        %v3932 = vpack.c.b16 %v2924, %v2908
        %v3933 = vpack.c.b16 %v2925, %v2909
        %v3934 = vpack.c.b16 %v2926, %v2910
        %v3935 = vpack.c.b16 %v2927, %v2911
        %v3936 = vpack.c.b16 %v2928, %v2912
        %v3937 = vpack.c.b16 %v2929, %v2913
        %v3938 = vpack.c.b16 %v2930, %v2914
        %v3939 = vpack.c.b16 %v2931, %v2915
        %v3940 = vpack.c.b16 %v2932, %v2916
        %v3941 = vpack.c.b16 %v2933, %v2917
        %v3942 = vpack.c.b16 %v2950, %v2934
        %v3943 = vpack.c.b16 %v2951, %v2935
        %v3944 = vpack.c.b16 %v2952, %v2936
        %v3945 = vpack.c.b16 %v2953, %v2937
        %v3946 = vpack.c.b16 %v2954, %v2938
        %v3947 = vpack.c.b16 %v2955, %v2939
        %v3948 = vpack.c.b16 %v2956, %v2940
        %v3949 = vpack.c.b16 %v2957, %v2941
        %v3950 = vpack.c.b16 %v2958, %v2942
        %v3951 = vpack.c.b16 %v2959, %v2943
        %v3952 = vpack.c.b16 %v2960, %v2944
        %v3953 = vpack.c.b16 %v2961, %v2945
        %v3954 = vpack.c.b16 %v2962, %v2946
        %v3955 = vpack.c.b16 %v2963, %v2947
        %v3956 = vpack.c.b16 %v2964, %v2948
        %v3957 = vpack.c.b16 %v2965, %v2949
        %v3958 = vpack.c.b16 %v2982, %v2966
        %v3959 = vpack.c.b16 %v2983, %v2967
        %v3960 = vpack.c.b16 %v2984, %v2968
        %v3961 = vpack.c.b16 %v2985, %v2969
        %v3962 = vpack.c.b16 %v2986, %v2970
        %v3963 = vpack.c.b16 %v2987, %v2971
        %v3964 = vpack.c.b16 %v2988, %v2972
        %v3965 = vpack.c.b16 %v2989, %v2973
        %v3966 = vpack.c.b16 %v2990, %v2974
        %v3967 = vpack.c.b16 %v2991, %v2975
        %v3968 = vpack.c.b16 %v2992, %v2976
        %v3969 = vpack.c.b16 %v2993, %v2977
        %v3970 = vpack.c.b16 %v2994, %v2978
        %v3971 = vpack.c.b16 %v2995, %v2979
        %v3972 = vpack.c.b16 %v2996, %v2980
        %v3973 = vpack.c.b16 %v2997, %v2981
        %v3974 = vpack.c.b16 %v3014, %v2998
        %v3975 = vpack.c.b16 %v3015, %v2999
        %v3976 = vpack.c.b16 %v3016, %v3000
        %v3977 = vpack.c.b16 %v3017, %v3001
        %v3978 = vpack.c.b16 %v3018, %v3002
        %v3979 = vpack.c.b16 %v3019, %v3003
        %v3980 = vpack.c.b16 %v3020, %v3004
        %v3981 = vpack.c.b16 %v3021, %v3005
        %v3982 = vpack.c.b16 %v3022, %v3006
        %v3983 = vpack.c.b16 %v3023, %v3007
        %v3984 = vpack.c.b16 %v3024, %v3008
        %v3985 = vpack.c.b16 %v3025, %v3009
        %v3986 = vpack.c.b16 %v3026, %v3010
        %v3987 = vpack.c.b16 %v3027, %v3011
        %v3988 = vpack.c.b16 %v3028, %v3012
        %v3989 = vpack.c.b16 %v3029, %v3013
        %v3990 = vpack.c.b16 %v3046, %v3030
        %v3991 = vpack.c.b16 %v3047, %v3031
        %v3992 = vpack.c.b16 %v3048, %v3032
        %v3993 = vpack.c.b16 %v3049, %v3033
        %v3994 = vpack.c.b16 %v3050, %v3034
        %v3995 = vpack.c.b16 %v3051, %v3035
        %v3996 = vpack.c.b16 %v3052, %v3036
        %v3997 = vpack.c.b16 %v3053, %v3037
        %v3998 = vpack.c.b16 %v3054, %v3038
        %v3999 = vpack.c.b16 %v3055, %v3039
        %v4000 = vpack.c.b16 %v3056, %v3040
        %v4001 = vpack.c.b16 %v3057, %v3041
        %v4002 = vpack.c.b16 %v3058, %v3042
        %v4003 = vpack.c.b16 %v3059, %v3043
        %v4004 = vpack.c.b16 %v3060, %v3044
        %v4005 = vpack.c.b16 %v3061, %v3045
        %v4006 = vpack.c.b16 %v3078, %v3062
        %v4007 = vpack.c.b16 %v3079, %v3063
        %v4008 = vpack.c.b16 %v3080, %v3064
        %v4009 = vpack.c.b16 %v3081, %v3065
        %v4010 = vpack.c.b16 %v3082, %v3066
        %v4011 = vpack.c.b16 %v3083, %v3067
        %v4012 = vpack.c.b16 %v3084, %v3068
        %v4013 = vpack.c.b16 %v3085, %v3069
        %v4014 = vpack.c.b16 %v3086, %v3070
        %v4015 = vpack.c.b16 %v3087, %v3071
        %v4016 = vpack.c.b16 %v3088, %v3072
        %v4017 = vpack.c.b16 %v3089, %v3073
        %v4018 = vpack.c.b16 %v3090, %v3074
        %v4019 = vpack.c.b16 %v3091, %v3075
        %v4020 = vpack.c.b16 %v3092, %v3076
        %v4021 = vpack.c.b16 %v3093, %v3077
        %v4022 = vpack.c.b16 %v3110, %v3094
        %v4023 = vpack.c.b16 %v3111, %v3095
        %v4024 = vpack.c.b16 %v3112, %v3096
        %v4025 = vpack.c.b16 %v3113, %v3097
        %v4026 = vpack.c.b16 %v3114, %v3098
        %v4027 = vpack.c.b16 %v3115, %v3099
        %v4028 = vpack.c.b16 %v3116, %v3100
        %v4029 = vpack.c.b16 %v3117, %v3101
        %v4030 = vpack.c.b16 %v3118, %v3102
        %v4031 = vpack.c.b16 %v3119, %v3103
        %v4032 = vpack.c.b16 %v3120, %v3104
        %v4033 = vpack.c.b16 %v3121, %v3105
        %v4034 = vpack.c.b16 %v3122, %v3106
        %v4035 = vpack.c.b16 %v3123, %v3107
        %v4036 = vpack.c.b16 %v3124, %v3108
        %v4037 = vpack.c.b16 %v3125, %v3109
        %v4038 = vpack.c.b16 %v3142, %v3126
        %v4039 = vpack.c.b16 %v3143, %v3127
        %v4040 = vpack.c.b16 %v3144, %v3128
        %v4041 = vpack.c.b16 %v3145, %v3129
        %v4042 = vpack.c.b16 %v3146, %v3130
        %v4043 = vpack.c.b16 %v3147, %v3131
        %v4044 = vpack.c.b16 %v3148, %v3132
        %v4045 = vpack.c.b16 %v3149, %v3133
        %v4046 = vpack.c.b16 %v3150, %v3134
        %v4047 = vpack.c.b16 %v3151, %v3135
        %v4048 = vpack.c.b16 %v3152, %v3136
        %v4049 = vpack.c.b16 %v3153, %v3137
        %v4050 = vpack.c.b16 %v3154, %v3138
        %v4051 = vpack.c.b16 %v3155, %v3139
        %v4052 = vpack.c.b16 %v3156, %v3140
        %v4053 = vpack.c.b16 %v3157, %v3141
        %v4054 = vpack.c.b16 %v3174, %v3158
        %v4055 = vpack.c.b16 %v3175, %v3159
        %v4056 = vpack.c.b16 %v3176, %v3160
        %v4057 = vpack.c.b16 %v3177, %v3161
        %v4058 = vpack.c.b16 %v3178, %v3162
        %v4059 = vpack.c.b16 %v3179, %v3163
        %v4060 = vpack.c.b16 %v3180, %v3164
        %v4061 = vpack.c.b16 %v3181, %v3165
        %v4062 = vpack.c.b16 %v3182, %v3166
        %v4063 = vpack.c.b16 %v3183, %v3167
        %v4064 = vpack.c.b16 %v3184, %v3168
        %v4065 = vpack.c.b16 %v3185, %v3169
        %v4066 = vpack.c.b16 %v3186, %v3170
        %v4067 = vpack.c.b16 %v3187, %v3171
        %v4068 = vpack.c.b16 %v3188, %v3172
        %v4069 = vpack.c.b16 %v3189, %v3173
        %v4070 = vpack.c.b16 %v3206, %v3190
        %v4071 = vpack.c.b16 %v3207, %v3191
        %v4072 = vpack.c.b16 %v3208, %v3192
        %v4073 = vpack.c.b16 %v3209, %v3193
        %v4074 = vpack.c.b16 %v3210, %v3194
        %v4075 = vpack.c.b16 %v3211, %v3195
        %v4076 = vpack.c.b16 %v3212, %v3196
        %v4077 = vpack.c.b16 %v3213, %v3197
        %v4078 = vpack.c.b16 %v3214, %v3198
        %v4079 = vpack.c.b16 %v3215, %v3199
        %v4080 = vpack.c.b16 %v3216, %v3200
        %v4081 = vpack.c.b16 %v3217, %v3201
        %v4082 = vpack.c.b16 %v3218, %v3202
        %v4083 = vpack.c.b16 %v3219, %v3203
        %v4084 = vpack.c.b16 %v3220, %v3204
        %v4085 = vpack.c.b16 %v3221, %v3205
        %v4086 = vpack.c.b16 %v3238, %v3222
        %v4087 = vpack.c.b16 %v3239, %v3223
        %v4088 = vpack.c.b16 %v3240, %v3224
        %v4089 = vpack.c.b16 %v3241, %v3225
        %v4090 = vpack.c.b16 %v3242, %v3226
        %v4091 = vpack.c.b16 %v3243, %v3227
        %v4092 = vpack.c.b16 %v3244, %v3228
        %v4093 = vpack.c.b16 %v3245, %v3229
        %v4094 = vpack.c.b16 %v3246, %v3230
        %v4095 = vpack.c.b16 %v3247, %v3231
        %v4096 = vpack.c.b16 %v3248, %v3232
        %v4097 = vpack.c.b16 %v3249, %v3233
        %v4098 = vpack.c.b16 %v3250, %v3234
        %v4099 = vpack.c.b16 %v3251, %v3235
        %v4100 = vpack.c.b16 %v3252, %v3236
        %v4101 = vpack.c.b16 %v3253, %v3237
        %v4102 = vpack.c.b16 %v3270, %v3254
        %v4103 = vpack.c.b16 %v3271, %v3255
        %v4104 = vpack.c.b16 %v3272, %v3256
        %v4105 = vpack.c.b16 %v3273, %v3257
        %v4106 = vpack.c.b16 %v3274, %v3258
        %v4107 = vpack.c.b16 %v3275, %v3259
        %v4108 = vpack.c.b16 %v3276, %v3260
        %v4109 = vpack.c.b16 %v3277, %v3261
        %v4110 = vpack.c.b16 %v3278, %v3262
        %v4111 = vpack.c.b16 %v3279, %v3263
        %v4112 = vpack.c.b16 %v3280, %v3264
        %v4113 = vpack.c.b16 %v3281, %v3265
        %v4114 = vpack.c.b16 %v3282, %v3266
        %v4115 = vpack.c.b16 %v3283, %v3267
        %v4116 = vpack.c.b16 %v3284, %v3268
        %v4117 = vpack.c.b16 %v3285, %v3269
        %v4118 = vpack.c.b16 %v3302, %v3286
        %v4119 = vpack.c.b16 %v3303, %v3287
        %v4120 = vpack.c.b16 %v3304, %v3288
        %v4121 = vpack.c.b16 %v3305, %v3289
        %v4122 = vpack.c.b16 %v3306, %v3290
        %v4123 = vpack.c.b16 %v3307, %v3291
        %v4124 = vpack.c.b16 %v3308, %v3292
        %v4125 = vpack.c.b16 %v3309, %v3293
        %v4126 = vpack.c.b16 %v3310, %v3294
        %v4127 = vpack.c.b16 %v3311, %v3295
        %v4128 = vpack.c.b16 %v3312, %v3296
        %v4129 = vpack.c.b16 %v3313, %v3297
        %v4130 = vpack.c.b16 %v3314, %v3298
        %v4131 = vpack.c.b16 %v3315, %v3299
        %v4132 = vpack.c.b16 %v3316, %v3300
        %v4133 = vpack.c.b16 %v3317, %v3301
        %v4134 = vpack.c.b16 %v3334, %v3318
        %v4135 = vpack.c.b16 %v3335, %v3319
        %v4136 = vpack.c.b16 %v3336, %v3320
        %v4137 = vpack.c.b16 %v3337, %v3321
        %v4138 = vpack.c.b16 %v3338, %v3322
        %v4139 = vpack.c.b16 %v3339, %v3323
        %v4140 = vpack.c.b16 %v3340, %v3324
        %v4141 = vpack.c.b16 %v3341, %v3325
        %v4142 = vpack.c.b16 %v3342, %v3326
        %v4143 = vpack.c.b16 %v3343, %v3327
        %v4144 = vpack.c.b16 %v3344, %v3328
        %v4145 = vpack.c.b16 %v3345, %v3329
        %v4146 = vpack.c.b16 %v3346, %v3330
        %v4147 = vpack.c.b16 %v3347, %v3331
        %v4148 = vpack.c.b16 %v3348, %v3332
        %v4149 = vpack.c.b16 %v3349, %v3333
        %v4150 = vpack.c.b16 %v3366, %v3350
        %v4151 = vpack.c.b16 %v3367, %v3351
        %v4152 = vpack.c.b16 %v3368, %v3352
        %v4153 = vpack.c.b16 %v3369, %v3353
        %v4154 = vpack.c.b16 %v3370, %v3354
        %v4155 = vpack.c.b16 %v3371, %v3355
        %v4156 = vpack.c.b16 %v3372, %v3356
        %v4157 = vpack.c.b16 %v3373, %v3357
        %v4158 = vpack.c.b16 %v3374, %v3358
        %v4159 = vpack.c.b16 %v3375, %v3359
        %v4160 = vpack.c.b16 %v3376, %v3360
        %v4161 = vpack.c.b16 %v3377, %v3361
        %v4162 = vpack.c.b16 %v3378, %v3362
        %v4163 = vpack.c.b16 %v3379, %v3363
        %v4164 = vpack.c.b16 %v3380, %v3364
        %v4165 = vpack.c.b16 %v3381, %v3365
        %v4166 = vpack.c.b16 %v3398, %v3382
        %v4167 = vpack.c.b16 %v3399, %v3383
        %v4168 = vpack.c.b16 %v3400, %v3384
        %v4169 = vpack.c.b16 %v3401, %v3385
        %v4170 = vpack.c.b16 %v3402, %v3386
        %v4171 = vpack.c.b16 %v3403, %v3387
        %v4172 = vpack.c.b16 %v3404, %v3388
        %v4173 = vpack.c.b16 %v3405, %v3389
        %v4174 = vpack.c.b16 %v3406, %v3390
        %v4175 = vpack.c.b16 %v3407, %v3391
        %v4176 = vpack.c.b16 %v3408, %v3392
        %v4177 = vpack.c.b16 %v3409, %v3393
        %v4178 = vpack.c.b16 %v3410, %v3394
        %v4179 = vpack.c.b16 %v3411, %v3395
        %v4180 = vpack.c.b16 %v3412, %v3396
        %v4181 = vpack.c.b16 %v3413, %v3397
        %4950 = vmatprep.subr.bf16.mxu0 %v3527
        %4951 = vmatpush1.bf16.msra.mxu0 %v3526
        %4952 = vmatprep.subr.bf16.mxu0 %v3511
        %4953 = vmatpush1.bf16.msra.mxu0 %v3510
        %4954 = vmatprep.subr.bf16.mxu0 %v3495
        %4955 = vmatpush1.bf16.msra.mxu0 %v3494
        %4956 = vmatprep.subr.bf16.mxu0 %v3479
        %4957 = vmatpush1.bf16.msra.mxu0 %v3478
        %4958 = vmatprep.subr.bf16.mxu0 %v3463
        %4959 = vmatpush1.bf16.msra.mxu0 %v3462
        %4960 = vmatprep.subr.bf16.mxu0 %v3447
        %4961 = vmatpush1.bf16.msra.mxu0 %v3446
        %4962 = vmatprep.subr.bf16.mxu0 %v3431
        %4963 = vmatpush1.bf16.msra.mxu0 %v3430
        %4964 = vmatprep.subr.bf16.mxu0 %v3415
        %4965 = vmatpush1.bf16.msra.mxu0 %v3414
        %4966 = vmatprep.subr.bf16.mxu0 %v3655
        %4967 = vmatpush2.bf16.msra.mxu0 %v3654
        %4968 = vmatprep.subr.bf16.mxu0 %v3639
        %4969 = vmatpush2.bf16.msra.mxu0 %v3638
        %4970 = vmatprep.subr.bf16.mxu0 %v3623
        %4971 = vmatpush2.bf16.msra.mxu0 %v3622
        %4972 = vmatprep.subr.bf16.mxu0 %v3607
        %4973 = vmatpush2.bf16.msra.mxu0 %v3606
        %4974 = vmatprep.subr.bf16.mxu0 %v3591
        %4975 = vmatpush2.bf16.msra.mxu0 %v3590
        %4976 = vmatprep.subr.bf16.mxu0 %v3575
        %4977 = vmatpush2.bf16.msra.mxu0 %v3574
        %4978 = vmatprep.subr.bf16.mxu0 %v3559
        %4979 = vmatpush2.bf16.msra.mxu0 %v3558
        %4980 = vmatprep.subr.bf16.mxu0 %v3543
        %4981 = vmatpush2.bf16.msra.mxu0 %v3542
        %4982 = vmatprep.mubr.bf16.mxu0 %v337
        %4983 = vmatmul.mubr.bf16.gmra.mxu0 %v336
        %v4984 = vpop.f32.mrf.mxu0
        %v4985 = vadd.f32 0.0, %v4984
        %v4986 = vpop.f32.mrf.mxu0
        %v4987 = vadd.f32 0.0, %v4986
        %v4988 = vpop.f32.mrf.mxu0
        %v4989 = vpop.f32.mrf.mxu0
        %4990 = vdwg.mxu0
        %4991 = vmatprep.subr.bf16.mxu0 %v3783
        %4992 = vmatpush1.bf16.msra.mxu0 %v3782
        %4993 = vmatprep.subr.bf16.mxu0 %v3767
        %4994 = vmatpush1.bf16.msra.mxu0 %v3766
        %4995 = vmatprep.subr.bf16.mxu0 %v3751
        %4996 = vmatpush1.bf16.msra.mxu0 %v3750
        %4997 = vmatprep.subr.bf16.mxu0 %v3735
        %4998 = vmatpush1.bf16.msra.mxu0 %v3734
        %4999 = vmatprep.subr.bf16.mxu0 %v3719
        %5000 = vmatpush1.bf16.msra.mxu0 %v3718
        %5001 = vmatprep.subr.bf16.mxu0 %v3703
        %5002 = vmatpush1.bf16.msra.mxu0 %v3702
        %5003 = vmatprep.subr.bf16.mxu0 %v3687
        %5004 = vmatpush1.bf16.msra.mxu0 %v3686
        %5005 = vmatprep.subr.bf16.mxu0 %v3671
        %5006 = vmatpush1.bf16.msra.mxu0 %v3670
        %5007 = vmatprep.subr.bf16.mxu0 %v3911
        %5008 = vmatpush2.bf16.msra.mxu0 %v3910
        %5009 = vmatprep.subr.bf16.mxu0 %v3895
        %5010 = vmatpush2.bf16.msra.mxu0 %v3894
        %5011 = vmatprep.subr.bf16.mxu0 %v3879
        %5012 = vmatpush2.bf16.msra.mxu0 %v3878
        %5013 = vmatprep.subr.bf16.mxu0 %v3863
        %5014 = vmatpush2.bf16.msra.mxu0 %v3862
        %5015 = vmatprep.subr.bf16.mxu0 %v3847
        %5016 = vmatpush2.bf16.msra.mxu0 %v3846
        %5017 = vmatprep.subr.bf16.mxu0 %v3831
        %5018 = vmatpush2.bf16.msra.mxu0 %v3830
        %5019 = vmatprep.subr.bf16.mxu0 %v3815
        %5020 = vmatpush2.bf16.msra.mxu0 %v3814
        %5021 = vmatprep.subr.bf16.mxu0 %v3799
        %5022 = vmatpush2.bf16.msra.mxu0 %v3798
        %5023 = vmatprep.mubr.bf16.mxu0 %v339
        %5024 = vmatmul.mubr.bf16.gmra.mxu0 %v338
        %v5025 = vpop.f32.mrf.mxu0
        %v5026 = vadd.f32 %v4985, %v5025
        %v5027 = vpop.f32.mrf.mxu0
        %v5028 = vadd.f32 %v4987, %v5027
        %v5029 = vpop.f32.mrf.mxu0
        %v5030 = vpop.f32.mrf.mxu0
        %5031 = vdwg.mxu0
        %5032 = vmatprep.subr.bf16.mxu0 %v4039
        %5033 = vmatpush1.bf16.msra.mxu0 %v4038
        %5034 = vmatprep.subr.bf16.mxu0 %v4023
        %5035 = vmatpush1.bf16.msra.mxu0 %v4022
        %5036 = vmatprep.subr.bf16.mxu0 %v4007
        %5037 = vmatpush1.bf16.msra.mxu0 %v4006
        %5038 = vmatprep.subr.bf16.mxu0 %v3991
        %5039 = vmatpush1.bf16.msra.mxu0 %v3990
        %5040 = vmatprep.subr.bf16.mxu0 %v3975
        %5041 = vmatpush1.bf16.msra.mxu0 %v3974
        %5042 = vmatprep.subr.bf16.mxu0 %v3959
        %5043 = vmatpush1.bf16.msra.mxu0 %v3958
        %5044 = vmatprep.subr.bf16.mxu0 %v3943
        %5045 = vmatpush1.bf16.msra.mxu0 %v3942
        %5046 = vmatprep.subr.bf16.mxu0 %v3927
        %5047 = vmatpush1.bf16.msra.mxu0 %v3926
        %5048 = vmatprep.subr.bf16.mxu0 %v4167
        %5049 = vmatpush2.bf16.msra.mxu0 %v4166
        %5050 = vmatprep.subr.bf16.mxu0 %v4151
        %5051 = vmatpush2.bf16.msra.mxu0 %v4150
        %5052 = vmatprep.subr.bf16.mxu0 %v4135
        %5053 = vmatpush2.bf16.msra.mxu0 %v4134
        %5054 = vmatprep.subr.bf16.mxu0 %v4119
        %5055 = vmatpush2.bf16.msra.mxu0 %v4118
        %5056 = vmatprep.subr.bf16.mxu0 %v4103
        %5057 = vmatpush2.bf16.msra.mxu0 %v4102
        %5058 = vmatprep.subr.bf16.mxu0 %v4087
        %5059 = vmatpush2.bf16.msra.mxu0 %v4086
        %5060 = vmatprep.subr.bf16.mxu0 %v4071
        %5061 = vmatpush2.bf16.msra.mxu0 %v4070
        %5062 = vmatprep.subr.bf16.mxu0 %v4055
        %5063 = vmatpush2.bf16.msra.mxu0 %v4054
        %5064 = vmatprep.mubr.bf16.mxu0 %v341
        %5065 = vmatmul.mubr.bf16.gmra.mxu0 %v340
        %v5066 = vpop.f32.mrf.mxu0
        %v5067 = vadd.f32 %v5026, %v5066
        %v5068 = vpop.f32.mrf.mxu0
        %v5069 = vadd.f32 %v5028, %v5068
        %v5070 = vpop.f32.mrf.mxu0
        %v5071 = vpop.f32.mrf.mxu0
        %5072 = vdwg.mxu0
        %5073 = vmatprep.subr.bf16.mxu0 %v3529
        %5074 = vmatpush1.bf16.msra.mxu0 %v3528
        %5075 = vmatprep.subr.bf16.mxu0 %v3513
        %5076 = vmatpush1.bf16.msra.mxu0 %v3512
        %5077 = vmatprep.subr.bf16.mxu0 %v3497
        %5078 = vmatpush1.bf16.msra.mxu0 %v3496
        %5079 = vmatprep.subr.bf16.mxu0 %v3481
        %5080 = vmatpush1.bf16.msra.mxu0 %v3480
        %5081 = vmatprep.subr.bf16.mxu0 %v3465
        %5082 = vmatpush1.bf16.msra.mxu0 %v3464
        %5083 = vmatprep.subr.bf16.mxu0 %v3449
        %5084 = vmatpush1.bf16.msra.mxu0 %v3448
        %5085 = vmatprep.subr.bf16.mxu0 %v3433
        %5086 = vmatpush1.bf16.msra.mxu0 %v3432
        %5087 = vmatprep.subr.bf16.mxu0 %v3417
        %5088 = vmatpush1.bf16.msra.mxu0 %v3416
        %5089 = vmatprep.subr.bf16.mxu0 %v3657
        %5090 = vmatpush2.bf16.msra.mxu0 %v3656
        %5091 = vmatprep.subr.bf16.mxu0 %v3641
        %5092 = vmatpush2.bf16.msra.mxu0 %v3640
        %5093 = vmatprep.subr.bf16.mxu0 %v3625
        %5094 = vmatpush2.bf16.msra.mxu0 %v3624
        %5095 = vmatprep.subr.bf16.mxu0 %v3609
        %5096 = vmatpush2.bf16.msra.mxu0 %v3608
        %5097 = vmatprep.subr.bf16.mxu0 %v3593
        %5098 = vmatpush2.bf16.msra.mxu0 %v3592
        %5099 = vmatprep.subr.bf16.mxu0 %v3577
        %5100 = vmatpush2.bf16.msra.mxu0 %v3576
        %5101 = vmatprep.subr.bf16.mxu0 %v3561
        %5102 = vmatpush2.bf16.msra.mxu0 %v3560
        %5103 = vmatprep.subr.bf16.mxu0 %v3545
        %5104 = vmatpush2.bf16.msra.mxu0 %v3544
        %5105 = vmatprep.mubr.bf16.mxu0 %v337
        %5106 = vmatmul.mubr.bf16.gmra.mxu0 %v336
        %v5107 = vpop.f32.mrf.mxu0
        %v5108 = vadd.f32 0.0, %v5107
        %v5109 = vpop.f32.mrf.mxu0
        %v5110 = vadd.f32 0.0, %v5109
        %v5111 = vpop.f32.mrf.mxu0
        %v5112 = vpop.f32.mrf.mxu0
        %5113 = vdwg.mxu0
        %5114 = vmatprep.subr.bf16.mxu0 %v3785
        %5115 = vmatpush1.bf16.msra.mxu0 %v3784
        %5116 = vmatprep.subr.bf16.mxu0 %v3769
        %5117 = vmatpush1.bf16.msra.mxu0 %v3768
        %5118 = vmatprep.subr.bf16.mxu0 %v3753
        %5119 = vmatpush1.bf16.msra.mxu0 %v3752
        %5120 = vmatprep.subr.bf16.mxu0 %v3737
        %5121 = vmatpush1.bf16.msra.mxu0 %v3736
        %5122 = vmatprep.subr.bf16.mxu0 %v3721
        %5123 = vmatpush1.bf16.msra.mxu0 %v3720
        %5124 = vmatprep.subr.bf16.mxu0 %v3705
        %5125 = vmatpush1.bf16.msra.mxu0 %v3704
        %5126 = vmatprep.subr.bf16.mxu0 %v3689
        %5127 = vmatpush1.bf16.msra.mxu0 %v3688
        %5128 = vmatprep.subr.bf16.mxu0 %v3673
        %5129 = vmatpush1.bf16.msra.mxu0 %v3672
        %5130 = vmatprep.subr.bf16.mxu0 %v3913
        %5131 = vmatpush2.bf16.msra.mxu0 %v3912
        %5132 = vmatprep.subr.bf16.mxu0 %v3897
        %5133 = vmatpush2.bf16.msra.mxu0 %v3896
        %5134 = vmatprep.subr.bf16.mxu0 %v3881
        %5135 = vmatpush2.bf16.msra.mxu0 %v3880
        %5136 = vmatprep.subr.bf16.mxu0 %v3865
        %5137 = vmatpush2.bf16.msra.mxu0 %v3864
        %5138 = vmatprep.subr.bf16.mxu0 %v3849
        %5139 = vmatpush2.bf16.msra.mxu0 %v3848
        %5140 = vmatprep.subr.bf16.mxu0 %v3833
        %5141 = vmatpush2.bf16.msra.mxu0 %v3832
        %5142 = vmatprep.subr.bf16.mxu0 %v3817
        %5143 = vmatpush2.bf16.msra.mxu0 %v3816
        %5144 = vmatprep.subr.bf16.mxu0 %v3801
        %5145 = vmatpush2.bf16.msra.mxu0 %v3800
        %5146 = vmatprep.mubr.bf16.mxu0 %v339
        %5147 = vmatmul.mubr.bf16.gmra.mxu0 %v338
        %v5148 = vpop.f32.mrf.mxu0
        %v5149 = vadd.f32 %v5108, %v5148
        %v5150 = vpop.f32.mrf.mxu0
        %v5151 = vadd.f32 %v5110, %v5150
        %v5152 = vpop.f32.mrf.mxu0
        %v5153 = vpop.f32.mrf.mxu0
        %5154 = vdwg.mxu0
        %5155 = vmatprep.subr.bf16.mxu0 %v4041
        %5156 = vmatpush1.bf16.msra.mxu0 %v4040
        %5157 = vmatprep.subr.bf16.mxu0 %v4025
        %5158 = vmatpush1.bf16.msra.mxu0 %v4024
        %5159 = vmatprep.subr.bf16.mxu0 %v4009
        %5160 = vmatpush1.bf16.msra.mxu0 %v4008
        %5161 = vmatprep.subr.bf16.mxu0 %v3993
        %5162 = vmatpush1.bf16.msra.mxu0 %v3992
        %5163 = vmatprep.subr.bf16.mxu0 %v3977
        %5164 = vmatpush1.bf16.msra.mxu0 %v3976
        %5165 = vmatprep.subr.bf16.mxu0 %v3961
        %5166 = vmatpush1.bf16.msra.mxu0 %v3960
        %5167 = vmatprep.subr.bf16.mxu0 %v3945
        %5168 = vmatpush1.bf16.msra.mxu0 %v3944
        %5169 = vmatprep.subr.bf16.mxu0 %v3929
        %5170 = vmatpush1.bf16.msra.mxu0 %v3928
        %5171 = vmatprep.subr.bf16.mxu0 %v4169
        %5172 = vmatpush2.bf16.msra.mxu0 %v4168
        %5173 = vmatprep.subr.bf16.mxu0 %v4153
        %5174 = vmatpush2.bf16.msra.mxu0 %v4152
        %5175 = vmatprep.subr.bf16.mxu0 %v4137
        %5176 = vmatpush2.bf16.msra.mxu0 %v4136
        %5177 = vmatprep.subr.bf16.mxu0 %v4121
        %5178 = vmatpush2.bf16.msra.mxu0 %v4120
        %5179 = vmatprep.subr.bf16.mxu0 %v4105
        %5180 = vmatpush2.bf16.msra.mxu0 %v4104
        %5181 = vmatprep.subr.bf16.mxu0 %v4089
        %5182 = vmatpush2.bf16.msra.mxu0 %v4088
        %5183 = vmatprep.subr.bf16.mxu0 %v4073
        %5184 = vmatpush2.bf16.msra.mxu0 %v4072
        %5185 = vmatprep.subr.bf16.mxu0 %v4057
        %5186 = vmatpush2.bf16.msra.mxu0 %v4056
        %5187 = vmatprep.mubr.bf16.mxu0 %v341
        %5188 = vmatmul.mubr.bf16.gmra.mxu0 %v340
        %v5189 = vpop.f32.mrf.mxu0
        %v5190 = vadd.f32 %v5149, %v5189
        %v5191 = vpop.f32.mrf.mxu0
        %v5192 = vadd.f32 %v5151, %v5191
        %v5193 = vpop.f32.mrf.mxu0
        %v5194 = vpop.f32.mrf.mxu0
        %5195 = vdwg.mxu0
        %5196 = vmatprep.subr.bf16.mxu0 %v3531
        %5197 = vmatpush1.bf16.msra.mxu0 %v3530
        %5198 = vmatprep.subr.bf16.mxu0 %v3515
        %5199 = vmatpush1.bf16.msra.mxu0 %v3514
        %5200 = vmatprep.subr.bf16.mxu0 %v3499
        %5201 = vmatpush1.bf16.msra.mxu0 %v3498
        %5202 = vmatprep.subr.bf16.mxu0 %v3483
        %5203 = vmatpush1.bf16.msra.mxu0 %v3482
        %5204 = vmatprep.subr.bf16.mxu0 %v3467
        %5205 = vmatpush1.bf16.msra.mxu0 %v3466
        %5206 = vmatprep.subr.bf16.mxu0 %v3451
        %5207 = vmatpush1.bf16.msra.mxu0 %v3450
        %5208 = vmatprep.subr.bf16.mxu0 %v3435
        %5209 = vmatpush1.bf16.msra.mxu0 %v3434
        %5210 = vmatprep.subr.bf16.mxu0 %v3419
        %5211 = vmatpush1.bf16.msra.mxu0 %v3418
        %5212 = vmatprep.subr.bf16.mxu0 %v3659
        %5213 = vmatpush2.bf16.msra.mxu0 %v3658
        %5214 = vmatprep.subr.bf16.mxu0 %v3643
        %5215 = vmatpush2.bf16.msra.mxu0 %v3642
        %5216 = vmatprep.subr.bf16.mxu0 %v3627
        %5217 = vmatpush2.bf16.msra.mxu0 %v3626
        %5218 = vmatprep.subr.bf16.mxu0 %v3611
        %5219 = vmatpush2.bf16.msra.mxu0 %v3610
        %5220 = vmatprep.subr.bf16.mxu0 %v3595
        %5221 = vmatpush2.bf16.msra.mxu0 %v3594
        %5222 = vmatprep.subr.bf16.mxu0 %v3579
        %5223 = vmatpush2.bf16.msra.mxu0 %v3578
        %5224 = vmatprep.subr.bf16.mxu0 %v3563
        %5225 = vmatpush2.bf16.msra.mxu0 %v3562
        %5226 = vmatprep.subr.bf16.mxu0 %v3547
        %5227 = vmatpush2.bf16.msra.mxu0 %v3546
        %5228 = vmatprep.mubr.bf16.mxu0 %v337
        %5229 = vmatmul.mubr.bf16.gmra.mxu0 %v336
        %v5230 = vpop.f32.mrf.mxu0
        %v5231 = vadd.f32 0.0, %v5230
        %v5232 = vpop.f32.mrf.mxu0
        %v5233 = vadd.f32 0.0, %v5232
        %v5234 = vpop.f32.mrf.mxu0
        %v5235 = vpop.f32.mrf.mxu0
        %5236 = vdwg.mxu0
        %5237 = vmatprep.subr.bf16.mxu0 %v3787
        %5238 = vmatpush1.bf16.msra.mxu0 %v3786
        %5239 = vmatprep.subr.bf16.mxu0 %v3771
        %5240 = vmatpush1.bf16.msra.mxu0 %v3770
        %5241 = vmatprep.subr.bf16.mxu0 %v3755
        %5242 = vmatpush1.bf16.msra.mxu0 %v3754
        %5243 = vmatprep.subr.bf16.mxu0 %v3739
        %5244 = vmatpush1.bf16.msra.mxu0 %v3738
        %5245 = vmatprep.subr.bf16.mxu0 %v3723
        %5246 = vmatpush1.bf16.msra.mxu0 %v3722
        %5247 = vmatprep.subr.bf16.mxu0 %v3707
        %5248 = vmatpush1.bf16.msra.mxu0 %v3706
        %5249 = vmatprep.subr.bf16.mxu0 %v3691
        %5250 = vmatpush1.bf16.msra.mxu0 %v3690
        %5251 = vmatprep.subr.bf16.mxu0 %v3675
        %5252 = vmatpush1.bf16.msra.mxu0 %v3674
        %5253 = vmatprep.subr.bf16.mxu0 %v3915
        %5254 = vmatpush2.bf16.msra.mxu0 %v3914
        %5255 = vmatprep.subr.bf16.mxu0 %v3899
        %5256 = vmatpush2.bf16.msra.mxu0 %v3898
        %5257 = vmatprep.subr.bf16.mxu0 %v3883
        %5258 = vmatpush2.bf16.msra.mxu0 %v3882
        %5259 = vmatprep.subr.bf16.mxu0 %v3867
        %5260 = vmatpush2.bf16.msra.mxu0 %v3866
        %5261 = vmatprep.subr.bf16.mxu0 %v3851
        %5262 = vmatpush2.bf16.msra.mxu0 %v3850
        %5263 = vmatprep.subr.bf16.mxu0 %v3835
        %5264 = vmatpush2.bf16.msra.mxu0 %v3834
        %5265 = vmatprep.subr.bf16.mxu0 %v3819
        %5266 = vmatpush2.bf16.msra.mxu0 %v3818
        %5267 = vmatprep.subr.bf16.mxu0 %v3803
        %5268 = vmatpush2.bf16.msra.mxu0 %v3802
        %5269 = vmatprep.mubr.bf16.mxu0 %v339
        %5270 = vmatmul.mubr.bf16.gmra.mxu0 %v338
        %v5271 = vpop.f32.mrf.mxu0
        %v5272 = vadd.f32 %v5231, %v5271
        %v5273 = vpop.f32.mrf.mxu0
        %v5274 = vadd.f32 %v5233, %v5273
        %v5275 = vpop.f32.mrf.mxu0
        %v5276 = vpop.f32.mrf.mxu0
        %5277 = vdwg.mxu0
        %5278 = vmatprep.subr.bf16.mxu0 %v4043
        %5279 = vmatpush1.bf16.msra.mxu0 %v4042
        %5280 = vmatprep.subr.bf16.mxu0 %v4027
        %5281 = vmatpush1.bf16.msra.mxu0 %v4026
        %5282 = vmatprep.subr.bf16.mxu0 %v4011
        %5283 = vmatpush1.bf16.msra.mxu0 %v4010
        %5284 = vmatprep.subr.bf16.mxu0 %v3995
        %5285 = vmatpush1.bf16.msra.mxu0 %v3994
        %5286 = vmatprep.subr.bf16.mxu0 %v3979
        %5287 = vmatpush1.bf16.msra.mxu0 %v3978
        %5288 = vmatprep.subr.bf16.mxu0 %v3963
        %5289 = vmatpush1.bf16.msra.mxu0 %v3962
        %5290 = vmatprep.subr.bf16.mxu0 %v3947
        %5291 = vmatpush1.bf16.msra.mxu0 %v3946
        %5292 = vmatprep.subr.bf16.mxu0 %v3931
        %5293 = vmatpush1.bf16.msra.mxu0 %v3930
        %5294 = vmatprep.subr.bf16.mxu0 %v4171
        %5295 = vmatpush2.bf16.msra.mxu0 %v4170
        %5296 = vmatprep.subr.bf16.mxu0 %v4155
        %5297 = vmatpush2.bf16.msra.mxu0 %v4154
        %5298 = vmatprep.subr.bf16.mxu0 %v4139
        %5299 = vmatpush2.bf16.msra.mxu0 %v4138
        %5300 = vmatprep.subr.bf16.mxu0 %v4123
        %5301 = vmatpush2.bf16.msra.mxu0 %v4122
        %5302 = vmatprep.subr.bf16.mxu0 %v4107
        %5303 = vmatpush2.bf16.msra.mxu0 %v4106
        %5304 = vmatprep.subr.bf16.mxu0 %v4091
        %5305 = vmatpush2.bf16.msra.mxu0 %v4090
        %5306 = vmatprep.subr.bf16.mxu0 %v4075
        %5307 = vmatpush2.bf16.msra.mxu0 %v4074
        %5308 = vmatprep.subr.bf16.mxu0 %v4059
        %5309 = vmatpush2.bf16.msra.mxu0 %v4058
        %5310 = vmatprep.mubr.bf16.mxu0 %v341
        %5311 = vmatmul.mubr.bf16.gmra.mxu0 %v340
        %v5312 = vpop.f32.mrf.mxu0
        %v5313 = vadd.f32 %v5272, %v5312
        %v5314 = vpop.f32.mrf.mxu0
        %v5315 = vadd.f32 %v5274, %v5314
        %v5316 = vpop.f32.mrf.mxu0
        %v5317 = vpop.f32.mrf.mxu0
        %5318 = vdwg.mxu0
        %5319 = vmatprep.subr.bf16.mxu0 %v3533
        %5320 = vmatpush1.bf16.msra.mxu0 %v3532
        %5321 = vmatprep.subr.bf16.mxu0 %v3517
        %5322 = vmatpush1.bf16.msra.mxu0 %v3516
        %5323 = vmatprep.subr.bf16.mxu0 %v3501
        %5324 = vmatpush1.bf16.msra.mxu0 %v3500
        %5325 = vmatprep.subr.bf16.mxu0 %v3485
        %5326 = vmatpush1.bf16.msra.mxu0 %v3484
        %5327 = vmatprep.subr.bf16.mxu0 %v3469
        %5328 = vmatpush1.bf16.msra.mxu0 %v3468
        %5329 = vmatprep.subr.bf16.mxu0 %v3453
        %5330 = vmatpush1.bf16.msra.mxu0 %v3452
        %5331 = vmatprep.subr.bf16.mxu0 %v3437
        %5332 = vmatpush1.bf16.msra.mxu0 %v3436
        %5333 = vmatprep.subr.bf16.mxu0 %v3421
        %5334 = vmatpush1.bf16.msra.mxu0 %v3420
        %5335 = vmatprep.subr.bf16.mxu0 %v3661
        %5336 = vmatpush2.bf16.msra.mxu0 %v3660
        %5337 = vmatprep.subr.bf16.mxu0 %v3645
        %5338 = vmatpush2.bf16.msra.mxu0 %v3644
        %5339 = vmatprep.subr.bf16.mxu0 %v3629
        %5340 = vmatpush2.bf16.msra.mxu0 %v3628
        %5341 = vmatprep.subr.bf16.mxu0 %v3613
        %5342 = vmatpush2.bf16.msra.mxu0 %v3612
        %5343 = vmatprep.subr.bf16.mxu0 %v3597
        %5344 = vmatpush2.bf16.msra.mxu0 %v3596
        %5345 = vmatprep.subr.bf16.mxu0 %v3581
        %5346 = vmatpush2.bf16.msra.mxu0 %v3580
        %5347 = vmatprep.subr.bf16.mxu0 %v3565
        %5348 = vmatpush2.bf16.msra.mxu0 %v3564
        %5349 = vmatprep.subr.bf16.mxu0 %v3549
        %5350 = vmatpush2.bf16.msra.mxu0 %v3548
        %5351 = vmatprep.mubr.bf16.mxu0 %v337
        %5352 = vmatmul.mubr.bf16.gmra.mxu0 %v336
        %v5353 = vpop.f32.mrf.mxu0
        %v5354 = vadd.f32 0.0, %v5353
        %v5355 = vpop.f32.mrf.mxu0
        %v5356 = vadd.f32 0.0, %v5355
        %v5357 = vpop.f32.mrf.mxu0
        %v5358 = vpop.f32.mrf.mxu0
        %5359 = vdwg.mxu0
        %5360 = vmatprep.subr.bf16.mxu0 %v3789
        %5361 = vmatpush1.bf16.msra.mxu0 %v3788
        %5362 = vmatprep.subr.bf16.mxu0 %v3773
        %5363 = vmatpush1.bf16.msra.mxu0 %v3772
        %5364 = vmatprep.subr.bf16.mxu0 %v3757
        %5365 = vmatpush1.bf16.msra.mxu0 %v3756
        %5366 = vmatprep.subr.bf16.mxu0 %v3741
        %5367 = vmatpush1.bf16.msra.mxu0 %v3740
        %5368 = vmatprep.subr.bf16.mxu0 %v3725
        %5369 = vmatpush1.bf16.msra.mxu0 %v3724
        %5370 = vmatprep.subr.bf16.mxu0 %v3709
        %5371 = vmatpush1.bf16.msra.mxu0 %v3708
        %5372 = vmatprep.subr.bf16.mxu0 %v3693
        %5373 = vmatpush1.bf16.msra.mxu0 %v3692
        %5374 = vmatprep.subr.bf16.mxu0 %v3677
        %5375 = vmatpush1.bf16.msra.mxu0 %v3676
        %5376 = vmatprep.subr.bf16.mxu0 %v3917
        %5377 = vmatpush2.bf16.msra.mxu0 %v3916
        %5378 = vmatprep.subr.bf16.mxu0 %v3901
        %5379 = vmatpush2.bf16.msra.mxu0 %v3900
        %5380 = vmatprep.subr.bf16.mxu0 %v3885
        %5381 = vmatpush2.bf16.msra.mxu0 %v3884
        %5382 = vmatprep.subr.bf16.mxu0 %v3869
        %5383 = vmatpush2.bf16.msra.mxu0 %v3868
        %5384 = vmatprep.subr.bf16.mxu0 %v3853
        %5385 = vmatpush2.bf16.msra.mxu0 %v3852
        %5386 = vmatprep.subr.bf16.mxu0 %v3837
        %5387 = vmatpush2.bf16.msra.mxu0 %v3836
        %5388 = vmatprep.subr.bf16.mxu0 %v3821
        %5389 = vmatpush2.bf16.msra.mxu0 %v3820
        %5390 = vmatprep.subr.bf16.mxu0 %v3805
        %5391 = vmatpush2.bf16.msra.mxu0 %v3804
        %5392 = vmatprep.mubr.bf16.mxu0 %v339
        %5393 = vmatmul.mubr.bf16.gmra.mxu0 %v338
        %v5394 = vpop.f32.mrf.mxu0
        %v5395 = vadd.f32 %v5354, %v5394
        %v5396 = vpop.f32.mrf.mxu0
        %v5397 = vadd.f32 %v5356, %v5396
        %v5398 = vpop.f32.mrf.mxu0
        %v5399 = vpop.f32.mrf.mxu0
        %5400 = vdwg.mxu0
        %5401 = vmatprep.subr.bf16.mxu0 %v4045
        %5402 = vmatpush1.bf16.msra.mxu0 %v4044
        %5403 = vmatprep.subr.bf16.mxu0 %v4029
        %5404 = vmatpush1.bf16.msra.mxu0 %v4028
        %5405 = vmatprep.subr.bf16.mxu0 %v4013
        %5406 = vmatpush1.bf16.msra.mxu0 %v4012
        %5407 = vmatprep.subr.bf16.mxu0 %v3997
        %5408 = vmatpush1.bf16.msra.mxu0 %v3996
        %5409 = vmatprep.subr.bf16.mxu0 %v3981
        %5410 = vmatpush1.bf16.msra.mxu0 %v3980
        %5411 = vmatprep.subr.bf16.mxu0 %v3965
        %5412 = vmatpush1.bf16.msra.mxu0 %v3964
        %5413 = vmatprep.subr.bf16.mxu0 %v3949
        %5414 = vmatpush1.bf16.msra.mxu0 %v3948
        %5415 = vmatprep.subr.bf16.mxu0 %v3933
        %5416 = vmatpush1.bf16.msra.mxu0 %v3932
        %5417 = vmatprep.subr.bf16.mxu0 %v4173
        %5418 = vmatpush2.bf16.msra.mxu0 %v4172
        %5419 = vmatprep.subr.bf16.mxu0 %v4157
        %5420 = vmatpush2.bf16.msra.mxu0 %v4156
        %5421 = vmatprep.subr.bf16.mxu0 %v4141
        %5422 = vmatpush2.bf16.msra.mxu0 %v4140
        %5423 = vmatprep.subr.bf16.mxu0 %v4125
        %5424 = vmatpush2.bf16.msra.mxu0 %v4124
        %5425 = vmatprep.subr.bf16.mxu0 %v4109
        %5426 = vmatpush2.bf16.msra.mxu0 %v4108
        %5427 = vmatprep.subr.bf16.mxu0 %v4093
        %5428 = vmatpush2.bf16.msra.mxu0 %v4092
        %5429 = vmatprep.subr.bf16.mxu0 %v4077
        %5430 = vmatpush2.bf16.msra.mxu0 %v4076
        %5431 = vmatprep.subr.bf16.mxu0 %v4061
        %5432 = vmatpush2.bf16.msra.mxu0 %v4060
        %5433 = vmatprep.mubr.bf16.mxu0 %v341
        %5434 = vmatmul.mubr.bf16.gmra.mxu0 %v340
        %v5435 = vpop.f32.mrf.mxu0
        %v5436 = vadd.f32 %v5395, %v5435
        %v5437 = vpop.f32.mrf.mxu0
        %v5438 = vadd.f32 %v5397, %v5437
        %v5439 = vpop.f32.mrf.mxu0
        %v5440 = vpop.f32.mrf.mxu0
        %5441 = vdwg.mxu0
        %5442 = vmatprep.subr.bf16.mxu0 %v3535
        %5443 = vmatpush1.bf16.msra.mxu0 %v3534
        %5444 = vmatprep.subr.bf16.mxu0 %v3519
        %5445 = vmatpush1.bf16.msra.mxu0 %v3518
        %5446 = vmatprep.subr.bf16.mxu0 %v3503
        %5447 = vmatpush1.bf16.msra.mxu0 %v3502
        %5448 = vmatprep.subr.bf16.mxu0 %v3487
        %5449 = vmatpush1.bf16.msra.mxu0 %v3486
        %5450 = vmatprep.subr.bf16.mxu0 %v3471
        %5451 = vmatpush1.bf16.msra.mxu0 %v3470
        %5452 = vmatprep.subr.bf16.mxu0 %v3455
        %5453 = vmatpush1.bf16.msra.mxu0 %v3454
        %5454 = vmatprep.subr.bf16.mxu0 %v3439
        %5455 = vmatpush1.bf16.msra.mxu0 %v3438
        %5456 = vmatprep.subr.bf16.mxu0 %v3423
        %5457 = vmatpush1.bf16.msra.mxu0 %v3422
        %5458 = vmatprep.subr.bf16.mxu0 %v3663
        %5459 = vmatpush2.bf16.msra.mxu0 %v3662
        %5460 = vmatprep.subr.bf16.mxu0 %v3647
        %5461 = vmatpush2.bf16.msra.mxu0 %v3646
        %5462 = vmatprep.subr.bf16.mxu0 %v3631
        %5463 = vmatpush2.bf16.msra.mxu0 %v3630
        %5464 = vmatprep.subr.bf16.mxu0 %v3615
        %5465 = vmatpush2.bf16.msra.mxu0 %v3614
        %5466 = vmatprep.subr.bf16.mxu0 %v3599
        %5467 = vmatpush2.bf16.msra.mxu0 %v3598
        %5468 = vmatprep.subr.bf16.mxu0 %v3583
        %5469 = vmatpush2.bf16.msra.mxu0 %v3582
        %5470 = vmatprep.subr.bf16.mxu0 %v3567
        %5471 = vmatpush2.bf16.msra.mxu0 %v3566
        %5472 = vmatprep.subr.bf16.mxu0 %v3551
        %5473 = vmatpush2.bf16.msra.mxu0 %v3550
        %5474 = vmatprep.mubr.bf16.mxu0 %v337
        %5475 = vmatmul.mubr.bf16.gmra.mxu0 %v336
        %v5476 = vpop.f32.mrf.mxu0
        %v5477 = vadd.f32 0.0, %v5476
        %v5478 = vpop.f32.mrf.mxu0
        %v5479 = vadd.f32 0.0, %v5478
        %v5480 = vpop.f32.mrf.mxu0
        %v5481 = vpop.f32.mrf.mxu0
        %5482 = vdwg.mxu0
        %5483 = vmatprep.subr.bf16.mxu0 %v3791
        %5484 = vmatpush1.bf16.msra.mxu0 %v3790
        %5485 = vmatprep.subr.bf16.mxu0 %v3775
        %5486 = vmatpush1.bf16.msra.mxu0 %v3774
        %5487 = vmatprep.subr.bf16.mxu0 %v3759
        %5488 = vmatpush1.bf16.msra.mxu0 %v3758
        %5489 = vmatprep.subr.bf16.mxu0 %v3743
        %5490 = vmatpush1.bf16.msra.mxu0 %v3742
        %5491 = vmatprep.subr.bf16.mxu0 %v3727
        %5492 = vmatpush1.bf16.msra.mxu0 %v3726
        %5493 = vmatprep.subr.bf16.mxu0 %v3711
        %5494 = vmatpush1.bf16.msra.mxu0 %v3710
        %5495 = vmatprep.subr.bf16.mxu0 %v3695
        %5496 = vmatpush1.bf16.msra.mxu0 %v3694
        %5497 = vmatprep.subr.bf16.mxu0 %v3679
        %5498 = vmatpush1.bf16.msra.mxu0 %v3678
        %5499 = vmatprep.subr.bf16.mxu0 %v3919
        %5500 = vmatpush2.bf16.msra.mxu0 %v3918
        %5501 = vmatprep.subr.bf16.mxu0 %v3903
        %5502 = vmatpush2.bf16.msra.mxu0 %v3902
        %5503 = vmatprep.subr.bf16.mxu0 %v3887
        %5504 = vmatpush2.bf16.msra.mxu0 %v3886
        %5505 = vmatprep.subr.bf16.mxu0 %v3871
        %5506 = vmatpush2.bf16.msra.mxu0 %v3870
        %5507 = vmatprep.subr.bf16.mxu0 %v3855
        %5508 = vmatpush2.bf16.msra.mxu0 %v3854
        %5509 = vmatprep.subr.bf16.mxu0 %v3839
        %5510 = vmatpush2.bf16.msra.mxu0 %v3838
        %5511 = vmatprep.subr.bf16.mxu0 %v3823
        %5512 = vmatpush2.bf16.msra.mxu0 %v3822
        %5513 = vmatprep.subr.bf16.mxu0 %v3807
        %5514 = vmatpush2.bf16.msra.mxu0 %v3806
        %5515 = vmatprep.mubr.bf16.mxu0 %v339
        %5516 = vmatmul.mubr.bf16.gmra.mxu0 %v338
        %v5517 = vpop.f32.mrf.mxu0
        %v5518 = vadd.f32 %v5477, %v5517
        %v5519 = vpop.f32.mrf.mxu0
        %v5520 = vadd.f32 %v5479, %v5519
        %v5521 = vpop.f32.mrf.mxu0
        %v5522 = vpop.f32.mrf.mxu0
        %5523 = vdwg.mxu0
        %5524 = vmatprep.subr.bf16.mxu0 %v4047
        %5525 = vmatpush1.bf16.msra.mxu0 %v4046
        %5526 = vmatprep.subr.bf16.mxu0 %v4031
        %5527 = vmatpush1.bf16.msra.mxu0 %v4030
        %5528 = vmatprep.subr.bf16.mxu0 %v4015
        %5529 = vmatpush1.bf16.msra.mxu0 %v4014
        %5530 = vmatprep.subr.bf16.mxu0 %v3999
        %5531 = vmatpush1.bf16.msra.mxu0 %v3998
        %5532 = vmatprep.subr.bf16.mxu0 %v3983
        %5533 = vmatpush1.bf16.msra.mxu0 %v3982
        %5534 = vmatprep.subr.bf16.mxu0 %v3967
        %5535 = vmatpush1.bf16.msra.mxu0 %v3966
        %5536 = vmatprep.subr.bf16.mxu0 %v3951
        %5537 = vmatpush1.bf16.msra.mxu0 %v3950
        %5538 = vmatprep.subr.bf16.mxu0 %v3935
        %5539 = vmatpush1.bf16.msra.mxu0 %v3934
        %5540 = vmatprep.subr.bf16.mxu0 %v4175
        %5541 = vmatpush2.bf16.msra.mxu0 %v4174
        %5542 = vmatprep.subr.bf16.mxu0 %v4159
        %5543 = vmatpush2.bf16.msra.mxu0 %v4158
        %5544 = vmatprep.subr.bf16.mxu0 %v4143
        %5545 = vmatpush2.bf16.msra.mxu0 %v4142
        %5546 = vmatprep.subr.bf16.mxu0 %v4127
        %5547 = vmatpush2.bf16.msra.mxu0 %v4126
        %5548 = vmatprep.subr.bf16.mxu0 %v4111
        %5549 = vmatpush2.bf16.msra.mxu0 %v4110
        %5550 = vmatprep.subr.bf16.mxu0 %v4095
        %5551 = vmatpush2.bf16.msra.mxu0 %v4094
        %5552 = vmatprep.subr.bf16.mxu0 %v4079
        %5553 = vmatpush2.bf16.msra.mxu0 %v4078
        %5554 = vmatprep.subr.bf16.mxu0 %v4063
        %5555 = vmatpush2.bf16.msra.mxu0 %v4062
        %5556 = vmatprep.mubr.bf16.mxu0 %v341
        %5557 = vmatmul.mubr.bf16.gmra.mxu0 %v340
        %v5558 = vpop.f32.mrf.mxu0
        %v5559 = vadd.f32 %v5518, %v5558
        %v5560 = vpop.f32.mrf.mxu0
        %v5561 = vadd.f32 %v5520, %v5560
        %v5562 = vpop.f32.mrf.mxu0
        %v5563 = vpop.f32.mrf.mxu0
        %5564 = vdwg.mxu0
        %5565 = vmatprep.subr.bf16.mxu0 %v3537
        %5566 = vmatpush1.bf16.msra.mxu0 %v3536
        %5567 = vmatprep.subr.bf16.mxu0 %v3521
        %5568 = vmatpush1.bf16.msra.mxu0 %v3520
        %5569 = vmatprep.subr.bf16.mxu0 %v3505
        %5570 = vmatpush1.bf16.msra.mxu0 %v3504
        %5571 = vmatprep.subr.bf16.mxu0 %v3489
        %5572 = vmatpush1.bf16.msra.mxu0 %v3488
        %5573 = vmatprep.subr.bf16.mxu0 %v3473
        %5574 = vmatpush1.bf16.msra.mxu0 %v3472
        %5575 = vmatprep.subr.bf16.mxu0 %v3457
        %5576 = vmatpush1.bf16.msra.mxu0 %v3456
        %5577 = vmatprep.subr.bf16.mxu0 %v3441
        %5578 = vmatpush1.bf16.msra.mxu0 %v3440
        %5579 = vmatprep.subr.bf16.mxu0 %v3425
        %5580 = vmatpush1.bf16.msra.mxu0 %v3424
        %5581 = vmatprep.subr.bf16.mxu0 %v3665
        %5582 = vmatpush2.bf16.msra.mxu0 %v3664
        %5583 = vmatprep.subr.bf16.mxu0 %v3649
        %5584 = vmatpush2.bf16.msra.mxu0 %v3648
        %5585 = vmatprep.subr.bf16.mxu0 %v3633
        %5586 = vmatpush2.bf16.msra.mxu0 %v3632
        %5587 = vmatprep.subr.bf16.mxu0 %v3617
        %5588 = vmatpush2.bf16.msra.mxu0 %v3616
        %5589 = vmatprep.subr.bf16.mxu0 %v3601
        %5590 = vmatpush2.bf16.msra.mxu0 %v3600
        %5591 = vmatprep.subr.bf16.mxu0 %v3585
        %5592 = vmatpush2.bf16.msra.mxu0 %v3584
        %5593 = vmatprep.subr.bf16.mxu0 %v3569
        %5594 = vmatpush2.bf16.msra.mxu0 %v3568
        %5595 = vmatprep.subr.bf16.mxu0 %v3553
        %5596 = vmatpush2.bf16.msra.mxu0 %v3552
        %5597 = vmatprep.mubr.bf16.mxu0 %v337
        %5598 = vmatmul.mubr.bf16.gmra.mxu0 %v336
        %v5599 = vpop.f32.mrf.mxu0
        %v5600 = vadd.f32 0.0, %v5599
        %v5601 = vpop.f32.mrf.mxu0
        %v5602 = vadd.f32 0.0, %v5601
        %v5603 = vpop.f32.mrf.mxu0
        %v5604 = vpop.f32.mrf.mxu0
        %5605 = vdwg.mxu0
        %5606 = vmatprep.subr.bf16.mxu0 %v3793
        %5607 = vmatpush1.bf16.msra.mxu0 %v3792
        %5608 = vmatprep.subr.bf16.mxu0 %v3777
        %5609 = vmatpush1.bf16.msra.mxu0 %v3776
        %5610 = vmatprep.subr.bf16.mxu0 %v3761
        %5611 = vmatpush1.bf16.msra.mxu0 %v3760
        %5612 = vmatprep.subr.bf16.mxu0 %v3745
        %5613 = vmatpush1.bf16.msra.mxu0 %v3744
        %5614 = vmatprep.subr.bf16.mxu0 %v3729
        %5615 = vmatpush1.bf16.msra.mxu0 %v3728
        %5616 = vmatprep.subr.bf16.mxu0 %v3713
        %5617 = vmatpush1.bf16.msra.mxu0 %v3712
        %5618 = vmatprep.subr.bf16.mxu0 %v3697
        %5619 = vmatpush1.bf16.msra.mxu0 %v3696
        %5620 = vmatprep.subr.bf16.mxu0 %v3681
        %5621 = vmatpush1.bf16.msra.mxu0 %v3680
        %5622 = vmatprep.subr.bf16.mxu0 %v3921
        %5623 = vmatpush2.bf16.msra.mxu0 %v3920
        %5624 = vmatprep.subr.bf16.mxu0 %v3905
        %5625 = vmatpush2.bf16.msra.mxu0 %v3904
        %5626 = vmatprep.subr.bf16.mxu0 %v3889
        %5627 = vmatpush2.bf16.msra.mxu0 %v3888
        %5628 = vmatprep.subr.bf16.mxu0 %v3873
        %5629 = vmatpush2.bf16.msra.mxu0 %v3872
        %5630 = vmatprep.subr.bf16.mxu0 %v3857
        %5631 = vmatpush2.bf16.msra.mxu0 %v3856
        %5632 = vmatprep.subr.bf16.mxu0 %v3841
        %5633 = vmatpush2.bf16.msra.mxu0 %v3840
        %5634 = vmatprep.subr.bf16.mxu0 %v3825
        %5635 = vmatpush2.bf16.msra.mxu0 %v3824
        %5636 = vmatprep.subr.bf16.mxu0 %v3809
        %5637 = vmatpush2.bf16.msra.mxu0 %v3808
        %5638 = vmatprep.mubr.bf16.mxu0 %v339
        %5639 = vmatmul.mubr.bf16.gmra.mxu0 %v338
        %v5640 = vpop.f32.mrf.mxu0
        %v5641 = vadd.f32 %v5600, %v5640
        %v5642 = vpop.f32.mrf.mxu0
        %v5643 = vadd.f32 %v5602, %v5642
        %v5644 = vpop.f32.mrf.mxu0
        %v5645 = vpop.f32.mrf.mxu0
        %5646 = vdwg.mxu0
        %5647 = vmatprep.subr.bf16.mxu0 %v4049
        %5648 = vmatpush1.bf16.msra.mxu0 %v4048
        %5649 = vmatprep.subr.bf16.mxu0 %v4033
        %5650 = vmatpush1.bf16.msra.mxu0 %v4032
        %5651 = vmatprep.subr.bf16.mxu0 %v4017
        %5652 = vmatpush1.bf16.msra.mxu0 %v4016
        %5653 = vmatprep.subr.bf16.mxu0 %v4001
        %5654 = vmatpush1.bf16.msra.mxu0 %v4000
        %5655 = vmatprep.subr.bf16.mxu0 %v3985
        %5656 = vmatpush1.bf16.msra.mxu0 %v3984
        %5657 = vmatprep.subr.bf16.mxu0 %v3969
        %5658 = vmatpush1.bf16.msra.mxu0 %v3968
        %5659 = vmatprep.subr.bf16.mxu0 %v3953
        %5660 = vmatpush1.bf16.msra.mxu0 %v3952
        %5661 = vmatprep.subr.bf16.mxu0 %v3937
        %5662 = vmatpush1.bf16.msra.mxu0 %v3936
        %5663 = vmatprep.subr.bf16.mxu0 %v4177
        %5664 = vmatpush2.bf16.msra.mxu0 %v4176
        %5665 = vmatprep.subr.bf16.mxu0 %v4161
        %5666 = vmatpush2.bf16.msra.mxu0 %v4160
        %5667 = vmatprep.subr.bf16.mxu0 %v4145
        %5668 = vmatpush2.bf16.msra.mxu0 %v4144
        %5669 = vmatprep.subr.bf16.mxu0 %v4129
        %5670 = vmatpush2.bf16.msra.mxu0 %v4128
        %5671 = vmatprep.subr.bf16.mxu0 %v4113
        %5672 = vmatpush2.bf16.msra.mxu0 %v4112
        %5673 = vmatprep.subr.bf16.mxu0 %v4097
        %5674 = vmatpush2.bf16.msra.mxu0 %v4096
        %5675 = vmatprep.subr.bf16.mxu0 %v4081
        %5676 = vmatpush2.bf16.msra.mxu0 %v4080
        %5677 = vmatprep.subr.bf16.mxu0 %v4065
        %5678 = vmatpush2.bf16.msra.mxu0 %v4064
        %5679 = vmatprep.mubr.bf16.mxu0 %v341
        %5680 = vmatmul.mubr.bf16.gmra.mxu0 %v340
        %v5681 = vpop.f32.mrf.mxu0
        %v5682 = vadd.f32 %v5641, %v5681
        %v5683 = vpop.f32.mrf.mxu0
        %v5684 = vadd.f32 %v5643, %v5683
        %v5685 = vpop.f32.mrf.mxu0
        %v5686 = vpop.f32.mrf.mxu0
        %5687 = vdwg.mxu0
        %5688 = vmatprep.subr.bf16.mxu0 %v3539
        %5689 = vmatpush1.bf16.msra.mxu0 %v3538
        %5690 = vmatprep.subr.bf16.mxu0 %v3523
        %5691 = vmatpush1.bf16.msra.mxu0 %v3522
        %5692 = vmatprep.subr.bf16.mxu0 %v3507
        %5693 = vmatpush1.bf16.msra.mxu0 %v3506
        %5694 = vmatprep.subr.bf16.mxu0 %v3491
        %5695 = vmatpush1.bf16.msra.mxu0 %v3490
        %5696 = vmatprep.subr.bf16.mxu0 %v3475
        %5697 = vmatpush1.bf16.msra.mxu0 %v3474
        %5698 = vmatprep.subr.bf16.mxu0 %v3459
        %5699 = vmatpush1.bf16.msra.mxu0 %v3458
        %5700 = vmatprep.subr.bf16.mxu0 %v3443
        %5701 = vmatpush1.bf16.msra.mxu0 %v3442
        %5702 = vmatprep.subr.bf16.mxu0 %v3427
        %5703 = vmatpush1.bf16.msra.mxu0 %v3426
        %5704 = vmatprep.subr.bf16.mxu0 %v3667
        %5705 = vmatpush2.bf16.msra.mxu0 %v3666
        %5706 = vmatprep.subr.bf16.mxu0 %v3651
        %5707 = vmatpush2.bf16.msra.mxu0 %v3650
        %5708 = vmatprep.subr.bf16.mxu0 %v3635
        %5709 = vmatpush2.bf16.msra.mxu0 %v3634
        %5710 = vmatprep.subr.bf16.mxu0 %v3619
        %5711 = vmatpush2.bf16.msra.mxu0 %v3618
        %5712 = vmatprep.subr.bf16.mxu0 %v3603
        %5713 = vmatpush2.bf16.msra.mxu0 %v3602
        %5714 = vmatprep.subr.bf16.mxu0 %v3587
        %5715 = vmatpush2.bf16.msra.mxu0 %v3586
        %5716 = vmatprep.subr.bf16.mxu0 %v3571
        %5717 = vmatpush2.bf16.msra.mxu0 %v3570
        %5718 = vmatprep.subr.bf16.mxu0 %v3555
        %5719 = vmatpush2.bf16.msra.mxu0 %v3554
        %5720 = vmatprep.mubr.bf16.mxu0 %v337
        %5721 = vmatmul.mubr.bf16.gmra.mxu0 %v336
        %v5722 = vpop.f32.mrf.mxu0
        %v5723 = vadd.f32 0.0, %v5722
        %v5724 = vpop.f32.mrf.mxu0
        %v5725 = vadd.f32 0.0, %v5724
        %v5726 = vpop.f32.mrf.mxu0
        %v5727 = vpop.f32.mrf.mxu0
        %5728 = vdwg.mxu0
        %5729 = vmatprep.subr.bf16.mxu0 %v3795
        %5730 = vmatpush1.bf16.msra.mxu0 %v3794
        %5731 = vmatprep.subr.bf16.mxu0 %v3779
        %5732 = vmatpush1.bf16.msra.mxu0 %v3778
        %5733 = vmatprep.subr.bf16.mxu0 %v3763
        %5734 = vmatpush1.bf16.msra.mxu0 %v3762
        %5735 = vmatprep.subr.bf16.mxu0 %v3747
        %5736 = vmatpush1.bf16.msra.mxu0 %v3746
        %5737 = vmatprep.subr.bf16.mxu0 %v3731
        %5738 = vmatpush1.bf16.msra.mxu0 %v3730
        %5739 = vmatprep.subr.bf16.mxu0 %v3715
        %5740 = vmatpush1.bf16.msra.mxu0 %v3714
        %5741 = vmatprep.subr.bf16.mxu0 %v3699
        %5742 = vmatpush1.bf16.msra.mxu0 %v3698
        %5743 = vmatprep.subr.bf16.mxu0 %v3683
        %5744 = vmatpush1.bf16.msra.mxu0 %v3682
        %5745 = vmatprep.subr.bf16.mxu0 %v3923
        %5746 = vmatpush2.bf16.msra.mxu0 %v3922
        %5747 = vmatprep.subr.bf16.mxu0 %v3907
        %5748 = vmatpush2.bf16.msra.mxu0 %v3906
        %5749 = vmatprep.subr.bf16.mxu0 %v3891
        %5750 = vmatpush2.bf16.msra.mxu0 %v3890
        %5751 = vmatprep.subr.bf16.mxu0 %v3875
        %5752 = vmatpush2.bf16.msra.mxu0 %v3874
        %5753 = vmatprep.subr.bf16.mxu0 %v3859
        %5754 = vmatpush2.bf16.msra.mxu0 %v3858
        %5755 = vmatprep.subr.bf16.mxu0 %v3843
        %5756 = vmatpush2.bf16.msra.mxu0 %v3842
        %5757 = vmatprep.subr.bf16.mxu0 %v3827
        %5758 = vmatpush2.bf16.msra.mxu0 %v3826
        %5759 = vmatprep.subr.bf16.mxu0 %v3811
        %5760 = vmatpush2.bf16.msra.mxu0 %v3810
        %5761 = vmatprep.mubr.bf16.mxu0 %v339
        %5762 = vmatmul.mubr.bf16.gmra.mxu0 %v338
        %v5763 = vpop.f32.mrf.mxu0
        %v5764 = vadd.f32 %v5723, %v5763
        %v5765 = vpop.f32.mrf.mxu0
        %v5766 = vadd.f32 %v5725, %v5765
        %v5767 = vpop.f32.mrf.mxu0
        %v5768 = vpop.f32.mrf.mxu0
        %5769 = vdwg.mxu0
        %5770 = vmatprep.subr.bf16.mxu0 %v4051
        %5771 = vmatpush1.bf16.msra.mxu0 %v4050
        %5772 = vmatprep.subr.bf16.mxu0 %v4035
        %5773 = vmatpush1.bf16.msra.mxu0 %v4034
        %5774 = vmatprep.subr.bf16.mxu0 %v4019
        %5775 = vmatpush1.bf16.msra.mxu0 %v4018
        %5776 = vmatprep.subr.bf16.mxu0 %v4003
        %5777 = vmatpush1.bf16.msra.mxu0 %v4002
        %5778 = vmatprep.subr.bf16.mxu0 %v3987
        %5779 = vmatpush1.bf16.msra.mxu0 %v3986
        %5780 = vmatprep.subr.bf16.mxu0 %v3971
        %5781 = vmatpush1.bf16.msra.mxu0 %v3970
        %5782 = vmatprep.subr.bf16.mxu0 %v3955
        %5783 = vmatpush1.bf16.msra.mxu0 %v3954
        %5784 = vmatprep.subr.bf16.mxu0 %v3939
        %5785 = vmatpush1.bf16.msra.mxu0 %v3938
        %5786 = vmatprep.subr.bf16.mxu0 %v4179
        %5787 = vmatpush2.bf16.msra.mxu0 %v4178
        %5788 = vmatprep.subr.bf16.mxu0 %v4163
        %5789 = vmatpush2.bf16.msra.mxu0 %v4162
        %5790 = vmatprep.subr.bf16.mxu0 %v4147
        %5791 = vmatpush2.bf16.msra.mxu0 %v4146
        %5792 = vmatprep.subr.bf16.mxu0 %v4131
        %5793 = vmatpush2.bf16.msra.mxu0 %v4130
        %5794 = vmatprep.subr.bf16.mxu0 %v4115
        %5795 = vmatpush2.bf16.msra.mxu0 %v4114
        %5796 = vmatprep.subr.bf16.mxu0 %v4099
        %5797 = vmatpush2.bf16.msra.mxu0 %v4098
        %5798 = vmatprep.subr.bf16.mxu0 %v4083
        %5799 = vmatpush2.bf16.msra.mxu0 %v4082
        %5800 = vmatprep.subr.bf16.mxu0 %v4067
        %5801 = vmatpush2.bf16.msra.mxu0 %v4066
        %5802 = vmatprep.mubr.bf16.mxu0 %v341
        %5803 = vmatmul.mubr.bf16.gmra.mxu0 %v340
        %v5804 = vpop.f32.mrf.mxu0
        %v5805 = vadd.f32 %v5764, %v5804
        %v5806 = vpop.f32.mrf.mxu0
        %v5807 = vadd.f32 %v5766, %v5806
        %v5808 = vpop.f32.mrf.mxu0
        %v5809 = vpop.f32.mrf.mxu0
        %5810 = vdwg.mxu0
        %5811 = vmatprep.subr.bf16.mxu0 %v3541
        %5812 = vmatpush1.bf16.msra.mxu0 %v3540
        %5813 = vmatprep.subr.bf16.mxu0 %v3525
        %5814 = vmatpush1.bf16.msra.mxu0 %v3524
        %5815 = vmatprep.subr.bf16.mxu0 %v3509
        %5816 = vmatpush1.bf16.msra.mxu0 %v3508
        %5817 = vmatprep.subr.bf16.mxu0 %v3493
        %5818 = vmatpush1.bf16.msra.mxu0 %v3492
        %5819 = vmatprep.subr.bf16.mxu0 %v3477
        %5820 = vmatpush1.bf16.msra.mxu0 %v3476
        %5821 = vmatprep.subr.bf16.mxu0 %v3461
        %5822 = vmatpush1.bf16.msra.mxu0 %v3460
        %5823 = vmatprep.subr.bf16.mxu0 %v3445
        %5824 = vmatpush1.bf16.msra.mxu0 %v3444
        %5825 = vmatprep.subr.bf16.mxu0 %v3429
        %5826 = vmatpush1.bf16.msra.mxu0 %v3428
        %5827 = vmatprep.subr.bf16.mxu0 %v3669
        %5828 = vmatpush2.bf16.msra.mxu0 %v3668
        %5829 = vmatprep.subr.bf16.mxu0 %v3653
        %5830 = vmatpush2.bf16.msra.mxu0 %v3652
        %5831 = vmatprep.subr.bf16.mxu0 %v3637
        %5832 = vmatpush2.bf16.msra.mxu0 %v3636
        %5833 = vmatprep.subr.bf16.mxu0 %v3621
        %5834 = vmatpush2.bf16.msra.mxu0 %v3620
        %5835 = vmatprep.subr.bf16.mxu0 %v3605
        %5836 = vmatpush2.bf16.msra.mxu0 %v3604
        %5837 = vmatprep.subr.bf16.mxu0 %v3589
        %5838 = vmatpush2.bf16.msra.mxu0 %v3588
        %5839 = vmatprep.subr.bf16.mxu0 %v3573
        %5840 = vmatpush2.bf16.msra.mxu0 %v3572
        %5841 = vmatprep.subr.bf16.mxu0 %v3557
        %5842 = vmatpush2.bf16.msra.mxu0 %v3556
        %5843 = vmatprep.mubr.bf16.mxu0 %v337
        %5844 = vmatmul.mubr.bf16.gmra.mxu0 %v336
        %v5845 = vpop.f32.mrf.mxu0
        %v5846 = vadd.f32 0.0, %v5845
        %v5847 = vpop.f32.mrf.mxu0
        %v5848 = vadd.f32 0.0, %v5847
        %v5849 = vpop.f32.mrf.mxu0
        %v5850 = vpop.f32.mrf.mxu0
        %5851 = vdwg.mxu0
        %5852 = vmatprep.subr.bf16.mxu0 %v3797
        %5853 = vmatpush1.bf16.msra.mxu0 %v3796
        %5854 = vmatprep.subr.bf16.mxu0 %v3781
        %5855 = vmatpush1.bf16.msra.mxu0 %v3780
        %5856 = vmatprep.subr.bf16.mxu0 %v3765
        %5857 = vmatpush1.bf16.msra.mxu0 %v3764
        %5858 = vmatprep.subr.bf16.mxu0 %v3749
        %5859 = vmatpush1.bf16.msra.mxu0 %v3748
        %5860 = vmatprep.subr.bf16.mxu0 %v3733
        %5861 = vmatpush1.bf16.msra.mxu0 %v3732
        %5862 = vmatprep.subr.bf16.mxu0 %v3717
        %5863 = vmatpush1.bf16.msra.mxu0 %v3716
        %5864 = vmatprep.subr.bf16.mxu0 %v3701
        %5865 = vmatpush1.bf16.msra.mxu0 %v3700
        %5866 = vmatprep.subr.bf16.mxu0 %v3685
        %5867 = vmatpush1.bf16.msra.mxu0 %v3684
        %5868 = vmatprep.subr.bf16.mxu0 %v3925
        %5869 = vmatpush2.bf16.msra.mxu0 %v3924
        %5870 = vmatprep.subr.bf16.mxu0 %v3909
        %5871 = vmatpush2.bf16.msra.mxu0 %v3908
        %5872 = vmatprep.subr.bf16.mxu0 %v3893
        %5873 = vmatpush2.bf16.msra.mxu0 %v3892
        %5874 = vmatprep.subr.bf16.mxu0 %v3877
        %5875 = vmatpush2.bf16.msra.mxu0 %v3876
        %5876 = vmatprep.subr.bf16.mxu0 %v3861
        %5877 = vmatpush2.bf16.msra.mxu0 %v3860
        %5878 = vmatprep.subr.bf16.mxu0 %v3845
        %5879 = vmatpush2.bf16.msra.mxu0 %v3844
        %5880 = vmatprep.subr.bf16.mxu0 %v3829
        %5881 = vmatpush2.bf16.msra.mxu0 %v3828
        %5882 = vmatprep.subr.bf16.mxu0 %v3813
        %5883 = vmatpush2.bf16.msra.mxu0 %v3812
        %5884 = vmatprep.mubr.bf16.mxu0 %v339
        %5885 = vmatmul.mubr.bf16.gmra.mxu0 %v338
        %v5886 = vpop.f32.mrf.mxu0
        %v5887 = vadd.f32 %v5846, %v5886
        %v5888 = vpop.f32.mrf.mxu0
        %v5889 = vadd.f32 %v5848, %v5888
        %v5890 = vpop.f32.mrf.mxu0
        %v5891 = vpop.f32.mrf.mxu0
        %5892 = vdwg.mxu0
        %5893 = vmatprep.subr.bf16.mxu0 %v4053
        %5894 = vmatpush1.bf16.msra.mxu0 %v4052
        %5895 = vmatprep.subr.bf16.mxu0 %v4037
        %5896 = vmatpush1.bf16.msra.mxu0 %v4036
        %5897 = vmatprep.subr.bf16.mxu0 %v4021
        %5898 = vmatpush1.bf16.msra.mxu0 %v4020
        %5899 = vmatprep.subr.bf16.mxu0 %v4005
        %5900 = vmatpush1.bf16.msra.mxu0 %v4004
        %5901 = vmatprep.subr.bf16.mxu0 %v3989
        %5902 = vmatpush1.bf16.msra.mxu0 %v3988
        %5903 = vmatprep.subr.bf16.mxu0 %v3973
        %5904 = vmatpush1.bf16.msra.mxu0 %v3972
        %5905 = vmatprep.subr.bf16.mxu0 %v3957
        %5906 = vmatpush1.bf16.msra.mxu0 %v3956
        %5907 = vmatprep.subr.bf16.mxu0 %v3941
        %5908 = vmatpush1.bf16.msra.mxu0 %v3940
        %5909 = vmatprep.subr.bf16.mxu0 %v4181
        %5910 = vmatpush2.bf16.msra.mxu0 %v4180
        %5911 = vmatprep.subr.bf16.mxu0 %v4165
        %5912 = vmatpush2.bf16.msra.mxu0 %v4164
        %5913 = vmatprep.subr.bf16.mxu0 %v4149
        %5914 = vmatpush2.bf16.msra.mxu0 %v4148
        %5915 = vmatprep.subr.bf16.mxu0 %v4133
        %5916 = vmatpush2.bf16.msra.mxu0 %v4132
        %5917 = vmatprep.subr.bf16.mxu0 %v4117
        %5918 = vmatpush2.bf16.msra.mxu0 %v4116
        %5919 = vmatprep.subr.bf16.mxu0 %v4101
        %5920 = vmatpush2.bf16.msra.mxu0 %v4100
        %5921 = vmatprep.subr.bf16.mxu0 %v4085
        %5922 = vmatpush2.bf16.msra.mxu0 %v4084
        %5923 = vmatprep.subr.bf16.mxu0 %v4069
        %5924 = vmatpush2.bf16.msra.mxu0 %v4068
        %5925 = vmatprep.mubr.bf16.mxu0 %v341
        %5926 = vmatmul.mubr.bf16.gmra.mxu0 %v340
        %v5927 = vpop.f32.mrf.mxu0
        %v5928 = vadd.f32 %v5887, %v5927
        %v5929 = vpop.f32.mrf.mxu0
        %v5930 = vadd.f32 %v5889, %v5929
        %v5931 = vpop.f32.mrf.mxu0
        %v5932 = vpop.f32.mrf.mxu0
        %5933 = vdwg.mxu0
        %v5934 = vrot.slane %v5067, 4
        %v5935 = vadd.f32 %v5067, %v5934
        %v5936 = vrot.slane %v5935, 2
        %v5937 = vadd.f32 %v5935, %v5936
        %v5938 = vrot.slane %v5937, 1
        %v5939 = vadd.f32 %v5937, %v5938
        %v5940 = vrot.slane %v5069, 4
        %v5941 = vadd.f32 %v5069, %v5940
        %v5942 = vrot.slane %v5941, 2
        %v5943 = vadd.f32 %v5941, %v5942
        %v5944 = vrot.slane %v5943, 1
        %v5945 = vadd.f32 %v5943, %v5944
        %v5946 = vrot.slane %v5190, 4
        %v5947 = vadd.f32 %v5190, %v5946
        %v5948 = vrot.slane %v5947, 2
        %v5949 = vadd.f32 %v5947, %v5948
        %v5950 = vrot.slane %v5949, 1
        %v5951 = vadd.f32 %v5949, %v5950
        %v5952 = vrot.slane %v5192, 4
        %v5953 = vadd.f32 %v5192, %v5952
        %v5954 = vrot.slane %v5953, 2
        %v5955 = vadd.f32 %v5953, %v5954
        %v5956 = vrot.slane %v5955, 1
        %v5957 = vadd.f32 %v5955, %v5956
        %v5958 = vrot.slane %v5313, 4
        %v5959 = vadd.f32 %v5313, %v5958
        %v5960 = vrot.slane %v5959, 2
        %v5961 = vadd.f32 %v5959, %v5960
        %v5962 = vrot.slane %v5961, 1
        %v5963 = vadd.f32 %v5961, %v5962
        %v5964 = vrot.slane %v5315, 4
        %v5965 = vadd.f32 %v5315, %v5964
        %v5966 = vrot.slane %v5965, 2
        %v5967 = vadd.f32 %v5965, %v5966
        %v5968 = vrot.slane %v5967, 1
        %v5969 = vadd.f32 %v5967, %v5968
        %v5970 = vrot.slane %v5436, 4
        %v5971 = vadd.f32 %v5436, %v5970
        %v5972 = vrot.slane %v5971, 2
        %v5973 = vadd.f32 %v5971, %v5972
        %v5974 = vrot.slane %v5973, 1
        %v5975 = vadd.f32 %v5973, %v5974
        %v5976 = vrot.slane %v5438, 4
        %v5977 = vadd.f32 %v5438, %v5976
        %v5978 = vrot.slane %v5977, 2
        %v5979 = vadd.f32 %v5977, %v5978
        %v5980 = vrot.slane %v5979, 1
        %v5981 = vadd.f32 %v5979, %v5980
        %v5982 = vrot.slane %v5559, 4
        %v5983 = vadd.f32 %v5559, %v5982
        %v5984 = vrot.slane %v5983, 2
        %v5985 = vadd.f32 %v5983, %v5984
        %v5986 = vrot.slane %v5985, 1
        %v5987 = vadd.f32 %v5985, %v5986
        %v5988 = vrot.slane %v5561, 4
        %v5989 = vadd.f32 %v5561, %v5988
        %v5990 = vrot.slane %v5989, 2
        %v5991 = vadd.f32 %v5989, %v5990
        %v5992 = vrot.slane %v5991, 1
        %v5993 = vadd.f32 %v5991, %v5992
        %v5994 = vrot.slane %v5682, 4
        %v5995 = vadd.f32 %v5682, %v5994
        %v5996 = vrot.slane %v5995, 2
        %v5997 = vadd.f32 %v5995, %v5996
        %v5998 = vrot.slane %v5997, 1
        %v5999 = vadd.f32 %v5997, %v5998
        %v6000 = vrot.slane %v5684, 4
        %v6001 = vadd.f32 %v5684, %v6000
        %v6002 = vrot.slane %v6001, 2
        %v6003 = vadd.f32 %v6001, %v6002
        %v6004 = vrot.slane %v6003, 1
        %v6005 = vadd.f32 %v6003, %v6004
        %v6006 = vrot.slane %v5805, 4
        %v6007 = vadd.f32 %v5805, %v6006
        %v6008 = vrot.slane %v6007, 2
        %v6009 = vadd.f32 %v6007, %v6008
        %v6010 = vrot.slane %v6009, 1
        %v6011 = vadd.f32 %v6009, %v6010
        %v6012 = vrot.slane %v5807, 4
        %v6013 = vadd.f32 %v5807, %v6012
        %v6014 = vrot.slane %v6013, 2
        %v6015 = vadd.f32 %v6013, %v6014
        %v6016 = vrot.slane %v6015, 1
        %v6017 = vadd.f32 %v6015, %v6016
        %v6018 = vrot.slane %v5928, 4
        %v6019 = vadd.f32 %v5928, %v6018
        %v6020 = vrot.slane %v6019, 2
        %v6021 = vadd.f32 %v6019, %v6020
        %v6022 = vrot.slane %v6021, 1
        %v6023 = vadd.f32 %v6021, %v6022
        %v6024 = vrot.slane %v5930, 4
        %v6025 = vadd.f32 %v5930, %v6024
        %v6026 = vrot.slane %v6025, 2
        %v6027 = vadd.f32 %v6025, %v6026
        %v6028 = vrot.slane %v6027, 1
        %v6029 = vadd.f32 %v6027, %v6028
        %v6030 = vrcp.pop 8.0
        %v6031 = vmul.f32 %v5939, %v6030
        %v6032 = vmul.f32 %v5945, %v6030
        %v6033 = vmul.f32 %v5951, %v6030
        %v6034 = vmul.f32 %v5957, %v6030
        %v6035 = vmul.f32 %v5963, %v6030
        %v6036 = vmul.f32 %v5969, %v6030
        %v6037 = vmul.f32 %v5975, %v6030
        %v6038 = vmul.f32 %v5981, %v6030
        %v6039 = vmul.f32 %v5987, %v6030
        %v6040 = vmul.f32 %v5993, %v6030
        %v6041 = vmul.f32 %v5999, %v6030
        %v6042 = vmul.f32 %v6005, %v6030
        %v6043 = vmul.f32 %v6011, %v6030
        %v6044 = vmul.f32 %v6017, %v6030
        %v6045 = vmul.f32 %v6023, %v6030
        %v6046 = vmul.f32 %v6029, %v6030
        %v6047 = vmul.f32 %v5067, %v5067
        %v6048 = vmul.f32 %v5069, %v5069
        %v6049 = vmul.f32 %v5190, %v5190
        %v6050 = vmul.f32 %v5192, %v5192
        %v6051 = vmul.f32 %v5313, %v5313
        %v6052 = vmul.f32 %v5315, %v5315
        %v6053 = vmul.f32 %v5436, %v5436
        %v6054 = vmul.f32 %v5438, %v5438
        %v6055 = vmul.f32 %v5559, %v5559
        %v6056 = vmul.f32 %v5561, %v5561
        %v6057 = vmul.f32 %v5682, %v5682
        %v6058 = vmul.f32 %v5684, %v5684
        %v6059 = vmul.f32 %v5805, %v5805
        %v6060 = vmul.f32 %v5807, %v5807
        %v6061 = vmul.f32 %v5928, %v5928
        %v6062 = vmul.f32 %v5930, %v5930
        %v6063 = vrot.slane %v6047, 4
        %v6064 = vadd.f32 %v6047, %v6063
        %v6065 = vrot.slane %v6064, 2
        %v6066 = vadd.f32 %v6064, %v6065
        %v6067 = vrot.slane %v6066, 1
        %v6068 = vadd.f32 %v6066, %v6067
        %v6069 = vrot.slane %v6048, 4
        %v6070 = vadd.f32 %v6048, %v6069
        %v6071 = vrot.slane %v6070, 2
        %v6072 = vadd.f32 %v6070, %v6071
        %v6073 = vrot.slane %v6072, 1
        %v6074 = vadd.f32 %v6072, %v6073
        %v6075 = vrot.slane %v6049, 4
        %v6076 = vadd.f32 %v6049, %v6075
        %v6077 = vrot.slane %v6076, 2
        %v6078 = vadd.f32 %v6076, %v6077
        %v6079 = vrot.slane %v6078, 1
        %v6080 = vadd.f32 %v6078, %v6079
        %v6081 = vrot.slane %v6050, 4
        %v6082 = vadd.f32 %v6050, %v6081
        %v6083 = vrot.slane %v6082, 2
        %v6084 = vadd.f32 %v6082, %v6083
        %v6085 = vrot.slane %v6084, 1
        %v6086 = vadd.f32 %v6084, %v6085
        %v6087 = vrot.slane %v6051, 4
        %v6088 = vadd.f32 %v6051, %v6087
        %v6089 = vrot.slane %v6088, 2
        %v6090 = vadd.f32 %v6088, %v6089
        %v6091 = vrot.slane %v6090, 1
        %v6092 = vadd.f32 %v6090, %v6091
        %v6093 = vrot.slane %v6052, 4
        %v6094 = vadd.f32 %v6052, %v6093
        %v6095 = vrot.slane %v6094, 2
        %v6096 = vadd.f32 %v6094, %v6095
        %v6097 = vrot.slane %v6096, 1
        %v6098 = vadd.f32 %v6096, %v6097
        %v6099 = vrot.slane %v6053, 4
        %v6100 = vadd.f32 %v6053, %v6099
        %v6101 = vrot.slane %v6100, 2
        %v6102 = vadd.f32 %v6100, %v6101
        %v6103 = vrot.slane %v6102, 1
        %v6104 = vadd.f32 %v6102, %v6103
        %v6105 = vrot.slane %v6054, 4
        %v6106 = vadd.f32 %v6054, %v6105
        %v6107 = vrot.slane %v6106, 2
        %v6108 = vadd.f32 %v6106, %v6107
        %v6109 = vrot.slane %v6108, 1
        %v6110 = vadd.f32 %v6108, %v6109
        %v6111 = vrot.slane %v6055, 4
        %v6112 = vadd.f32 %v6055, %v6111
        %v6113 = vrot.slane %v6112, 2
        %v6114 = vadd.f32 %v6112, %v6113
        %v6115 = vrot.slane %v6114, 1
        %v6116 = vadd.f32 %v6114, %v6115
        %v6117 = vrot.slane %v6056, 4
        %v6118 = vadd.f32 %v6056, %v6117
        %v6119 = vrot.slane %v6118, 2
        %v6120 = vadd.f32 %v6118, %v6119
        %v6121 = vrot.slane %v6120, 1
        %v6122 = vadd.f32 %v6120, %v6121
        %v6123 = vrot.slane %v6057, 4
        %v6124 = vadd.f32 %v6057, %v6123
        %v6125 = vrot.slane %v6124, 2
        %v6126 = vadd.f32 %v6124, %v6125
        %v6127 = vrot.slane %v6126, 1
        %v6128 = vadd.f32 %v6126, %v6127
        %v6129 = vrot.slane %v6058, 4
        %v6130 = vadd.f32 %v6058, %v6129
        %v6131 = vrot.slane %v6130, 2
        %v6132 = vadd.f32 %v6130, %v6131
        %v6133 = vrot.slane %v6132, 1
        %v6134 = vadd.f32 %v6132, %v6133
        %v6135 = vrot.slane %v6059, 4
        %v6136 = vadd.f32 %v6059, %v6135
        %v6137 = vrot.slane %v6136, 2
        %v6138 = vadd.f32 %v6136, %v6137
        %v6139 = vrot.slane %v6138, 1
        %v6140 = vadd.f32 %v6138, %v6139
        %v6141 = vrot.slane %v6060, 4
        %v6142 = vadd.f32 %v6060, %v6141
        %v6143 = vrot.slane %v6142, 2
        %v6144 = vadd.f32 %v6142, %v6143
        %v6145 = vrot.slane %v6144, 1
        %v6146 = vadd.f32 %v6144, %v6145
        %v6147 = vrot.slane %v6061, 4
        %v6148 = vadd.f32 %v6061, %v6147
        %v6149 = vrot.slane %v6148, 2
        %v6150 = vadd.f32 %v6148, %v6149
        %v6151 = vrot.slane %v6150, 1
        %v6152 = vadd.f32 %v6150, %v6151
        %v6153 = vrot.slane %v6062, 4
        %v6154 = vadd.f32 %v6062, %v6153
        %v6155 = vrot.slane %v6154, 2
        %v6156 = vadd.f32 %v6154, %v6155
        %v6157 = vrot.slane %v6156, 1
        %v6158 = vadd.f32 %v6156, %v6157
        %v6159 = vmul.f32 %v6068, %v6030
        %v6160 = vmul.f32 %v6074, %v6030
        %v6161 = vmul.f32 %v6080, %v6030
        %v6162 = vmul.f32 %v6086, %v6030
        %v6163 = vmul.f32 %v6092, %v6030
        %v6164 = vmul.f32 %v6098, %v6030
        %v6165 = vmul.f32 %v6104, %v6030
        %v6166 = vmul.f32 %v6110, %v6030
        %v6167 = vmul.f32 %v6116, %v6030
        %v6168 = vmul.f32 %v6122, %v6030
        %v6169 = vmul.f32 %v6128, %v6030
        %v6170 = vmul.f32 %v6134, %v6030
        %v6171 = vmul.f32 %v6140, %v6030
        %v6172 = vmul.f32 %v6146, %v6030
        %v6173 = vmul.f32 %v6152, %v6030
        %v6174 = vmul.f32 %v6158, %v6030
        %v6175 = vmul.f32 %v6031, %v6031
        %v6176 = vmul.f32 %v6032, %v6032
        %v6177 = vmul.f32 %v6033, %v6033
        %v6178 = vmul.f32 %v6034, %v6034
        %v6179 = vmul.f32 %v6035, %v6035
        %v6180 = vmul.f32 %v6036, %v6036
        %v6181 = vmul.f32 %v6037, %v6037
        %v6182 = vmul.f32 %v6038, %v6038
        %v6183 = vmul.f32 %v6039, %v6039
        %v6184 = vmul.f32 %v6040, %v6040
        %v6185 = vmul.f32 %v6041, %v6041
        %v6186 = vmul.f32 %v6042, %v6042
        %v6187 = vmul.f32 %v6043, %v6043
        %v6188 = vmul.f32 %v6044, %v6044
        %v6189 = vmul.f32 %v6045, %v6045
        %v6190 = vmul.f32 %v6046, %v6046
        %v6191 = vsub.f32 %v6159, %v6175
        %v6192 = vsub.f32 %v6160, %v6176
        %v6193 = vsub.f32 %v6161, %v6177
        %v6194 = vsub.f32 %v6162, %v6178
        %v6195 = vsub.f32 %v6163, %v6179
        %v6196 = vsub.f32 %v6164, %v6180
        %v6197 = vsub.f32 %v6165, %v6181
        %v6198 = vsub.f32 %v6166, %v6182
        %v6199 = vsub.f32 %v6167, %v6183
        %v6200 = vsub.f32 %v6168, %v6184
        %v6201 = vsub.f32 %v6169, %v6185
        %v6202 = vsub.f32 %v6170, %v6186
        %v6203 = vsub.f32 %v6171, %v6187
        %v6204 = vsub.f32 %v6172, %v6188
        %v6205 = vsub.f32 %v6173, %v6189
        %v6206 = vsub.f32 %v6174, %v6190
        %v6207 = vld [vmem:[%s308] sm:$0xff]
        %v6208 = vld [vmem:[%s308 + $0x8] sm:$0xff]
        %v6209 = vunpack.c.l.bf16 %v6207
        %v6210 = vunpack.c.h.bf16 %v6207
        %v6211 = vunpack.c.l.bf16 %v6208
        %v6212 = vunpack.c.h.bf16 %v6208
        %v6213 = vadd.f32 %v6191, 1e-05
        %v6214 = vadd.f32 %v6192, 1e-05
        %v6215 = vadd.f32 %v6193, 1e-05
        %v6216 = vadd.f32 %v6194, 1e-05
        %v6217 = vadd.f32 %v6195, 1e-05
        %v6218 = vadd.f32 %v6196, 1e-05
        %v6219 = vadd.f32 %v6197, 1e-05
        %v6220 = vadd.f32 %v6198, 1e-05
        %v6221 = vadd.f32 %v6199, 1e-05
        %v6222 = vadd.f32 %v6200, 1e-05
        %v6223 = vadd.f32 %v6201, 1e-05
        %v6224 = vadd.f32 %v6202, 1e-05
        %v6225 = vadd.f32 %v6203, 1e-05
        %v6226 = vadd.f32 %v6204, 1e-05
        %v6227 = vadd.f32 %v6205, 1e-05
        %v6228 = vadd.f32 %v6206, 1e-05
        %v6229 = vrsqrt.pop %v6213
        %v6230 = vrsqrt.pop %v6214
        %v6231 = vrsqrt.pop %v6215
        %v6232 = vrsqrt.pop %v6216
        %v6233 = vrsqrt.pop %v6217
        %v6234 = vrsqrt.pop %v6218
        %v6235 = vrsqrt.pop %v6219
        %v6236 = vrsqrt.pop %v6220
        %v6237 = vrsqrt.pop %v6221
        %v6238 = vrsqrt.pop %v6222
        %v6239 = vrsqrt.pop %v6223
        %v6240 = vrsqrt.pop %v6224
        %v6241 = vrsqrt.pop %v6225
        %v6242 = vrsqrt.pop %v6226
        %v6243 = vrsqrt.pop %v6227
        %v6244 = vrsqrt.pop %v6228
        %v6261 = vcombine.low %v6229, %v6230
        %v6262 = vcombine.low %v6231, %v6232
        %v6264 = vunpack.c.l.s4 1983009808
        %v6265 = vunpack.c.0.s8 %v6264
        %v6266 = vlaneseq
        %v6267 = vshrl.u32 %v6266, 7
        %v6268 = vsub.s32 %v6265, %v6267
        %v6269 = vrot.slane %v6261, %v6268
        %v6271 = vunpack.c.l.s4 1983009808
        %v6272 = vunpack.c.0.s8 %v6271
        %v6273 = vlaneseq
        %v6274 = vshrl.u32 %v6273, 7
        %v6275 = vsub.s32 %v6272, %v6274
        %v6276 = vrot.slane %v6262, %v6275
        %v6277 = vcombine.low %v6269, %v6276
        %v6278 = vcombine.low %v6233, %v6234
        %v6279 = vcombine.low %v6235, %v6236
        %v6281 = vunpack.c.l.s4 1983009808
        %v6282 = vunpack.c.0.s8 %v6281
        %v6283 = vlaneseq
        %v6284 = vshrl.u32 %v6283, 7
        %v6285 = vsub.s32 %v6282, %v6284
        %v6286 = vrot.slane %v6278, %v6285
        %v6288 = vunpack.c.l.s4 1983009808
        %v6289 = vunpack.c.0.s8 %v6288
        %v6290 = vlaneseq
        %v6291 = vshrl.u32 %v6290, 7
        %v6292 = vsub.s32 %v6289, %v6291
        %v6293 = vrot.slane %v6279, %v6292
        %v6294 = vcombine.low %v6286, %v6293
        %v6295 = vcombine.low %v6237, %v6238
        %v6296 = vcombine.low %v6239, %v6240
        %v6298 = vunpack.c.l.s4 1983009808
        %v6299 = vunpack.c.0.s8 %v6298
        %v6300 = vlaneseq
        %v6301 = vshrl.u32 %v6300, 7
        %v6302 = vsub.s32 %v6299, %v6301
        %v6303 = vrot.slane %v6295, %v6302
        %v6305 = vunpack.c.l.s4 1983009808
        %v6306 = vunpack.c.0.s8 %v6305
        %v6307 = vlaneseq
        %v6308 = vshrl.u32 %v6307, 7
        %v6309 = vsub.s32 %v6306, %v6308
        %v6310 = vrot.slane %v6296, %v6309
        %v6311 = vcombine.low %v6303, %v6310
        %v6312 = vcombine.low %v6241, %v6242
        %v6313 = vcombine.low %v6243, %v6244
        %v6315 = vunpack.c.l.s4 1983009808
        %v6316 = vunpack.c.0.s8 %v6315
        %v6317 = vlaneseq
        %v6318 = vshrl.u32 %v6317, 7
        %v6319 = vsub.s32 %v6316, %v6318
        %v6320 = vrot.slane %v6312, %v6319
        %v6322 = vunpack.c.l.s4 1983009808
        %v6323 = vunpack.c.0.s8 %v6322
        %v6324 = vlaneseq
        %v6325 = vshrl.u32 %v6324, 7
        %v6326 = vsub.s32 %v6323, %v6325
        %v6327 = vrot.slane %v6313, %v6326
        %v6328 = vcombine.low %v6320, %v6327
        %v6333 = vmul.f32 %v6209, %v6277
        %v6334 = vmul.f32 %v6210, %v6294
        %v6335 = vmul.f32 %v6211, %v6311
        %v6336 = vmul.f32 %v6212, %v6328
        %v6341 = vlaneseq
        %v6342 = vshrl.u32 %v6341, 7
        %v6343 = vsub.s32 0, %v6342
        %v6344 = vrot.slane %v6333, %v6343
        %v6345 = vlaneseq
        %v6346 = vshrl.u32 %v6345, 7
        %v6347 = vsub.s32 2, %v6346
        %v6348 = vrot.slane %v6333, %v6347
        %v6349 = vlaneseq
        %v6350 = vshrl.u32 %v6349, 7
        %v6351 = vsub.s32 4, %v6350
        %v6352 = vrot.slane %v6333, %v6351
        %v6353 = vlaneseq
        %v6354 = vshrl.u32 %v6353, 7
        %v6355 = vsub.s32 6, %v6354
        %v6356 = vrot.slane %v6333, %v6355
        %v6357 = vlaneseq
        %v6358 = vshrl.u32 %v6357, 7
        %v6359 = vsub.s32 0, %v6358
        %v6360 = vrot.slane %v6334, %v6359
        %v6361 = vlaneseq
        %v6362 = vshrl.u32 %v6361, 7
        %v6363 = vsub.s32 2, %v6362
        %v6364 = vrot.slane %v6334, %v6363
        %v6365 = vlaneseq
        %v6366 = vshrl.u32 %v6365, 7
        %v6367 = vsub.s32 4, %v6366
        %v6368 = vrot.slane %v6334, %v6367
        %v6369 = vlaneseq
        %v6370 = vshrl.u32 %v6369, 7
        %v6371 = vsub.s32 6, %v6370
        %v6372 = vrot.slane %v6334, %v6371
        %v6373 = vlaneseq
        %v6374 = vshrl.u32 %v6373, 7
        %v6375 = vsub.s32 0, %v6374
        %v6376 = vrot.slane %v6335, %v6375
        %v6377 = vlaneseq
        %v6378 = vshrl.u32 %v6377, 7
        %v6379 = vsub.s32 2, %v6378
        %v6380 = vrot.slane %v6335, %v6379
        %v6381 = vlaneseq
        %v6382 = vshrl.u32 %v6381, 7
        %v6383 = vsub.s32 4, %v6382
        %v6384 = vrot.slane %v6335, %v6383
        %v6385 = vlaneseq
        %v6386 = vshrl.u32 %v6385, 7
        %v6387 = vsub.s32 6, %v6386
        %v6388 = vrot.slane %v6335, %v6387
        %v6389 = vlaneseq
        %v6390 = vshrl.u32 %v6389, 7
        %v6391 = vsub.s32 0, %v6390
        %v6392 = vrot.slane %v6336, %v6391
        %v6393 = vlaneseq
        %v6394 = vshrl.u32 %v6393, 7
        %v6395 = vsub.s32 2, %v6394
        %v6396 = vrot.slane %v6336, %v6395
        %v6397 = vlaneseq
        %v6398 = vshrl.u32 %v6397, 7
        %v6399 = vsub.s32 4, %v6398
        %v6400 = vrot.slane %v6336, %v6399
        %v6401 = vlaneseq
        %v6402 = vshrl.u32 %v6401, 7
        %v6403 = vsub.s32 6, %v6402
        %v6404 = vrot.slane %v6336, %v6403
        %v6421 = vmul.f32 %v6031, %v6344
        %v6422 = vmul.f32 %v6032, %v6348
        %v6423 = vmul.f32 %v6033, %v6352
        %v6424 = vmul.f32 %v6034, %v6356
        %v6425 = vmul.f32 %v6035, %v6360
        %v6426 = vmul.f32 %v6036, %v6364
        %v6427 = vmul.f32 %v6037, %v6368
        %v6428 = vmul.f32 %v6038, %v6372
        %v6429 = vmul.f32 %v6039, %v6376
        %v6430 = vmul.f32 %v6040, %v6380
        %v6431 = vmul.f32 %v6041, %v6384
        %v6432 = vmul.f32 %v6042, %v6388
        %v6433 = vmul.f32 %v6043, %v6392
        %v6434 = vmul.f32 %v6044, %v6396
        %v6435 = vmul.f32 %v6045, %v6400
        %v6436 = vmul.f32 %v6046, %v6404
        %v6453 = vcombine.low %v6421, %v6422
        %v6454 = vcombine.low %v6423, %v6424
        %v6456 = vunpack.c.l.s4 1983009808
        %v6457 = vunpack.c.0.s8 %v6456
        %v6458 = vlaneseq
        %v6459 = vshrl.u32 %v6458, 7
        %v6460 = vsub.s32 %v6457, %v6459
        %v6461 = vrot.slane %v6453, %v6460
        %v6463 = vunpack.c.l.s4 1983009808
        %v6464 = vunpack.c.0.s8 %v6463
        %v6465 = vlaneseq
        %v6466 = vshrl.u32 %v6465, 7
        %v6467 = vsub.s32 %v6464, %v6466
        %v6468 = vrot.slane %v6454, %v6467
        %v6469 = vcombine.low %v6461, %v6468
        %v6470 = vcombine.low %v6425, %v6426
        %v6471 = vcombine.low %v6427, %v6428
        %v6473 = vunpack.c.l.s4 1983009808
        %v6474 = vunpack.c.0.s8 %v6473
        %v6475 = vlaneseq
        %v6476 = vshrl.u32 %v6475, 7
        %v6477 = vsub.s32 %v6474, %v6476
        %v6478 = vrot.slane %v6470, %v6477
        %v6480 = vunpack.c.l.s4 1983009808
        %v6481 = vunpack.c.0.s8 %v6480
        %v6482 = vlaneseq
        %v6483 = vshrl.u32 %v6482, 7
        %v6484 = vsub.s32 %v6481, %v6483
        %v6485 = vrot.slane %v6471, %v6484
        %v6486 = vcombine.low %v6478, %v6485
        %v6487 = vcombine.low %v6429, %v6430
        %v6488 = vcombine.low %v6431, %v6432
        %v6490 = vunpack.c.l.s4 1983009808
        %v6491 = vunpack.c.0.s8 %v6490
        %v6492 = vlaneseq
        %v6493 = vshrl.u32 %v6492, 7
        %v6494 = vsub.s32 %v6491, %v6493
        %v6495 = vrot.slane %v6487, %v6494
        %v6497 = vunpack.c.l.s4 1983009808
        %v6498 = vunpack.c.0.s8 %v6497
        %v6499 = vlaneseq
        %v6500 = vshrl.u32 %v6499, 7
        %v6501 = vsub.s32 %v6498, %v6500
        %v6502 = vrot.slane %v6488, %v6501
        %v6503 = vcombine.low %v6495, %v6502
        %v6504 = vcombine.low %v6433, %v6434
        %v6505 = vcombine.low %v6435, %v6436
        %v6507 = vunpack.c.l.s4 1983009808
        %v6508 = vunpack.c.0.s8 %v6507
        %v6509 = vlaneseq
        %v6510 = vshrl.u32 %v6509, 7
        %v6511 = vsub.s32 %v6508, %v6510
        %v6512 = vrot.slane %v6504, %v6511
        %v6514 = vunpack.c.l.s4 1983009808
        %v6515 = vunpack.c.0.s8 %v6514
        %v6516 = vlaneseq
        %v6517 = vshrl.u32 %v6516, 7
        %v6518 = vsub.s32 %v6515, %v6517
        %v6519 = vrot.slane %v6505, %v6518
        %v6520 = vcombine.low %v6512, %v6519
        %v6521 = vrot.slane %v6469, 7
        %v6522 = vrot.slane %v6486, 7
        %v6523 = vrot.slane %v6503, 7
        %v6524 = vrot.slane %v6520, 7
        %v6529 = vsub.f32 %v6209, %v6521
        %v6530 = vsub.f32 %v6210, %v6522
        %v6531 = vsub.f32 %v6211, %v6523
        %v6532 = vsub.f32 %v6212, %v6524
        %v6533 = vlaneseq
        %v6534 = vshrl.u32 %v6533, 7
        %v6535 = vsub.s32 0, %v6534
        %v6536 = vrot.slane %v6344, %v6535
        %v6537 = vlaneseq
        %v6538 = vshrl.u32 %v6537, 7
        %v6539 = vsub.s32 0, %v6538
        %v6540 = vrot.slane %v6348, %v6539
        %v6541 = vlaneseq
        %v6542 = vshrl.u32 %v6541, 7
        %v6543 = vsub.s32 0, %v6542
        %v6544 = vrot.slane %v6352, %v6543
        %v6545 = vlaneseq
        %v6546 = vshrl.u32 %v6545, 7
        %v6547 = vsub.s32 0, %v6546
        %v6548 = vrot.slane %v6356, %v6547
        %v6549 = vlaneseq
        %v6550 = vshrl.u32 %v6549, 7
        %v6551 = vsub.s32 0, %v6550
        %v6552 = vrot.slane %v6360, %v6551
        %v6553 = vlaneseq
        %v6554 = vshrl.u32 %v6553, 7
        %v6555 = vsub.s32 0, %v6554
        %v6556 = vrot.slane %v6364, %v6555
        %v6557 = vlaneseq
        %v6558 = vshrl.u32 %v6557, 7
        %v6559 = vsub.s32 0, %v6558
        %v6560 = vrot.slane %v6368, %v6559
        %v6561 = vlaneseq
        %v6562 = vshrl.u32 %v6561, 7
        %v6563 = vsub.s32 0, %v6562
        %v6564 = vrot.slane %v6372, %v6563
        %v6565 = vlaneseq
        %v6566 = vshrl.u32 %v6565, 7
        %v6567 = vsub.s32 0, %v6566
        %v6568 = vrot.slane %v6376, %v6567
        %v6569 = vlaneseq
        %v6570 = vshrl.u32 %v6569, 7
        %v6571 = vsub.s32 0, %v6570
        %v6572 = vrot.slane %v6380, %v6571
        %v6573 = vlaneseq
        %v6574 = vshrl.u32 %v6573, 7
        %v6575 = vsub.s32 0, %v6574
        %v6576 = vrot.slane %v6384, %v6575
        %v6577 = vlaneseq
        %v6578 = vshrl.u32 %v6577, 7
        %v6579 = vsub.s32 0, %v6578
        %v6580 = vrot.slane %v6388, %v6579
        %v6581 = vlaneseq
        %v6582 = vshrl.u32 %v6581, 7
        %v6583 = vsub.s32 0, %v6582
        %v6584 = vrot.slane %v6392, %v6583
        %v6585 = vlaneseq
        %v6586 = vshrl.u32 %v6585, 7
        %v6587 = vsub.s32 0, %v6586
        %v6588 = vrot.slane %v6396, %v6587
        %v6589 = vlaneseq
        %v6590 = vshrl.u32 %v6589, 7
        %v6591 = vsub.s32 0, %v6590
        %v6592 = vrot.slane %v6400, %v6591
        %v6593 = vlaneseq
        %v6594 = vshrl.u32 %v6593, 7
        %v6595 = vsub.s32 0, %v6594
        %v6596 = vrot.slane %v6404, %v6595
        %v6597 = vmul.f32 %v5067, %v6536
        %v6598 = vmul.f32 %v5069, %v6540
        %v6599 = vmul.f32 %v5190, %v6544
        %v6600 = vmul.f32 %v5192, %v6548
        %v6601 = vmul.f32 %v5313, %v6552
        %v6602 = vmul.f32 %v5315, %v6556
        %v6603 = vmul.f32 %v5436, %v6560
        %v6604 = vmul.f32 %v5438, %v6564
        %v6605 = vmul.f32 %v5559, %v6568
        %v6606 = vmul.f32 %v5561, %v6572
        %v6607 = vmul.f32 %v5682, %v6576
        %v6608 = vmul.f32 %v5684, %v6580
        %v6609 = vmul.f32 %v5805, %v6584
        %v6610 = vmul.f32 %v5807, %v6588
        %v6611 = vmul.f32 %v5928, %v6592
        %v6612 = vmul.f32 %v5930, %v6596
        %v6617 = vlaneseq
        %v6618 = vshrl.u32 %v6617, 7
        %v6619 = vsub.s32 1, %v6618
        %v6620 = vrot.slane %v6529, %v6619
        %v6621 = vlaneseq
        %v6622 = vshrl.u32 %v6621, 7
        %v6623 = vsub.s32 3, %v6622
        %v6624 = vrot.slane %v6529, %v6623
        %v6625 = vlaneseq
        %v6626 = vshrl.u32 %v6625, 7
        %v6627 = vsub.s32 5, %v6626
        %v6628 = vrot.slane %v6529, %v6627
        %v6629 = vlaneseq
        %v6630 = vshrl.u32 %v6629, 7
        %v6631 = vsub.s32 7, %v6630
        %v6632 = vrot.slane %v6529, %v6631
        %v6633 = vlaneseq
        %v6634 = vshrl.u32 %v6633, 7
        %v6635 = vsub.s32 1, %v6634
        %v6636 = vrot.slane %v6530, %v6635
        %v6637 = vlaneseq
        %v6638 = vshrl.u32 %v6637, 7
        %v6639 = vsub.s32 3, %v6638
        %v6640 = vrot.slane %v6530, %v6639
        %v6641 = vlaneseq
        %v6642 = vshrl.u32 %v6641, 7
        %v6643 = vsub.s32 5, %v6642
        %v6644 = vrot.slane %v6530, %v6643
        %v6645 = vlaneseq
        %v6646 = vshrl.u32 %v6645, 7
        %v6647 = vsub.s32 7, %v6646
        %v6648 = vrot.slane %v6530, %v6647
        %v6649 = vlaneseq
        %v6650 = vshrl.u32 %v6649, 7
        %v6651 = vsub.s32 1, %v6650
        %v6652 = vrot.slane %v6531, %v6651
        %v6653 = vlaneseq
        %v6654 = vshrl.u32 %v6653, 7
        %v6655 = vsub.s32 3, %v6654
        %v6656 = vrot.slane %v6531, %v6655
        %v6657 = vlaneseq
        %v6658 = vshrl.u32 %v6657, 7
        %v6659 = vsub.s32 5, %v6658
        %v6660 = vrot.slane %v6531, %v6659
        %v6661 = vlaneseq
        %v6662 = vshrl.u32 %v6661, 7
        %v6663 = vsub.s32 7, %v6662
        %v6664 = vrot.slane %v6531, %v6663
        %v6665 = vlaneseq
        %v6666 = vshrl.u32 %v6665, 7
        %v6667 = vsub.s32 1, %v6666
        %v6668 = vrot.slane %v6532, %v6667
        %v6669 = vlaneseq
        %v6670 = vshrl.u32 %v6669, 7
        %v6671 = vsub.s32 3, %v6670
        %v6672 = vrot.slane %v6532, %v6671
        %v6673 = vlaneseq
        %v6674 = vshrl.u32 %v6673, 7
        %v6675 = vsub.s32 5, %v6674
        %v6676 = vrot.slane %v6532, %v6675
        %v6677 = vlaneseq
        %v6678 = vshrl.u32 %v6677, 7
        %v6679 = vsub.s32 7, %v6678
        %v6680 = vrot.slane %v6532, %v6679
        %v6697 = vlaneseq
        %v6698 = vshrl.u32 %v6697, 7
        %v6699 = vsub.s32 1, %v6698
        %v6700 = vrot.slane %v6620, %v6699
        %v6701 = vlaneseq
        %v6702 = vshrl.u32 %v6701, 7
        %v6703 = vsub.s32 1, %v6702
        %v6704 = vrot.slane %v6624, %v6703
        %v6705 = vlaneseq
        %v6706 = vshrl.u32 %v6705, 7
        %v6707 = vsub.s32 1, %v6706
        %v6708 = vrot.slane %v6628, %v6707
        %v6709 = vlaneseq
        %v6710 = vshrl.u32 %v6709, 7
        %v6711 = vsub.s32 1, %v6710
        %v6712 = vrot.slane %v6632, %v6711
        %v6713 = vlaneseq
        %v6714 = vshrl.u32 %v6713, 7
        %v6715 = vsub.s32 1, %v6714
        %v6716 = vrot.slane %v6636, %v6715
        %v6717 = vlaneseq
        %v6718 = vshrl.u32 %v6717, 7
        %v6719 = vsub.s32 1, %v6718
        %v6720 = vrot.slane %v6640, %v6719
        %v6721 = vlaneseq
        %v6722 = vshrl.u32 %v6721, 7
        %v6723 = vsub.s32 1, %v6722
        %v6724 = vrot.slane %v6644, %v6723
        %v6725 = vlaneseq
        %v6726 = vshrl.u32 %v6725, 7
        %v6727 = vsub.s32 1, %v6726
        %v6728 = vrot.slane %v6648, %v6727
        %v6729 = vlaneseq
        %v6730 = vshrl.u32 %v6729, 7
        %v6731 = vsub.s32 1, %v6730
        %v6732 = vrot.slane %v6652, %v6731
        %v6733 = vlaneseq
        %v6734 = vshrl.u32 %v6733, 7
        %v6735 = vsub.s32 1, %v6734
        %v6736 = vrot.slane %v6656, %v6735
        %v6737 = vlaneseq
        %v6738 = vshrl.u32 %v6737, 7
        %v6739 = vsub.s32 1, %v6738
        %v6740 = vrot.slane %v6660, %v6739
        %v6741 = vlaneseq
        %v6742 = vshrl.u32 %v6741, 7
        %v6743 = vsub.s32 1, %v6742
        %v6744 = vrot.slane %v6664, %v6743
        %v6745 = vlaneseq
        %v6746 = vshrl.u32 %v6745, 7
        %v6747 = vsub.s32 1, %v6746
        %v6748 = vrot.slane %v6668, %v6747
        %v6749 = vlaneseq
        %v6750 = vshrl.u32 %v6749, 7
        %v6751 = vsub.s32 1, %v6750
        %v6752 = vrot.slane %v6672, %v6751
        %v6753 = vlaneseq
        %v6754 = vshrl.u32 %v6753, 7
        %v6755 = vsub.s32 1, %v6754
        %v6756 = vrot.slane %v6676, %v6755
        %v6757 = vlaneseq
        %v6758 = vshrl.u32 %v6757, 7
        %v6759 = vsub.s32 1, %v6758
        %v6760 = vrot.slane %v6680, %v6759
        %v6761 = vadd.f32 %v6597, %v6700
        %v6762 = vadd.f32 %v6598, %v6704
        %v6763 = vadd.f32 %v6599, %v6708
        %v6764 = vadd.f32 %v6600, %v6712
        %v6765 = vadd.f32 %v6601, %v6716
        %v6766 = vadd.f32 %v6602, %v6720
        %v6767 = vadd.f32 %v6603, %v6724
        %v6768 = vadd.f32 %v6604, %v6728
        %v6769 = vadd.f32 %v6605, %v6732
        %v6770 = vadd.f32 %v6606, %v6736
        %v6771 = vadd.f32 %v6607, %v6740
        %v6772 = vadd.f32 %v6608, %v6744
        %v6773 = vadd.f32 %v6609, %v6748
        %v6774 = vadd.f32 %v6610, %v6752
        %v6775 = vadd.f32 %v6611, %v6756
        %v6776 = vadd.f32 %v6612, %v6760
        %v6777 = vmax.f32 %v6761, 0.0
        %v6778 = vmax.f32 %v6762, 0.0
        %v6779 = vmax.f32 %v6763, 0.0
        %v6780 = vmax.f32 %v6764, 0.0
        %v6781 = vmax.f32 %v6765, 0.0
        %v6782 = vmax.f32 %v6766, 0.0
        %v6783 = vmax.f32 %v6767, 0.0
        %v6784 = vmax.f32 %v6768, 0.0
        %v6785 = vmax.f32 %v6769, 0.0
        %v6786 = vmax.f32 %v6770, 0.0
        %v6787 = vmax.f32 %v6771, 0.0
        %v6788 = vmax.f32 %v6772, 0.0
        %v6789 = vmax.f32 %v6773, 0.0
        %v6790 = vmax.f32 %v6774, 0.0
        %v6791 = vmax.f32 %v6775, 0.0
        %v6792 = vmax.f32 %v6776, 0.0
        %v6793 = vld [vmem:[%s5] sm:$0xff]
        %v6794 = vld [vmem:[%s5 + $0x8] sm:$0xff]
        %v6795 = vpack.c.bf16 %v6777, %v6777
        %v6796 = vpack.c.bf16 %v6778, %v6778
        %v6797 = vpack.c.bf16 %v6779, %v6779
        %v6798 = vpack.c.bf16 %v6780, %v6780
        %v6799 = vpack.c.bf16 %v6781, %v6781
        %v6800 = vpack.c.bf16 %v6782, %v6782
        %v6801 = vpack.c.bf16 %v6783, %v6783
        %v6802 = vpack.c.bf16 %v6784, %v6784
        %v6803 = vpack.c.bf16 %v6785, %v6785
        %v6804 = vpack.c.bf16 %v6786, %v6786
        %v6805 = vpack.c.bf16 %v6787, %v6787
        %v6806 = vpack.c.bf16 %v6788, %v6788
        %v6807 = vpack.c.bf16 %v6789, %v6789
        %v6808 = vpack.c.bf16 %v6790, %v6790
        %v6809 = vpack.c.bf16 %v6791, %v6791
        %v6810 = vpack.c.bf16 %v6792, %v6792
        %v6811 = vld [vmem:[%s319] sm:$0xff]
        %v6812 = vld [vmem:[%s319 + $0x8] sm:$0xff]
        %v6813 = vld [vmem:[%s319 + $0x10] sm:$0xff]
        %v6814 = vld [vmem:[%s319 + $0x18] sm:$0xff]
        %v6815 = vld [vmem:[%s319 + $0x20] sm:$0xff]
        %v6816 = vld [vmem:[%s319 + $0x28] sm:$0xff]
        %v6817 = vld [vmem:[%s319 + $0x30] sm:$0xff]
        %v6818 = vld [vmem:[%s319 + $0x38] sm:$0xff]
        %v6819 = vld [vmem:[%s319 + $0x40] sm:$0xff]
        %v6820 = vld [vmem:[%s319 + $0x48] sm:$0xff]
        %v6821 = vld [vmem:[%s319 + $0x50] sm:$0xff]
        %v6822 = vld [vmem:[%s319 + $0x58] sm:$0xff]
        %v6823 = vld [vmem:[%s319 + $0x60] sm:$0xff]
        %v6824 = vld [vmem:[%s319 + $0x68] sm:$0xff]
        %v6825 = vld [vmem:[%s319 + $0x70] sm:$0xff]
        %v6826 = vld [vmem:[%s319 + $0x78] sm:$0xff]
        %v6827 = vld [vmem:[%s319 + $0x80] sm:$0xff]
        %v6828 = vld [vmem:[%s319 + $0x88] sm:$0xff]
        %v6829 = vld [vmem:[%s319 + $0x90] sm:$0xff]
        %v6830 = vld [vmem:[%s319 + $0x98] sm:$0xff]
        %v6831 = vld [vmem:[%s319 + $0xa0] sm:$0xff]
        %v6832 = vld [vmem:[%s319 + $0xa8] sm:$0xff]
        %v6833 = vld [vmem:[%s319 + $0xb0] sm:$0xff]
        %v6834 = vld [vmem:[%s319 + $0xb8] sm:$0xff]
        %v6835 = vld [vmem:[%s319 + $0xc0] sm:$0xff]
        %v6836 = vld [vmem:[%s319 + $0xc8] sm:$0xff]
        %v6837 = vld [vmem:[%s319 + $0xd0] sm:$0xff]
        %v6838 = vld [vmem:[%s319 + $0xd8] sm:$0xff]
        %v6839 = vld [vmem:[%s319 + $0xe0] sm:$0xff]
        %v6840 = vld [vmem:[%s319 + $0xe8] sm:$0xff]
        %v6841 = vld [vmem:[%s319 + $0xf0] sm:$0xff]
        %v6842 = vld [vmem:[%s319 + $0xf8] sm:$0xff]
        %v6843 = vld [vmem:[%s319 + $0x100] sm:$0xff]
        %v6844 = vld [vmem:[%s319 + $0x108] sm:$0xff]
        %v6845 = vld [vmem:[%s319 + $0x110] sm:$0xff]
        %v6846 = vld [vmem:[%s319 + $0x118] sm:$0xff]
        %v6847 = vld [vmem:[%s319 + $0x120] sm:$0xff]
        %v6848 = vld [vmem:[%s319 + $0x128] sm:$0xff]
        %v6849 = vld [vmem:[%s319 + $0x130] sm:$0xff]
        %v6850 = vld [vmem:[%s319 + $0x138] sm:$0xff]
        %v6851 = vld [vmem:[%s319 + $0x140] sm:$0xff]
        %v6852 = vld [vmem:[%s319 + $0x148] sm:$0xff]
        %v6853 = vld [vmem:[%s319 + $0x150] sm:$0xff]
        %v6854 = vld [vmem:[%s319 + $0x158] sm:$0xff]
        %v6855 = vld [vmem:[%s319 + $0x160] sm:$0xff]
        %v6856 = vld [vmem:[%s319 + $0x168] sm:$0xff]
        %v6857 = vld [vmem:[%s319 + $0x170] sm:$0xff]
        %v6858 = vld [vmem:[%s319 + $0x178] sm:$0xff]
        %v6859 = vld [vmem:[%s319 + $0x180] sm:$0xff]
        %v6860 = vld [vmem:[%s319 + $0x188] sm:$0xff]
        %v6861 = vld [vmem:[%s319 + $0x190] sm:$0xff]
        %v6862 = vld [vmem:[%s319 + $0x198] sm:$0xff]
        %v6863 = vld [vmem:[%s319 + $0x1a0] sm:$0xff]
        %v6864 = vld [vmem:[%s319 + $0x1a8] sm:$0xff]
        %v6865 = vld [vmem:[%s319 + $0x1b0] sm:$0xff]
        %v6866 = vld [vmem:[%s319 + $0x1b8] sm:$0xff]
        %v6867 = vld [vmem:[%s319 + $0x1c0] sm:$0xff]
        %v6868 = vld [vmem:[%s319 + $0x1c8] sm:$0xff]
        %v6869 = vld [vmem:[%s319 + $0x1d0] sm:$0xff]
        %v6870 = vld [vmem:[%s319 + $0x1d8] sm:$0xff]
        %v6871 = vld [vmem:[%s319 + $0x1e0] sm:$0xff]
        %v6872 = vld [vmem:[%s319 + $0x1e8] sm:$0xff]
        %v6873 = vld [vmem:[%s319 + $0x1f0] sm:$0xff]
        %v6874 = vld [vmem:[%s319 + $0x1f8] sm:$0xff]
        %v6875 = vld [vmem:[%s319 + $0x200] sm:$0xff]
        %v6876 = vld [vmem:[%s319 + $0x208] sm:$0xff]
        %v6877 = vld [vmem:[%s319 + $0x210] sm:$0xff]
        %v6878 = vld [vmem:[%s319 + $0x218] sm:$0xff]
        %v6879 = vld [vmem:[%s319 + $0x220] sm:$0xff]
        %v6880 = vld [vmem:[%s319 + $0x228] sm:$0xff]
        %v6881 = vld [vmem:[%s319 + $0x230] sm:$0xff]
        %v6882 = vld [vmem:[%s319 + $0x238] sm:$0xff]
        %v6883 = vld [vmem:[%s319 + $0x240] sm:$0xff]
        %v6884 = vld [vmem:[%s319 + $0x248] sm:$0xff]
        %v6885 = vld [vmem:[%s319 + $0x250] sm:$0xff]
        %v6886 = vld [vmem:[%s319 + $0x258] sm:$0xff]
        %v6887 = vld [vmem:[%s319 + $0x260] sm:$0xff]
        %v6888 = vld [vmem:[%s319 + $0x268] sm:$0xff]
        %v6889 = vld [vmem:[%s319 + $0x270] sm:$0xff]
        %v6890 = vld [vmem:[%s319 + $0x278] sm:$0xff]
        %v6891 = vld [vmem:[%s319 + $0x280] sm:$0xff]
        %v6892 = vld [vmem:[%s319 + $0x288] sm:$0xff]
        %v6893 = vld [vmem:[%s319 + $0x290] sm:$0xff]
        %v6894 = vld [vmem:[%s319 + $0x298] sm:$0xff]
        %v6895 = vld [vmem:[%s319 + $0x2a0] sm:$0xff]
        %v6896 = vld [vmem:[%s319 + $0x2a8] sm:$0xff]
        %v6897 = vld [vmem:[%s319 + $0x2b0] sm:$0xff]
        %v6898 = vld [vmem:[%s319 + $0x2b8] sm:$0xff]
        %v6899 = vld [vmem:[%s319 + $0x2c0] sm:$0xff]
        %v6900 = vld [vmem:[%s319 + $0x2c8] sm:$0xff]
        %v6901 = vld [vmem:[%s319 + $0x2d0] sm:$0xff]
        %v6902 = vld [vmem:[%s319 + $0x2d8] sm:$0xff]
        %v6903 = vld [vmem:[%s319 + $0x2e0] sm:$0xff]
        %v6904 = vld [vmem:[%s319 + $0x2e8] sm:$0xff]
        %v6905 = vld [vmem:[%s319 + $0x2f0] sm:$0xff]
        %v6906 = vld [vmem:[%s319 + $0x2f8] sm:$0xff]
        %v6907 = vld [vmem:[%s319 + $0x300] sm:$0xff]
        %v6908 = vld [vmem:[%s319 + $0x308] sm:$0xff]
        %v6909 = vld [vmem:[%s319 + $0x310] sm:$0xff]
        %v6910 = vld [vmem:[%s319 + $0x318] sm:$0xff]
        %v6911 = vld [vmem:[%s319 + $0x320] sm:$0xff]
        %v6912 = vld [vmem:[%s319 + $0x328] sm:$0xff]
        %v6913 = vld [vmem:[%s319 + $0x330] sm:$0xff]
        %v6914 = vld [vmem:[%s319 + $0x338] sm:$0xff]
        %v6915 = vld [vmem:[%s319 + $0x340] sm:$0xff]
        %v6916 = vld [vmem:[%s319 + $0x348] sm:$0xff]
        %v6917 = vld [vmem:[%s319 + $0x350] sm:$0xff]
        %v6918 = vld [vmem:[%s319 + $0x358] sm:$0xff]
        %v6919 = vld [vmem:[%s319 + $0x360] sm:$0xff]
        %v6920 = vld [vmem:[%s319 + $0x368] sm:$0xff]
        %v6921 = vld [vmem:[%s319 + $0x370] sm:$0xff]
        %v6922 = vld [vmem:[%s319 + $0x378] sm:$0xff]
        %v6923 = vld [vmem:[%s319 + $0x380] sm:$0xff]
        %v6924 = vld [vmem:[%s319 + $0x388] sm:$0xff]
        %v6925 = vld [vmem:[%s319 + $0x390] sm:$0xff]
        %v6926 = vld [vmem:[%s319 + $0x398] sm:$0xff]
        %v6927 = vld [vmem:[%s319 + $0x3a0] sm:$0xff]
        %v6928 = vld [vmem:[%s319 + $0x3a8] sm:$0xff]
        %v6929 = vld [vmem:[%s319 + $0x3b0] sm:$0xff]
        %v6930 = vld [vmem:[%s319 + $0x3b8] sm:$0xff]
        %v6931 = vld [vmem:[%s319 + $0x3c0] sm:$0xff]
        %v6932 = vld [vmem:[%s319 + $0x3c8] sm:$0xff]
        %v6933 = vld [vmem:[%s319 + $0x3d0] sm:$0xff]
        %v6934 = vld [vmem:[%s319 + $0x3d8] sm:$0xff]
        %v6935 = vld [vmem:[%s319 + $0x3e0] sm:$0xff]
        %v6936 = vld [vmem:[%s319 + $0x3e8] sm:$0xff]
        %v6937 = vld [vmem:[%s319 + $0x3f0] sm:$0xff]
        %v6938 = vld [vmem:[%s319 + $0x3f8] sm:$0xff]
        %v6939 = vld [vmem:[%s319 + $0x400] sm:$0xff]
        %v6940 = vld [vmem:[%s319 + $0x408] sm:$0xff]
        %v6941 = vld [vmem:[%s319 + $0x410] sm:$0xff]
        %v6942 = vld [vmem:[%s319 + $0x418] sm:$0xff]
        %v6943 = vld [vmem:[%s319 + $0x420] sm:$0xff]
        %v6944 = vld [vmem:[%s319 + $0x428] sm:$0xff]
        %v6945 = vld [vmem:[%s319 + $0x430] sm:$0xff]
        %v6946 = vld [vmem:[%s319 + $0x438] sm:$0xff]
        %v6947 = vld [vmem:[%s319 + $0x440] sm:$0xff]
        %v6948 = vld [vmem:[%s319 + $0x448] sm:$0xff]
        %v6949 = vld [vmem:[%s319 + $0x450] sm:$0xff]
        %v6950 = vld [vmem:[%s319 + $0x458] sm:$0xff]
        %v6951 = vld [vmem:[%s319 + $0x460] sm:$0xff]
        %v6952 = vld [vmem:[%s319 + $0x468] sm:$0xff]
        %v6953 = vld [vmem:[%s319 + $0x470] sm:$0xff]
        %v6954 = vld [vmem:[%s319 + $0x478] sm:$0xff]
        %v6955 = vld [vmem:[%s319 + $0x480] sm:$0xff]
        %v6956 = vld [vmem:[%s319 + $0x488] sm:$0xff]
        %v6957 = vld [vmem:[%s319 + $0x490] sm:$0xff]
        %v6958 = vld [vmem:[%s319 + $0x498] sm:$0xff]
        %v6959 = vld [vmem:[%s319 + $0x4a0] sm:$0xff]
        %v6960 = vld [vmem:[%s319 + $0x4a8] sm:$0xff]
        %v6961 = vld [vmem:[%s319 + $0x4b0] sm:$0xff]
        %v6962 = vld [vmem:[%s319 + $0x4b8] sm:$0xff]
        %v6963 = vld [vmem:[%s319 + $0x4c0] sm:$0xff]
        %v6964 = vld [vmem:[%s319 + $0x4c8] sm:$0xff]
        %v6965 = vld [vmem:[%s319 + $0x4d0] sm:$0xff]
        %v6966 = vld [vmem:[%s319 + $0x4d8] sm:$0xff]
        %v6967 = vld [vmem:[%s319 + $0x4e0] sm:$0xff]
        %v6968 = vld [vmem:[%s319 + $0x4e8] sm:$0xff]
        %v6969 = vld [vmem:[%s319 + $0x4f0] sm:$0xff]
        %v6970 = vld [vmem:[%s319 + $0x4f8] sm:$0xff]
        %v6971 = vld [vmem:[%s319 + $0x500] sm:$0xff]
        %v6972 = vld [vmem:[%s319 + $0x508] sm:$0xff]
        %v6973 = vld [vmem:[%s319 + $0x510] sm:$0xff]
        %v6974 = vld [vmem:[%s319 + $0x518] sm:$0xff]
        %v6975 = vld [vmem:[%s319 + $0x520] sm:$0xff]
        %v6976 = vld [vmem:[%s319 + $0x528] sm:$0xff]
        %v6977 = vld [vmem:[%s319 + $0x530] sm:$0xff]
        %v6978 = vld [vmem:[%s319 + $0x538] sm:$0xff]
        %v6979 = vld [vmem:[%s319 + $0x540] sm:$0xff]
        %v6980 = vld [vmem:[%s319 + $0x548] sm:$0xff]
        %v6981 = vld [vmem:[%s319 + $0x550] sm:$0xff]
        %v6982 = vld [vmem:[%s319 + $0x558] sm:$0xff]
        %v6983 = vld [vmem:[%s319 + $0x560] sm:$0xff]
        %v6984 = vld [vmem:[%s319 + $0x568] sm:$0xff]
        %v6985 = vld [vmem:[%s319 + $0x570] sm:$0xff]
        %v6986 = vld [vmem:[%s319 + $0x578] sm:$0xff]
        %v6987 = vld [vmem:[%s319 + $0x580] sm:$0xff]
        %v6988 = vld [vmem:[%s319 + $0x588] sm:$0xff]
        %v6989 = vld [vmem:[%s319 + $0x590] sm:$0xff]
        %v6990 = vld [vmem:[%s319 + $0x598] sm:$0xff]
        %v6991 = vld [vmem:[%s319 + $0x5a0] sm:$0xff]
        %v6992 = vld [vmem:[%s319 + $0x5a8] sm:$0xff]
        %v6993 = vld [vmem:[%s319 + $0x5b0] sm:$0xff]
        %v6994 = vld [vmem:[%s319 + $0x5b8] sm:$0xff]
        %v6995 = vld [vmem:[%s319 + $0x5c0] sm:$0xff]
        %v6996 = vld [vmem:[%s319 + $0x5c8] sm:$0xff]
        %v6997 = vld [vmem:[%s319 + $0x5d0] sm:$0xff]
        %v6998 = vld [vmem:[%s319 + $0x5d8] sm:$0xff]
        %v6999 = vld [vmem:[%s319 + $0x5e0] sm:$0xff]
        %v7000 = vld [vmem:[%s319 + $0x5e8] sm:$0xff]
        %v7001 = vld [vmem:[%s319 + $0x5f0] sm:$0xff]
        %v7002 = vld [vmem:[%s319 + $0x5f8] sm:$0xff]
        %v7003 = vld [vmem:[%s319 + $0x600] sm:$0xff]
        %v7004 = vld [vmem:[%s319 + $0x608] sm:$0xff]
        %v7005 = vld [vmem:[%s319 + $0x610] sm:$0xff]
        %v7006 = vld [vmem:[%s319 + $0x618] sm:$0xff]
        %v7007 = vld [vmem:[%s319 + $0x620] sm:$0xff]
        %v7008 = vld [vmem:[%s319 + $0x628] sm:$0xff]
        %v7009 = vld [vmem:[%s319 + $0x630] sm:$0xff]
        %v7010 = vld [vmem:[%s319 + $0x638] sm:$0xff]
        %v7011 = vld [vmem:[%s319 + $0x640] sm:$0xff]
        %v7012 = vld [vmem:[%s319 + $0x648] sm:$0xff]
        %v7013 = vld [vmem:[%s319 + $0x650] sm:$0xff]
        %v7014 = vld [vmem:[%s319 + $0x658] sm:$0xff]
        %v7015 = vld [vmem:[%s319 + $0x660] sm:$0xff]
        %v7016 = vld [vmem:[%s319 + $0x668] sm:$0xff]
        %v7017 = vld [vmem:[%s319 + $0x670] sm:$0xff]
        %v7018 = vld [vmem:[%s319 + $0x678] sm:$0xff]
        %v7019 = vld [vmem:[%s319 + $0x680] sm:$0xff]
        %v7020 = vld [vmem:[%s319 + $0x688] sm:$0xff]
        %v7021 = vld [vmem:[%s319 + $0x690] sm:$0xff]
        %v7022 = vld [vmem:[%s319 + $0x698] sm:$0xff]
        %v7023 = vld [vmem:[%s319 + $0x6a0] sm:$0xff]
        %v7024 = vld [vmem:[%s319 + $0x6a8] sm:$0xff]
        %v7025 = vld [vmem:[%s319 + $0x6b0] sm:$0xff]
        %v7026 = vld [vmem:[%s319 + $0x6b8] sm:$0xff]
        %v7027 = vld [vmem:[%s319 + $0x6c0] sm:$0xff]
        %v7028 = vld [vmem:[%s319 + $0x6c8] sm:$0xff]
        %v7029 = vld [vmem:[%s319 + $0x6d0] sm:$0xff]
        %v7030 = vld [vmem:[%s319 + $0x6d8] sm:$0xff]
        %v7031 = vld [vmem:[%s319 + $0x6e0] sm:$0xff]
        %v7032 = vld [vmem:[%s319 + $0x6e8] sm:$0xff]
        %v7033 = vld [vmem:[%s319 + $0x6f0] sm:$0xff]
        %v7034 = vld [vmem:[%s319 + $0x6f8] sm:$0xff]
        %v7035 = vld [vmem:[%s319 + $0x700] sm:$0xff]
        %v7036 = vld [vmem:[%s319 + $0x708] sm:$0xff]
        %v7037 = vld [vmem:[%s319 + $0x710] sm:$0xff]
        %v7038 = vld [vmem:[%s319 + $0x718] sm:$0xff]
        %v7039 = vld [vmem:[%s319 + $0x720] sm:$0xff]
        %v7040 = vld [vmem:[%s319 + $0x728] sm:$0xff]
        %v7041 = vld [vmem:[%s319 + $0x730] sm:$0xff]
        %v7042 = vld [vmem:[%s319 + $0x738] sm:$0xff]
        %v7043 = vld [vmem:[%s319 + $0x740] sm:$0xff]
        %v7044 = vld [vmem:[%s319 + $0x748] sm:$0xff]
        %v7045 = vld [vmem:[%s319 + $0x750] sm:$0xff]
        %v7046 = vld [vmem:[%s319 + $0x758] sm:$0xff]
        %v7047 = vld [vmem:[%s319 + $0x760] sm:$0xff]
        %v7048 = vld [vmem:[%s319 + $0x768] sm:$0xff]
        %v7049 = vld [vmem:[%s319 + $0x770] sm:$0xff]
        %v7050 = vld [vmem:[%s319 + $0x778] sm:$0xff]
        %v7051 = vld [vmem:[%s319 + $0x780] sm:$0xff]
        %v7052 = vld [vmem:[%s319 + $0x788] sm:$0xff]
        %v7053 = vld [vmem:[%s319 + $0x790] sm:$0xff]
        %v7054 = vld [vmem:[%s319 + $0x798] sm:$0xff]
        %v7055 = vld [vmem:[%s319 + $0x7a0] sm:$0xff]
        %v7056 = vld [vmem:[%s319 + $0x7a8] sm:$0xff]
        %v7057 = vld [vmem:[%s319 + $0x7b0] sm:$0xff]
        %v7058 = vld [vmem:[%s319 + $0x7b8] sm:$0xff]
        %v7059 = vld [vmem:[%s319 + $0x7c0] sm:$0xff]
        %v7060 = vld [vmem:[%s319 + $0x7c8] sm:$0xff]
        %v7061 = vld [vmem:[%s319 + $0x7d0] sm:$0xff]
        %v7062 = vld [vmem:[%s319 + $0x7d8] sm:$0xff]
        %v7063 = vld [vmem:[%s319 + $0x7e0] sm:$0xff]
        %v7064 = vld [vmem:[%s319 + $0x7e8] sm:$0xff]
        %v7065 = vld [vmem:[%s319 + $0x7f0] sm:$0xff]
        %v7066 = vld [vmem:[%s319 + $0x7f8] sm:$0xff]
        %v7323 = vunpack.c.l.b16 %v6811
        %v7324 = vunpack.c.h.b16 %v6811
        %v7325 = vunpack.c.l.b16 %v6812
        %v7326 = vunpack.c.h.b16 %v6812
        %v7327 = vunpack.c.l.b16 %v6813
        %v7328 = vunpack.c.h.b16 %v6813
        %v7329 = vunpack.c.l.b16 %v6814
        %v7330 = vunpack.c.h.b16 %v6814
        %v7331 = vunpack.c.l.b16 %v6815
        %v7332 = vunpack.c.h.b16 %v6815
        %v7333 = vunpack.c.l.b16 %v6816
        %v7334 = vunpack.c.h.b16 %v6816
        %v7335 = vunpack.c.l.b16 %v6817
        %v7336 = vunpack.c.h.b16 %v6817
        %v7337 = vunpack.c.l.b16 %v6818
        %v7338 = vunpack.c.h.b16 %v6818
        %v7339 = vunpack.c.l.b16 %v6819
        %v7340 = vunpack.c.h.b16 %v6819
        %v7341 = vunpack.c.l.b16 %v6820
        %v7342 = vunpack.c.h.b16 %v6820
        %v7343 = vunpack.c.l.b16 %v6821
        %v7344 = vunpack.c.h.b16 %v6821
        %v7345 = vunpack.c.l.b16 %v6822
        %v7346 = vunpack.c.h.b16 %v6822
        %v7347 = vunpack.c.l.b16 %v6823
        %v7348 = vunpack.c.h.b16 %v6823
        %v7349 = vunpack.c.l.b16 %v6824
        %v7350 = vunpack.c.h.b16 %v6824
        %v7351 = vunpack.c.l.b16 %v6825
        %v7352 = vunpack.c.h.b16 %v6825
        %v7353 = vunpack.c.l.b16 %v6826
        %v7354 = vunpack.c.h.b16 %v6826
        %v7355 = vunpack.c.l.b16 %v6827
        %v7356 = vunpack.c.h.b16 %v6827
        %v7357 = vunpack.c.l.b16 %v6828
        %v7358 = vunpack.c.h.b16 %v6828
        %v7359 = vunpack.c.l.b16 %v6829
        %v7360 = vunpack.c.h.b16 %v6829
        %v7361 = vunpack.c.l.b16 %v6830
        %v7362 = vunpack.c.h.b16 %v6830
        %v7363 = vunpack.c.l.b16 %v6831
        %v7364 = vunpack.c.h.b16 %v6831
        %v7365 = vunpack.c.l.b16 %v6832
        %v7366 = vunpack.c.h.b16 %v6832
        %v7367 = vunpack.c.l.b16 %v6833
        %v7368 = vunpack.c.h.b16 %v6833
        %v7369 = vunpack.c.l.b16 %v6834
        %v7370 = vunpack.c.h.b16 %v6834
        %v7371 = vunpack.c.l.b16 %v6835
        %v7372 = vunpack.c.h.b16 %v6835
        %v7373 = vunpack.c.l.b16 %v6836
        %v7374 = vunpack.c.h.b16 %v6836
        %v7375 = vunpack.c.l.b16 %v6837
        %v7376 = vunpack.c.h.b16 %v6837
        %v7377 = vunpack.c.l.b16 %v6838
        %v7378 = vunpack.c.h.b16 %v6838
        %v7379 = vunpack.c.l.b16 %v6839
        %v7380 = vunpack.c.h.b16 %v6839
        %v7381 = vunpack.c.l.b16 %v6840
        %v7382 = vunpack.c.h.b16 %v6840
        %v7383 = vunpack.c.l.b16 %v6841
        %v7384 = vunpack.c.h.b16 %v6841
        %v7385 = vunpack.c.l.b16 %v6842
        %v7386 = vunpack.c.h.b16 %v6842
        %v7387 = vunpack.c.l.b16 %v6843
        %v7388 = vunpack.c.h.b16 %v6843
        %v7389 = vunpack.c.l.b16 %v6844
        %v7390 = vunpack.c.h.b16 %v6844
        %v7391 = vunpack.c.l.b16 %v6845
        %v7392 = vunpack.c.h.b16 %v6845
        %v7393 = vunpack.c.l.b16 %v6846
        %v7394 = vunpack.c.h.b16 %v6846
        %v7395 = vunpack.c.l.b16 %v6847
        %v7396 = vunpack.c.h.b16 %v6847
        %v7397 = vunpack.c.l.b16 %v6848
        %v7398 = vunpack.c.h.b16 %v6848
        %v7399 = vunpack.c.l.b16 %v6849
        %v7400 = vunpack.c.h.b16 %v6849
        %v7401 = vunpack.c.l.b16 %v6850
        %v7402 = vunpack.c.h.b16 %v6850
        %v7403 = vunpack.c.l.b16 %v6851
        %v7404 = vunpack.c.h.b16 %v6851
        %v7405 = vunpack.c.l.b16 %v6852
        %v7406 = vunpack.c.h.b16 %v6852
        %v7407 = vunpack.c.l.b16 %v6853
        %v7408 = vunpack.c.h.b16 %v6853
        %v7409 = vunpack.c.l.b16 %v6854
        %v7410 = vunpack.c.h.b16 %v6854
        %v7411 = vunpack.c.l.b16 %v6855
        %v7412 = vunpack.c.h.b16 %v6855
        %v7413 = vunpack.c.l.b16 %v6856
        %v7414 = vunpack.c.h.b16 %v6856
        %v7415 = vunpack.c.l.b16 %v6857
        %v7416 = vunpack.c.h.b16 %v6857
        %v7417 = vunpack.c.l.b16 %v6858
        %v7418 = vunpack.c.h.b16 %v6858
        %v7419 = vunpack.c.l.b16 %v6859
        %v7420 = vunpack.c.h.b16 %v6859
        %v7421 = vunpack.c.l.b16 %v6860
        %v7422 = vunpack.c.h.b16 %v6860
        %v7423 = vunpack.c.l.b16 %v6861
        %v7424 = vunpack.c.h.b16 %v6861
        %v7425 = vunpack.c.l.b16 %v6862
        %v7426 = vunpack.c.h.b16 %v6862
        %v7427 = vunpack.c.l.b16 %v6863
        %v7428 = vunpack.c.h.b16 %v6863
        %v7429 = vunpack.c.l.b16 %v6864
        %v7430 = vunpack.c.h.b16 %v6864
        %v7431 = vunpack.c.l.b16 %v6865
        %v7432 = vunpack.c.h.b16 %v6865
        %v7433 = vunpack.c.l.b16 %v6866
        %v7434 = vunpack.c.h.b16 %v6866
        %v7435 = vunpack.c.l.b16 %v6867
        %v7436 = vunpack.c.h.b16 %v6867
        %v7437 = vunpack.c.l.b16 %v6868
        %v7438 = vunpack.c.h.b16 %v6868
        %v7439 = vunpack.c.l.b16 %v6869
        %v7440 = vunpack.c.h.b16 %v6869
        %v7441 = vunpack.c.l.b16 %v6870
        %v7442 = vunpack.c.h.b16 %v6870
        %v7443 = vunpack.c.l.b16 %v6871
        %v7444 = vunpack.c.h.b16 %v6871
        %v7445 = vunpack.c.l.b16 %v6872
        %v7446 = vunpack.c.h.b16 %v6872
        %v7447 = vunpack.c.l.b16 %v6873
        %v7448 = vunpack.c.h.b16 %v6873
        %v7449 = vunpack.c.l.b16 %v6874
        %v7450 = vunpack.c.h.b16 %v6874
        %v7451 = vunpack.c.l.b16 %v6875
        %v7452 = vunpack.c.h.b16 %v6875
        %v7453 = vunpack.c.l.b16 %v6876
        %v7454 = vunpack.c.h.b16 %v6876
        %v7455 = vunpack.c.l.b16 %v6877
        %v7456 = vunpack.c.h.b16 %v6877
        %v7457 = vunpack.c.l.b16 %v6878
        %v7458 = vunpack.c.h.b16 %v6878
        %v7459 = vunpack.c.l.b16 %v6879
        %v7460 = vunpack.c.h.b16 %v6879
        %v7461 = vunpack.c.l.b16 %v6880
        %v7462 = vunpack.c.h.b16 %v6880
        %v7463 = vunpack.c.l.b16 %v6881
        %v7464 = vunpack.c.h.b16 %v6881
        %v7465 = vunpack.c.l.b16 %v6882
        %v7466 = vunpack.c.h.b16 %v6882
        %v7467 = vunpack.c.l.b16 %v6883
        %v7468 = vunpack.c.h.b16 %v6883
        %v7469 = vunpack.c.l.b16 %v6884
        %v7470 = vunpack.c.h.b16 %v6884
        %v7471 = vunpack.c.l.b16 %v6885
        %v7472 = vunpack.c.h.b16 %v6885
        %v7473 = vunpack.c.l.b16 %v6886
        %v7474 = vunpack.c.h.b16 %v6886
        %v7475 = vunpack.c.l.b16 %v6887
        %v7476 = vunpack.c.h.b16 %v6887
        %v7477 = vunpack.c.l.b16 %v6888
        %v7478 = vunpack.c.h.b16 %v6888
        %v7479 = vunpack.c.l.b16 %v6889
        %v7480 = vunpack.c.h.b16 %v6889
        %v7481 = vunpack.c.l.b16 %v6890
        %v7482 = vunpack.c.h.b16 %v6890
        %v7483 = vunpack.c.l.b16 %v6891
        %v7484 = vunpack.c.h.b16 %v6891
        %v7485 = vunpack.c.l.b16 %v6892
        %v7486 = vunpack.c.h.b16 %v6892
        %v7487 = vunpack.c.l.b16 %v6893
        %v7488 = vunpack.c.h.b16 %v6893
        %v7489 = vunpack.c.l.b16 %v6894
        %v7490 = vunpack.c.h.b16 %v6894
        %v7491 = vunpack.c.l.b16 %v6895
        %v7492 = vunpack.c.h.b16 %v6895
        %v7493 = vunpack.c.l.b16 %v6896
        %v7494 = vunpack.c.h.b16 %v6896
        %v7495 = vunpack.c.l.b16 %v6897
        %v7496 = vunpack.c.h.b16 %v6897
        %v7497 = vunpack.c.l.b16 %v6898
        %v7498 = vunpack.c.h.b16 %v6898
        %v7499 = vunpack.c.l.b16 %v6899
        %v7500 = vunpack.c.h.b16 %v6899
        %v7501 = vunpack.c.l.b16 %v6900
        %v7502 = vunpack.c.h.b16 %v6900
        %v7503 = vunpack.c.l.b16 %v6901
        %v7504 = vunpack.c.h.b16 %v6901
        %v7505 = vunpack.c.l.b16 %v6902
        %v7506 = vunpack.c.h.b16 %v6902
        %v7507 = vunpack.c.l.b16 %v6903
        %v7508 = vunpack.c.h.b16 %v6903
        %v7509 = vunpack.c.l.b16 %v6904
        %v7510 = vunpack.c.h.b16 %v6904
        %v7511 = vunpack.c.l.b16 %v6905
        %v7512 = vunpack.c.h.b16 %v6905
        %v7513 = vunpack.c.l.b16 %v6906
        %v7514 = vunpack.c.h.b16 %v6906
        %v7515 = vunpack.c.l.b16 %v6907
        %v7516 = vunpack.c.h.b16 %v6907
        %v7517 = vunpack.c.l.b16 %v6908
        %v7518 = vunpack.c.h.b16 %v6908
        %v7519 = vunpack.c.l.b16 %v6909
        %v7520 = vunpack.c.h.b16 %v6909
        %v7521 = vunpack.c.l.b16 %v6910
        %v7522 = vunpack.c.h.b16 %v6910
        %v7523 = vunpack.c.l.b16 %v6911
        %v7524 = vunpack.c.h.b16 %v6911
        %v7525 = vunpack.c.l.b16 %v6912
        %v7526 = vunpack.c.h.b16 %v6912
        %v7527 = vunpack.c.l.b16 %v6913
        %v7528 = vunpack.c.h.b16 %v6913
        %v7529 = vunpack.c.l.b16 %v6914
        %v7530 = vunpack.c.h.b16 %v6914
        %v7531 = vunpack.c.l.b16 %v6915
        %v7532 = vunpack.c.h.b16 %v6915
        %v7533 = vunpack.c.l.b16 %v6916
        %v7534 = vunpack.c.h.b16 %v6916
        %v7535 = vunpack.c.l.b16 %v6917
        %v7536 = vunpack.c.h.b16 %v6917
        %v7537 = vunpack.c.l.b16 %v6918
        %v7538 = vunpack.c.h.b16 %v6918
        %v7539 = vunpack.c.l.b16 %v6919
        %v7540 = vunpack.c.h.b16 %v6919
        %v7541 = vunpack.c.l.b16 %v6920
        %v7542 = vunpack.c.h.b16 %v6920
        %v7543 = vunpack.c.l.b16 %v6921
        %v7544 = vunpack.c.h.b16 %v6921
        %v7545 = vunpack.c.l.b16 %v6922
        %v7546 = vunpack.c.h.b16 %v6922
        %v7547 = vunpack.c.l.b16 %v6923
        %v7548 = vunpack.c.h.b16 %v6923
        %v7549 = vunpack.c.l.b16 %v6924
        %v7550 = vunpack.c.h.b16 %v6924
        %v7551 = vunpack.c.l.b16 %v6925
        %v7552 = vunpack.c.h.b16 %v6925
        %v7553 = vunpack.c.l.b16 %v6926
        %v7554 = vunpack.c.h.b16 %v6926
        %v7555 = vunpack.c.l.b16 %v6927
        %v7556 = vunpack.c.h.b16 %v6927
        %v7557 = vunpack.c.l.b16 %v6928
        %v7558 = vunpack.c.h.b16 %v6928
        %v7559 = vunpack.c.l.b16 %v6929
        %v7560 = vunpack.c.h.b16 %v6929
        %v7561 = vunpack.c.l.b16 %v6930
        %v7562 = vunpack.c.h.b16 %v6930
        %v7563 = vunpack.c.l.b16 %v6931
        %v7564 = vunpack.c.h.b16 %v6931
        %v7565 = vunpack.c.l.b16 %v6932
        %v7566 = vunpack.c.h.b16 %v6932
        %v7567 = vunpack.c.l.b16 %v6933
        %v7568 = vunpack.c.h.b16 %v6933
        %v7569 = vunpack.c.l.b16 %v6934
        %v7570 = vunpack.c.h.b16 %v6934
        %v7571 = vunpack.c.l.b16 %v6935
        %v7572 = vunpack.c.h.b16 %v6935
        %v7573 = vunpack.c.l.b16 %v6936
        %v7574 = vunpack.c.h.b16 %v6936
        %v7575 = vunpack.c.l.b16 %v6937
        %v7576 = vunpack.c.h.b16 %v6937
        %v7577 = vunpack.c.l.b16 %v6938
        %v7578 = vunpack.c.h.b16 %v6938
        %v7579 = vunpack.c.l.b16 %v6939
        %v7580 = vunpack.c.h.b16 %v6939
        %v7581 = vunpack.c.l.b16 %v6940
        %v7582 = vunpack.c.h.b16 %v6940
        %v7583 = vunpack.c.l.b16 %v6941
        %v7584 = vunpack.c.h.b16 %v6941
        %v7585 = vunpack.c.l.b16 %v6942
        %v7586 = vunpack.c.h.b16 %v6942
        %v7587 = vunpack.c.l.b16 %v6943
        %v7588 = vunpack.c.h.b16 %v6943
        %v7589 = vunpack.c.l.b16 %v6944
        %v7590 = vunpack.c.h.b16 %v6944
        %v7591 = vunpack.c.l.b16 %v6945
        %v7592 = vunpack.c.h.b16 %v6945
        %v7593 = vunpack.c.l.b16 %v6946
        %v7594 = vunpack.c.h.b16 %v6946
        %v7595 = vunpack.c.l.b16 %v6947
        %v7596 = vunpack.c.h.b16 %v6947
        %v7597 = vunpack.c.l.b16 %v6948
        %v7598 = vunpack.c.h.b16 %v6948
        %v7599 = vunpack.c.l.b16 %v6949
        %v7600 = vunpack.c.h.b16 %v6949
        %v7601 = vunpack.c.l.b16 %v6950
        %v7602 = vunpack.c.h.b16 %v6950
        %v7603 = vunpack.c.l.b16 %v6951
        %v7604 = vunpack.c.h.b16 %v6951
        %v7605 = vunpack.c.l.b16 %v6952
        %v7606 = vunpack.c.h.b16 %v6952
        %v7607 = vunpack.c.l.b16 %v6953
        %v7608 = vunpack.c.h.b16 %v6953
        %v7609 = vunpack.c.l.b16 %v6954
        %v7610 = vunpack.c.h.b16 %v6954
        %v7611 = vunpack.c.l.b16 %v6955
        %v7612 = vunpack.c.h.b16 %v6955
        %v7613 = vunpack.c.l.b16 %v6956
        %v7614 = vunpack.c.h.b16 %v6956
        %v7615 = vunpack.c.l.b16 %v6957
        %v7616 = vunpack.c.h.b16 %v6957
        %v7617 = vunpack.c.l.b16 %v6958
        %v7618 = vunpack.c.h.b16 %v6958
        %v7619 = vunpack.c.l.b16 %v6959
        %v7620 = vunpack.c.h.b16 %v6959
        %v7621 = vunpack.c.l.b16 %v6960
        %v7622 = vunpack.c.h.b16 %v6960
        %v7623 = vunpack.c.l.b16 %v6961
        %v7624 = vunpack.c.h.b16 %v6961
        %v7625 = vunpack.c.l.b16 %v6962
        %v7626 = vunpack.c.h.b16 %v6962
        %v7627 = vunpack.c.l.b16 %v6963
        %v7628 = vunpack.c.h.b16 %v6963
        %v7629 = vunpack.c.l.b16 %v6964
        %v7630 = vunpack.c.h.b16 %v6964
        %v7631 = vunpack.c.l.b16 %v6965
        %v7632 = vunpack.c.h.b16 %v6965
        %v7633 = vunpack.c.l.b16 %v6966
        %v7634 = vunpack.c.h.b16 %v6966
        %v7635 = vunpack.c.l.b16 %v6967
        %v7636 = vunpack.c.h.b16 %v6967
        %v7637 = vunpack.c.l.b16 %v6968
        %v7638 = vunpack.c.h.b16 %v6968
        %v7639 = vunpack.c.l.b16 %v6969
        %v7640 = vunpack.c.h.b16 %v6969
        %v7641 = vunpack.c.l.b16 %v6970
        %v7642 = vunpack.c.h.b16 %v6970
        %v7643 = vunpack.c.l.b16 %v6971
        %v7644 = vunpack.c.h.b16 %v6971
        %v7645 = vunpack.c.l.b16 %v6972
        %v7646 = vunpack.c.h.b16 %v6972
        %v7647 = vunpack.c.l.b16 %v6973
        %v7648 = vunpack.c.h.b16 %v6973
        %v7649 = vunpack.c.l.b16 %v6974
        %v7650 = vunpack.c.h.b16 %v6974
        %v7651 = vunpack.c.l.b16 %v6975
        %v7652 = vunpack.c.h.b16 %v6975
        %v7653 = vunpack.c.l.b16 %v6976
        %v7654 = vunpack.c.h.b16 %v6976
        %v7655 = vunpack.c.l.b16 %v6977
        %v7656 = vunpack.c.h.b16 %v6977
        %v7657 = vunpack.c.l.b16 %v6978
        %v7658 = vunpack.c.h.b16 %v6978
        %v7659 = vunpack.c.l.b16 %v6979
        %v7660 = vunpack.c.h.b16 %v6979
        %v7661 = vunpack.c.l.b16 %v6980
        %v7662 = vunpack.c.h.b16 %v6980
        %v7663 = vunpack.c.l.b16 %v6981
        %v7664 = vunpack.c.h.b16 %v6981
        %v7665 = vunpack.c.l.b16 %v6982
        %v7666 = vunpack.c.h.b16 %v6982
        %v7667 = vunpack.c.l.b16 %v6983
        %v7668 = vunpack.c.h.b16 %v6983
        %v7669 = vunpack.c.l.b16 %v6984
        %v7670 = vunpack.c.h.b16 %v6984
        %v7671 = vunpack.c.l.b16 %v6985
        %v7672 = vunpack.c.h.b16 %v6985
        %v7673 = vunpack.c.l.b16 %v6986
        %v7674 = vunpack.c.h.b16 %v6986
        %v7675 = vunpack.c.l.b16 %v6987
        %v7676 = vunpack.c.h.b16 %v6987
        %v7677 = vunpack.c.l.b16 %v6988
        %v7678 = vunpack.c.h.b16 %v6988
        %v7679 = vunpack.c.l.b16 %v6989
        %v7680 = vunpack.c.h.b16 %v6989
        %v7681 = vunpack.c.l.b16 %v6990
        %v7682 = vunpack.c.h.b16 %v6990
        %v7683 = vunpack.c.l.b16 %v6991
        %v7684 = vunpack.c.h.b16 %v6991
        %v7685 = vunpack.c.l.b16 %v6992
        %v7686 = vunpack.c.h.b16 %v6992
        %v7687 = vunpack.c.l.b16 %v6993
        %v7688 = vunpack.c.h.b16 %v6993
        %v7689 = vunpack.c.l.b16 %v6994
        %v7690 = vunpack.c.h.b16 %v6994
        %v7691 = vunpack.c.l.b16 %v6995
        %v7692 = vunpack.c.h.b16 %v6995
        %v7693 = vunpack.c.l.b16 %v6996
        %v7694 = vunpack.c.h.b16 %v6996
        %v7695 = vunpack.c.l.b16 %v6997
        %v7696 = vunpack.c.h.b16 %v6997
        %v7697 = vunpack.c.l.b16 %v6998
        %v7698 = vunpack.c.h.b16 %v6998
        %v7699 = vunpack.c.l.b16 %v6999
        %v7700 = vunpack.c.h.b16 %v6999
        %v7701 = vunpack.c.l.b16 %v7000
        %v7702 = vunpack.c.h.b16 %v7000
        %v7703 = vunpack.c.l.b16 %v7001
        %v7704 = vunpack.c.h.b16 %v7001
        %v7705 = vunpack.c.l.b16 %v7002
        %v7706 = vunpack.c.h.b16 %v7002
        %v7707 = vunpack.c.l.b16 %v7003
        %v7708 = vunpack.c.h.b16 %v7003
        %v7709 = vunpack.c.l.b16 %v7004
        %v7710 = vunpack.c.h.b16 %v7004
        %v7711 = vunpack.c.l.b16 %v7005
        %v7712 = vunpack.c.h.b16 %v7005
        %v7713 = vunpack.c.l.b16 %v7006
        %v7714 = vunpack.c.h.b16 %v7006
        %v7715 = vunpack.c.l.b16 %v7007
        %v7716 = vunpack.c.h.b16 %v7007
        %v7717 = vunpack.c.l.b16 %v7008
        %v7718 = vunpack.c.h.b16 %v7008
        %v7719 = vunpack.c.l.b16 %v7009
        %v7720 = vunpack.c.h.b16 %v7009
        %v7721 = vunpack.c.l.b16 %v7010
        %v7722 = vunpack.c.h.b16 %v7010
        %v7723 = vunpack.c.l.b16 %v7011
        %v7724 = vunpack.c.h.b16 %v7011
        %v7725 = vunpack.c.l.b16 %v7012
        %v7726 = vunpack.c.h.b16 %v7012
        %v7727 = vunpack.c.l.b16 %v7013
        %v7728 = vunpack.c.h.b16 %v7013
        %v7729 = vunpack.c.l.b16 %v7014
        %v7730 = vunpack.c.h.b16 %v7014
        %v7731 = vunpack.c.l.b16 %v7015
        %v7732 = vunpack.c.h.b16 %v7015
        %v7733 = vunpack.c.l.b16 %v7016
        %v7734 = vunpack.c.h.b16 %v7016
        %v7735 = vunpack.c.l.b16 %v7017
        %v7736 = vunpack.c.h.b16 %v7017
        %v7737 = vunpack.c.l.b16 %v7018
        %v7738 = vunpack.c.h.b16 %v7018
        %v7739 = vunpack.c.l.b16 %v7019
        %v7740 = vunpack.c.h.b16 %v7019
        %v7741 = vunpack.c.l.b16 %v7020
        %v7742 = vunpack.c.h.b16 %v7020
        %v7743 = vunpack.c.l.b16 %v7021
        %v7744 = vunpack.c.h.b16 %v7021
        %v7745 = vunpack.c.l.b16 %v7022
        %v7746 = vunpack.c.h.b16 %v7022
        %v7747 = vunpack.c.l.b16 %v7023
        %v7748 = vunpack.c.h.b16 %v7023
        %v7749 = vunpack.c.l.b16 %v7024
        %v7750 = vunpack.c.h.b16 %v7024
        %v7751 = vunpack.c.l.b16 %v7025
        %v7752 = vunpack.c.h.b16 %v7025
        %v7753 = vunpack.c.l.b16 %v7026
        %v7754 = vunpack.c.h.b16 %v7026
        %v7755 = vunpack.c.l.b16 %v7027
        %v7756 = vunpack.c.h.b16 %v7027
        %v7757 = vunpack.c.l.b16 %v7028
        %v7758 = vunpack.c.h.b16 %v7028
        %v7759 = vunpack.c.l.b16 %v7029
        %v7760 = vunpack.c.h.b16 %v7029
        %v7761 = vunpack.c.l.b16 %v7030
        %v7762 = vunpack.c.h.b16 %v7030
        %v7763 = vunpack.c.l.b16 %v7031
        %v7764 = vunpack.c.h.b16 %v7031
        %v7765 = vunpack.c.l.b16 %v7032
        %v7766 = vunpack.c.h.b16 %v7032
        %v7767 = vunpack.c.l.b16 %v7033
        %v7768 = vunpack.c.h.b16 %v7033
        %v7769 = vunpack.c.l.b16 %v7034
        %v7770 = vunpack.c.h.b16 %v7034
        %v7771 = vunpack.c.l.b16 %v7035
        %v7772 = vunpack.c.h.b16 %v7035
        %v7773 = vunpack.c.l.b16 %v7036
        %v7774 = vunpack.c.h.b16 %v7036
        %v7775 = vunpack.c.l.b16 %v7037
        %v7776 = vunpack.c.h.b16 %v7037
        %v7777 = vunpack.c.l.b16 %v7038
        %v7778 = vunpack.c.h.b16 %v7038
        %v7779 = vunpack.c.l.b16 %v7039
        %v7780 = vunpack.c.h.b16 %v7039
        %v7781 = vunpack.c.l.b16 %v7040
        %v7782 = vunpack.c.h.b16 %v7040
        %v7783 = vunpack.c.l.b16 %v7041
        %v7784 = vunpack.c.h.b16 %v7041
        %v7785 = vunpack.c.l.b16 %v7042
        %v7786 = vunpack.c.h.b16 %v7042
        %v7787 = vunpack.c.l.b16 %v7043
        %v7788 = vunpack.c.h.b16 %v7043
        %v7789 = vunpack.c.l.b16 %v7044
        %v7790 = vunpack.c.h.b16 %v7044
        %v7791 = vunpack.c.l.b16 %v7045
        %v7792 = vunpack.c.h.b16 %v7045
        %v7793 = vunpack.c.l.b16 %v7046
        %v7794 = vunpack.c.h.b16 %v7046
        %v7795 = vunpack.c.l.b16 %v7047
        %v7796 = vunpack.c.h.b16 %v7047
        %v7797 = vunpack.c.l.b16 %v7048
        %v7798 = vunpack.c.h.b16 %v7048
        %v7799 = vunpack.c.l.b16 %v7049
        %v7800 = vunpack.c.h.b16 %v7049
        %v7801 = vunpack.c.l.b16 %v7050
        %v7802 = vunpack.c.h.b16 %v7050
        %v7803 = vunpack.c.l.b16 %v7051
        %v7804 = vunpack.c.h.b16 %v7051
        %v7805 = vunpack.c.l.b16 %v7052
        %v7806 = vunpack.c.h.b16 %v7052
        %v7807 = vunpack.c.l.b16 %v7053
        %v7808 = vunpack.c.h.b16 %v7053
        %v7809 = vunpack.c.l.b16 %v7054
        %v7810 = vunpack.c.h.b16 %v7054
        %v7811 = vunpack.c.l.b16 %v7055
        %v7812 = vunpack.c.h.b16 %v7055
        %v7813 = vunpack.c.l.b16 %v7056
        %v7814 = vunpack.c.h.b16 %v7056
        %v7815 = vunpack.c.l.b16 %v7057
        %v7816 = vunpack.c.h.b16 %v7057
        %v7817 = vunpack.c.l.b16 %v7058
        %v7818 = vunpack.c.h.b16 %v7058
        %v7819 = vunpack.c.l.b16 %v7059
        %v7820 = vunpack.c.h.b16 %v7059
        %v7821 = vunpack.c.l.b16 %v7060
        %v7822 = vunpack.c.h.b16 %v7060
        %v7823 = vunpack.c.l.b16 %v7061
        %v7824 = vunpack.c.h.b16 %v7061
        %v7825 = vunpack.c.l.b16 %v7062
        %v7826 = vunpack.c.h.b16 %v7062
        %v7827 = vunpack.c.l.b16 %v7063
        %v7828 = vunpack.c.h.b16 %v7063
        %v7829 = vunpack.c.l.b16 %v7064
        %v7830 = vunpack.c.h.b16 %v7064
        %v7831 = vunpack.c.l.b16 %v7065
        %v7832 = vunpack.c.h.b16 %v7065
        %v7833 = vunpack.c.l.b16 %v7066
        %v7834 = vunpack.c.h.b16 %v7066
        %v7835 = vpack.c.b16 %v7325, %v7323
        %v7836 = vpack.c.b16 %v7326, %v7324
        %v7837 = vpack.c.b16 %v7329, %v7327
        %v7838 = vpack.c.b16 %v7330, %v7328
        %v7839 = vpack.c.b16 %v7333, %v7331
        %v7840 = vpack.c.b16 %v7334, %v7332
        %v7841 = vpack.c.b16 %v7337, %v7335
        %v7842 = vpack.c.b16 %v7338, %v7336
        %v7843 = vpack.c.b16 %v7341, %v7339
        %v7844 = vpack.c.b16 %v7342, %v7340
        %v7845 = vpack.c.b16 %v7345, %v7343
        %v7846 = vpack.c.b16 %v7346, %v7344
        %v7847 = vpack.c.b16 %v7349, %v7347
        %v7848 = vpack.c.b16 %v7350, %v7348
        %v7849 = vpack.c.b16 %v7353, %v7351
        %v7850 = vpack.c.b16 %v7354, %v7352
        %v7851 = vpack.c.b16 %v7357, %v7355
        %v7852 = vpack.c.b16 %v7358, %v7356
        %v7853 = vpack.c.b16 %v7361, %v7359
        %v7854 = vpack.c.b16 %v7362, %v7360
        %v7855 = vpack.c.b16 %v7365, %v7363
        %v7856 = vpack.c.b16 %v7366, %v7364
        %v7857 = vpack.c.b16 %v7369, %v7367
        %v7858 = vpack.c.b16 %v7370, %v7368
        %v7859 = vpack.c.b16 %v7373, %v7371
        %v7860 = vpack.c.b16 %v7374, %v7372
        %v7861 = vpack.c.b16 %v7377, %v7375
        %v7862 = vpack.c.b16 %v7378, %v7376
        %v7863 = vpack.c.b16 %v7381, %v7379
        %v7864 = vpack.c.b16 %v7382, %v7380
        %v7865 = vpack.c.b16 %v7385, %v7383
        %v7866 = vpack.c.b16 %v7386, %v7384
        %v7867 = vpack.c.b16 %v7389, %v7387
        %v7868 = vpack.c.b16 %v7390, %v7388
        %v7869 = vpack.c.b16 %v7393, %v7391
        %v7870 = vpack.c.b16 %v7394, %v7392
        %v7871 = vpack.c.b16 %v7397, %v7395
        %v7872 = vpack.c.b16 %v7398, %v7396
        %v7873 = vpack.c.b16 %v7401, %v7399
        %v7874 = vpack.c.b16 %v7402, %v7400
        %v7875 = vpack.c.b16 %v7405, %v7403
        %v7876 = vpack.c.b16 %v7406, %v7404
        %v7877 = vpack.c.b16 %v7409, %v7407
        %v7878 = vpack.c.b16 %v7410, %v7408
        %v7879 = vpack.c.b16 %v7413, %v7411
        %v7880 = vpack.c.b16 %v7414, %v7412
        %v7881 = vpack.c.b16 %v7417, %v7415
        %v7882 = vpack.c.b16 %v7418, %v7416
        %v7883 = vpack.c.b16 %v7421, %v7419
        %v7884 = vpack.c.b16 %v7422, %v7420
        %v7885 = vpack.c.b16 %v7425, %v7423
        %v7886 = vpack.c.b16 %v7426, %v7424
        %v7887 = vpack.c.b16 %v7429, %v7427
        %v7888 = vpack.c.b16 %v7430, %v7428
        %v7889 = vpack.c.b16 %v7433, %v7431
        %v7890 = vpack.c.b16 %v7434, %v7432
        %v7891 = vpack.c.b16 %v7437, %v7435
        %v7892 = vpack.c.b16 %v7438, %v7436
        %v7893 = vpack.c.b16 %v7441, %v7439
        %v7894 = vpack.c.b16 %v7442, %v7440
        %v7895 = vpack.c.b16 %v7445, %v7443
        %v7896 = vpack.c.b16 %v7446, %v7444
        %v7897 = vpack.c.b16 %v7449, %v7447
        %v7898 = vpack.c.b16 %v7450, %v7448
        %v7899 = vpack.c.b16 %v7453, %v7451
        %v7900 = vpack.c.b16 %v7454, %v7452
        %v7901 = vpack.c.b16 %v7457, %v7455
        %v7902 = vpack.c.b16 %v7458, %v7456
        %v7903 = vpack.c.b16 %v7461, %v7459
        %v7904 = vpack.c.b16 %v7462, %v7460
        %v7905 = vpack.c.b16 %v7465, %v7463
        %v7906 = vpack.c.b16 %v7466, %v7464
        %v7907 = vpack.c.b16 %v7469, %v7467
        %v7908 = vpack.c.b16 %v7470, %v7468
        %v7909 = vpack.c.b16 %v7473, %v7471
        %v7910 = vpack.c.b16 %v7474, %v7472
        %v7911 = vpack.c.b16 %v7477, %v7475
        %v7912 = vpack.c.b16 %v7478, %v7476
        %v7913 = vpack.c.b16 %v7481, %v7479
        %v7914 = vpack.c.b16 %v7482, %v7480
        %v7915 = vpack.c.b16 %v7485, %v7483
        %v7916 = vpack.c.b16 %v7486, %v7484
        %v7917 = vpack.c.b16 %v7489, %v7487
        %v7918 = vpack.c.b16 %v7490, %v7488
        %v7919 = vpack.c.b16 %v7493, %v7491
        %v7920 = vpack.c.b16 %v7494, %v7492
        %v7921 = vpack.c.b16 %v7497, %v7495
        %v7922 = vpack.c.b16 %v7498, %v7496
        %v7923 = vpack.c.b16 %v7501, %v7499
        %v7924 = vpack.c.b16 %v7502, %v7500
        %v7925 = vpack.c.b16 %v7505, %v7503
        %v7926 = vpack.c.b16 %v7506, %v7504
        %v7927 = vpack.c.b16 %v7509, %v7507
        %v7928 = vpack.c.b16 %v7510, %v7508
        %v7929 = vpack.c.b16 %v7513, %v7511
        %v7930 = vpack.c.b16 %v7514, %v7512
        %v7931 = vpack.c.b16 %v7517, %v7515
        %v7932 = vpack.c.b16 %v7518, %v7516
        %v7933 = vpack.c.b16 %v7521, %v7519
        %v7934 = vpack.c.b16 %v7522, %v7520
        %v7935 = vpack.c.b16 %v7525, %v7523
        %v7936 = vpack.c.b16 %v7526, %v7524
        %v7937 = vpack.c.b16 %v7529, %v7527
        %v7938 = vpack.c.b16 %v7530, %v7528
        %v7939 = vpack.c.b16 %v7533, %v7531
        %v7940 = vpack.c.b16 %v7534, %v7532
        %v7941 = vpack.c.b16 %v7537, %v7535
        %v7942 = vpack.c.b16 %v7538, %v7536
        %v7943 = vpack.c.b16 %v7541, %v7539
        %v7944 = vpack.c.b16 %v7542, %v7540
        %v7945 = vpack.c.b16 %v7545, %v7543
        %v7946 = vpack.c.b16 %v7546, %v7544
        %v7947 = vpack.c.b16 %v7549, %v7547
        %v7948 = vpack.c.b16 %v7550, %v7548
        %v7949 = vpack.c.b16 %v7553, %v7551
        %v7950 = vpack.c.b16 %v7554, %v7552
        %v7951 = vpack.c.b16 %v7557, %v7555
        %v7952 = vpack.c.b16 %v7558, %v7556
        %v7953 = vpack.c.b16 %v7561, %v7559
        %v7954 = vpack.c.b16 %v7562, %v7560
        %v7955 = vpack.c.b16 %v7565, %v7563
        %v7956 = vpack.c.b16 %v7566, %v7564
        %v7957 = vpack.c.b16 %v7569, %v7567
        %v7958 = vpack.c.b16 %v7570, %v7568
        %v7959 = vpack.c.b16 %v7573, %v7571
        %v7960 = vpack.c.b16 %v7574, %v7572
        %v7961 = vpack.c.b16 %v7577, %v7575
        %v7962 = vpack.c.b16 %v7578, %v7576
        %v7963 = vpack.c.b16 %v7581, %v7579
        %v7964 = vpack.c.b16 %v7582, %v7580
        %v7965 = vpack.c.b16 %v7585, %v7583
        %v7966 = vpack.c.b16 %v7586, %v7584
        %v7967 = vpack.c.b16 %v7589, %v7587
        %v7968 = vpack.c.b16 %v7590, %v7588
        %v7969 = vpack.c.b16 %v7593, %v7591
        %v7970 = vpack.c.b16 %v7594, %v7592
        %v7971 = vpack.c.b16 %v7597, %v7595
        %v7972 = vpack.c.b16 %v7598, %v7596
        %v7973 = vpack.c.b16 %v7601, %v7599
        %v7974 = vpack.c.b16 %v7602, %v7600
        %v7975 = vpack.c.b16 %v7605, %v7603
        %v7976 = vpack.c.b16 %v7606, %v7604
        %v7977 = vpack.c.b16 %v7609, %v7607
        %v7978 = vpack.c.b16 %v7610, %v7608
        %v7979 = vpack.c.b16 %v7613, %v7611
        %v7980 = vpack.c.b16 %v7614, %v7612
        %v7981 = vpack.c.b16 %v7617, %v7615
        %v7982 = vpack.c.b16 %v7618, %v7616
        %v7983 = vpack.c.b16 %v7621, %v7619
        %v7984 = vpack.c.b16 %v7622, %v7620
        %v7985 = vpack.c.b16 %v7625, %v7623
        %v7986 = vpack.c.b16 %v7626, %v7624
        %v7987 = vpack.c.b16 %v7629, %v7627
        %v7988 = vpack.c.b16 %v7630, %v7628
        %v7989 = vpack.c.b16 %v7633, %v7631
        %v7990 = vpack.c.b16 %v7634, %v7632
        %v7991 = vpack.c.b16 %v7637, %v7635
        %v7992 = vpack.c.b16 %v7638, %v7636
        %v7993 = vpack.c.b16 %v7641, %v7639
        %v7994 = vpack.c.b16 %v7642, %v7640
        %v7995 = vpack.c.b16 %v7645, %v7643
        %v7996 = vpack.c.b16 %v7646, %v7644
        %v7997 = vpack.c.b16 %v7649, %v7647
        %v7998 = vpack.c.b16 %v7650, %v7648
        %v7999 = vpack.c.b16 %v7653, %v7651
        %v8000 = vpack.c.b16 %v7654, %v7652
        %v8001 = vpack.c.b16 %v7657, %v7655
        %v8002 = vpack.c.b16 %v7658, %v7656
        %v8003 = vpack.c.b16 %v7661, %v7659
        %v8004 = vpack.c.b16 %v7662, %v7660
        %v8005 = vpack.c.b16 %v7665, %v7663
        %v8006 = vpack.c.b16 %v7666, %v7664
        %v8007 = vpack.c.b16 %v7669, %v7667
        %v8008 = vpack.c.b16 %v7670, %v7668
        %v8009 = vpack.c.b16 %v7673, %v7671
        %v8010 = vpack.c.b16 %v7674, %v7672
        %v8011 = vpack.c.b16 %v7677, %v7675
        %v8012 = vpack.c.b16 %v7678, %v7676
        %v8013 = vpack.c.b16 %v7681, %v7679
        %v8014 = vpack.c.b16 %v7682, %v7680
        %v8015 = vpack.c.b16 %v7685, %v7683
        %v8016 = vpack.c.b16 %v7686, %v7684
        %v8017 = vpack.c.b16 %v7689, %v7687
        %v8018 = vpack.c.b16 %v7690, %v7688
        %v8019 = vpack.c.b16 %v7693, %v7691
        %v8020 = vpack.c.b16 %v7694, %v7692
        %v8021 = vpack.c.b16 %v7697, %v7695
        %v8022 = vpack.c.b16 %v7698, %v7696
        %v8023 = vpack.c.b16 %v7701, %v7699
        %v8024 = vpack.c.b16 %v7702, %v7700
        %v8025 = vpack.c.b16 %v7705, %v7703
        %v8026 = vpack.c.b16 %v7706, %v7704
        %v8027 = vpack.c.b16 %v7709, %v7707
        %v8028 = vpack.c.b16 %v7710, %v7708
        %v8029 = vpack.c.b16 %v7713, %v7711
        %v8030 = vpack.c.b16 %v7714, %v7712
        %v8031 = vpack.c.b16 %v7717, %v7715
        %v8032 = vpack.c.b16 %v7718, %v7716
        %v8033 = vpack.c.b16 %v7721, %v7719
        %v8034 = vpack.c.b16 %v7722, %v7720
        %v8035 = vpack.c.b16 %v7725, %v7723
        %v8036 = vpack.c.b16 %v7726, %v7724
        %v8037 = vpack.c.b16 %v7729, %v7727
        %v8038 = vpack.c.b16 %v7730, %v7728
        %v8039 = vpack.c.b16 %v7733, %v7731
        %v8040 = vpack.c.b16 %v7734, %v7732
        %v8041 = vpack.c.b16 %v7737, %v7735
        %v8042 = vpack.c.b16 %v7738, %v7736
        %v8043 = vpack.c.b16 %v7741, %v7739
        %v8044 = vpack.c.b16 %v7742, %v7740
        %v8045 = vpack.c.b16 %v7745, %v7743
        %v8046 = vpack.c.b16 %v7746, %v7744
        %v8047 = vpack.c.b16 %v7749, %v7747
        %v8048 = vpack.c.b16 %v7750, %v7748
        %v8049 = vpack.c.b16 %v7753, %v7751
        %v8050 = vpack.c.b16 %v7754, %v7752
        %v8051 = vpack.c.b16 %v7757, %v7755
        %v8052 = vpack.c.b16 %v7758, %v7756
        %v8053 = vpack.c.b16 %v7761, %v7759
        %v8054 = vpack.c.b16 %v7762, %v7760
        %v8055 = vpack.c.b16 %v7765, %v7763
        %v8056 = vpack.c.b16 %v7766, %v7764
        %v8057 = vpack.c.b16 %v7769, %v7767
        %v8058 = vpack.c.b16 %v7770, %v7768
        %v8059 = vpack.c.b16 %v7773, %v7771
        %v8060 = vpack.c.b16 %v7774, %v7772
        %v8061 = vpack.c.b16 %v7777, %v7775
        %v8062 = vpack.c.b16 %v7778, %v7776
        %v8063 = vpack.c.b16 %v7781, %v7779
        %v8064 = vpack.c.b16 %v7782, %v7780
        %v8065 = vpack.c.b16 %v7785, %v7783
        %v8066 = vpack.c.b16 %v7786, %v7784
        %v8067 = vpack.c.b16 %v7789, %v7787
        %v8068 = vpack.c.b16 %v7790, %v7788
        %v8069 = vpack.c.b16 %v7793, %v7791
        %v8070 = vpack.c.b16 %v7794, %v7792
        %v8071 = vpack.c.b16 %v7797, %v7795
        %v8072 = vpack.c.b16 %v7798, %v7796
        %v8073 = vpack.c.b16 %v7801, %v7799
        %v8074 = vpack.c.b16 %v7802, %v7800
        %v8075 = vpack.c.b16 %v7805, %v7803
        %v8076 = vpack.c.b16 %v7806, %v7804
        %v8077 = vpack.c.b16 %v7809, %v7807
        %v8078 = vpack.c.b16 %v7810, %v7808
        %v8079 = vpack.c.b16 %v7813, %v7811
        %v8080 = vpack.c.b16 %v7814, %v7812
        %v8081 = vpack.c.b16 %v7817, %v7815
        %v8082 = vpack.c.b16 %v7818, %v7816
        %v8083 = vpack.c.b16 %v7821, %v7819
        %v8084 = vpack.c.b16 %v7822, %v7820
        %v8085 = vpack.c.b16 %v7825, %v7823
        %v8086 = vpack.c.b16 %v7826, %v7824
        %v8087 = vpack.c.b16 %v7829, %v7827
        %v8088 = vpack.c.b16 %v7830, %v7828
        %v8089 = vpack.c.b16 %v7833, %v7831
        %v8090 = vpack.c.b16 %v7834, %v7832
        %8347 = vmatprep.subr.bf16.mxu0 %v7850
        %8348 = vmatpush1.bf16.msra.mxu0 %v7849
        %8349 = vmatprep.subr.bf16.mxu0 %v7848
        %8350 = vmatpush1.bf16.msra.mxu0 %v7847
        %8351 = vmatprep.subr.bf16.mxu0 %v7846
        %8352 = vmatpush1.bf16.msra.mxu0 %v7845
        %8353 = vmatprep.subr.bf16.mxu0 %v7844
        %8354 = vmatpush1.bf16.msra.mxu0 %v7843
        %8355 = vmatprep.subr.bf16.mxu0 %v7842
        %8356 = vmatpush1.bf16.msra.mxu0 %v7841
        %8357 = vmatprep.subr.bf16.mxu0 %v7840
        %8358 = vmatpush1.bf16.msra.mxu0 %v7839
        %8359 = vmatprep.subr.bf16.mxu0 %v7838
        %8360 = vmatpush1.bf16.msra.mxu0 %v7837
        %8361 = vmatprep.subr.bf16.mxu0 %v7836
        %8362 = vmatpush1.bf16.msra.mxu0 %v7835
        %8363 = vmatprep.subr.bf16.mxu0 %v7866
        %8364 = vmatpush2.bf16.msra.mxu0 %v7865
        %8365 = vmatprep.subr.bf16.mxu0 %v7864
        %8366 = vmatpush2.bf16.msra.mxu0 %v7863
        %8367 = vmatprep.subr.bf16.mxu0 %v7862
        %8368 = vmatpush2.bf16.msra.mxu0 %v7861
        %8369 = vmatprep.subr.bf16.mxu0 %v7860
        %8370 = vmatpush2.bf16.msra.mxu0 %v7859
        %8371 = vmatprep.subr.bf16.mxu0 %v7858
        %8372 = vmatpush2.bf16.msra.mxu0 %v7857
        %8373 = vmatprep.subr.bf16.mxu0 %v7856
        %8374 = vmatpush2.bf16.msra.mxu0 %v7855
        %8375 = vmatprep.subr.bf16.mxu0 %v7854
        %8376 = vmatpush2.bf16.msra.mxu0 %v7853
        %8377 = vmatprep.subr.bf16.mxu0 %v7852
        %8378 = vmatpush2.bf16.msra.mxu0 %v7851
        %8379 = vmatprep.mubr.bf16.mxu0 %v6796
        %8380 = vmatmul.mubr.bf16.gmra.mxu0 %v6795
        %v8381 = vpop.f32.mrf.mxu0
        %v8382 = vadd.f32 0.0, %v8381
        %v8383 = vpop.f32.mrf.mxu0
        %v8384 = vadd.f32 0.0, %v8383
        %v8385 = vpop.f32.mrf.mxu0
        %v8386 = vpop.f32.mrf.mxu0
        %8387 = vdwg.mxu0
        %8388 = vmatprep.subr.bf16.mxu0 %v7882
        %8389 = vmatpush1.bf16.msra.mxu0 %v7881
        %8390 = vmatprep.subr.bf16.mxu0 %v7880
        %8391 = vmatpush1.bf16.msra.mxu0 %v7879
        %8392 = vmatprep.subr.bf16.mxu0 %v7878
        %8393 = vmatpush1.bf16.msra.mxu0 %v7877
        %8394 = vmatprep.subr.bf16.mxu0 %v7876
        %8395 = vmatpush1.bf16.msra.mxu0 %v7875
        %8396 = vmatprep.subr.bf16.mxu0 %v7874
        %8397 = vmatpush1.bf16.msra.mxu0 %v7873
        %8398 = vmatprep.subr.bf16.mxu0 %v7872
        %8399 = vmatpush1.bf16.msra.mxu0 %v7871
        %8400 = vmatprep.subr.bf16.mxu0 %v7870
        %8401 = vmatpush1.bf16.msra.mxu0 %v7869
        %8402 = vmatprep.subr.bf16.mxu0 %v7868
        %8403 = vmatpush1.bf16.msra.mxu0 %v7867
        %8404 = vmatprep.subr.bf16.mxu0 %v7898
        %8405 = vmatpush2.bf16.msra.mxu0 %v7897
        %8406 = vmatprep.subr.bf16.mxu0 %v7896
        %8407 = vmatpush2.bf16.msra.mxu0 %v7895
        %8408 = vmatprep.subr.bf16.mxu0 %v7894
        %8409 = vmatpush2.bf16.msra.mxu0 %v7893
        %8410 = vmatprep.subr.bf16.mxu0 %v7892
        %8411 = vmatpush2.bf16.msra.mxu0 %v7891
        %8412 = vmatprep.subr.bf16.mxu0 %v7890
        %8413 = vmatpush2.bf16.msra.mxu0 %v7889
        %8414 = vmatprep.subr.bf16.mxu0 %v7888
        %8415 = vmatpush2.bf16.msra.mxu0 %v7887
        %8416 = vmatprep.subr.bf16.mxu0 %v7886
        %8417 = vmatpush2.bf16.msra.mxu0 %v7885
        %8418 = vmatprep.subr.bf16.mxu0 %v7884
        %8419 = vmatpush2.bf16.msra.mxu0 %v7883
        %8420 = vmatprep.mubr.bf16.mxu0 %v6798
        %8421 = vmatmul.mubr.bf16.gmra.mxu0 %v6797
        %v8422 = vpop.f32.mrf.mxu0
        %v8423 = vadd.f32 %v8382, %v8422
        %v8424 = vpop.f32.mrf.mxu0
        %v8425 = vadd.f32 %v8384, %v8424
        %v8426 = vpop.f32.mrf.mxu0
        %v8427 = vpop.f32.mrf.mxu0
        %8428 = vdwg.mxu0
        %8429 = vmatprep.subr.bf16.mxu0 %v7914
        %8430 = vmatpush1.bf16.msra.mxu0 %v7913
        %8431 = vmatprep.subr.bf16.mxu0 %v7912
        %8432 = vmatpush1.bf16.msra.mxu0 %v7911
        %8433 = vmatprep.subr.bf16.mxu0 %v7910
        %8434 = vmatpush1.bf16.msra.mxu0 %v7909
        %8435 = vmatprep.subr.bf16.mxu0 %v7908
        %8436 = vmatpush1.bf16.msra.mxu0 %v7907
        %8437 = vmatprep.subr.bf16.mxu0 %v7906
        %8438 = vmatpush1.bf16.msra.mxu0 %v7905
        %8439 = vmatprep.subr.bf16.mxu0 %v7904
        %8440 = vmatpush1.bf16.msra.mxu0 %v7903
        %8441 = vmatprep.subr.bf16.mxu0 %v7902
        %8442 = vmatpush1.bf16.msra.mxu0 %v7901
        %8443 = vmatprep.subr.bf16.mxu0 %v7900
        %8444 = vmatpush1.bf16.msra.mxu0 %v7899
        %8445 = vmatprep.subr.bf16.mxu0 %v7930
        %8446 = vmatpush2.bf16.msra.mxu0 %v7929
        %8447 = vmatprep.subr.bf16.mxu0 %v7928
        %8448 = vmatpush2.bf16.msra.mxu0 %v7927
        %8449 = vmatprep.subr.bf16.mxu0 %v7926
        %8450 = vmatpush2.bf16.msra.mxu0 %v7925
        %8451 = vmatprep.subr.bf16.mxu0 %v7924
        %8452 = vmatpush2.bf16.msra.mxu0 %v7923
        %8453 = vmatprep.subr.bf16.mxu0 %v7922
        %8454 = vmatpush2.bf16.msra.mxu0 %v7921
        %8455 = vmatprep.subr.bf16.mxu0 %v7920
        %8456 = vmatpush2.bf16.msra.mxu0 %v7919
        %8457 = vmatprep.subr.bf16.mxu0 %v7918
        %8458 = vmatpush2.bf16.msra.mxu0 %v7917
        %8459 = vmatprep.subr.bf16.mxu0 %v7916
        %8460 = vmatpush2.bf16.msra.mxu0 %v7915
        %8461 = vmatprep.mubr.bf16.mxu0 %v6800
        %8462 = vmatmul.mubr.bf16.gmra.mxu0 %v6799
        %v8463 = vpop.f32.mrf.mxu0
        %v8464 = vadd.f32 %v8423, %v8463
        %v8465 = vpop.f32.mrf.mxu0
        %v8466 = vadd.f32 %v8425, %v8465
        %v8467 = vpop.f32.mrf.mxu0
        %v8468 = vpop.f32.mrf.mxu0
        %8469 = vdwg.mxu0
        %8470 = vmatprep.subr.bf16.mxu0 %v7946
        %8471 = vmatpush1.bf16.msra.mxu0 %v7945
        %8472 = vmatprep.subr.bf16.mxu0 %v7944
        %8473 = vmatpush1.bf16.msra.mxu0 %v7943
        %8474 = vmatprep.subr.bf16.mxu0 %v7942
        %8475 = vmatpush1.bf16.msra.mxu0 %v7941
        %8476 = vmatprep.subr.bf16.mxu0 %v7940
        %8477 = vmatpush1.bf16.msra.mxu0 %v7939
        %8478 = vmatprep.subr.bf16.mxu0 %v7938
        %8479 = vmatpush1.bf16.msra.mxu0 %v7937
        %8480 = vmatprep.subr.bf16.mxu0 %v7936
        %8481 = vmatpush1.bf16.msra.mxu0 %v7935
        %8482 = vmatprep.subr.bf16.mxu0 %v7934
        %8483 = vmatpush1.bf16.msra.mxu0 %v7933
        %8484 = vmatprep.subr.bf16.mxu0 %v7932
        %8485 = vmatpush1.bf16.msra.mxu0 %v7931
        %8486 = vmatprep.subr.bf16.mxu0 %v7962
        %8487 = vmatpush2.bf16.msra.mxu0 %v7961
        %8488 = vmatprep.subr.bf16.mxu0 %v7960
        %8489 = vmatpush2.bf16.msra.mxu0 %v7959
        %8490 = vmatprep.subr.bf16.mxu0 %v7958
        %8491 = vmatpush2.bf16.msra.mxu0 %v7957
        %8492 = vmatprep.subr.bf16.mxu0 %v7956
        %8493 = vmatpush2.bf16.msra.mxu0 %v7955
        %8494 = vmatprep.subr.bf16.mxu0 %v7954
        %8495 = vmatpush2.bf16.msra.mxu0 %v7953
        %8496 = vmatprep.subr.bf16.mxu0 %v7952
        %8497 = vmatpush2.bf16.msra.mxu0 %v7951
        %8498 = vmatprep.subr.bf16.mxu0 %v7950
        %8499 = vmatpush2.bf16.msra.mxu0 %v7949
        %8500 = vmatprep.subr.bf16.mxu0 %v7948
        %8501 = vmatpush2.bf16.msra.mxu0 %v7947
        %8502 = vmatprep.mubr.bf16.mxu0 %v6802
        %8503 = vmatmul.mubr.bf16.gmra.mxu0 %v6801
        %v8504 = vpop.f32.mrf.mxu0
        %v8505 = vadd.f32 %v8464, %v8504
        %v8506 = vpop.f32.mrf.mxu0
        %v8507 = vadd.f32 %v8466, %v8506
        %v8508 = vpop.f32.mrf.mxu0
        %v8509 = vpop.f32.mrf.mxu0
        %8510 = vdwg.mxu0
        %8511 = vmatprep.subr.bf16.mxu0 %v7978
        %8512 = vmatpush1.bf16.msra.mxu0 %v7977
        %8513 = vmatprep.subr.bf16.mxu0 %v7976
        %8514 = vmatpush1.bf16.msra.mxu0 %v7975
        %8515 = vmatprep.subr.bf16.mxu0 %v7974
        %8516 = vmatpush1.bf16.msra.mxu0 %v7973
        %8517 = vmatprep.subr.bf16.mxu0 %v7972
        %8518 = vmatpush1.bf16.msra.mxu0 %v7971
        %8519 = vmatprep.subr.bf16.mxu0 %v7970
        %8520 = vmatpush1.bf16.msra.mxu0 %v7969
        %8521 = vmatprep.subr.bf16.mxu0 %v7968
        %8522 = vmatpush1.bf16.msra.mxu0 %v7967
        %8523 = vmatprep.subr.bf16.mxu0 %v7966
        %8524 = vmatpush1.bf16.msra.mxu0 %v7965
        %8525 = vmatprep.subr.bf16.mxu0 %v7964
        %8526 = vmatpush1.bf16.msra.mxu0 %v7963
        %8527 = vmatprep.subr.bf16.mxu0 %v7994
        %8528 = vmatpush2.bf16.msra.mxu0 %v7993
        %8529 = vmatprep.subr.bf16.mxu0 %v7992
        %8530 = vmatpush2.bf16.msra.mxu0 %v7991
        %8531 = vmatprep.subr.bf16.mxu0 %v7990
        %8532 = vmatpush2.bf16.msra.mxu0 %v7989
        %8533 = vmatprep.subr.bf16.mxu0 %v7988
        %8534 = vmatpush2.bf16.msra.mxu0 %v7987
        %8535 = vmatprep.subr.bf16.mxu0 %v7986
        %8536 = vmatpush2.bf16.msra.mxu0 %v7985
        %8537 = vmatprep.subr.bf16.mxu0 %v7984
        %8538 = vmatpush2.bf16.msra.mxu0 %v7983
        %8539 = vmatprep.subr.bf16.mxu0 %v7982
        %8540 = vmatpush2.bf16.msra.mxu0 %v7981
        %8541 = vmatprep.subr.bf16.mxu0 %v7980
        %8542 = vmatpush2.bf16.msra.mxu0 %v7979
        %8543 = vmatprep.mubr.bf16.mxu0 %v6804
        %8544 = vmatmul.mubr.bf16.gmra.mxu0 %v6803
        %v8545 = vpop.f32.mrf.mxu0
        %v8546 = vadd.f32 %v8505, %v8545
        %v8547 = vpop.f32.mrf.mxu0
        %v8548 = vadd.f32 %v8507, %v8547
        %v8549 = vpop.f32.mrf.mxu0
        %v8550 = vpop.f32.mrf.mxu0
        %8551 = vdwg.mxu0
        %8552 = vmatprep.subr.bf16.mxu0 %v8010
        %8553 = vmatpush1.bf16.msra.mxu0 %v8009
        %8554 = vmatprep.subr.bf16.mxu0 %v8008
        %8555 = vmatpush1.bf16.msra.mxu0 %v8007
        %8556 = vmatprep.subr.bf16.mxu0 %v8006
        %8557 = vmatpush1.bf16.msra.mxu0 %v8005
        %8558 = vmatprep.subr.bf16.mxu0 %v8004
        %8559 = vmatpush1.bf16.msra.mxu0 %v8003
        %8560 = vmatprep.subr.bf16.mxu0 %v8002
        %8561 = vmatpush1.bf16.msra.mxu0 %v8001
        %8562 = vmatprep.subr.bf16.mxu0 %v8000
        %8563 = vmatpush1.bf16.msra.mxu0 %v7999
        %8564 = vmatprep.subr.bf16.mxu0 %v7998
        %8565 = vmatpush1.bf16.msra.mxu0 %v7997
        %8566 = vmatprep.subr.bf16.mxu0 %v7996
        %8567 = vmatpush1.bf16.msra.mxu0 %v7995
        %8568 = vmatprep.subr.bf16.mxu0 %v8026
        %8569 = vmatpush2.bf16.msra.mxu0 %v8025
        %8570 = vmatprep.subr.bf16.mxu0 %v8024
        %8571 = vmatpush2.bf16.msra.mxu0 %v8023
        %8572 = vmatprep.subr.bf16.mxu0 %v8022
        %8573 = vmatpush2.bf16.msra.mxu0 %v8021
        %8574 = vmatprep.subr.bf16.mxu0 %v8020
        %8575 = vmatpush2.bf16.msra.mxu0 %v8019
        %8576 = vmatprep.subr.bf16.mxu0 %v8018
        %8577 = vmatpush2.bf16.msra.mxu0 %v8017
        %8578 = vmatprep.subr.bf16.mxu0 %v8016
        %8579 = vmatpush2.bf16.msra.mxu0 %v8015
        %8580 = vmatprep.subr.bf16.mxu0 %v8014
        %8581 = vmatpush2.bf16.msra.mxu0 %v8013
        %8582 = vmatprep.subr.bf16.mxu0 %v8012
        %8583 = vmatpush2.bf16.msra.mxu0 %v8011
        %8584 = vmatprep.mubr.bf16.mxu0 %v6806
        %8585 = vmatmul.mubr.bf16.gmra.mxu0 %v6805
        %v8586 = vpop.f32.mrf.mxu0
        %v8587 = vadd.f32 %v8546, %v8586
        %v8588 = vpop.f32.mrf.mxu0
        %v8589 = vadd.f32 %v8548, %v8588
        %v8590 = vpop.f32.mrf.mxu0
        %v8591 = vpop.f32.mrf.mxu0
        %8592 = vdwg.mxu0
        %8593 = vmatprep.subr.bf16.mxu0 %v8042
        %8594 = vmatpush1.bf16.msra.mxu0 %v8041
        %8595 = vmatprep.subr.bf16.mxu0 %v8040
        %8596 = vmatpush1.bf16.msra.mxu0 %v8039
        %8597 = vmatprep.subr.bf16.mxu0 %v8038
        %8598 = vmatpush1.bf16.msra.mxu0 %v8037
        %8599 = vmatprep.subr.bf16.mxu0 %v8036
        %8600 = vmatpush1.bf16.msra.mxu0 %v8035
        %8601 = vmatprep.subr.bf16.mxu0 %v8034
        %8602 = vmatpush1.bf16.msra.mxu0 %v8033
        %8603 = vmatprep.subr.bf16.mxu0 %v8032
        %8604 = vmatpush1.bf16.msra.mxu0 %v8031
        %8605 = vmatprep.subr.bf16.mxu0 %v8030
        %8606 = vmatpush1.bf16.msra.mxu0 %v8029
        %8607 = vmatprep.subr.bf16.mxu0 %v8028
        %8608 = vmatpush1.bf16.msra.mxu0 %v8027
        %8609 = vmatprep.subr.bf16.mxu0 %v8058
        %8610 = vmatpush2.bf16.msra.mxu0 %v8057
        %8611 = vmatprep.subr.bf16.mxu0 %v8056
        %8612 = vmatpush2.bf16.msra.mxu0 %v8055
        %8613 = vmatprep.subr.bf16.mxu0 %v8054
        %8614 = vmatpush2.bf16.msra.mxu0 %v8053
        %8615 = vmatprep.subr.bf16.mxu0 %v8052
        %8616 = vmatpush2.bf16.msra.mxu0 %v8051
        %8617 = vmatprep.subr.bf16.mxu0 %v8050
        %8618 = vmatpush2.bf16.msra.mxu0 %v8049
        %8619 = vmatprep.subr.bf16.mxu0 %v8048
        %8620 = vmatpush2.bf16.msra.mxu0 %v8047
        %8621 = vmatprep.subr.bf16.mxu0 %v8046
        %8622 = vmatpush2.bf16.msra.mxu0 %v8045
        %8623 = vmatprep.subr.bf16.mxu0 %v8044
        %8624 = vmatpush2.bf16.msra.mxu0 %v8043
        %8625 = vmatprep.mubr.bf16.mxu0 %v6808
        %8626 = vmatmul.mubr.bf16.gmra.mxu0 %v6807
        %v8627 = vpop.f32.mrf.mxu0
        %v8628 = vadd.f32 %v8587, %v8627
        %v8629 = vpop.f32.mrf.mxu0
        %v8630 = vadd.f32 %v8589, %v8629
        %v8631 = vpop.f32.mrf.mxu0
        %v8632 = vpop.f32.mrf.mxu0
        %8633 = vdwg.mxu0
        %8634 = vmatprep.subr.bf16.mxu0 %v8074
        %8635 = vmatpush1.bf16.msra.mxu0 %v8073
        %8636 = vmatprep.subr.bf16.mxu0 %v8072
        %8637 = vmatpush1.bf16.msra.mxu0 %v8071
        %8638 = vmatprep.subr.bf16.mxu0 %v8070
        %8639 = vmatpush1.bf16.msra.mxu0 %v8069
        %8640 = vmatprep.subr.bf16.mxu0 %v8068
        %8641 = vmatpush1.bf16.msra.mxu0 %v8067
        %8642 = vmatprep.subr.bf16.mxu0 %v8066
        %8643 = vmatpush1.bf16.msra.mxu0 %v8065
        %8644 = vmatprep.subr.bf16.mxu0 %v8064
        %8645 = vmatpush1.bf16.msra.mxu0 %v8063
        %8646 = vmatprep.subr.bf16.mxu0 %v8062
        %8647 = vmatpush1.bf16.msra.mxu0 %v8061
        %8648 = vmatprep.subr.bf16.mxu0 %v8060
        %8649 = vmatpush1.bf16.msra.mxu0 %v8059
        %8650 = vmatprep.subr.bf16.mxu0 %v8090
        %8651 = vmatpush2.bf16.msra.mxu0 %v8089
        %8652 = vmatprep.subr.bf16.mxu0 %v8088
        %8653 = vmatpush2.bf16.msra.mxu0 %v8087
        %8654 = vmatprep.subr.bf16.mxu0 %v8086
        %8655 = vmatpush2.bf16.msra.mxu0 %v8085
        %8656 = vmatprep.subr.bf16.mxu0 %v8084
        %8657 = vmatpush2.bf16.msra.mxu0 %v8083
        %8658 = vmatprep.subr.bf16.mxu0 %v8082
        %8659 = vmatpush2.bf16.msra.mxu0 %v8081
        %8660 = vmatprep.subr.bf16.mxu0 %v8080
        %8661 = vmatpush2.bf16.msra.mxu0 %v8079
        %8662 = vmatprep.subr.bf16.mxu0 %v8078
        %8663 = vmatpush2.bf16.msra.mxu0 %v8077
        %8664 = vmatprep.subr.bf16.mxu0 %v8076
        %8665 = vmatpush2.bf16.msra.mxu0 %v8075
        %8666 = vmatprep.mubr.bf16.mxu0 %v6810
        %8667 = vmatmul.mubr.bf16.gmra.mxu0 %v6809
        %v8668 = vpop.f32.mrf.mxu0
        %v8669 = vadd.f32 %v8628, %v8668
        %v8670 = vpop.f32.mrf.mxu0
        %v8671 = vadd.f32 %v8630, %v8670
        %v8672 = vpop.f32.mrf.mxu0
        %v8673 = vpop.f32.mrf.mxu0
        %8674 = vdwg.mxu0
        %v8675 = vadd.f32 %v6793, %v8669
        %v8676 = vadd.f32 %v6794, %v8671
        %8677 = vst [vmem:[%s5] sm:$0xff] %v8675
        %vm8678 = vcmask 162816
        %8679 = vst.msk [vmem:[%s5 + $0x8] sm:$0xff] %vm8678, %v8676
        %p8680 = scmp.eq.s32.totalorder %s24, 1
        %p8681 = scmp.eq.s32.totalorder %s23, 0
        %p8682 = pnand %p8680, %p8681
        %p8683 = pneg %p8682
        // Predicated region
        $region49: #{clustering_model_head_i.1} parent=39 // pred_check
          _
        $region50: #{clustering_model_head_i.1} parent=39 // pred_check_branch
          %8685 = sbr.rel (%p8682) target = $region52
        $region51: #{clustering_model_head_i.1} parent=39 // pred_region
          %v8686 = vld [vmem:[%s5] sm:$0xff]
          %v8687 = vld [vmem:[%s5 + $0x8] sm:$0xff]
          %v8688 = vld [vmem:[%s4] sm:$0x3]
          %v8690 = vlaneseq
          %v8691 = vshrl.u32 %v8690, 7
          %v8692 = vsub.s32 0, %v8691
          %v8693 = vrot.slane %v8688, %v8692
          %v8694 = vlaneseq
          %v8695 = vshrl.u32 %v8694, 7
          %v8696 = vsub.s32 1, %v8695
          %v8697 = vrot.slane %v8688, %v8696
          %v8700 = vadd.f32 %v8686, %v8693
          %v8701 = vadd.f32 %v8687, %v8697
          %8702 = vst [vmem:[%s5] sm:$0xff] %v8700
          %8703 = vst.msk [vmem:[%s5 + $0x8] sm:$0xff] %vm8678, %v8701
        $region52: #{clustering_model_head_i.1} parent=39 // pred_fallthru
          _
        // Predicated region
        $region53: #{clustering_model_head_i.1} parent=39 // pred_check
          %p8704 = pneg %p176
        $region54: #{clustering_model_head_i.1} parent=39 // pred_check_branch
          %8706 = sbr.rel (%p8704) target = $region56
        $region55: #{clustering_model_head_i.1} parent=39 // pred_region
          _
        $region56: #{clustering_model_head_i.1} parent=39 // pred_fallthru
          _
        // Predicated region
        $region57: #{clustering_model_head_i.1} parent=39 // pred_check
          %p8707 = pneg %p176
        $region58: #{clustering_model_head_i.1} parent=39 // pred_check_branch
          %8709 = sbr.rel (%p8707) target = $region60
        $region59: #{clustering_model_head_i.1} parent=39 // pred_region
          _
        $region60: #{clustering_model_head_i.1} parent=39 // pred_fallthru
          _
      $region40: #{clustering_model_head_i.1} parent=5 // pred_fallthru
        _
      %p8710 = scmp.le.s32.totalorder 2, %s14
      // Predicated region
      $region61: #{clustering_model_head_i.1} parent=5 // pred_check
        %p8711 = pneg %p8710
      $region62: #{clustering_model_head_i.1} parent=5 // pred_check_branch
        %8713 = sbr.rel (%p8711) target = $region64
      $region63: #{clustering_model_head_i.1} parent=5 // pred_region
        %s8714 = ssub.s32 %s14, 2
      $region64: #{clustering_model_head_i.1} parent=5 // pred_fallthru
        _
    $region6: #{clustering_model_head_i.1} parent=1 // loop_footer
      %s18 = sadd.s32 1, %s14
    $region7: #{clustering_model_head_i.1} parent=1 // loop_footer_branch
      %13 = sbr.rel target = $region3
    $region8: #{clustering_model_head_i.1} parent=1 // loop_exit
      _
    %8715 = vsyncpa [#allocation3], 1
    %s8716 = scalar_lea.sflag [#allocation3], 1
    %8717 = vsyncpa %s8716, 1

</llo_original>
